<compile_context>
chip_gen: v7x
topology: tpu7x:2x2x1
jax: 0.10.0
libtpu: 0.0.40
codegen_flags: <defaults>
</compile_context>

<pallas_src>
import numpy as np

import jax
import jax.numpy as jnp
from jax.experimental import pallas as pl
from jax.experimental.pallas import tpu as pltpu


# ----------------------------------------------------------------------------
# Model configuration
# ----------------------------------------------------------------------------
C_IN, C_OUT = 4, 8
H, W = 16, 16
EMB, NCLS = 32, 16
KH, KW = 3, 3
PAD = 1
HP, WP = H + 2 * PAD, W + 2 * PAD


# ----------------------------------------------------------------------------
# Fused Pallas kernel: conv(+relu) -> flatten -> linear(+relu) -> linear
# One grid step == one batch sample.
# ----------------------------------------------------------------------------
def _fused_face_kernel(x_ref, t_ref, bc_ref, wn_ref, bn_ref, wh_ref, bh_ref,
                       o_ref):
    # x_ref : (HP, 1, WP*C_IN)        padded input rows of this sample (NHWC)
    # t_ref : (KH, WP*C_IN, W*C_OUT)  banded conv weight (im2col folded in)
    # bc_ref: (1, W*C_OUT)            conv bias tiled over w
    # wn_ref: (H, W*C_OUT, EMB)       neck weight, permuted to (h, (w,co), e)
    # bn_ref: (1, EMB)
    # wh_ref: (EMB, NCLS)
    # bh_ref: (1, NCLS)
    # o_ref : (1, 1, NCLS)
    neck_acc = jnp.zeros((1, EMB), jnp.float32)
    for h in range(H):
        # ---- backbone: one output row of the conv, lane-dense (1, W*C_OUT) --
        acc = jnp.zeros((1, W * C_OUT), jnp.float32)
        for dy in range(KH):
            acc = acc + jnp.dot(x_ref[h + dy], t_ref[dy],
                                preferred_element_type=jnp.float32)
        conv_h = jnp.maximum(acc + bc_ref[...], 0.0)          # lanes = (w, co)
        # ---- neck contraction for this row (flatten is implicit) -----------
        neck_acc = neck_acc + jnp.dot(conv_h, wn_ref[h],
                                      preferred_element_type=jnp.float32)
    neck = jnp.maximum(neck_acc + bn_ref[...], 0.0)            # (1, EMB)
    # ---- head -----------------------------------------------------------
    logits = jnp.dot(neck, wh_ref[...],
                     preferred_element_type=jnp.float32) + bh_ref[...]
    o_ref[0] = logits.astype(o_ref.dtype)


def face_model_forward(x_nchw, prep):
    """x_nchw: (N, C_IN, H, W) f32 -> logits (N, NCLS) f32."""
    N = x_nchw.shape[0]

    # Layout glue on the *raw* input only (no 9x im2col materialization):
    # NCHW -> NHWC, zero-pad spatial, fold channels into the lane dim, and
    # expose one padded image row per leading index.
    x_nhwc = jnp.transpose(x_nchw, (0, 2, 3, 1))
    x_pad = jnp.pad(x_nhwc, ((0, 0), (PAD, PAD), (PAD, PAD), (0, 0)))
    x_rows = x_pad.reshape(N * HP, 1, WP * C_IN)

    out = pl.pallas_call(
        _fused_face_kernel,
        out_shape=jax.ShapeDtypeStruct((N, 1, NCLS), jnp.float32),
        grid=(N,),
        in_specs=[
            pl.BlockSpec((HP, 1, WP * C_IN), lambda n: (n, 0, 0)),
            pl.BlockSpec((KH, WP * C_IN, W * C_OUT), lambda n: (0, 0, 0)),
            pl.BlockSpec((1, W * C_OUT), lambda n: (0, 0)),
            pl.BlockSpec((H, W * C_OUT, EMB), lambda n: (0, 0, 0)),
            pl.BlockSpec((1, EMB), lambda n: (0, 0)),
            pl.BlockSpec((EMB, NCLS), lambda n: (0, 0)),
            pl.BlockSpec((1, NCLS), lambda n: (0, 0)),
        ],
        out_specs=pl.BlockSpec((1, 1, NCLS), lambda n: (n, 0, 0)),
        compiler_params=pltpu.CompilerParams(
            dimension_semantics=("parallel",),
        ),
    )(x_rows, prep["t_conv"], prep["b_conv_row"], prep["w_neck3"],
      prep["b_neck"], prep["w_head"], prep["b_head"])
    return out.reshape(N, NCLS)


# ----------------------------------------------------------------------------
# Init-time weight preprocessing (static; mathematically identical forward)
# ----------------------------------------------------------------------------
def prepare_params(params):
    w_conv = np.asarray(params["conv_w"])   # (C_OUT, C_IN, 3, 3)
    b_conv = np.asarray(params["conv_b"])   # (C_OUT,)
    w_neck = np.asarray(params["neck_w"])   # (EMB, C_OUT*H*W), PyTorch flatten
    b_neck = np.asarray(params["neck_b"])   # (EMB,)
    w_head = np.asarray(params["head_w"])   # (NCLS, EMB)
    b_head = np.asarray(params["head_b"])   # (NCLS,)

    # Banded (Toeplitz) conv weight: T[dy, wp*C_IN+ci, w*C_OUT+co]
    #   = w_conv[co, ci, dy, wp - w]  if 0 <= wp - w < KW  else 0
    t = np.zeros((KH, WP * C_IN, W * C_OUT), np.float32)
    for dy in range(KH):
        for w in range(W):
            for kx in range(KW):
                wp = w + kx
                t[dy, wp * C_IN:(wp + 1) * C_IN,
                  w * C_OUT:(w + 1) * C_OUT] = w_conv[:, :, dy, kx].T

    # Conv bias broadcast over the (w, co) lane layout.
    b_conv_row = np.tile(b_conv, W)[None, :]                 # (1, W*C_OUT)

    # Neck weight permuted so the kernel's per-row (w, co) layout matches the
    # PyTorch NCHW flatten index co*H*W + h*W + w.
    wn = w_neck.reshape(EMB, C_OUT, H, W).transpose(2, 3, 1, 0)  # (H,W,CO,EMB)
    w_neck3 = wn.reshape(H, W * C_OUT, EMB)

    return {
        "t_conv": jnp.asarray(t),
        "b_conv_row": jnp.asarray(b_conv_row),
        "w_neck3": jnp.asarray(w_neck3),
        "b_neck": jnp.asarray(b_neck[None, :]),
        "w_head": jnp.asarray(w_head.T),                     # (EMB, NCLS)
        "b_head": jnp.asarray(b_head[None, :]),
    }


def init_params(key):
    ks = jax.random.split(key, 6)
    scale = 0.05
    return {
        "conv_w": scale * jax.random.normal(ks[0], (C_OUT, C_IN, 3, 3), jnp.float32),
        "conv_b": scale * jax.random.normal(ks[1], (C_OUT,), jnp.float32),
        "neck_w": scale * jax.random.normal(ks[2], (EMB, C_OUT * H * W), jnp.float32),
        "neck_b": scale * jax.random.normal(ks[3], (EMB,), jnp.float32),
        "head_w": scale * jax.random.normal(ks[4], (NCLS, EMB), jnp.float32),
        "head_b": scale * jax.random.normal(ks[5], (NCLS,), jnp.float32),
    }


# Pure-JAX reference (mirrors the PyTorch forward) for a correctness check.
def face_model_reference(x_nchw, params):
    conv = jax.lax.conv_general_dilated(
        x_nchw, params["conv_w"], window_strides=(1, 1),
        padding=((PAD, PAD), (PAD, PAD)),
        dimension_numbers=("NCHW", "OIHW", "NCHW"))
    conv = jnp.maximum(conv + params["conv_b"][None, :, None, None], 0.0)
    feat = conv.reshape(x_nchw.shape[0], -1)
    neck = jnp.maximum(feat @ params["neck_w"].T + params["neck_b"], 0.0)
    return neck @ params["head_w"].T + params["head_b"]


if __name__ == "__main__":
    key = jax.random.PRNGKey(0)
    k_x, k_p = jax.random.split(key)

    # NCHW input, matching the PyTorch convention.
    x = jax.random.normal(k_x, (2, C_IN, H, W), jnp.float32)
    params = init_params(k_p)
    prep = prepare_params(params)

    out = face_model_forward(x, prep)
    out = jax.block_until_ready(out)
    assert out.shape == (2, NCLS) and out.dtype == jnp.float32

    ref = face_model_reference(x, params)
    assert jnp.allclose(out, ref, atol=1e-3, rtol=1e-3), float(
        jnp.max(jnp.abs(out - ref)))

    print("KERNEL_OK")
</pallas_src>

<mosaic_0001>
module attributes {stable_mosaic.version = 11 : i64} {
  func.func @_fused_face_kernel(%arg0: i32, %arg1: memref<18x1x72xf32, #tpu.memory_space<vmem>>, %arg2: memref<3x72x128xf32, #tpu.memory_space<vmem>>, %arg3: memref<1x128xf32, #tpu.memory_space<vmem>>, %arg4: memref<16x128x32xf32, #tpu.memory_space<vmem>>, %arg5: memref<1x32xf32, #tpu.memory_space<vmem>>, %arg6: memref<32x16xf32, #tpu.memory_space<vmem>>, %arg7: memref<1x16xf32, #tpu.memory_space<vmem>>, %arg8: memref<1x1x16xf32, #tpu.memory_space<vmem>>) attributes {dimension_semantics = [#tpu.dimension_semantics<parallel>], iteration_bounds = array<i64: 2>, scalar_prefetch = 0 : i64, scratch_operands = 0 : i64, tpu.core_type = #tpu.core_type<tc>, window_params = [{transform_indices = @transform_0, window_bounds = array<i64: 18, 1, 72>}, {pipeline_mode = #tpu.pipeline_mode<synchronous>, transform_indices = @transform_1, window_bounds = array<i64: 3, 72, 128>}, {pipeline_mode = #tpu.pipeline_mode<synchronous>, transform_indices = @transform_2, window_bounds = array<i64: 1, 128>}, {pipeline_mode = #tpu.pipeline_mode<synchronous>, transform_indices = @transform_3, window_bounds = array<i64: 16, 128, 32>}, {pipeline_mode = #tpu.pipeline_mode<synchronous>, transform_indices = @transform_4, window_bounds = array<i64: 1, 32>}, {pipeline_mode = #tpu.pipeline_mode<synchronous>, transform_indices = @transform_5, window_bounds = array<i64: 32, 16>}, {pipeline_mode = #tpu.pipeline_mode<synchronous>, transform_indices = @transform_6, window_bounds = array<i64: 1, 16>}, {transform_indices = @transform_7, window_bounds = array<i64: 1, 1, 16>}]} {
    %cst = arith.constant 0.000000e+00 : f32
    %0 = vector.broadcast %cst : f32 to vector<1x32xf32>
    %cst_0 = arith.constant 0.000000e+00 : f32
    %1 = vector.broadcast %cst_0 : f32 to vector<1x128xf32>
    %c0 = arith.constant 0 : index
    %c0_1 = arith.constant 0 : index
    %c0_2 = arith.constant 0 : index
    %2 = vector.load %arg1[%c0, %c0_1, %c0_2] : memref<18x1x72xf32, #tpu.memory_space<vmem>>, vector<1x1x72xf32>
    %3 = vector.shape_cast %2 : vector<1x1x72xf32> to vector<1x72xf32>
    %c0_3 = arith.constant 0 : index
    %c0_4 = arith.constant 0 : index
    %c0_5 = arith.constant 0 : index
    %4 = vector.load %arg2[%c0_3, %c0_4, %c0_5] : memref<3x72x128xf32, #tpu.memory_space<vmem>>, vector<1x72x128xf32>
    %5 = vector.shape_cast %4 : vector<1x72x128xf32> to vector<72x128xf32>
    %cst_6 = arith.constant dense<0.000000e+00> : vector<1x128xf32>
    %6 = tpu.matmul %3, %5, %cst_6 {dimension_numbers = #tpu.dot_dimension_numbers<[1], [0], [0], [1], [0, 0, 1, 1], [], []>} : vector<1x72xf32>, vector<72x128xf32>, vector<1x128xf32> -> vector<1x128xf32>
    %7 = arith.addf %1, %6 : vector<1x128xf32>
    %c1 = arith.constant 1 : index
    %c0_7 = arith.constant 0 : index
    %c0_8 = arith.constant 0 : index
    %8 = vector.load %arg1[%c1, %c0_7, %c0_8] : memref<18x1x72xf32, #tpu.memory_space<vmem>>, vector<1x1x72xf32>
    %9 = vector.shape_cast %8 : vector<1x1x72xf32> to vector<1x72xf32>
    %c1_9 = arith.constant 1 : index
    %c0_10 = arith.constant 0 : index
    %c0_11 = arith.constant 0 : index
    %10 = vector.load %arg2[%c1_9, %c0_10, %c0_11] : memref<3x72x128xf32, #tpu.memory_space<vmem>>, vector<1x72x128xf32>
    %11 = vector.shape_cast %10 : vector<1x72x128xf32> to vector<72x128xf32>
    %cst_12 = arith.constant dense<0.000000e+00> : vector<1x128xf32>
    %12 = tpu.matmul %9, %11, %cst_12 {dimension_numbers = #tpu.dot_dimension_numbers<[1], [0], [0], [1], [0, 0, 1, 1], [], []>} : vector<1x72xf32>, vector<72x128xf32>, vector<1x128xf32> -> vector<1x128xf32>
    %13 = arith.addf %7, %12 : vector<1x128xf32>
    %c2 = arith.constant 2 : index
    %c0_13 = arith.constant 0 : index
    %c0_14 = arith.constant 0 : index
    %14 = vector.load %arg1[%c2, %c0_13, %c0_14] : memref<18x1x72xf32, #tpu.memory_space<vmem>>, vector<1x1x72xf32>
    %15 = vector.shape_cast %14 : vector<1x1x72xf32> to vector<1x72xf32>
    %c2_15 = arith.constant 2 : index
    %c0_16 = arith.constant 0 : index
    %c0_17 = arith.constant 0 : index
    %16 = vector.load %arg2[%c2_15, %c0_16, %c0_17] : memref<3x72x128xf32, #tpu.memory_space<vmem>>, vector<1x72x128xf32>
    %17 = vector.shape_cast %16 : vector<1x72x128xf32> to vector<72x128xf32>
    %cst_18 = arith.constant dense<0.000000e+00> : vector<1x128xf32>
    %18 = tpu.matmul %15, %17, %cst_18 {dimension_numbers = #tpu.dot_dimension_numbers<[1], [0], [0], [1], [0, 0, 1, 1], [], []>} : vector<1x72xf32>, vector<72x128xf32>, vector<1x128xf32> -> vector<1x128xf32>
    %19 = arith.addf %13, %18 : vector<1x128xf32>
    %c0_19 = arith.constant 0 : index
    %c0_20 = arith.constant 0 : index
    %20 = vector.load %arg3[%c0_19, %c0_20] : memref<1x128xf32, #tpu.memory_space<vmem>>, vector<1x128xf32>
    %21 = arith.addf %19, %20 : vector<1x128xf32>
    %cst_21 = arith.constant 0.000000e+00 : f32
    %22 = vector.broadcast %cst_21 : f32 to vector<1x128xf32>
    %23 = arith.maximumf %21, %22 : vector<1x128xf32>
    %c0_22 = arith.constant 0 : index
    %c0_23 = arith.constant 0 : index
    %c0_24 = arith.constant 0 : index
    %24 = vector.load %arg4[%c0_22, %c0_23, %c0_24] : memref<16x128x32xf32, #tpu.memory_space<vmem>>, vector<1x128x32xf32>
    %25 = vector.shape_cast %24 : vector<1x128x32xf32> to vector<128x32xf32>
    %cst_25 = arith.constant dense<0.000000e+00> : vector<1x32xf32>
    %26 = tpu.matmul %23, %25, %cst_25 {dimension_numbers = #tpu.dot_dimension_numbers<[1], [0], [0], [1], [0, 0, 1, 1], [], []>} : vector<1x128xf32>, vector<128x32xf32>, vector<1x32xf32> -> vector<1x32xf32>
    %27 = arith.addf %0, %26 : vector<1x32xf32>
    %cst_26 = arith.constant 0.000000e+00 : f32
    %28 = vector.broadcast %cst_26 : f32 to vector<1x128xf32>
    %c1_27 = arith.constant 1 : index
    %c0_28 = arith.constant 0 : index
    %c0_29 = arith.constant 0 : index
    %29 = vector.load %arg1[%c1_27, %c0_28, %c0_29] : memref<18x1x72xf32, #tpu.memory_space<vmem>>, vector<1x1x72xf32>
    %30 = vector.shape_cast %29 : vector<1x1x72xf32> to vector<1x72xf32>
    %c0_30 = arith.constant 0 : index
    %c0_31 = arith.constant 0 : index
    %c0_32 = arith.constant 0 : index
    %31 = vector.load %arg2[%c0_30, %c0_31, %c0_32] : memref<3x72x128xf32, #tpu.memory_space<vmem>>, vector<1x72x128xf32>
    %32 = vector.shape_cast %31 : vector<1x72x128xf32> to vector<72x128xf32>
    %cst_33 = arith.constant dense<0.000000e+00> : vector<1x128xf32>
    %33 = tpu.matmul %30, %32, %cst_33 {dimension_numbers = #tpu.dot_dimension_numbers<[1], [0], [0], [1], [0, 0, 1, 1], [], []>} : vector<1x72xf32>, vector<72x128xf32>, vector<1x128xf32> -> vector<1x128xf32>
    %34 = arith.addf %28, %33 : vector<1x128xf32>
    %c2_34 = arith.constant 2 : index
    %c0_35 = arith.constant 0 : index
    %c0_36 = arith.constant 0 : index
    %35 = vector.load %arg1[%c2_34, %c0_35, %c0_36] : memref<18x1x72xf32, #tpu.memory_space<vmem>>, vector<1x1x72xf32>
    %36 = vector.shape_cast %35 : vector<1x1x72xf32> to vector<1x72xf32>
    %c1_37 = arith.constant 1 : index
    %c0_38 = arith.constant 0 : index
    %c0_39 = arith.constant 0 : index
    %37 = vector.load %arg2[%c1_37, %c0_38, %c0_39] : memref<3x72x128xf32, #tpu.memory_space<vmem>>, vector<1x72x128xf32>
    %38 = vector.shape_cast %37 : vector<1x72x128xf32> to vector<72x128xf32>
    %cst_40 = arith.constant dense<0.000000e+00> : vector<1x128xf32>
    %39 = tpu.matmul %36, %38, %cst_40 {dimension_numbers = #tpu.dot_dimension_numbers<[1], [0], [0], [1], [0, 0, 1, 1], [], []>} : vector<1x72xf32>, vector<72x128xf32>, vector<1x128xf32> -> vector<1x128xf32>
    %40 = arith.addf %34, %39 : vector<1x128xf32>
    %c3 = arith.constant 3 : index
    %c0_41 = arith.constant 0 : index
    %c0_42 = arith.constant 0 : index
    %41 = vector.load %arg1[%c3, %c0_41, %c0_42] : memref<18x1x72xf32, #tpu.memory_space<vmem>>, vector<1x1x72xf32>
    %42 = vector.shape_cast %41 : vector<1x1x72xf32> to vector<1x72xf32>
    %c2_43 = arith.constant 2 : index
    %c0_44 = arith.constant 0 : index
    %c0_45 = arith.constant 0 : index
    %43 = vector.load %arg2[%c2_43, %c0_44, %c0_45] : memref<3x72x128xf32, #tpu.memory_space<vmem>>, vector<1x72x128xf32>
    %44 = vector.shape_cast %43 : vector<1x72x128xf32> to vector<72x128xf32>
    %cst_46 = arith.constant dense<0.000000e+00> : vector<1x128xf32>
    %45 = tpu.matmul %42, %44, %cst_46 {dimension_numbers = #tpu.dot_dimension_numbers<[1], [0], [0], [1], [0, 0, 1, 1], [], []>} : vector<1x72xf32>, vector<72x128xf32>, vector<1x128xf32> -> vector<1x128xf32>
    %46 = arith.addf %40, %45 : vector<1x128xf32>
    %c0_47 = arith.constant 0 : index
    %c0_48 = arith.constant 0 : index
    %47 = vector.load %arg3[%c0_47, %c0_48] : memref<1x128xf32, #tpu.memory_space<vmem>>, vector<1x128xf32>
    %48 = arith.addf %46, %47 : vector<1x128xf32>
    %cst_49 = arith.constant 0.000000e+00 : f32
    %49 = vector.broadcast %cst_49 : f32 to vector<1x128xf32>
    %50 = arith.maximumf %48, %49 : vector<1x128xf32>
    %c1_50 = arith.constant 1 : index
    %c0_51 = arith.constant 0 : index
    %c0_52 = arith.constant 0 : index
    %51 = vector.load %arg4[%c1_50, %c0_51, %c0_52] : memref<16x128x32xf32, #tpu.memory_space<vmem>>, vector<1x128x32xf32>
    %52 = vector.shape_cast %51 : vector<1x128x32xf32> to vector<128x32xf32>
    %cst_53 = arith.constant dense<0.000000e+00> : vector<1x32xf32>
    %53 = tpu.matmul %50, %52, %cst_53 {dimension_numbers = #tpu.dot_dimension_numbers<[1], [0], [0], [1], [0, 0, 1, 1], [], []>} : vector<1x128xf32>, vector<128x32xf32>, vector<1x32xf32> -> vector<1x32xf32>
    %54 = arith.addf %27, %53 : vector<1x32xf32>
    %cst_54 = arith.constant 0.000000e+00 : f32
    %55 = vector.broadcast %cst_54 : f32 to vector<1x128xf32>
    %c2_55 = arith.constant 2 : index
    %c0_56 = arith.constant 0 : index
    %c0_57 = arith.constant 0 : index
    %56 = vector.load %arg1[%c2_55, %c0_56, %c0_57] : memref<18x1x72xf32, #tpu.memory_space<vmem>>, vector<1x1x72xf32>
    %57 = vector.shape_cast %56 : vector<1x1x72xf32> to vector<1x72xf32>
    %c0_58 = arith.constant 0 : index
    %c0_59 = arith.constant 0 : index
    %c0_60 = arith.constant 0 : index
    %58 = vector.load %arg2[%c0_58, %c0_59, %c0_60] : memref<3x72x128xf32, #tpu.memory_space<vmem>>, vector<1x72x128xf32>
    %59 = vector.shape_cast %58 : vector<1x72x128xf32> to vector<72x128xf32>
    %cst_61 = arith.constant dense<0.000000e+00> : vector<1x128xf32>
    %60 = tpu.matmul %57, %59, %cst_61 {dimension_numbers = #tpu.dot_dimension_numbers<[1], [0], [0], [1], [0, 0, 1, 1], [], []>} : vector<1x72xf32>, vector<72x128xf32>, vector<1x128xf32> -> vector<1x128xf32>
    %61 = arith.addf %55, %60 : vector<1x128xf32>
    %c3_62 = arith.constant 3 : index
    %c0_63 = arith.constant 0 : index
    %c0_64 = arith.constant 0 : index
    %62 = vector.load %arg1[%c3_62, %c0_63, %c0_64] : memref<18x1x72xf32, #tpu.memory_space<vmem>>, vector<1x1x72xf32>
    %63 = vector.shape_cast %62 : vector<1x1x72xf32> to vector<1x72xf32>
    %c1_65 = arith.constant 1 : index
    %c0_66 = arith.constant 0 : index
    %c0_67 = arith.constant 0 : index
    %64 = vector.load %arg2[%c1_65, %c0_66, %c0_67] : memref<3x72x128xf32, #tpu.memory_space<vmem>>, vector<1x72x128xf32>
    %65 = vector.shape_cast %64 : vector<1x72x128xf32> to vector<72x128xf32>
    %cst_68 = arith.constant dense<0.000000e+00> : vector<1x128xf32>
    %66 = tpu.matmul %63, %65, %cst_68 {dimension_numbers = #tpu.dot_dimension_numbers<[1], [0], [0], [1], [0, 0, 1, 1], [], []>} : vector<1x72xf32>, vector<72x128xf32>, vector<1x128xf32> -> vector<1x128xf32>
    %67 = arith.addf %61, %66 : vector<1x128xf32>
    %c4 = arith.constant 4 : index
    %c0_69 = arith.constant 0 : index
    %c0_70 = arith.constant 0 : index
    %68 = vector.load %arg1[%c4, %c0_69, %c0_70] : memref<18x1x72xf32, #tpu.memory_space<vmem>>, vector<1x1x72xf32>
    %69 = vector.shape_cast %68 : vector<1x1x72xf32> to vector<1x72xf32>
    %c2_71 = arith.constant 2 : index
    %c0_72 = arith.constant 0 : index
    %c0_73 = arith.constant 0 : index
    %70 = vector.load %arg2[%c2_71, %c0_72, %c0_73] : memref<3x72x128xf32, #tpu.memory_space<vmem>>, vector<1x72x128xf32>
    %71 = vector.shape_cast %70 : vector<1x72x128xf32> to vector<72x128xf32>
    %cst_74 = arith.constant dense<0.000000e+00> : vector<1x128xf32>
    %72 = tpu.matmul %69, %71, %cst_74 {dimension_numbers = #tpu.dot_dimension_numbers<[1], [0], [0], [1], [0, 0, 1, 1], [], []>} : vector<1x72xf32>, vector<72x128xf32>, vector<1x128xf32> -> vector<1x128xf32>
    %73 = arith.addf %67, %72 : vector<1x128xf32>
    %c0_75 = arith.constant 0 : index
    %c0_76 = arith.constant 0 : index
    %74 = vector.load %arg3[%c0_75, %c0_76] : memref<1x128xf32, #tpu.memory_space<vmem>>, vector<1x128xf32>
    %75 = arith.addf %73, %74 : vector<1x128xf32>
    %cst_77 = arith.constant 0.000000e+00 : f32
    %76 = vector.broadcast %cst_77 : f32 to vector<1x128xf32>
    %77 = arith.maximumf %75, %76 : vector<1x128xf32>
    %c2_78 = arith.constant 2 : index
    %c0_79 = arith.constant 0 : index
    %c0_80 = arith.constant 0 : index
    %78 = vector.load %arg4[%c2_78, %c0_79, %c0_80] : memref<16x128x32xf32, #tpu.memory_space<vmem>>, vector<1x128x32xf32>
    %79 = vector.shape_cast %78 : vector<1x128x32xf32> to vector<128x32xf32>
    %cst_81 = arith.constant dense<0.000000e+00> : vector<1x32xf32>
    %80 = tpu.matmul %77, %79, %cst_81 {dimension_numbers = #tpu.dot_dimension_numbers<[1], [0], [0], [1], [0, 0, 1, 1], [], []>} : vector<1x128xf32>, vector<128x32xf32>, vector<1x32xf32> -> vector<1x32xf32>
    %81 = arith.addf %54, %80 : vector<1x32xf32>
    %cst_82 = arith.constant 0.000000e+00 : f32
    %82 = vector.broadcast %cst_82 : f32 to vector<1x128xf32>
    %c3_83 = arith.constant 3 : index
    %c0_84 = arith.constant 0 : index
    %c0_85 = arith.constant 0 : index
    %83 = vector.load %arg1[%c3_83, %c0_84, %c0_85] : memref<18x1x72xf32, #tpu.memory_space<vmem>>, vector<1x1x72xf32>
    %84 = vector.shape_cast %83 : vector<1x1x72xf32> to vector<1x72xf32>
    %c0_86 = arith.constant 0 : index
    %c0_87 = arith.constant 0 : index
    %c0_88 = arith.constant 0 : index
    %85 = vector.load %arg2[%c0_86, %c0_87, %c0_88] : memref<3x72x128xf32, #tpu.memory_space<vmem>>, vector<1x72x128xf32>
    %86 = vector.shape_cast %85 : vector<1x72x128xf32> to vector<72x128xf32>
    %cst_89 = arith.constant dense<0.000000e+00> : vector<1x128xf32>
    %87 = tpu.matmul %84, %86, %cst_89 {dimension_numbers = #tpu.dot_dimension_numbers<[1], [0], [0], [1], [0, 0, 1, 1], [], []>} : vector<1x72xf32>, vector<72x128xf32>, vector<1x128xf32> -> vector<1x128xf32>
    %88 = arith.addf %82, %87 : vector<1x128xf32>
    %c4_90 = arith.constant 4 : index
    %c0_91 = arith.constant 0 : index
    %c0_92 = arith.constant 0 : index
    %89 = vector.load %arg1[%c4_90, %c0_91, %c0_92] : memref<18x1x72xf32, #tpu.memory_space<vmem>>, vector<1x1x72xf32>
    %90 = vector.shape_cast %89 : vector<1x1x72xf32> to vector<1x72xf32>
    %c1_93 = arith.constant 1 : index
    %c0_94 = arith.constant 0 : index
    %c0_95 = arith.constant 0 : index
    %91 = vector.load %arg2[%c1_93, %c0_94, %c0_95] : memref<3x72x128xf32, #tpu.memory_space<vmem>>, vector<1x72x128xf32>
    %92 = vector.shape_cast %91 : vector<1x72x128xf32> to vector<72x128xf32>
    %cst_96 = arith.constant dense<0.000000e+00> : vector<1x128xf32>
    %93 = tpu.matmul %90, %92, %cst_96 {dimension_numbers = #tpu.dot_dimension_numbers<[1], [0], [0], [1], [0, 0, 1, 1], [], []>} : vector<1x72xf32>, vector<72x128xf32>, vector<1x128xf32> -> vector<1x128xf32>
    %94 = arith.addf %88, %93 : vector<1x128xf32>
    %c5 = arith.constant 5 : index
    %c0_97 = arith.constant 0 : index
    %c0_98 = arith.constant 0 : index
    %95 = vector.load %arg1[%c5, %c0_97, %c0_98] : memref<18x1x72xf32, #tpu.memory_space<vmem>>, vector<1x1x72xf32>
    %96 = vector.shape_cast %95 : vector<1x1x72xf32> to vector<1x72xf32>
    %c2_99 = arith.constant 2 : index
    %c0_100 = arith.constant 0 : index
    %c0_101 = arith.constant 0 : index
    %97 = vector.load %arg2[%c2_99, %c0_100, %c0_101] : memref<3x72x128xf32, #tpu.memory_space<vmem>>, vector<1x72x128xf32>
    %98 = vector.shape_cast %97 : vector<1x72x128xf32> to vector<72x128xf32>
    %cst_102 = arith.constant dense<0.000000e+00> : vector<1x128xf32>
    %99 = tpu.matmul %96, %98, %cst_102 {dimension_numbers = #tpu.dot_dimension_numbers<[1], [0], [0], [1], [0, 0, 1, 1], [], []>} : vector<1x72xf32>, vector<72x128xf32>, vector<1x128xf32> -> vector<1x128xf32>
    %100 = arith.addf %94, %99 : vector<1x128xf32>
    %c0_103 = arith.constant 0 : index
    %c0_104 = arith.constant 0 : index
    %101 = vector.load %arg3[%c0_103, %c0_104] : memref<1x128xf32, #tpu.memory_space<vmem>>, vector<1x128xf32>
    %102 = arith.addf %100, %101 : vector<1x128xf32>
    %cst_105 = arith.constant 0.000000e+00 : f32
    %103 = vector.broadcast %cst_105 : f32 to vector<1x128xf32>
    %104 = arith.maximumf %102, %103 : vector<1x128xf32>
    %c3_106 = arith.constant 3 : index
    %c0_107 = arith.constant 0 : index
    %c0_108 = arith.constant 0 : index
    %105 = vector.load %arg4[%c3_106, %c0_107, %c0_108] : memref<16x128x32xf32, #tpu.memory_space<vmem>>, vector<1x128x32xf32>
    %106 = vector.shape_cast %105 : vector<1x128x32xf32> to vector<128x32xf32>
    %cst_109 = arith.constant dense<0.000000e+00> : vector<1x32xf32>
    %107 = tpu.matmul %104, %106, %cst_109 {dimension_numbers = #tpu.dot_dimension_numbers<[1], [0], [0], [1], [0, 0, 1, 1], [], []>} : vector<1x128xf32>, vector<128x32xf32>, vector<1x32xf32> -> vector<1x32xf32>
    %108 = arith.addf %81, %107 : vector<1x32xf32>
    %cst_110 = arith.constant 0.000000e+00 : f32
    %109 = vector.broadcast %cst_110 : f32 to vector<1x128xf32>
    %c4_111 = arith.constant 4 : index
    %c0_112 = arith.constant 0 : index
    %c0_113 = arith.constant 0 : index
    %110 = vector.load %arg1[%c4_111, %c0_112, %c0_113] : memref<18x1x72xf32, #tpu.memory_space<vmem>>, vector<1x1x72xf32>
    %111 = vector.shape_cast %110 : vector<1x1x72xf32> to vector<1x72xf32>
    %c0_114 = arith.constant 0 : index
    %c0_115 = arith.constant 0 : index
    %c0_116 = arith.constant 0 : index
    %112 = vector.load %arg2[%c0_114, %c0_115, %c0_116] : memref<3x72x128xf32, #tpu.memory_space<vmem>>, vector<1x72x128xf32>
    %113 = vector.shape_cast %112 : vector<1x72x128xf32> to vector<72x128xf32>
    %cst_117 = arith.constant dense<0.000000e+00> : vector<1x128xf32>
    %114 = tpu.matmul %111, %113, %cst_117 {dimension_numbers = #tpu.dot_dimension_numbers<[1], [0], [0], [1], [0, 0, 1, 1], [], []>} : vector<1x72xf32>, vector<72x128xf32>, vector<1x128xf32> -> vector<1x128xf32>
    %115 = arith.addf %109, %114 : vector<1x128xf32>
    %c5_118 = arith.constant 5 : index
    %c0_119 = arith.constant 0 : index
    %c0_120 = arith.constant 0 : index
    %116 = vector.load %arg1[%c5_118, %c0_119, %c0_120] : memref<18x1x72xf32, #tpu.memory_space<vmem>>, vector<1x1x72xf32>
    %117 = vector.shape_cast %116 : vector<1x1x72xf32> to vector<1x72xf32>
    %c1_121 = arith.constant 1 : index
    %c0_122 = arith.constant 0 : index
    %c0_123 = arith.constant 0 : index
    %118 = vector.load %arg2[%c1_121, %c0_122, %c0_123] : memref<3x72x128xf32, #tpu.memory_space<vmem>>, vector<1x72x128xf32>
    %119 = vector.shape_cast %118 : vector<1x72x128xf32> to vector<72x128xf32>
    %cst_124 = arith.constant dense<0.000000e+00> : vector<1x128xf32>
    %120 = tpu.matmul %117, %119, %cst_124 {dimension_numbers = #tpu.dot_dimension_numbers<[1], [0], [0], [1], [0, 0, 1, 1], [], []>} : vector<1x72xf32>, vector<72x128xf32>, vector<1x128xf32> -> vector<1x128xf32>
    %121 = arith.addf %115, %120 : vector<1x128xf32>
    %c6 = arith.constant 6 : index
    %c0_125 = arith.constant 0 : index
    %c0_126 = arith.constant 0 : index
    %122 = vector.load %arg1[%c6, %c0_125, %c0_126] : memref<18x1x72xf32, #tpu.memory_space<vmem>>, vector<1x1x72xf32>
    %123 = vector.shape_cast %122 : vector<1x1x72xf32> to vector<1x72xf32>
    %c2_127 = arith.constant 2 : index
    %c0_128 = arith.constant 0 : index
    %c0_129 = arith.constant 0 : index
    %124 = vector.load %arg2[%c2_127, %c0_128, %c0_129] : memref<3x72x128xf32, #tpu.memory_space<vmem>>, vector<1x72x128xf32>
    %125 = vector.shape_cast %124 : vector<1x72x128xf32> to vector<72x128xf32>
    %cst_130 = arith.constant dense<0.000000e+00> : vector<1x128xf32>
    %126 = tpu.matmul %123, %125, %cst_130 {dimension_numbers = #tpu.dot_dimension_numbers<[1], [0], [0], [1], [0, 0, 1, 1], [], []>} : vector<1x72xf32>, vector<72x128xf32>, vector<1x128xf32> -> vector<1x128xf32>
    %127 = arith.addf %121, %126 : vector<1x128xf32>
    %c0_131 = arith.constant 0 : index
    %c0_132 = arith.constant 0 : index
    %128 = vector.load %arg3[%c0_131, %c0_132] : memref<1x128xf32, #tpu.memory_space<vmem>>, vector<1x128xf32>
    %129 = arith.addf %127, %128 : vector<1x128xf32>
    %cst_133 = arith.constant 0.000000e+00 : f32
    %130 = vector.broadcast %cst_133 : f32 to vector<1x128xf32>
    %131 = arith.maximumf %129, %130 : vector<1x128xf32>
    %c4_134 = arith.constant 4 : index
    %c0_135 = arith.constant 0 : index
    %c0_136 = arith.constant 0 : index
    %132 = vector.load %arg4[%c4_134, %c0_135, %c0_136] : memref<16x128x32xf32, #tpu.memory_space<vmem>>, vector<1x128x32xf32>
    %133 = vector.shape_cast %132 : vector<1x128x32xf32> to vector<128x32xf32>
    %cst_137 = arith.constant dense<0.000000e+00> : vector<1x32xf32>
    %134 = tpu.matmul %131, %133, %cst_137 {dimension_numbers = #tpu.dot_dimension_numbers<[1], [0], [0], [1], [0, 0, 1, 1], [], []>} : vector<1x128xf32>, vector<128x32xf32>, vector<1x32xf32> -> vector<1x32xf32>
    %135 = arith.addf %108, %134 : vector<1x32xf32>
    %cst_138 = arith.constant 0.000000e+00 : f32
    %136 = vector.broadcast %cst_138 : f32 to vector<1x128xf32>
    %c5_139 = arith.constant 5 : index
    %c0_140 = arith.constant 0 : index
    %c0_141 = arith.constant 0 : index
    %137 = vector.load %arg1[%c5_139, %c0_140, %c0_141] : memref<18x1x72xf32, #tpu.memory_space<vmem>>, vector<1x1x72xf32>
    %138 = vector.shape_cast %137 : vector<1x1x72xf32> to vector<1x72xf32>
    %c0_142 = arith.constant 0 : index
    %c0_143 = arith.constant 0 : index
    %c0_144 = arith.constant 0 : index
    %139 = vector.load %arg2[%c0_142, %c0_143, %c0_144] : memref<3x72x128xf32, #tpu.memory_space<vmem>>, vector<1x72x128xf32>
    %140 = vector.shape_cast %139 : vector<1x72x128xf32> to vector<72x128xf32>
    %cst_145 = arith.constant dense<0.000000e+00> : vector<1x128xf32>
    %141 = tpu.matmul %138, %140, %cst_145 {dimension_numbers = #tpu.dot_dimension_numbers<[1], [0], [0], [1], [0, 0, 1, 1], [], []>} : vector<1x72xf32>, vector<72x128xf32>, vector<1x128xf32> -> vector<1x128xf32>
    %142 = arith.addf %136, %141 : vector<1x128xf32>
    %c6_146 = arith.constant 6 : index
    %c0_147 = arith.constant 0 : index
    %c0_148 = arith.constant 0 : index
    %143 = vector.load %arg1[%c6_146, %c0_147, %c0_148] : memref<18x1x72xf32, #tpu.memory_space<vmem>>, vector<1x1x72xf32>
    %144 = vector.shape_cast %143 : vector<1x1x72xf32> to vector<1x72xf32>
    %c1_149 = arith.constant 1 : index
    %c0_150 = arith.constant 0 : index
    %c0_151 = arith.constant 0 : index
    %145 = vector.load %arg2[%c1_149, %c0_150, %c0_151] : memref<3x72x128xf32, #tpu.memory_space<vmem>>, vector<1x72x128xf32>
    %146 = vector.shape_cast %145 : vector<1x72x128xf32> to vector<72x128xf32>
    %cst_152 = arith.constant dense<0.000000e+00> : vector<1x128xf32>
    %147 = tpu.matmul %144, %146, %cst_152 {dimension_numbers = #tpu.dot_dimension_numbers<[1], [0], [0], [1], [0, 0, 1, 1], [], []>} : vector<1x72xf32>, vector<72x128xf32>, vector<1x128xf32> -> vector<1x128xf32>
    %148 = arith.addf %142, %147 : vector<1x128xf32>
    %c7 = arith.constant 7 : index
    %c0_153 = arith.constant 0 : index
    %c0_154 = arith.constant 0 : index
    %149 = vector.load %arg1[%c7, %c0_153, %c0_154] : memref<18x1x72xf32, #tpu.memory_space<vmem>>, vector<1x1x72xf32>
    %150 = vector.shape_cast %149 : vector<1x1x72xf32> to vector<1x72xf32>
    %c2_155 = arith.constant 2 : index
    %c0_156 = arith.constant 0 : index
    %c0_157 = arith.constant 0 : index
    %151 = vector.load %arg2[%c2_155, %c0_156, %c0_157] : memref<3x72x128xf32, #tpu.memory_space<vmem>>, vector<1x72x128xf32>
    %152 = vector.shape_cast %151 : vector<1x72x128xf32> to vector<72x128xf32>
    %cst_158 = arith.constant dense<0.000000e+00> : vector<1x128xf32>
    %153 = tpu.matmul %150, %152, %cst_158 {dimension_numbers = #tpu.dot_dimension_numbers<[1], [0], [0], [1], [0, 0, 1, 1], [], []>} : vector<1x72xf32>, vector<72x128xf32>, vector<1x128xf32> -> vector<1x128xf32>
    %154 = arith.addf %148, %153 : vector<1x128xf32>
    %c0_159 = arith.constant 0 : index
    %c0_160 = arith.constant 0 : index
    %155 = vector.load %arg3[%c0_159, %c0_160] : memref<1x128xf32, #tpu.memory_space<vmem>>, vector<1x128xf32>
    %156 = arith.addf %154, %155 : vector<1x128xf32>
    %cst_161 = arith.constant 0.000000e+00 : f32
    %157 = vector.broadcast %cst_161 : f32 to vector<1x128xf32>
    %158 = arith.maximumf %156, %157 : vector<1x128xf32>
    %c5_162 = arith.constant 5 : index
    %c0_163 = arith.constant 0 : index
    %c0_164 = arith.constant 0 : index
    %159 = vector.load %arg4[%c5_162, %c0_163, %c0_164] : memref<16x128x32xf32, #tpu.memory_space<vmem>>, vector<1x128x32xf32>
    %160 = vector.shape_cast %159 : vector<1x128x32xf32> to vector<128x32xf32>
    %cst_165 = arith.constant dense<0.000000e+00> : vector<1x32xf32>
    %161 = tpu.matmul %158, %160, %cst_165 {dimension_numbers = #tpu.dot_dimension_numbers<[1], [0], [0], [1], [0, 0, 1, 1], [], []>} : vector<1x128xf32>, vector<128x32xf32>, vector<1x32xf32> -> vector<1x32xf32>
    %162 = arith.addf %135, %161 : vector<1x32xf32>
    %cst_166 = arith.constant 0.000000e+00 : f32
    %163 = vector.broadcast %cst_166 : f32 to vector<1x128xf32>
    %c6_167 = arith.constant 6 : index
    %c0_168 = arith.constant 0 : index
    %c0_169 = arith.constant 0 : index
    %164 = vector.load %arg1[%c6_167, %c0_168, %c0_169] : memref<18x1x72xf32, #tpu.memory_space<vmem>>, vector<1x1x72xf32>
    %165 = vector.shape_cast %164 : vector<1x1x72xf32> to vector<1x72xf32>
    %c0_170 = arith.constant 0 : index
    %c0_171 = arith.constant 0 : index
    %c0_172 = arith.constant 0 : index
    %166 = vector.load %arg2[%c0_170, %c0_171, %c0_172] : memref<3x72x128xf32, #tpu.memory_space<vmem>>, vector<1x72x128xf32>
    %167 = vector.shape_cast %166 : vector<1x72x128xf32> to vector<72x128xf32>
    %cst_173 = arith.constant dense<0.000000e+00> : vector<1x128xf32>
    %168 = tpu.matmul %165, %167, %cst_173 {dimension_numbers = #tpu.dot_dimension_numbers<[1], [0], [0], [1], [0, 0, 1, 1], [], []>} : vector<1x72xf32>, vector<72x128xf32>, vector<1x128xf32> -> vector<1x128xf32>
    %169 = arith.addf %163, %168 : vector<1x128xf32>
    %c7_174 = arith.constant 7 : index
    %c0_175 = arith.constant 0 : index
    %c0_176 = arith.constant 0 : index
    %170 = vector.load %arg1[%c7_174, %c0_175, %c0_176] : memref<18x1x72xf32, #tpu.memory_space<vmem>>, vector<1x1x72xf32>
    %171 = vector.shape_cast %170 : vector<1x1x72xf32> to vector<1x72xf32>
    %c1_177 = arith.constant 1 : index
    %c0_178 = arith.constant 0 : index
    %c0_179 = arith.constant 0 : index
    %172 = vector.load %arg2[%c1_177, %c0_178, %c0_179] : memref<3x72x128xf32, #tpu.memory_space<vmem>>, vector<1x72x128xf32>
    %173 = vector.shape_cast %172 : vector<1x72x128xf32> to vector<72x128xf32>
    %cst_180 = arith.constant dense<0.000000e+00> : vector<1x128xf32>
    %174 = tpu.matmul %171, %173, %cst_180 {dimension_numbers = #tpu.dot_dimension_numbers<[1], [0], [0], [1], [0, 0, 1, 1], [], []>} : vector<1x72xf32>, vector<72x128xf32>, vector<1x128xf32> -> vector<1x128xf32>
    %175 = arith.addf %169, %174 : vector<1x128xf32>
    %c8 = arith.constant 8 : index
    %c0_181 = arith.constant 0 : index
    %c0_182 = arith.constant 0 : index
    %176 = vector.load %arg1[%c8, %c0_181, %c0_182] : memref<18x1x72xf32, #tpu.memory_space<vmem>>, vector<1x1x72xf32>
    %177 = vector.shape_cast %176 : vector<1x1x72xf32> to vector<1x72xf32>
    %c2_183 = arith.constant 2 : index
    %c0_184 = arith.constant 0 : index
    %c0_185 = arith.constant 0 : index
    %178 = vector.load %arg2[%c2_183, %c0_184, %c0_185] : memref<3x72x128xf32, #tpu.memory_space<vmem>>, vector<1x72x128xf32>
    %179 = vector.shape_cast %178 : vector<1x72x128xf32> to vector<72x128xf32>
    %cst_186 = arith.constant dense<0.000000e+00> : vector<1x128xf32>
    %180 = tpu.matmul %177, %179, %cst_186 {dimension_numbers = #tpu.dot_dimension_numbers<[1], [0], [0], [1], [0, 0, 1, 1], [], []>} : vector<1x72xf32>, vector<72x128xf32>, vector<1x128xf32> -> vector<1x128xf32>
    %181 = arith.addf %175, %180 : vector<1x128xf32>
    %c0_187 = arith.constant 0 : index
    %c0_188 = arith.constant 0 : index
    %182 = vector.load %arg3[%c0_187, %c0_188] : memref<1x128xf32, #tpu.memory_space<vmem>>, vector<1x128xf32>
    %183 = arith.addf %181, %182 : vector<1x128xf32>
    %cst_189 = arith.constant 0.000000e+00 : f32
    %184 = vector.broadcast %cst_189 : f32 to vector<1x128xf32>
    %185 = arith.maximumf %183, %184 : vector<1x128xf32>
    %c6_190 = arith.constant 6 : index
    %c0_191 = arith.constant 0 : index
    %c0_192 = arith.constant 0 : index
    %186 = vector.load %arg4[%c6_190, %c0_191, %c0_192] : memref<16x128x32xf32, #tpu.memory_space<vmem>>, vector<1x128x32xf32>
    %187 = vector.shape_cast %186 : vector<1x128x32xf32> to vector<128x32xf32>
    %cst_193 = arith.constant dense<0.000000e+00> : vector<1x32xf32>
    %188 = tpu.matmul %185, %187, %cst_193 {dimension_numbers = #tpu.dot_dimension_numbers<[1], [0], [0], [1], [0, 0, 1, 1], [], []>} : vector<1x128xf32>, vector<128x32xf32>, vector<1x32xf32> -> vector<1x32xf32>
    %189 = arith.addf %162, %188 : vector<1x32xf32>
    %cst_194 = arith.constant 0.000000e+00 : f32
    %190 = vector.broadcast %cst_194 : f32 to vector<1x128xf32>
    %c7_195 = arith.constant 7 : index
    %c0_196 = arith.constant 0 : index
    %c0_197 = arith.constant 0 : index
    %191 = vector.load %arg1[%c7_195, %c0_196, %c0_197] : memref<18x1x72xf32, #tpu.memory_space<vmem>>, vector<1x1x72xf32>
    %192 = vector.shape_cast %191 : vector<1x1x72xf32> to vector<1x72xf32>
    %c0_198 = arith.constant 0 : index
    %c0_199 = arith.constant 0 : index
    %c0_200 = arith.constant 0 : index
    %193 = vector.load %arg2[%c0_198, %c0_199, %c0_200] : memref<3x72x128xf32, #tpu.memory_space<vmem>>, vector<1x72x128xf32>
    %194 = vector.shape_cast %193 : vector<1x72x128xf32> to vector<72x128xf32>
    %cst_201 = arith.constant dense<0.000000e+00> : vector<1x128xf32>
    %195 = tpu.matmul %192, %194, %cst_201 {dimension_numbers = #tpu.dot_dimension_numbers<[1], [0], [0], [1], [0, 0, 1, 1], [], []>} : vector<1x72xf32>, vector<72x128xf32>, vector<1x128xf32> -> vector<1x128xf32>
    %196 = arith.addf %190, %195 : vector<1x128xf32>
    %c8_202 = arith.constant 8 : index
    %c0_203 = arith.constant 0 : index
    %c0_204 = arith.constant 0 : index
    %197 = vector.load %arg1[%c8_202, %c0_203, %c0_204] : memref<18x1x72xf32, #tpu.memory_space<vmem>>, vector<1x1x72xf32>
    %198 = vector.shape_cast %197 : vector<1x1x72xf32> to vector<1x72xf32>
    %c1_205 = arith.constant 1 : index
    %c0_206 = arith.constant 0 : index
    %c0_207 = arith.constant 0 : index
    %199 = vector.load %arg2[%c1_205, %c0_206, %c0_207] : memref<3x72x128xf32, #tpu.memory_space<vmem>>, vector<1x72x128xf32>
    %200 = vector.shape_cast %199 : vector<1x72x128xf32> to vector<72x128xf32>
    %cst_208 = arith.constant dense<0.000000e+00> : vector<1x128xf32>
    %201 = tpu.matmul %198, %200, %cst_208 {dimension_numbers = #tpu.dot_dimension_numbers<[1], [0], [0], [1], [0, 0, 1, 1], [], []>} : vector<1x72xf32>, vector<72x128xf32>, vector<1x128xf32> -> vector<1x128xf32>
    %202 = arith.addf %196, %201 : vector<1x128xf32>
    %c9 = arith.constant 9 : index
    %c0_209 = arith.constant 0 : index
    %c0_210 = arith.constant 0 : index
    %203 = vector.load %arg1[%c9, %c0_209, %c0_210] : memref<18x1x72xf32, #tpu.memory_space<vmem>>, vector<1x1x72xf32>
    %204 = vector.shape_cast %203 : vector<1x1x72xf32> to vector<1x72xf32>
    %c2_211 = arith.constant 2 : index
    %c0_212 = arith.constant 0 : index
    %c0_213 = arith.constant 0 : index
    %205 = vector.load %arg2[%c2_211, %c0_212, %c0_213] : memref<3x72x128xf32, #tpu.memory_space<vmem>>, vector<1x72x128xf32>
    %206 = vector.shape_cast %205 : vector<1x72x128xf32> to vector<72x128xf32>
    %cst_214 = arith.constant dense<0.000000e+00> : vector<1x128xf32>
    %207 = tpu.matmul %204, %206, %cst_214 {dimension_numbers = #tpu.dot_dimension_numbers<[1], [0], [0], [1], [0, 0, 1, 1], [], []>} : vector<1x72xf32>, vector<72x128xf32>, vector<1x128xf32> -> vector<1x128xf32>
    %208 = arith.addf %202, %207 : vector<1x128xf32>
    %c0_215 = arith.constant 0 : index
    %c0_216 = arith.constant 0 : index
    %209 = vector.load %arg3[%c0_215, %c0_216] : memref<1x128xf32, #tpu.memory_space<vmem>>, vector<1x128xf32>
    %210 = arith.addf %208, %209 : vector<1x128xf32>
    %cst_217 = arith.constant 0.000000e+00 : f32
    %211 = vector.broadcast %cst_217 : f32 to vector<1x128xf32>
    %212 = arith.maximumf %210, %211 : vector<1x128xf32>
    %c7_218 = arith.constant 7 : index
    %c0_219 = arith.constant 0 : index
    %c0_220 = arith.constant 0 : index
    %213 = vector.load %arg4[%c7_218, %c0_219, %c0_220] : memref<16x128x32xf32, #tpu.memory_space<vmem>>, vector<1x128x32xf32>
    %214 = vector.shape_cast %213 : vector<1x128x32xf32> to vector<128x32xf32>
    %cst_221 = arith.constant dense<0.000000e+00> : vector<1x32xf32>
    %215 = tpu.matmul %212, %214, %cst_221 {dimension_numbers = #tpu.dot_dimension_numbers<[1], [0], [0], [1], [0, 0, 1, 1], [], []>} : vector<1x128xf32>, vector<128x32xf32>, vector<1x32xf32> -> vector<1x32xf32>
    %216 = arith.addf %189, %215 : vector<1x32xf32>
    %cst_222 = arith.constant 0.000000e+00 : f32
    %217 = vector.broadcast %cst_222 : f32 to vector<1x128xf32>
    %c8_223 = arith.constant 8 : index
    %c0_224 = arith.constant 0 : index
    %c0_225 = arith.constant 0 : index
    %218 = vector.load %arg1[%c8_223, %c0_224, %c0_225] : memref<18x1x72xf32, #tpu.memory_space<vmem>>, vector<1x1x72xf32>
    %219 = vector.shape_cast %218 : vector<1x1x72xf32> to vector<1x72xf32>
    %c0_226 = arith.constant 0 : index
    %c0_227 = arith.constant 0 : index
    %c0_228 = arith.constant 0 : index
    %220 = vector.load %arg2[%c0_226, %c0_227, %c0_228] : memref<3x72x128xf32, #tpu.memory_space<vmem>>, vector<1x72x128xf32>
    %221 = vector.shape_cast %220 : vector<1x72x128xf32> to vector<72x128xf32>
    %cst_229 = arith.constant dense<0.000000e+00> : vector<1x128xf32>
    %222 = tpu.matmul %219, %221, %cst_229 {dimension_numbers = #tpu.dot_dimension_numbers<[1], [0], [0], [1], [0, 0, 1, 1], [], []>} : vector<1x72xf32>, vector<72x128xf32>, vector<1x128xf32> -> vector<1x128xf32>
    %223 = arith.addf %217, %222 : vector<1x128xf32>
    %c9_230 = arith.constant 9 : index
    %c0_231 = arith.constant 0 : index
    %c0_232 = arith.constant 0 : index
    %224 = vector.load %arg1[%c9_230, %c0_231, %c0_232] : memref<18x1x72xf32, #tpu.memory_space<vmem>>, vector<1x1x72xf32>
    %225 = vector.shape_cast %224 : vector<1x1x72xf32> to vector<1x72xf32>
    %c1_233 = arith.constant 1 : index
    %c0_234 = arith.constant 0 : index
    %c0_235 = arith.constant 0 : index
    %226 = vector.load %arg2[%c1_233, %c0_234, %c0_235] : memref<3x72x128xf32, #tpu.memory_space<vmem>>, vector<1x72x128xf32>
    %227 = vector.shape_cast %226 : vector<1x72x128xf32> to vector<72x128xf32>
    %cst_236 = arith.constant dense<0.000000e+00> : vector<1x128xf32>
    %228 = tpu.matmul %225, %227, %cst_236 {dimension_numbers = #tpu.dot_dimension_numbers<[1], [0], [0], [1], [0, 0, 1, 1], [], []>} : vector<1x72xf32>, vector<72x128xf32>, vector<1x128xf32> -> vector<1x128xf32>
    %229 = arith.addf %223, %228 : vector<1x128xf32>
    %c10 = arith.constant 10 : index
    %c0_237 = arith.constant 0 : index
    %c0_238 = arith.constant 0 : index
    %230 = vector.load %arg1[%c10, %c0_237, %c0_238] : memref<18x1x72xf32, #tpu.memory_space<vmem>>, vector<1x1x72xf32>
    %231 = vector.shape_cast %230 : vector<1x1x72xf32> to vector<1x72xf32>
    %c2_239 = arith.constant 2 : index
    %c0_240 = arith.constant 0 : index
    %c0_241 = arith.constant 0 : index
    %232 = vector.load %arg2[%c2_239, %c0_240, %c0_241] : memref<3x72x128xf32, #tpu.memory_space<vmem>>, vector<1x72x128xf32>
    %233 = vector.shape_cast %232 : vector<1x72x128xf32> to vector<72x128xf32>
    %cst_242 = arith.constant dense<0.000000e+00> : vector<1x128xf32>
    %234 = tpu.matmul %231, %233, %cst_242 {dimension_numbers = #tpu.dot_dimension_numbers<[1], [0], [0], [1], [0, 0, 1, 1], [], []>} : vector<1x72xf32>, vector<72x128xf32>, vector<1x128xf32> -> vector<1x128xf32>
    %235 = arith.addf %229, %234 : vector<1x128xf32>
    %c0_243 = arith.constant 0 : index
    %c0_244 = arith.constant 0 : index
    %236 = vector.load %arg3[%c0_243, %c0_244] : memref<1x128xf32, #tpu.memory_space<vmem>>, vector<1x128xf32>
    %237 = arith.addf %235, %236 : vector<1x128xf32>
    %cst_245 = arith.constant 0.000000e+00 : f32
    %238 = vector.broadcast %cst_245 : f32 to vector<1x128xf32>
    %239 = arith.maximumf %237, %238 : vector<1x128xf32>
    %c8_246 = arith.constant 8 : index
    %c0_247 = arith.constant 0 : index
    %c0_248 = arith.constant 0 : index
    %240 = vector.load %arg4[%c8_246, %c0_247, %c0_248] : memref<16x128x32xf32, #tpu.memory_space<vmem>>, vector<1x128x32xf32>
    %241 = vector.shape_cast %240 : vector<1x128x32xf32> to vector<128x32xf32>
    %cst_249 = arith.constant dense<0.000000e+00> : vector<1x32xf32>
    %242 = tpu.matmul %239, %241, %cst_249 {dimension_numbers = #tpu.dot_dimension_numbers<[1], [0], [0], [1], [0, 0, 1, 1], [], []>} : vector<1x128xf32>, vector<128x32xf32>, vector<1x32xf32> -> vector<1x32xf32>
    %243 = arith.addf %216, %242 : vector<1x32xf32>
    %cst_250 = arith.constant 0.000000e+00 : f32
    %244 = vector.broadcast %cst_250 : f32 to vector<1x128xf32>
    %c9_251 = arith.constant 9 : index
    %c0_252 = arith.constant 0 : index
    %c0_253 = arith.constant 0 : index
    %245 = vector.load %arg1[%c9_251, %c0_252, %c0_253] : memref<18x1x72xf32, #tpu.memory_space<vmem>>, vector<1x1x72xf32>
    %246 = vector.shape_cast %245 : vector<1x1x72xf32> to vector<1x72xf32>
    %c0_254 = arith.constant 0 : index
    %c0_255 = arith.constant 0 : index
    %c0_256 = arith.constant 0 : index
    %247 = vector.load %arg2[%c0_254, %c0_255, %c0_256] : memref<3x72x128xf32, #tpu.memory_space<vmem>>, vector<1x72x128xf32>
    %248 = vector.shape_cast %247 : vector<1x72x128xf32> to vector<72x128xf32>
    %cst_257 = arith.constant dense<0.000000e+00> : vector<1x128xf32>
    %249 = tpu.matmul %246, %248, %cst_257 {dimension_numbers = #tpu.dot_dimension_numbers<[1], [0], [0], [1], [0, 0, 1, 1], [], []>} : vector<1x72xf32>, vector<72x128xf32>, vector<1x128xf32> -> vector<1x128xf32>
    %250 = arith.addf %244, %249 : vector<1x128xf32>
    %c10_258 = arith.constant 10 : index
    %c0_259 = arith.constant 0 : index
    %c0_260 = arith.constant 0 : index
    %251 = vector.load %arg1[%c10_258, %c0_259, %c0_260] : memref<18x1x72xf32, #tpu.memory_space<vmem>>, vector<1x1x72xf32>
    %252 = vector.shape_cast %251 : vector<1x1x72xf32> to vector<1x72xf32>
    %c1_261 = arith.constant 1 : index
    %c0_262 = arith.constant 0 : index
    %c0_263 = arith.constant 0 : index
    %253 = vector.load %arg2[%c1_261, %c0_262, %c0_263] : memref<3x72x128xf32, #tpu.memory_space<vmem>>, vector<1x72x128xf32>
    %254 = vector.shape_cast %253 : vector<1x72x128xf32> to vector<72x128xf32>
    %cst_264 = arith.constant dense<0.000000e+00> : vector<1x128xf32>
    %255 = tpu.matmul %252, %254, %cst_264 {dimension_numbers = #tpu.dot_dimension_numbers<[1], [0], [0], [1], [0, 0, 1, 1], [], []>} : vector<1x72xf32>, vector<72x128xf32>, vector<1x128xf32> -> vector<1x128xf32>
    %256 = arith.addf %250, %255 : vector<1x128xf32>
    %c11 = arith.constant 11 : index
    %c0_265 = arith.constant 0 : index
    %c0_266 = arith.constant 0 : index
    %257 = vector.load %arg1[%c11, %c0_265, %c0_266] : memref<18x1x72xf32, #tpu.memory_space<vmem>>, vector<1x1x72xf32>
    %258 = vector.shape_cast %257 : vector<1x1x72xf32> to vector<1x72xf32>
    %c2_267 = arith.constant 2 : index
    %c0_268 = arith.constant 0 : index
    %c0_269 = arith.constant 0 : index
    %259 = vector.load %arg2[%c2_267, %c0_268, %c0_269] : memref<3x72x128xf32, #tpu.memory_space<vmem>>, vector<1x72x128xf32>
    %260 = vector.shape_cast %259 : vector<1x72x128xf32> to vector<72x128xf32>
    %cst_270 = arith.constant dense<0.000000e+00> : vector<1x128xf32>
    %261 = tpu.matmul %258, %260, %cst_270 {dimension_numbers = #tpu.dot_dimension_numbers<[1], [0], [0], [1], [0, 0, 1, 1], [], []>} : vector<1x72xf32>, vector<72x128xf32>, vector<1x128xf32> -> vector<1x128xf32>
    %262 = arith.addf %256, %261 : vector<1x128xf32>
    %c0_271 = arith.constant 0 : index
    %c0_272 = arith.constant 0 : index
    %263 = vector.load %arg3[%c0_271, %c0_272] : memref<1x128xf32, #tpu.memory_space<vmem>>, vector<1x128xf32>
    %264 = arith.addf %262, %263 : vector<1x128xf32>
    %cst_273 = arith.constant 0.000000e+00 : f32
    %265 = vector.broadcast %cst_273 : f32 to vector<1x128xf32>
    %266 = arith.maximumf %264, %265 : vector<1x128xf32>
    %c9_274 = arith.constant 9 : index
    %c0_275 = arith.constant 0 : index
    %c0_276 = arith.constant 0 : index
    %267 = vector.load %arg4[%c9_274, %c0_275, %c0_276] : memref<16x128x32xf32, #tpu.memory_space<vmem>>, vector<1x128x32xf32>
    %268 = vector.shape_cast %267 : vector<1x128x32xf32> to vector<128x32xf32>
    %cst_277 = arith.constant dense<0.000000e+00> : vector<1x32xf32>
    %269 = tpu.matmul %266, %268, %cst_277 {dimension_numbers = #tpu.dot_dimension_numbers<[1], [0], [0], [1], [0, 0, 1, 1], [], []>} : vector<1x128xf32>, vector<128x32xf32>, vector<1x32xf32> -> vector<1x32xf32>
    %270 = arith.addf %243, %269 : vector<1x32xf32>
    %cst_278 = arith.constant 0.000000e+00 : f32
    %271 = vector.broadcast %cst_278 : f32 to vector<1x128xf32>
    %c10_279 = arith.constant 10 : index
    %c0_280 = arith.constant 0 : index
    %c0_281 = arith.constant 0 : index
    %272 = vector.load %arg1[%c10_279, %c0_280, %c0_281] : memref<18x1x72xf32, #tpu.memory_space<vmem>>, vector<1x1x72xf32>
    %273 = vector.shape_cast %272 : vector<1x1x72xf32> to vector<1x72xf32>
    %c0_282 = arith.constant 0 : index
    %c0_283 = arith.constant 0 : index
    %c0_284 = arith.constant 0 : index
    %274 = vector.load %arg2[%c0_282, %c0_283, %c0_284] : memref<3x72x128xf32, #tpu.memory_space<vmem>>, vector<1x72x128xf32>
    %275 = vector.shape_cast %274 : vector<1x72x128xf32> to vector<72x128xf32>
    %cst_285 = arith.constant dense<0.000000e+00> : vector<1x128xf32>
    %276 = tpu.matmul %273, %275, %cst_285 {dimension_numbers = #tpu.dot_dimension_numbers<[1], [0], [0], [1], [0, 0, 1, 1], [], []>} : vector<1x72xf32>, vector<72x128xf32>, vector<1x128xf32> -> vector<1x128xf32>
    %277 = arith.addf %271, %276 : vector<1x128xf32>
    %c11_286 = arith.constant 11 : index
    %c0_287 = arith.constant 0 : index
    %c0_288 = arith.constant 0 : index
    %278 = vector.load %arg1[%c11_286, %c0_287, %c0_288] : memref<18x1x72xf32, #tpu.memory_space<vmem>>, vector<1x1x72xf32>
    %279 = vector.shape_cast %278 : vector<1x1x72xf32> to vector<1x72xf32>
    %c1_289 = arith.constant 1 : index
    %c0_290 = arith.constant 0 : index
    %c0_291 = arith.constant 0 : index
    %280 = vector.load %arg2[%c1_289, %c0_290, %c0_291] : memref<3x72x128xf32, #tpu.memory_space<vmem>>, vector<1x72x128xf32>
    %281 = vector.shape_cast %280 : vector<1x72x128xf32> to vector<72x128xf32>
    %cst_292 = arith.constant dense<0.000000e+00> : vector<1x128xf32>
    %282 = tpu.matmul %279, %281, %cst_292 {dimension_numbers = #tpu.dot_dimension_numbers<[1], [0], [0], [1], [0, 0, 1, 1], [], []>} : vector<1x72xf32>, vector<72x128xf32>, vector<1x128xf32> -> vector<1x128xf32>
    %283 = arith.addf %277, %282 : vector<1x128xf32>
    %c12 = arith.constant 12 : index
    %c0_293 = arith.constant 0 : index
    %c0_294 = arith.constant 0 : index
    %284 = vector.load %arg1[%c12, %c0_293, %c0_294] : memref<18x1x72xf32, #tpu.memory_space<vmem>>, vector<1x1x72xf32>
    %285 = vector.shape_cast %284 : vector<1x1x72xf32> to vector<1x72xf32>
    %c2_295 = arith.constant 2 : index
    %c0_296 = arith.constant 0 : index
    %c0_297 = arith.constant 0 : index
    %286 = vector.load %arg2[%c2_295, %c0_296, %c0_297] : memref<3x72x128xf32, #tpu.memory_space<vmem>>, vector<1x72x128xf32>
    %287 = vector.shape_cast %286 : vector<1x72x128xf32> to vector<72x128xf32>
    %cst_298 = arith.constant dense<0.000000e+00> : vector<1x128xf32>
    %288 = tpu.matmul %285, %287, %cst_298 {dimension_numbers = #tpu.dot_dimension_numbers<[1], [0], [0], [1], [0, 0, 1, 1], [], []>} : vector<1x72xf32>, vector<72x128xf32>, vector<1x128xf32> -> vector<1x128xf32>
    %289 = arith.addf %283, %288 : vector<1x128xf32>
    %c0_299 = arith.constant 0 : index
    %c0_300 = arith.constant 0 : index
    %290 = vector.load %arg3[%c0_299, %c0_300] : memref<1x128xf32, #tpu.memory_space<vmem>>, vector<1x128xf32>
    %291 = arith.addf %289, %290 : vector<1x128xf32>
    %cst_301 = arith.constant 0.000000e+00 : f32
    %292 = vector.broadcast %cst_301 : f32 to vector<1x128xf32>
    %293 = arith.maximumf %291, %292 : vector<1x128xf32>
    %c10_302 = arith.constant 10 : index
    %c0_303 = arith.constant 0 : index
    %c0_304 = arith.constant 0 : index
    %294 = vector.load %arg4[%c10_302, %c0_303, %c0_304] : memref<16x128x32xf32, #tpu.memory_space<vmem>>, vector<1x128x32xf32>
    %295 = vector.shape_cast %294 : vector<1x128x32xf32> to vector<128x32xf32>
    %cst_305 = arith.constant dense<0.000000e+00> : vector<1x32xf32>
    %296 = tpu.matmul %293, %295, %cst_305 {dimension_numbers = #tpu.dot_dimension_numbers<[1], [0], [0], [1], [0, 0, 1, 1], [], []>} : vector<1x128xf32>, vector<128x32xf32>, vector<1x32xf32> -> vector<1x32xf32>
    %297 = arith.addf %270, %296 : vector<1x32xf32>
    %cst_306 = arith.constant 0.000000e+00 : f32
    %298 = vector.broadcast %cst_306 : f32 to vector<1x128xf32>
    %c11_307 = arith.constant 11 : index
    %c0_308 = arith.constant 0 : index
    %c0_309 = arith.constant 0 : index
    %299 = vector.load %arg1[%c11_307, %c0_308, %c0_309] : memref<18x1x72xf32, #tpu.memory_space<vmem>>, vector<1x1x72xf32>
    %300 = vector.shape_cast %299 : vector<1x1x72xf32> to vector<1x72xf32>
    %c0_310 = arith.constant 0 : index
    %c0_311 = arith.constant 0 : index
    %c0_312 = arith.constant 0 : index
    %301 = vector.load %arg2[%c0_310, %c0_311, %c0_312] : memref<3x72x128xf32, #tpu.memory_space<vmem>>, vector<1x72x128xf32>
    %302 = vector.shape_cast %301 : vector<1x72x128xf32> to vector<72x128xf32>
    %cst_313 = arith.constant dense<0.000000e+00> : vector<1x128xf32>
    %303 = tpu.matmul %300, %302, %cst_313 {dimension_numbers = #tpu.dot_dimension_numbers<[1], [0], [0], [1], [0, 0, 1, 1], [], []>} : vector<1x72xf32>, vector<72x128xf32>, vector<1x128xf32> -> vector<1x128xf32>
    %304 = arith.addf %298, %303 : vector<1x128xf32>
    %c12_314 = arith.constant 12 : index
    %c0_315 = arith.constant 0 : index
    %c0_316 = arith.constant 0 : index
    %305 = vector.load %arg1[%c12_314, %c0_315, %c0_316] : memref<18x1x72xf32, #tpu.memory_space<vmem>>, vector<1x1x72xf32>
    %306 = vector.shape_cast %305 : vector<1x1x72xf32> to vector<1x72xf32>
    %c1_317 = arith.constant 1 : index
    %c0_318 = arith.constant 0 : index
    %c0_319 = arith.constant 0 : index
    %307 = vector.load %arg2[%c1_317, %c0_318, %c0_319] : memref<3x72x128xf32, #tpu.memory_space<vmem>>, vector<1x72x128xf32>
    %308 = vector.shape_cast %307 : vector<1x72x128xf32> to vector<72x128xf32>
    %cst_320 = arith.constant dense<0.000000e+00> : vector<1x128xf32>
    %309 = tpu.matmul %306, %308, %cst_320 {dimension_numbers = #tpu.dot_dimension_numbers<[1], [0], [0], [1], [0, 0, 1, 1], [], []>} : vector<1x72xf32>, vector<72x128xf32>, vector<1x128xf32> -> vector<1x128xf32>
    %310 = arith.addf %304, %309 : vector<1x128xf32>
    %c13 = arith.constant 13 : index
    %c0_321 = arith.constant 0 : index
    %c0_322 = arith.constant 0 : index
    %311 = vector.load %arg1[%c13, %c0_321, %c0_322] : memref<18x1x72xf32, #tpu.memory_space<vmem>>, vector<1x1x72xf32>
    %312 = vector.shape_cast %311 : vector<1x1x72xf32> to vector<1x72xf32>
    %c2_323 = arith.constant 2 : index
    %c0_324 = arith.constant 0 : index
    %c0_325 = arith.constant 0 : index
    %313 = vector.load %arg2[%c2_323, %c0_324, %c0_325] : memref<3x72x128xf32, #tpu.memory_space<vmem>>, vector<1x72x128xf32>
    %314 = vector.shape_cast %313 : vector<1x72x128xf32> to vector<72x128xf32>
    %cst_326 = arith.constant dense<0.000000e+00> : vector<1x128xf32>
    %315 = tpu.matmul %312, %314, %cst_326 {dimension_numbers = #tpu.dot_dimension_numbers<[1], [0], [0], [1], [0, 0, 1, 1], [], []>} : vector<1x72xf32>, vector<72x128xf32>, vector<1x128xf32> -> vector<1x128xf32>
    %316 = arith.addf %310, %315 : vector<1x128xf32>
    %c0_327 = arith.constant 0 : index
    %c0_328 = arith.constant 0 : index
    %317 = vector.load %arg3[%c0_327, %c0_328] : memref<1x128xf32, #tpu.memory_space<vmem>>, vector<1x128xf32>
    %318 = arith.addf %316, %317 : vector<1x128xf32>
    %cst_329 = arith.constant 0.000000e+00 : f32
    %319 = vector.broadcast %cst_329 : f32 to vector<1x128xf32>
    %320 = arith.maximumf %318, %319 : vector<1x128xf32>
    %c11_330 = arith.constant 11 : index
    %c0_331 = arith.constant 0 : index
    %c0_332 = arith.constant 0 : index
    %321 = vector.load %arg4[%c11_330, %c0_331, %c0_332] : memref<16x128x32xf32, #tpu.memory_space<vmem>>, vector<1x128x32xf32>
    %322 = vector.shape_cast %321 : vector<1x128x32xf32> to vector<128x32xf32>
    %cst_333 = arith.constant dense<0.000000e+00> : vector<1x32xf32>
    %323 = tpu.matmul %320, %322, %cst_333 {dimension_numbers = #tpu.dot_dimension_numbers<[1], [0], [0], [1], [0, 0, 1, 1], [], []>} : vector<1x128xf32>, vector<128x32xf32>, vector<1x32xf32> -> vector<1x32xf32>
    %324 = arith.addf %297, %323 : vector<1x32xf32>
    %cst_334 = arith.constant 0.000000e+00 : f32
    %325 = vector.broadcast %cst_334 : f32 to vector<1x128xf32>
    %c12_335 = arith.constant 12 : index
    %c0_336 = arith.constant 0 : index
    %c0_337 = arith.constant 0 : index
    %326 = vector.load %arg1[%c12_335, %c0_336, %c0_337] : memref<18x1x72xf32, #tpu.memory_space<vmem>>, vector<1x1x72xf32>
    %327 = vector.shape_cast %326 : vector<1x1x72xf32> to vector<1x72xf32>
    %c0_338 = arith.constant 0 : index
    %c0_339 = arith.constant 0 : index
    %c0_340 = arith.constant 0 : index
    %328 = vector.load %arg2[%c0_338, %c0_339, %c0_340] : memref<3x72x128xf32, #tpu.memory_space<vmem>>, vector<1x72x128xf32>
    %329 = vector.shape_cast %328 : vector<1x72x128xf32> to vector<72x128xf32>
    %cst_341 = arith.constant dense<0.000000e+00> : vector<1x128xf32>
    %330 = tpu.matmul %327, %329, %cst_341 {dimension_numbers = #tpu.dot_dimension_numbers<[1], [0], [0], [1], [0, 0, 1, 1], [], []>} : vector<1x72xf32>, vector<72x128xf32>, vector<1x128xf32> -> vector<1x128xf32>
    %331 = arith.addf %325, %330 : vector<1x128xf32>
    %c13_342 = arith.constant 13 : index
    %c0_343 = arith.constant 0 : index
    %c0_344 = arith.constant 0 : index
    %332 = vector.load %arg1[%c13_342, %c0_343, %c0_344] : memref<18x1x72xf32, #tpu.memory_space<vmem>>, vector<1x1x72xf32>
    %333 = vector.shape_cast %332 : vector<1x1x72xf32> to vector<1x72xf32>
    %c1_345 = arith.constant 1 : index
    %c0_346 = arith.constant 0 : index
    %c0_347 = arith.constant 0 : index
    %334 = vector.load %arg2[%c1_345, %c0_346, %c0_347] : memref<3x72x128xf32, #tpu.memory_space<vmem>>, vector<1x72x128xf32>
    %335 = vector.shape_cast %334 : vector<1x72x128xf32> to vector<72x128xf32>
    %cst_348 = arith.constant dense<0.000000e+00> : vector<1x128xf32>
    %336 = tpu.matmul %333, %335, %cst_348 {dimension_numbers = #tpu.dot_dimension_numbers<[1], [0], [0], [1], [0, 0, 1, 1], [], []>} : vector<1x72xf32>, vector<72x128xf32>, vector<1x128xf32> -> vector<1x128xf32>
    %337 = arith.addf %331, %336 : vector<1x128xf32>
    %c14 = arith.constant 14 : index
    %c0_349 = arith.constant 0 : index
    %c0_350 = arith.constant 0 : index
    %338 = vector.load %arg1[%c14, %c0_349, %c0_350] : memref<18x1x72xf32, #tpu.memory_space<vmem>>, vector<1x1x72xf32>
    %339 = vector.shape_cast %338 : vector<1x1x72xf32> to vector<1x72xf32>
    %c2_351 = arith.constant 2 : index
    %c0_352 = arith.constant 0 : index
    %c0_353 = arith.constant 0 : index
    %340 = vector.load %arg2[%c2_351, %c0_352, %c0_353] : memref<3x72x128xf32, #tpu.memory_space<vmem>>, vector<1x72x128xf32>
    %341 = vector.shape_cast %340 : vector<1x72x128xf32> to vector<72x128xf32>
    %cst_354 = arith.constant dense<0.000000e+00> : vector<1x128xf32>
    %342 = tpu.matmul %339, %341, %cst_354 {dimension_numbers = #tpu.dot_dimension_numbers<[1], [0], [0], [1], [0, 0, 1, 1], [], []>} : vector<1x72xf32>, vector<72x128xf32>, vector<1x128xf32> -> vector<1x128xf32>
    %343 = arith.addf %337, %342 : vector<1x128xf32>
    %c0_355 = arith.constant 0 : index
    %c0_356 = arith.constant 0 : index
    %344 = vector.load %arg3[%c0_355, %c0_356] : memref<1x128xf32, #tpu.memory_space<vmem>>, vector<1x128xf32>
    %345 = arith.addf %343, %344 : vector<1x128xf32>
    %cst_357 = arith.constant 0.000000e+00 : f32
    %346 = vector.broadcast %cst_357 : f32 to vector<1x128xf32>
    %347 = arith.maximumf %345, %346 : vector<1x128xf32>
    %c12_358 = arith.constant 12 : index
    %c0_359 = arith.constant 0 : index
    %c0_360 = arith.constant 0 : index
    %348 = vector.load %arg4[%c12_358, %c0_359, %c0_360] : memref<16x128x32xf32, #tpu.memory_space<vmem>>, vector<1x128x32xf32>
    %349 = vector.shape_cast %348 : vector<1x128x32xf32> to vector<128x32xf32>
    %cst_361 = arith.constant dense<0.000000e+00> : vector<1x32xf32>
    %350 = tpu.matmul %347, %349, %cst_361 {dimension_numbers = #tpu.dot_dimension_numbers<[1], [0], [0], [1], [0, 0, 1, 1], [], []>} : vector<1x128xf32>, vector<128x32xf32>, vector<1x32xf32> -> vector<1x32xf32>
    %351 = arith.addf %324, %350 : vector<1x32xf32>
    %cst_362 = arith.constant 0.000000e+00 : f32
    %352 = vector.broadcast %cst_362 : f32 to vector<1x128xf32>
    %c13_363 = arith.constant 13 : index
    %c0_364 = arith.constant 0 : index
    %c0_365 = arith.constant 0 : index
    %353 = vector.load %arg1[%c13_363, %c0_364, %c0_365] : memref<18x1x72xf32, #tpu.memory_space<vmem>>, vector<1x1x72xf32>
    %354 = vector.shape_cast %353 : vector<1x1x72xf32> to vector<1x72xf32>
    %c0_366 = arith.constant 0 : index
    %c0_367 = arith.constant 0 : index
    %c0_368 = arith.constant 0 : index
    %355 = vector.load %arg2[%c0_366, %c0_367, %c0_368] : memref<3x72x128xf32, #tpu.memory_space<vmem>>, vector<1x72x128xf32>
    %356 = vector.shape_cast %355 : vector<1x72x128xf32> to vector<72x128xf32>
    %cst_369 = arith.constant dense<0.000000e+00> : vector<1x128xf32>
    %357 = tpu.matmul %354, %356, %cst_369 {dimension_numbers = #tpu.dot_dimension_numbers<[1], [0], [0], [1], [0, 0, 1, 1], [], []>} : vector<1x72xf32>, vector<72x128xf32>, vector<1x128xf32> -> vector<1x128xf32>
    %358 = arith.addf %352, %357 : vector<1x128xf32>
    %c14_370 = arith.constant 14 : index
    %c0_371 = arith.constant 0 : index
    %c0_372 = arith.constant 0 : index
    %359 = vector.load %arg1[%c14_370, %c0_371, %c0_372] : memref<18x1x72xf32, #tpu.memory_space<vmem>>, vector<1x1x72xf32>
    %360 = vector.shape_cast %359 : vector<1x1x72xf32> to vector<1x72xf32>
    %c1_373 = arith.constant 1 : index
    %c0_374 = arith.constant 0 : index
    %c0_375 = arith.constant 0 : index
    %361 = vector.load %arg2[%c1_373, %c0_374, %c0_375] : memref<3x72x128xf32, #tpu.memory_space<vmem>>, vector<1x72x128xf32>
    %362 = vector.shape_cast %361 : vector<1x72x128xf32> to vector<72x128xf32>
    %cst_376 = arith.constant dense<0.000000e+00> : vector<1x128xf32>
    %363 = tpu.matmul %360, %362, %cst_376 {dimension_numbers = #tpu.dot_dimension_numbers<[1], [0], [0], [1], [0, 0, 1, 1], [], []>} : vector<1x72xf32>, vector<72x128xf32>, vector<1x128xf32> -> vector<1x128xf32>
    %364 = arith.addf %358, %363 : vector<1x128xf32>
    %c15 = arith.constant 15 : index
    %c0_377 = arith.constant 0 : index
    %c0_378 = arith.constant 0 : index
    %365 = vector.load %arg1[%c15, %c0_377, %c0_378] : memref<18x1x72xf32, #tpu.memory_space<vmem>>, vector<1x1x72xf32>
    %366 = vector.shape_cast %365 : vector<1x1x72xf32> to vector<1x72xf32>
    %c2_379 = arith.constant 2 : index
    %c0_380 = arith.constant 0 : index
    %c0_381 = arith.constant 0 : index
    %367 = vector.load %arg2[%c2_379, %c0_380, %c0_381] : memref<3x72x128xf32, #tpu.memory_space<vmem>>, vector<1x72x128xf32>
    %368 = vector.shape_cast %367 : vector<1x72x128xf32> to vector<72x128xf32>
    %cst_382 = arith.constant dense<0.000000e+00> : vector<1x128xf32>
    %369 = tpu.matmul %366, %368, %cst_382 {dimension_numbers = #tpu.dot_dimension_numbers<[1], [0], [0], [1], [0, 0, 1, 1], [], []>} : vector<1x72xf32>, vector<72x128xf32>, vector<1x128xf32> -> vector<1x128xf32>
    %370 = arith.addf %364, %369 : vector<1x128xf32>
    %c0_383 = arith.constant 0 : index
    %c0_384 = arith.constant 0 : index
    %371 = vector.load %arg3[%c0_383, %c0_384] : memref<1x128xf32, #tpu.memory_space<vmem>>, vector<1x128xf32>
    %372 = arith.addf %370, %371 : vector<1x128xf32>
    %cst_385 = arith.constant 0.000000e+00 : f32
    %373 = vector.broadcast %cst_385 : f32 to vector<1x128xf32>
    %374 = arith.maximumf %372, %373 : vector<1x128xf32>
    %c13_386 = arith.constant 13 : index
    %c0_387 = arith.constant 0 : index
    %c0_388 = arith.constant 0 : index
    %375 = vector.load %arg4[%c13_386, %c0_387, %c0_388] : memref<16x128x32xf32, #tpu.memory_space<vmem>>, vector<1x128x32xf32>
    %376 = vector.shape_cast %375 : vector<1x128x32xf32> to vector<128x32xf32>
    %cst_389 = arith.constant dense<0.000000e+00> : vector<1x32xf32>
    %377 = tpu.matmul %374, %376, %cst_389 {dimension_numbers = #tpu.dot_dimension_numbers<[1], [0], [0], [1], [0, 0, 1, 1], [], []>} : vector<1x128xf32>, vector<128x32xf32>, vector<1x32xf32> -> vector<1x32xf32>
    %378 = arith.addf %351, %377 : vector<1x32xf32>
    %cst_390 = arith.constant 0.000000e+00 : f32
    %379 = vector.broadcast %cst_390 : f32 to vector<1x128xf32>
    %c14_391 = arith.constant 14 : index
    %c0_392 = arith.constant 0 : index
    %c0_393 = arith.constant 0 : index
    %380 = vector.load %arg1[%c14_391, %c0_392, %c0_393] : memref<18x1x72xf32, #tpu.memory_space<vmem>>, vector<1x1x72xf32>
    %381 = vector.shape_cast %380 : vector<1x1x72xf32> to vector<1x72xf32>
    %c0_394 = arith.constant 0 : index
    %c0_395 = arith.constant 0 : index
    %c0_396 = arith.constant 0 : index
    %382 = vector.load %arg2[%c0_394, %c0_395, %c0_396] : memref<3x72x128xf32, #tpu.memory_space<vmem>>, vector<1x72x128xf32>
    %383 = vector.shape_cast %382 : vector<1x72x128xf32> to vector<72x128xf32>
    %cst_397 = arith.constant dense<0.000000e+00> : vector<1x128xf32>
    %384 = tpu.matmul %381, %383, %cst_397 {dimension_numbers = #tpu.dot_dimension_numbers<[1], [0], [0], [1], [0, 0, 1, 1], [], []>} : vector<1x72xf32>, vector<72x128xf32>, vector<1x128xf32> -> vector<1x128xf32>
    %385 = arith.addf %379, %384 : vector<1x128xf32>
    %c15_398 = arith.constant 15 : index
    %c0_399 = arith.constant 0 : index
    %c0_400 = arith.constant 0 : index
    %386 = vector.load %arg1[%c15_398, %c0_399, %c0_400] : memref<18x1x72xf32, #tpu.memory_space<vmem>>, vector<1x1x72xf32>
    %387 = vector.shape_cast %386 : vector<1x1x72xf32> to vector<1x72xf32>
    %c1_401 = arith.constant 1 : index
    %c0_402 = arith.constant 0 : index
    %c0_403 = arith.constant 0 : index
    %388 = vector.load %arg2[%c1_401, %c0_402, %c0_403] : memref<3x72x128xf32, #tpu.memory_space<vmem>>, vector<1x72x128xf32>
    %389 = vector.shape_cast %388 : vector<1x72x128xf32> to vector<72x128xf32>
    %cst_404 = arith.constant dense<0.000000e+00> : vector<1x128xf32>
    %390 = tpu.matmul %387, %389, %cst_404 {dimension_numbers = #tpu.dot_dimension_numbers<[1], [0], [0], [1], [0, 0, 1, 1], [], []>} : vector<1x72xf32>, vector<72x128xf32>, vector<1x128xf32> -> vector<1x128xf32>
    %391 = arith.addf %385, %390 : vector<1x128xf32>
    %c16 = arith.constant 16 : index
    %c0_405 = arith.constant 0 : index
    %c0_406 = arith.constant 0 : index
    %392 = vector.load %arg1[%c16, %c0_405, %c0_406] : memref<18x1x72xf32, #tpu.memory_space<vmem>>, vector<1x1x72xf32>
    %393 = vector.shape_cast %392 : vector<1x1x72xf32> to vector<1x72xf32>
    %c2_407 = arith.constant 2 : index
    %c0_408 = arith.constant 0 : index
    %c0_409 = arith.constant 0 : index
    %394 = vector.load %arg2[%c2_407, %c0_408, %c0_409] : memref<3x72x128xf32, #tpu.memory_space<vmem>>, vector<1x72x128xf32>
    %395 = vector.shape_cast %394 : vector<1x72x128xf32> to vector<72x128xf32>
    %cst_410 = arith.constant dense<0.000000e+00> : vector<1x128xf32>
    %396 = tpu.matmul %393, %395, %cst_410 {dimension_numbers = #tpu.dot_dimension_numbers<[1], [0], [0], [1], [0, 0, 1, 1], [], []>} : vector<1x72xf32>, vector<72x128xf32>, vector<1x128xf32> -> vector<1x128xf32>
    %397 = arith.addf %391, %396 : vector<1x128xf32>
    %c0_411 = arith.constant 0 : index
    %c0_412 = arith.constant 0 : index
    %398 = vector.load %arg3[%c0_411, %c0_412] : memref<1x128xf32, #tpu.memory_space<vmem>>, vector<1x128xf32>
    %399 = arith.addf %397, %398 : vector<1x128xf32>
    %cst_413 = arith.constant 0.000000e+00 : f32
    %400 = vector.broadcast %cst_413 : f32 to vector<1x128xf32>
    %401 = arith.maximumf %399, %400 : vector<1x128xf32>
    %c14_414 = arith.constant 14 : index
    %c0_415 = arith.constant 0 : index
    %c0_416 = arith.constant 0 : index
    %402 = vector.load %arg4[%c14_414, %c0_415, %c0_416] : memref<16x128x32xf32, #tpu.memory_space<vmem>>, vector<1x128x32xf32>
    %403 = vector.shape_cast %402 : vector<1x128x32xf32> to vector<128x32xf32>
    %cst_417 = arith.constant dense<0.000000e+00> : vector<1x32xf32>
    %404 = tpu.matmul %401, %403, %cst_417 {dimension_numbers = #tpu.dot_dimension_numbers<[1], [0], [0], [1], [0, 0, 1, 1], [], []>} : vector<1x128xf32>, vector<128x32xf32>, vector<1x32xf32> -> vector<1x32xf32>
    %405 = arith.addf %378, %404 : vector<1x32xf32>
    %cst_418 = arith.constant 0.000000e+00 : f32
    %406 = vector.broadcast %cst_418 : f32 to vector<1x128xf32>
    %c15_419 = arith.constant 15 : index
    %c0_420 = arith.constant 0 : index
    %c0_421 = arith.constant 0 : index
    %407 = vector.load %arg1[%c15_419, %c0_420, %c0_421] : memref<18x1x72xf32, #tpu.memory_space<vmem>>, vector<1x1x72xf32>
    %408 = vector.shape_cast %407 : vector<1x1x72xf32> to vector<1x72xf32>
    %c0_422 = arith.constant 0 : index
    %c0_423 = arith.constant 0 : index
    %c0_424 = arith.constant 0 : index
    %409 = vector.load %arg2[%c0_422, %c0_423, %c0_424] : memref<3x72x128xf32, #tpu.memory_space<vmem>>, vector<1x72x128xf32>
    %410 = vector.shape_cast %409 : vector<1x72x128xf32> to vector<72x128xf32>
    %cst_425 = arith.constant dense<0.000000e+00> : vector<1x128xf32>
    %411 = tpu.matmul %408, %410, %cst_425 {dimension_numbers = #tpu.dot_dimension_numbers<[1], [0], [0], [1], [0, 0, 1, 1], [], []>} : vector<1x72xf32>, vector<72x128xf32>, vector<1x128xf32> -> vector<1x128xf32>
    %412 = arith.addf %406, %411 : vector<1x128xf32>
    %c16_426 = arith.constant 16 : index
    %c0_427 = arith.constant 0 : index
    %c0_428 = arith.constant 0 : index
    %413 = vector.load %arg1[%c16_426, %c0_427, %c0_428] : memref<18x1x72xf32, #tpu.memory_space<vmem>>, vector<1x1x72xf32>
    %414 = vector.shape_cast %413 : vector<1x1x72xf32> to vector<1x72xf32>
    %c1_429 = arith.constant 1 : index
    %c0_430 = arith.constant 0 : index
    %c0_431 = arith.constant 0 : index
    %415 = vector.load %arg2[%c1_429, %c0_430, %c0_431] : memref<3x72x128xf32, #tpu.memory_space<vmem>>, vector<1x72x128xf32>
    %416 = vector.shape_cast %415 : vector<1x72x128xf32> to vector<72x128xf32>
    %cst_432 = arith.constant dense<0.000000e+00> : vector<1x128xf32>
    %417 = tpu.matmul %414, %416, %cst_432 {dimension_numbers = #tpu.dot_dimension_numbers<[1], [0], [0], [1], [0, 0, 1, 1], [], []>} : vector<1x72xf32>, vector<72x128xf32>, vector<1x128xf32> -> vector<1x128xf32>
    %418 = arith.addf %412, %417 : vector<1x128xf32>
    %c17 = arith.constant 17 : index
    %c0_433 = arith.constant 0 : index
    %c0_434 = arith.constant 0 : index
    %419 = vector.load %arg1[%c17, %c0_433, %c0_434] : memref<18x1x72xf32, #tpu.memory_space<vmem>>, vector<1x1x72xf32>
    %420 = vector.shape_cast %419 : vector<1x1x72xf32> to vector<1x72xf32>
    %c2_435 = arith.constant 2 : index
    %c0_436 = arith.constant 0 : index
    %c0_437 = arith.constant 0 : index
    %421 = vector.load %arg2[%c2_435, %c0_436, %c0_437] : memref<3x72x128xf32, #tpu.memory_space<vmem>>, vector<1x72x128xf32>
    %422 = vector.shape_cast %421 : vector<1x72x128xf32> to vector<72x128xf32>
    %cst_438 = arith.constant dense<0.000000e+00> : vector<1x128xf32>
    %423 = tpu.matmul %420, %422, %cst_438 {dimension_numbers = #tpu.dot_dimension_numbers<[1], [0], [0], [1], [0, 0, 1, 1], [], []>} : vector<1x72xf32>, vector<72x128xf32>, vector<1x128xf32> -> vector<1x128xf32>
    %424 = arith.addf %418, %423 : vector<1x128xf32>
    %c0_439 = arith.constant 0 : index
    %c0_440 = arith.constant 0 : index
    %425 = vector.load %arg3[%c0_439, %c0_440] : memref<1x128xf32, #tpu.memory_space<vmem>>, vector<1x128xf32>
    %426 = arith.addf %424, %425 : vector<1x128xf32>
    %cst_441 = arith.constant 0.000000e+00 : f32
    %427 = vector.broadcast %cst_441 : f32 to vector<1x128xf32>
    %428 = arith.maximumf %426, %427 : vector<1x128xf32>
    %c15_442 = arith.constant 15 : index
    %c0_443 = arith.constant 0 : index
    %c0_444 = arith.constant 0 : index
    %429 = vector.load %arg4[%c15_442, %c0_443, %c0_444] : memref<16x128x32xf32, #tpu.memory_space<vmem>>, vector<1x128x32xf32>
    %430 = vector.shape_cast %429 : vector<1x128x32xf32> to vector<128x32xf32>
    %cst_445 = arith.constant dense<0.000000e+00> : vector<1x32xf32>
    %431 = tpu.matmul %428, %430, %cst_445 {dimension_numbers = #tpu.dot_dimension_numbers<[1], [0], [0], [1], [0, 0, 1, 1], [], []>} : vector<1x128xf32>, vector<128x32xf32>, vector<1x32xf32> -> vector<1x32xf32>
    %432 = arith.addf %405, %431 : vector<1x32xf32>
    %c0_446 = arith.constant 0 : index
    %c0_447 = arith.constant 0 : index
    %433 = vector.load %arg5[%c0_446, %c0_447] : memref<1x32xf32, #tpu.memory_space<vmem>>, vector<1x32xf32>
    %434 = arith.addf %432, %433 : vector<1x32xf32>
    %cst_448 = arith.constant 0.000000e+00 : f32
    %435 = vector.broadcast %cst_448 : f32 to vector<1x32xf32>
    %436 = arith.maximumf %434, %435 : vector<1x32xf32>
    %c0_449 = arith.constant 0 : index
    %c0_450 = arith.constant 0 : index
    %437 = vector.load %arg6[%c0_449, %c0_450] : memref<32x16xf32, #tpu.memory_space<vmem>>, vector<32x16xf32>
    %cst_451 = arith.constant dense<0.000000e+00> : vector<1x16xf32>
    %438 = tpu.matmul %436, %437, %cst_451 {dimension_numbers = #tpu.dot_dimension_numbers<[1], [0], [0], [1], [0, 0, 1, 1], [], []>} : vector<1x32xf32>, vector<32x16xf32>, vector<1x16xf32> -> vector<1x16xf32>
    %c0_452 = arith.constant 0 : index
    %c0_453 = arith.constant 0 : index
    %439 = vector.load %arg7[%c0_452, %c0_453] : memref<1x16xf32, #tpu.memory_space<vmem>>, vector<1x16xf32>
    %440 = arith.addf %438, %439 : vector<1x16xf32>
    %c0_454 = arith.constant 0 : index
    %c0_455 = arith.constant 0 : index
    %c0_456 = arith.constant 0 : index
    %441 = vector.load %arg8[%c0_454, %c0_455, %c0_456] : memref<1x1x16xf32, #tpu.memory_space<vmem>>, vector<1x1x16xf32>
    %442 = vector.shape_cast %441 : vector<1x1x16xf32> to vector<1x16xf32>
    %443 = vector.shape_cast %440 : vector<1x16xf32> to vector<1x1x16xf32>
    tpu.vector_store %arg8[%c0_454, %c0_455, %c0_456], %443 {strides = array<i32>} : memref<1x1x16xf32, #tpu.memory_space<vmem>>, vector<1x1x16xf32>,
    return
  }
  func.func @transform_0(%arg0: i32) -> (i32, i32, i32) {
    %c0_i32 = arith.constant 0 : i32
    %c0_i32_0 = arith.constant 0 : i32
    %c0_i32_1 = arith.constant 0 : i32
    return %arg0, %c0_i32, %c0_i32_0 : i32, i32, i32
  }
  func.func @transform_1(%arg0: i32) -> (i32, i32, i32) {
    %c0_i32 = arith.constant 0 : i32
    %c0_i32_0 = arith.constant 0 : i32
    %c0_i32_1 = arith.constant 0 : i32
    %c0_i32_2 = arith.constant 0 : i32
    return %c0_i32, %c0_i32_0, %c0_i32_1 : i32, i32, i32
  }
  func.func @transform_2(%arg0: i32) -> (i32, i32) {
    %c0_i32 = arith.constant 0 : i32
    %c0_i32_0 = arith.constant 0 : i32
    %c0_i32_1 = arith.constant 0 : i32
    return %c0_i32, %c0_i32_0 : i32, i32
  }
  func.func @transform_3(%arg0: i32) -> (i32, i32, i32) {
    %c0_i32 = arith.constant 0 : i32
    %c0_i32_0 = arith.constant 0 : i32
    %c0_i32_1 = arith.constant 0 : i32
    %c0_i32_2 = arith.constant 0 : i32
    return %c0_i32, %c0_i32_0, %c0_i32_1 : i32, i32, i32
  }
  func.func @transform_4(%arg0: i32) -> (i32, i32) {
    %c0_i32 = arith.constant 0 : i32
    %c0_i32_0 = arith.constant 0 : i32
    %c0_i32_1 = arith.constant 0 : i32
    return %c0_i32, %c0_i32_0 : i32, i32
  }
  func.func @transform_5(%arg0: i32) -> (i32, i32) {
    %c0_i32 = arith.constant 0 : i32
    %c0_i32_0 = arith.constant 0 : i32
    %c0_i32_1 = arith.constant 0 : i32
    return %c0_i32, %c0_i32_0 : i32, i32
  }
  func.func @transform_6(%arg0: i32) -> (i32, i32) {
    %c0_i32 = arith.constant 0 : i32
    %c0_i32_0 = arith.constant 0 : i32
    %c0_i32_1 = arith.constant 0 : i32
    return %c0_i32, %c0_i32_0 : i32, i32
  }
  func.func @transform_7(%arg0: i32) -> (i32, i32, i32) {
    %c0_i32 = arith.constant 0 : i32
    %c0_i32_0 = arith.constant 0 : i32
    %c0_i32_1 = arith.constant 0 : i32
    return %arg0, %c0_i32, %c0_i32_0 : i32, i32, i32
  }
}

</mosaic_0001>

<llo_original>
// kernel: tpu_custom_call.1
$region0: #{tpu_custom_call.1}
  #allocation0 [shape = 'u32[]', space=smem, size = 0x4, offset = 0x4, fixed_abs, tag = 'smem constant byte address 0x4 - core index']
  #allocation1 [shape = 'u32[144,128]{1,0:T(1,128)}', space=vmem, size = 0x12000, scoped, tag = 'internal scratch']
  %s0 = inlined_call_operand.vmem [shape: f32[36,1,72], index: 0, kind: input, shape index: {}]
  %s1 = inlined_call_operand.vmem [shape: f32[3,72,128], index: 1, kind: input, shape index: {}]
  %s2 = inlined_call_operand.vmem [shape: f32[1,128], index: 2, kind: input, shape index: {}]
  %s3 = inlined_call_operand.vmem [shape: f32[16,128,32], index: 3, kind: input, shape index: {}]
  %s4 = inlined_call_operand.vmem [shape: f32[1,32], index: 4, kind: input, shape index: {}]
  %s5 = inlined_call_operand.vmem [shape: f32[32,16], index: 5, kind: input, shape index: {}]
  %s6 = inlined_call_operand.vmem [shape: f32[1,16], index: 6, kind: input, shape index: {}]
  %s7 = inlined_call_operand.hbm [shape: f32[2,1,16], index: 7, kind: output, shape index: {}]
  %s8 = sld [smem:[#allocation0]]
  $region61: #{tpu_custom_call.1} parent=0
    _
  %s10 = ssub.s32 1, %s8
  %s11 = scalar_select 0, %s10, %s8
  $region1: #{tpu_custom_call.1} parent=0
    #allocation2 [shape = 'u8[1024]{0}', space=vmem, size = 0x400, scoped, tag = 'output window, operand 0']
    #allocation3 [shape = 's32[2]{0}', space=sflag, size = 0x8, scoped, tag = 'scoped memory for tpu_custom_call.1']
    %12 = vsyncpa [#allocation3], 0
    %s13 = scalar_lea.sflag [#allocation3], 1
    %14 = vsyncpa %s13, 0
    loop: start=0, step=1, limit=4
    $region2: #{tpu_custom_call.1} parent=1 // loop_pre_header
      _
    $region3: #{tpu_custom_call.1} parent=1 // loop_header
      %s16 = sphi 0, %s20
      %p17 = scmp.ge.s32.totalorder %s16, 4
      %s26 = sphi 0, %s28
      %s29 = sphi 0, %s26
      %s30 = sphi 0, %s29
      %s46 = sphi 0, %s30
      %s50 = sphi 0, %s50
      %s52 = sphi 0, %s50
      %s53 = sphi 0, %s52
      %s67 = sphi 0, %s53
      %s71 = sphi 0, %s71
      %s73 = sphi 0, %s71
      %s74 = sphi 0, %s73
      %s88 = sphi 0, %s74
      %s92 = sphi 0, %s92
      %s94 = sphi 0, %s92
      %s95 = sphi 0, %s94
      %s109 = sphi 0, %s95
      %s113 = sphi 0, %s113
      %s115 = sphi 0, %s113
      %s116 = sphi 0, %s115
      %s130 = sphi 0, %s116
      %s134 = sphi 0, %s134
      %s136 = sphi 0, %s134
      %s137 = sphi 0, %s136
      %s151 = sphi 0, %s137
      %s155 = sphi 0, %s155
      %s157 = sphi 0, %s155
      %s158 = sphi 0, %s157
      %s172 = sphi 0, %s158
      %s178 = sphi 0, %s180
      %s181 = sphi 0, %s178
      %s182 = sphi 0, %s181
      %s198 = sphi 0, %s182
    $region4: #{tpu_custom_call.1} parent=1 // loop_header_branch
      %19 = sbr.rel (%p17) target = $region8
    $region5: #{tpu_custom_call.1} parent=1 // loop_body
      %s21 = ssub.s32 %s16, 1
      %s22 = ssub.s32 %s16, 2
      %s23 = sadd.s32 %s16, 1
      %s24 = ssub.s32 %s16, %s23
      %p25 = scmp.eq.s32.totalorder %s24, 0
      %s27 = sadd.s32 %s26, 1
      %s28 = scalar_select %p25, %s26, %s27
      %p31 = pneg %p25
      %p32 = scmp.eq.s32.totalorder %s16, 1
      %p33 = por %p31, %p32
      %p34 = scmp.ne.s32.totalorder %s26, %s29
      %p35 = scmp.eq.s32.totalorder %s16, 0
      %p36 = por %p34, %p35
      %p37 = scmp.ne.s32.totalorder %s26, %s29
      %p38 = scmp.eq.s32.totalorder %s21, 1
      %p39 = por %p37, %p38
      %p40 = scmp.ne.s32.totalorder %s29, %s30
      %p41 = scmp.eq.s32.totalorder %s21, 0
      %p42 = por %p40, %p41
      %p43 = scmp.ne.s32.totalorder %s29, %s30
      %p44 = scmp.eq.s32.totalorder %s22, 1
      %p45 = por %p43, %p44
      %p47 = scmp.ne.s32.totalorder %s30, %s46
      %p48 = scmp.eq.s32.totalorder %s22, 0
      %p49 = por %p47, %p48
      %s51 = sadd.s32 %s50, 1
      %p54 = scmp.eq.s32.totalorder %s16, 1
      %p55 = scmp.ne.s32.totalorder %s50, %s52
      %p56 = scmp.eq.s32.totalorder %s16, 0
      %p57 = por %p55, %p56
      %p58 = scmp.ne.s32.totalorder %s50, %s52
      %p59 = scmp.eq.s32.totalorder %s21, 1
      %p60 = por %p58, %p59
      %p61 = scmp.ne.s32.totalorder %s52, %s53
      %p62 = scmp.eq.s32.totalorder %s21, 0
      %p63 = por %p61, %p62
      %p64 = scmp.ne.s32.totalorder %s52, %s53
      %p65 = scmp.eq.s32.totalorder %s22, 1
      %p66 = por %p64, %p65
      %p68 = scmp.ne.s32.totalorder %s53, %s67
      %p69 = scmp.eq.s32.totalorder %s22, 0
      %p70 = por %p68, %p69
      %s72 = sadd.s32 %s71, 1
      %p75 = scmp.eq.s32.totalorder %s16, 1
      %p76 = scmp.ne.s32.totalorder %s71, %s73
      %p77 = scmp.eq.s32.totalorder %s16, 0
      %p78 = por %p76, %p77
      %p79 = scmp.ne.s32.totalorder %s71, %s73
      %p80 = scmp.eq.s32.totalorder %s21, 1
      %p81 = por %p79, %p80
      %p82 = scmp.ne.s32.totalorder %s73, %s74
      %p83 = scmp.eq.s32.totalorder %s21, 0
      %p84 = por %p82, %p83
      %p85 = scmp.ne.s32.totalorder %s73, %s74
      %p86 = scmp.eq.s32.totalorder %s22, 1
      %p87 = por %p85, %p86
      %p89 = scmp.ne.s32.totalorder %s74, %s88
      %p90 = scmp.eq.s32.totalorder %s22, 0
      %p91 = por %p89, %p90
      %s93 = sadd.s32 %s92, 1
      %p96 = scmp.eq.s32.totalorder %s16, 1
      %p97 = scmp.ne.s32.totalorder %s92, %s94
      %p98 = scmp.eq.s32.totalorder %s16, 0
      %p99 = por %p97, %p98
      %p100 = scmp.ne.s32.totalorder %s92, %s94
      %p101 = scmp.eq.s32.totalorder %s21, 1
      %p102 = por %p100, %p101
      %p103 = scmp.ne.s32.totalorder %s94, %s95
      %p104 = scmp.eq.s32.totalorder %s21, 0
      %p105 = por %p103, %p104
      %p106 = scmp.ne.s32.totalorder %s94, %s95
      %p107 = scmp.eq.s32.totalorder %s22, 1
      %p108 = por %p106, %p107
      %p110 = scmp.ne.s32.totalorder %s95, %s109
      %p111 = scmp.eq.s32.totalorder %s22, 0
      %p112 = por %p110, %p111
      %s114 = sadd.s32 %s113, 1
      %p117 = scmp.eq.s32.totalorder %s16, 1
      %p118 = scmp.ne.s32.totalorder %s113, %s115
      %p119 = scmp.eq.s32.totalorder %s16, 0
      %p120 = por %p118, %p119
      %p121 = scmp.ne.s32.totalorder %s113, %s115
      %p122 = scmp.eq.s32.totalorder %s21, 1
      %p123 = por %p121, %p122
      %p124 = scmp.ne.s32.totalorder %s115, %s116
      %p125 = scmp.eq.s32.totalorder %s21, 0
      %p126 = por %p124, %p125
      %p127 = scmp.ne.s32.totalorder %s115, %s116
      %p128 = scmp.eq.s32.totalorder %s22, 1
      %p129 = por %p127, %p128
      %p131 = scmp.ne.s32.totalorder %s116, %s130
      %p132 = scmp.eq.s32.totalorder %s22, 0
      %p133 = por %p131, %p132
      %s135 = sadd.s32 %s134, 1
      %p138 = scmp.eq.s32.totalorder %s16, 1
      %p139 = scmp.ne.s32.totalorder %s134, %s136
      %p140 = scmp.eq.s32.totalorder %s16, 0
      %p141 = por %p139, %p140
      %p142 = scmp.ne.s32.totalorder %s134, %s136
      %p143 = scmp.eq.s32.totalorder %s21, 1
      %p144 = por %p142, %p143
      %p145 = scmp.ne.s32.totalorder %s136, %s137
      %p146 = scmp.eq.s32.totalorder %s21, 0
      %p147 = por %p145, %p146
      %p148 = scmp.ne.s32.totalorder %s136, %s137
      %p149 = scmp.eq.s32.totalorder %s22, 1
      %p150 = por %p148, %p149
      %p152 = scmp.ne.s32.totalorder %s137, %s151
      %p153 = scmp.eq.s32.totalorder %s22, 0
      %p154 = por %p152, %p153
      %s156 = sadd.s32 %s155, 1
      %p159 = scmp.eq.s32.totalorder %s16, 1
      %p160 = scmp.ne.s32.totalorder %s155, %s157
      %p161 = scmp.eq.s32.totalorder %s16, 0
      %p162 = por %p160, %p161
      %p163 = scmp.ne.s32.totalorder %s155, %s157
      %p164 = scmp.eq.s32.totalorder %s21, 1
      %p165 = por %p163, %p164
      %p166 = scmp.ne.s32.totalorder %s157, %s158
      %p167 = scmp.eq.s32.totalorder %s21, 0
      %p168 = por %p166, %p167
      %p169 = scmp.ne.s32.totalorder %s157, %s158
      %p170 = scmp.eq.s32.totalorder %s22, 1
      %p171 = por %p169, %p170
      %p173 = scmp.ne.s32.totalorder %s158, %s172
      %p174 = scmp.eq.s32.totalorder %s22, 0
      %p175 = por %p173, %p174
      %s176 = ssub.s32 %s16, %s23
      %p177 = scmp.eq.s32.totalorder %s176, 0
      %s179 = sadd.s32 %s178, 1
      %s180 = scalar_select %p177, %s178, %s179
      %p183 = pneg %p177
      %p184 = scmp.eq.s32.totalorder %s16, 1
      %p185 = por %p183, %p184
      %p186 = scmp.ne.s32.totalorder %s178, %s181
      %p187 = scmp.eq.s32.totalorder %s16, 0
      %p188 = por %p186, %p187
      %p189 = scmp.ne.s32.totalorder %s178, %s181
      %p190 = scmp.eq.s32.totalorder %s21, 1
      %p191 = por %p189, %p190
      %p192 = scmp.ne.s32.totalorder %s181, %s182
      %p193 = scmp.eq.s32.totalorder %s21, 0
      %p194 = por %p192, %p193
      %p195 = scmp.ne.s32.totalorder %s181, %s182
      %p196 = scmp.eq.s32.totalorder %s22, 1
      %p197 = por %p195, %p196
      %p199 = scmp.ne.s32.totalorder %s182, %s198
      %p200 = scmp.eq.s32.totalorder %s22, 0
      %p201 = por %p199, %p200
      %p202 = scmp.le.s32.totalorder 1, %s16
      %p203 = scmp.lt.s32.totalorder %s16, 3
      %p204 = pnand %p202, %p203
      %p205 = pneg %p204
      // Predicated region
      $region9: #{tpu_custom_call.1} parent=5 // pred_check
        _
      $region10: #{tpu_custom_call.1} parent=5 // pred_check_branch
        %207 = sbr.rel (%p204) target = $region12
      $region11: #{tpu_custom_call.1} parent=5 // pred_region
        %s208 = ssub.s32 %s16, 1
        // Predicated region
        $region13: #{tpu_custom_call.1} parent=11 // pred_check
          %p209 = pneg %p63
        $region14: #{tpu_custom_call.1} parent=11 // pred_check_branch
          %211 = sbr.rel (%p209) target = $region16
        $region15: #{tpu_custom_call.1} parent=11 // pred_region
          _
        $region16: #{tpu_custom_call.1} parent=11 // pred_fallthru
          _
        // Predicated region
        $region17: #{tpu_custom_call.1} parent=11 // pred_check
          %p212 = pneg %p84
        $region18: #{tpu_custom_call.1} parent=11 // pred_check_branch
          %214 = sbr.rel (%p212) target = $region20
        $region19: #{tpu_custom_call.1} parent=11 // pred_region
          _
        $region20: #{tpu_custom_call.1} parent=11 // pred_fallthru
          _
        // Predicated region
        $region21: #{tpu_custom_call.1} parent=11 // pred_check
          %p215 = pneg %p105
        $region22: #{tpu_custom_call.1} parent=11 // pred_check_branch
          %217 = sbr.rel (%p215) target = $region24
        $region23: #{tpu_custom_call.1} parent=11 // pred_region
          _
        $region24: #{tpu_custom_call.1} parent=11 // pred_fallthru
          _
        // Predicated region
        $region25: #{tpu_custom_call.1} parent=11 // pred_check
          %p218 = pneg %p126
        $region26: #{tpu_custom_call.1} parent=11 // pred_check_branch
          %220 = sbr.rel (%p218) target = $region28
        $region27: #{tpu_custom_call.1} parent=11 // pred_region
          _
        $region28: #{tpu_custom_call.1} parent=11 // pred_fallthru
          _
        // Predicated region
        $region29: #{tpu_custom_call.1} parent=11 // pred_check
          %p221 = pneg %p147
        $region30: #{tpu_custom_call.1} parent=11 // pred_check_branch
          %223 = sbr.rel (%p221) target = $region32
        $region31: #{tpu_custom_call.1} parent=11 // pred_region
          _
        $region32: #{tpu_custom_call.1} parent=11 // pred_fallthru
          _
        // Predicated region
        $region33: #{tpu_custom_call.1} parent=11 // pred_check
          %p224 = pneg %p168
        $region34: #{tpu_custom_call.1} parent=11 // pred_check_branch
          %226 = sbr.rel (%p224) target = $region36
        $region35: #{tpu_custom_call.1} parent=11 // pred_region
          _
        $region36: #{tpu_custom_call.1} parent=11 // pred_fallthru
          _
      $region12: #{tpu_custom_call.1} parent=5 // pred_fallthru
        _
      %p227 = scmp.lt.s32.totalorder %s16, 2
      // Predicated region
      $region37: #{tpu_custom_call.1} parent=5 // pred_check
        %p228 = pneg %p227
      $region38: #{tpu_custom_call.1} parent=5 // pred_check_branch
        %230 = sbr.rel (%p228) target = $region40
      $region39: #{tpu_custom_call.1} parent=5 // pred_region
        // Predicated region
        $region41: #{tpu_custom_call.1} parent=39 // pred_check
          %p231 = pneg %p36
        $region42: #{tpu_custom_call.1} parent=39 // pred_check_branch
          %233 = sbr.rel (%p231) target = $region44
        $region43: #{tpu_custom_call.1} parent=39 // pred_region
          %s234 = smul.u32 18, %s16
          %p235 = scmp.lt.s32.totalorder %s234, 35
          %s236 = scalar_select %p235, %s234, 35
          %s237 = scalar_lea.vmem %s0, %s236
          %s238 = smul.u32 18, %s16
        $region44: #{tpu_custom_call.1} parent=39 // pred_fallthru
          _
      $region40: #{tpu_custom_call.1} parent=5 // pred_fallthru
        _
      %p239 = scmp.le.s32.totalorder 1, %s16
      %p240 = scmp.lt.s32.totalorder %s16, 3
      %p241 = pnand %p239, %p240
      %p242 = pneg %p241
      // Predicated region
      $region45: #{tpu_custom_call.1} parent=5 // pred_check
        _
      $region46: #{tpu_custom_call.1} parent=5 // pred_check_branch
        %244 = sbr.rel (%p241) target = $region48
      $region47: #{tpu_custom_call.1} parent=5 // pred_region
        %s245 = ssub.s32 %s16, 1
        %s246 = smul.u32 18, %s21
        %p247 = scmp.lt.s32.totalorder %s246, 35
        %s248 = scalar_select %p247, %s246, 35
        %s249 = scalar_lea.vmem %s0, %s248
        %p250 = pneg %p42
        %p251 = pneg %p39
        %p252 = pneg %p63
        %p253 = pneg %p60
        %p254 = pneg %p84
        %p255 = pneg %p81
        %p256 = pneg %p105
        %p257 = pneg %p102
        %p258 = pneg %p126
        %p259 = pneg %p123
        %p260 = pneg %p147
        %p261 = pneg %p144
        %p262 = pneg %p168
        %p263 = pneg %p165
        %p264 = pneg %p194
        %p265 = pneg %p191
        %s266 = sand.u32 %s181, 1
        %s267 = scalar_lea.sflag [#allocation3], %s266
        %s268 = sand.u32 %s181, 1
        %s269 = scalar_lea.vmem [#allocation2], %s268
        %s270 = smul.u32 18, %s21
        %p271 = scmp.lt.s32.totalorder %s270, 35
        %s272 = scalar_select %p271, %s270, 35
        %s273 = scalar_lea.vmem %s0, %s272
        %s274 = smul.u32 18, %s21
        %v275 = vld [vmem:[%s273] sm:$0x1]
        %v276 = vld [vmem:[%s1] sm:$0xff]
        %v277 = vld [vmem:[%s1 + $0x8] sm:$0xff]
        %v278 = vld [vmem:[%s1 + $0x10] sm:$0xff]
        %v279 = vld [vmem:[%s1 + $0x18] sm:$0xff]
        %v280 = vld [vmem:[%s1 + $0x20] sm:$0xff]
        %v281 = vld [vmem:[%s1 + $0x28] sm:$0xff]
        %v282 = vld [vmem:[%s1 + $0x30] sm:$0xff]
        %v283 = vld [vmem:[%s1 + $0x38] sm:$0xff]
        %v284 = vld [vmem:[%s1 + $0x40] sm:$0xff]
        %s285 = scalar_lea.vmem %s273, 1
        %v286 = vld [vmem:[%s285] sm:$0x1]
        %s287 = scalar_lea.vmem %s1, 72
        %v288 = vld [vmem:[%s287] sm:$0xff]
        %v289 = vld [vmem:[%s287 + $0x8] sm:$0xff]
        %v290 = vld [vmem:[%s287 + $0x10] sm:$0xff]
        %v291 = vld [vmem:[%s287 + $0x18] sm:$0xff]
        %v292 = vld [vmem:[%s287 + $0x20] sm:$0xff]
        %v293 = vld [vmem:[%s287 + $0x28] sm:$0xff]
        %v294 = vld [vmem:[%s287 + $0x30] sm:$0xff]
        %v295 = vld [vmem:[%s287 + $0x38] sm:$0xff]
        %v296 = vld [vmem:[%s287 + $0x40] sm:$0xff]
        %vm297 = vcmask 588800
        %v299 = vsel %vm297, %v286, 0
        %301 = vmatprep.subr.mxu0 0.0
        %302 = vmatpush1.msra.mxu0 %v288
        %303 = vmatprep.subr.mxu0 0.0
        %304 = vmatpush1.msra.mxu0 %v289
        %305 = vmatprep.subr.mxu0 0.0
        %306 = vmatpush1.msra.mxu0 %v290
        %307 = vmatprep.subr.mxu0 0.0
        %308 = vmatpush1.msra.mxu0 %v291
        %309 = vmatprep.subr.mxu0 0.0
        %310 = vmatpush1.msra.mxu0 %v292
        %311 = vmatprep.subr.mxu0 0.0
        %312 = vmatpush1.msra.mxu0 %v293
        %313 = vmatprep.subr.mxu0 0.0
        %314 = vmatpush1.msra.mxu0 %v294
        %315 = vmatprep.subr.mxu0 0.0
        %316 = vmatpush1.msra.mxu0 %v295
        %317 = vmatprep.subr.mxu0 0.0
        %318 = vmatpush1.msra.mxu0 %v296
        %319 = vmatprep.subr.mxu0 0.0
        %320 = vmatpush1.msra.mxu0 0.0
        %321 = vmatprep.subr.mxu0 0.0
        %322 = vmatpush1.msra.mxu0 0.0
        %323 = vmatprep.subr.mxu0 0.0
        %324 = vmatpush1.msra.mxu0 0.0
        %325 = vmatprep.subr.mxu0 0.0
        %326 = vmatpush1.msra.mxu0 0.0
        %327 = vmatprep.subr.mxu0 0.0
        %328 = vmatpush1.msra.mxu0 0.0
        %329 = vmatprep.subr.mxu0 0.0
        %330 = vmatpush1.msra.mxu0 0.0
        %331 = vmatprep.subr.mxu0 0.0
        %332 = vmatpush1.msra.mxu0 0.0
        %333 = vmatprep.subr.mxu0 0.0
        %334 = vmatpush1.msra.mxu0 0.0
        %335 = vmatprep.subr.mxu0 0.0
        %336 = vmatpush1.msra.mxu0 0.0
        %337 = vmatprep.subr.mxu0 0.0
        %338 = vmatpush1.msra.mxu0 0.0
        %339 = vmatprep.subr.mxu0 0.0
        %340 = vmatpush1.msra.mxu0 0.0
        %341 = vmatprep.subr.mxu0 0.0
        %342 = vmatpush1.msra.mxu0 0.0
        %343 = vmatprep.subr.mxu0 0.0
        %344 = vmatpush1.msra.mxu0 0.0
        %345 = vmatprep.subr.mxu0 0.0
        %346 = vmatpush1.msra.mxu0 0.0
        %347 = vmatprep.subr.mxu0 0.0
        %348 = vmatpush1.msra.mxu0 0.0
        %349 = vmatprep.subr.mxu0 0.0
        %350 = vmatpush1.msra.mxu0 0.0
        %351 = vmatprep.subr.mxu0 0.0
        %352 = vmatpush1.msra.mxu0 0.0
        %353 = vmatprep.subr.mxu0 0.0
        %354 = vmatpush1.msra.mxu0 0.0
        %355 = vmatprep.subr.mxu0 0.0
        %356 = vmatpush1.msra.mxu0 0.0
        %357 = vmatprep.subr.mxu0 0.0
        %358 = vmatpush1.msra.mxu0 0.0
        %359 = vmatprep.subr.mxu0 0.0
        %360 = vmatpush1.msra.mxu0 0.0
        %361 = vmatprep.subr.mxu0 0.0
        %362 = vmatpush1.msra.mxu0 0.0
        %363 = vmatprep.subr.mxu0 0.0
        %364 = vmatpush1.msra.mxu0 0.0
        %365 = vmatprep.mubr.f32.mxu0 0.0
        %366 = vmatmul.mubr.f32.gmra.mrb[0].mxu0 %v299
        %v367 = vpop.f32.mrb[0].mxu0
        %v368 = vadd.f32 0.0, %v367
        %v369 = vpop.f32.mrb[0].mxu0
        %370 = vdwg.mxu0
        %v372 = vsel %vm297, %v275, 0
        %374 = vmatprep.subr.mxu0 0.0
        %375 = vmatpush1.msra.mxu0 %v276
        %376 = vmatprep.subr.mxu0 0.0
        %377 = vmatpush1.msra.mxu0 %v277
        %378 = vmatprep.subr.mxu0 0.0
        %379 = vmatpush1.msra.mxu0 %v278
        %380 = vmatprep.subr.mxu0 0.0
        %381 = vmatpush1.msra.mxu0 %v279
        %382 = vmatprep.subr.mxu0 0.0
        %383 = vmatpush1.msra.mxu0 %v280
        %384 = vmatprep.subr.mxu0 0.0
        %385 = vmatpush1.msra.mxu0 %v281
        %386 = vmatprep.subr.mxu0 0.0
        %387 = vmatpush1.msra.mxu0 %v282
        %388 = vmatprep.subr.mxu0 0.0
        %389 = vmatpush1.msra.mxu0 %v283
        %390 = vmatprep.subr.mxu0 0.0
        %391 = vmatpush1.msra.mxu0 %v284
        %392 = vmatprep.subr.mxu0 0.0
        %393 = vmatpush1.msra.mxu0 0.0
        %394 = vmatprep.subr.mxu0 0.0
        %395 = vmatpush1.msra.mxu0 0.0
        %396 = vmatprep.subr.mxu0 0.0
        %397 = vmatpush1.msra.mxu0 0.0
        %398 = vmatprep.subr.mxu0 0.0
        %399 = vmatpush1.msra.mxu0 0.0
        %400 = vmatprep.subr.mxu0 0.0
        %401 = vmatpush1.msra.mxu0 0.0
        %402 = vmatprep.subr.mxu0 0.0
        %403 = vmatpush1.msra.mxu0 0.0
        %404 = vmatprep.subr.mxu0 0.0
        %405 = vmatpush1.msra.mxu0 0.0
        %406 = vmatprep.subr.mxu0 0.0
        %407 = vmatpush1.msra.mxu0 0.0
        %408 = vmatprep.subr.mxu0 0.0
        %409 = vmatpush1.msra.mxu0 0.0
        %410 = vmatprep.subr.mxu0 0.0
        %411 = vmatpush1.msra.mxu0 0.0
        %412 = vmatprep.subr.mxu0 0.0
        %413 = vmatpush1.msra.mxu0 0.0
        %414 = vmatprep.subr.mxu0 0.0
        %415 = vmatpush1.msra.mxu0 0.0
        %416 = vmatprep.subr.mxu0 0.0
        %417 = vmatpush1.msra.mxu0 0.0
        %418 = vmatprep.subr.mxu0 0.0
        %419 = vmatpush1.msra.mxu0 0.0
        %420 = vmatprep.subr.mxu0 0.0
        %421 = vmatpush1.msra.mxu0 0.0
        %422 = vmatprep.subr.mxu0 0.0
        %423 = vmatpush1.msra.mxu0 0.0
        %424 = vmatprep.subr.mxu0 0.0
        %425 = vmatpush1.msra.mxu0 0.0
        %426 = vmatprep.subr.mxu0 0.0
        %427 = vmatpush1.msra.mxu0 0.0
        %428 = vmatprep.subr.mxu0 0.0
        %429 = vmatpush1.msra.mxu0 0.0
        %430 = vmatprep.subr.mxu0 0.0
        %431 = vmatpush1.msra.mxu0 0.0
        %432 = vmatprep.subr.mxu0 0.0
        %433 = vmatpush1.msra.mxu0 0.0
        %434 = vmatprep.subr.mxu0 0.0
        %435 = vmatpush1.msra.mxu0 0.0
        %436 = vmatprep.subr.mxu0 0.0
        %437 = vmatpush1.msra.mxu0 0.0
        %438 = vmatprep.mubr.f32.mxu0 0.0
        %439 = vmatmul.mubr.f32.gmra.mrb[0].mxu0 %v372
        %v440 = vpop.f32.mrb[0].mxu0
        %v441 = vadd.f32 %v368, %v440
        %v442 = vpop.f32.mrb[0].mxu0
        %443 = vdwg.mxu0
        %s444 = scalar_lea.vmem %s273, 2
        %v445 = vld [vmem:[%s444] sm:$0x1]
        %s446 = scalar_lea.vmem %s1, 144
        %v447 = vld [vmem:[%s446] sm:$0xff]
        %v448 = vld [vmem:[%s446 + $0x8] sm:$0xff]
        %v449 = vld [vmem:[%s446 + $0x10] sm:$0xff]
        %v450 = vld [vmem:[%s446 + $0x18] sm:$0xff]
        %v451 = vld [vmem:[%s446 + $0x20] sm:$0xff]
        %v452 = vld [vmem:[%s446 + $0x28] sm:$0xff]
        %v453 = vld [vmem:[%s446 + $0x30] sm:$0xff]
        %v454 = vld [vmem:[%s446 + $0x38] sm:$0xff]
        %v455 = vld [vmem:[%s446 + $0x40] sm:$0xff]
        %v457 = vsel %vm297, %v445, 0
        %459 = vmatprep.subr.mxu0 0.0
        %460 = vmatpush1.msra.mxu0 %v447
        %461 = vmatprep.subr.mxu0 0.0
        %462 = vmatpush1.msra.mxu0 %v448
        %463 = vmatprep.subr.mxu0 0.0
        %464 = vmatpush1.msra.mxu0 %v449
        %465 = vmatprep.subr.mxu0 0.0
        %466 = vmatpush1.msra.mxu0 %v450
        %467 = vmatprep.subr.mxu0 0.0
        %468 = vmatpush1.msra.mxu0 %v451
        %469 = vmatprep.subr.mxu0 0.0
        %470 = vmatpush1.msra.mxu0 %v452
        %471 = vmatprep.subr.mxu0 0.0
        %472 = vmatpush1.msra.mxu0 %v453
        %473 = vmatprep.subr.mxu0 0.0
        %474 = vmatpush1.msra.mxu0 %v454
        %475 = vmatprep.subr.mxu0 0.0
        %476 = vmatpush1.msra.mxu0 %v455
        %477 = vmatprep.subr.mxu0 0.0
        %478 = vmatpush1.msra.mxu0 0.0
        %479 = vmatprep.subr.mxu0 0.0
        %480 = vmatpush1.msra.mxu0 0.0
        %481 = vmatprep.subr.mxu0 0.0
        %482 = vmatpush1.msra.mxu0 0.0
        %483 = vmatprep.subr.mxu0 0.0
        %484 = vmatpush1.msra.mxu0 0.0
        %485 = vmatprep.subr.mxu0 0.0
        %486 = vmatpush1.msra.mxu0 0.0
        %487 = vmatprep.subr.mxu0 0.0
        %488 = vmatpush1.msra.mxu0 0.0
        %489 = vmatprep.subr.mxu0 0.0
        %490 = vmatpush1.msra.mxu0 0.0
        %491 = vmatprep.subr.mxu0 0.0
        %492 = vmatpush1.msra.mxu0 0.0
        %493 = vmatprep.subr.mxu0 0.0
        %494 = vmatpush1.msra.mxu0 0.0
        %495 = vmatprep.subr.mxu0 0.0
        %496 = vmatpush1.msra.mxu0 0.0
        %497 = vmatprep.subr.mxu0 0.0
        %498 = vmatpush1.msra.mxu0 0.0
        %499 = vmatprep.subr.mxu0 0.0
        %500 = vmatpush1.msra.mxu0 0.0
        %501 = vmatprep.subr.mxu0 0.0
        %502 = vmatpush1.msra.mxu0 0.0
        %503 = vmatprep.subr.mxu0 0.0
        %504 = vmatpush1.msra.mxu0 0.0
        %505 = vmatprep.subr.mxu0 0.0
        %506 = vmatpush1.msra.mxu0 0.0
        %507 = vmatprep.subr.mxu0 0.0
        %508 = vmatpush1.msra.mxu0 0.0
        %509 = vmatprep.subr.mxu0 0.0
        %510 = vmatpush1.msra.mxu0 0.0
        %511 = vmatprep.subr.mxu0 0.0
        %512 = vmatpush1.msra.mxu0 0.0
        %513 = vmatprep.subr.mxu0 0.0
        %514 = vmatpush1.msra.mxu0 0.0
        %515 = vmatprep.subr.mxu0 0.0
        %516 = vmatpush1.msra.mxu0 0.0
        %517 = vmatprep.subr.mxu0 0.0
        %518 = vmatpush1.msra.mxu0 0.0
        %519 = vmatprep.subr.mxu0 0.0
        %520 = vmatpush1.msra.mxu0 0.0
        %521 = vmatprep.subr.mxu0 0.0
        %522 = vmatpush1.msra.mxu0 0.0
        %523 = vmatprep.mubr.f32.mxu0 0.0
        %524 = vmatmul.mubr.f32.gmra.mrb[0].mxu0 %v457
        %v525 = vpop.f32.mrb[0].mxu0
        %v526 = vadd.f32 0.0, %v525
        %v527 = vpop.f32.mrb[0].mxu0
        %528 = vdwg.mxu0
        %v529 = vadd.f32 %v441, %v526
        %v530 = vld [vmem:[%s2] sm:$0x1]
        %v531 = vadd.f32 %v529, %v530
        %v532 = vmax.f32 %v531, 0.0
        %v533 = vld [vmem:[%s3] sm:$0xff]
        %v534 = vld [vmem:[%s3 + $0x8] sm:$0xff]
        %v535 = vld [vmem:[%s3 + $0x10] sm:$0xff]
        %v536 = vld [vmem:[%s3 + $0x18] sm:$0xff]
        %v537 = vld [vmem:[%s3 + $0x20] sm:$0xff]
        %v538 = vld [vmem:[%s3 + $0x28] sm:$0xff]
        %v539 = vld [vmem:[%s3 + $0x30] sm:$0xff]
        %v540 = vld [vmem:[%s3 + $0x38] sm:$0xff]
        %v541 = vld [vmem:[%s3 + $0x40] sm:$0xff]
        %v542 = vld [vmem:[%s3 + $0x48] sm:$0xff]
        %v543 = vld [vmem:[%s3 + $0x50] sm:$0xff]
        %v544 = vld [vmem:[%s3 + $0x58] sm:$0xff]
        %v545 = vld [vmem:[%s3 + $0x60] sm:$0xff]
        %v546 = vld [vmem:[%s3 + $0x68] sm:$0xff]
        %v547 = vld [vmem:[%s3 + $0x70] sm:$0xff]
        %v548 = vld [vmem:[%s3 + $0x78] sm:$0xff]
        %549 = vmatprep.subr.mxu0 0.0
        %550 = vmatpush1.msra.mxu0 %v288
        %551 = vmatprep.subr.mxu0 0.0
        %552 = vmatpush1.msra.mxu0 %v289
        %553 = vmatprep.subr.mxu0 0.0
        %554 = vmatpush1.msra.mxu0 %v290
        %555 = vmatprep.subr.mxu0 0.0
        %556 = vmatpush1.msra.mxu0 %v291
        %557 = vmatprep.subr.mxu0 0.0
        %558 = vmatpush1.msra.mxu0 %v292
        %559 = vmatprep.subr.mxu0 0.0
        %560 = vmatpush1.msra.mxu0 %v293
        %561 = vmatprep.subr.mxu0 0.0
        %562 = vmatpush1.msra.mxu0 %v294
        %563 = vmatprep.subr.mxu0 0.0
        %564 = vmatpush1.msra.mxu0 %v295
        %565 = vmatprep.subr.mxu0 0.0
        %566 = vmatpush1.msra.mxu0 %v296
        %567 = vmatprep.subr.mxu0 0.0
        %568 = vmatpush1.msra.mxu0 0.0
        %569 = vmatprep.subr.mxu0 0.0
        %570 = vmatpush1.msra.mxu0 0.0
        %571 = vmatprep.subr.mxu0 0.0
        %572 = vmatpush1.msra.mxu0 0.0
        %573 = vmatprep.subr.mxu0 0.0
        %574 = vmatpush1.msra.mxu0 0.0
        %575 = vmatprep.subr.mxu0 0.0
        %576 = vmatpush1.msra.mxu0 0.0
        %577 = vmatprep.subr.mxu0 0.0
        %578 = vmatpush1.msra.mxu0 0.0
        %579 = vmatprep.subr.mxu0 0.0
        %580 = vmatpush1.msra.mxu0 0.0
        %581 = vmatprep.subr.mxu0 0.0
        %582 = vmatpush1.msra.mxu0 0.0
        %583 = vmatprep.subr.mxu0 0.0
        %584 = vmatpush1.msra.mxu0 0.0
        %585 = vmatprep.subr.mxu0 0.0
        %586 = vmatpush1.msra.mxu0 0.0
        %587 = vmatprep.subr.mxu0 0.0
        %588 = vmatpush1.msra.mxu0 0.0
        %589 = vmatprep.subr.mxu0 0.0
        %590 = vmatpush1.msra.mxu0 0.0
        %591 = vmatprep.subr.mxu0 0.0
        %592 = vmatpush1.msra.mxu0 0.0
        %593 = vmatprep.subr.mxu0 0.0
        %594 = vmatpush1.msra.mxu0 0.0
        %595 = vmatprep.subr.mxu0 0.0
        %596 = vmatpush1.msra.mxu0 0.0
        %597 = vmatprep.subr.mxu0 0.0
        %598 = vmatpush1.msra.mxu0 0.0
        %599 = vmatprep.subr.mxu0 0.0
        %600 = vmatpush1.msra.mxu0 0.0
        %601 = vmatprep.subr.mxu0 0.0
        %602 = vmatpush1.msra.mxu0 0.0
        %603 = vmatprep.subr.mxu0 0.0
        %604 = vmatpush1.msra.mxu0 0.0
        %605 = vmatprep.subr.mxu0 0.0
        %606 = vmatpush1.msra.mxu0 0.0
        %607 = vmatprep.subr.mxu0 0.0
        %608 = vmatpush1.msra.mxu0 0.0
        %609 = vmatprep.subr.mxu0 0.0
        %610 = vmatpush1.msra.mxu0 0.0
        %611 = vmatprep.subr.mxu0 0.0
        %612 = vmatpush1.msra.mxu0 0.0
        %613 = vmatprep.mubr.f32.mxu0 0.0
        %614 = vmatmul.mubr.f32.gmra.mrb[0].mxu0 %v457
        %v615 = vpop.f32.mrb[0].mxu0
        %v616 = vadd.f32 0.0, %v615
        %v617 = vpop.f32.mrb[0].mxu0
        %618 = vdwg.mxu0
        %619 = vmatprep.subr.mxu0 0.0
        %620 = vmatpush1.msra.mxu0 %v276
        %621 = vmatprep.subr.mxu0 0.0
        %622 = vmatpush1.msra.mxu0 %v277
        %623 = vmatprep.subr.mxu0 0.0
        %624 = vmatpush1.msra.mxu0 %v278
        %625 = vmatprep.subr.mxu0 0.0
        %626 = vmatpush1.msra.mxu0 %v279
        %627 = vmatprep.subr.mxu0 0.0
        %628 = vmatpush1.msra.mxu0 %v280
        %629 = vmatprep.subr.mxu0 0.0
        %630 = vmatpush1.msra.mxu0 %v281
        %631 = vmatprep.subr.mxu0 0.0
        %632 = vmatpush1.msra.mxu0 %v282
        %633 = vmatprep.subr.mxu0 0.0
        %634 = vmatpush1.msra.mxu0 %v283
        %635 = vmatprep.subr.mxu0 0.0
        %636 = vmatpush1.msra.mxu0 %v284
        %637 = vmatprep.subr.mxu0 0.0
        %638 = vmatpush1.msra.mxu0 0.0
        %639 = vmatprep.subr.mxu0 0.0
        %640 = vmatpush1.msra.mxu0 0.0
        %641 = vmatprep.subr.mxu0 0.0
        %642 = vmatpush1.msra.mxu0 0.0
        %643 = vmatprep.subr.mxu0 0.0
        %644 = vmatpush1.msra.mxu0 0.0
        %645 = vmatprep.subr.mxu0 0.0
        %646 = vmatpush1.msra.mxu0 0.0
        %647 = vmatprep.subr.mxu0 0.0
        %648 = vmatpush1.msra.mxu0 0.0
        %649 = vmatprep.subr.mxu0 0.0
        %650 = vmatpush1.msra.mxu0 0.0
        %651 = vmatprep.subr.mxu0 0.0
        %652 = vmatpush1.msra.mxu0 0.0
        %653 = vmatprep.subr.mxu0 0.0
        %654 = vmatpush1.msra.mxu0 0.0
        %655 = vmatprep.subr.mxu0 0.0
        %656 = vmatpush1.msra.mxu0 0.0
        %657 = vmatprep.subr.mxu0 0.0
        %658 = vmatpush1.msra.mxu0 0.0
        %659 = vmatprep.subr.mxu0 0.0
        %660 = vmatpush1.msra.mxu0 0.0
        %661 = vmatprep.subr.mxu0 0.0
        %662 = vmatpush1.msra.mxu0 0.0
        %663 = vmatprep.subr.mxu0 0.0
        %664 = vmatpush1.msra.mxu0 0.0
        %665 = vmatprep.subr.mxu0 0.0
        %666 = vmatpush1.msra.mxu0 0.0
        %667 = vmatprep.subr.mxu0 0.0
        %668 = vmatpush1.msra.mxu0 0.0
        %669 = vmatprep.subr.mxu0 0.0
        %670 = vmatpush1.msra.mxu0 0.0
        %671 = vmatprep.subr.mxu0 0.0
        %672 = vmatpush1.msra.mxu0 0.0
        %673 = vmatprep.subr.mxu0 0.0
        %674 = vmatpush1.msra.mxu0 0.0
        %675 = vmatprep.subr.mxu0 0.0
        %676 = vmatpush1.msra.mxu0 0.0
        %677 = vmatprep.subr.mxu0 0.0
        %678 = vmatpush1.msra.mxu0 0.0
        %679 = vmatprep.subr.mxu0 0.0
        %680 = vmatpush1.msra.mxu0 0.0
        %681 = vmatprep.subr.mxu0 0.0
        %682 = vmatpush1.msra.mxu0 0.0
        %683 = vmatprep.mubr.f32.mxu0 0.0
        %684 = vmatmul.mubr.f32.gmra.mrb[0].mxu0 %v299
        %v685 = vpop.f32.mrb[0].mxu0
        %v686 = vadd.f32 %v616, %v685
        %v687 = vpop.f32.mrb[0].mxu0
        %688 = vdwg.mxu0
        %s689 = scalar_lea.vmem %s273, 3
        %v690 = vld [vmem:[%s689] sm:$0x1]
        %v692 = vsel %vm297, %v690, 0
        %694 = vmatprep.subr.mxu0 0.0
        %695 = vmatpush1.msra.mxu0 %v447
        %696 = vmatprep.subr.mxu0 0.0
        %697 = vmatpush1.msra.mxu0 %v448
        %698 = vmatprep.subr.mxu0 0.0
        %699 = vmatpush1.msra.mxu0 %v449
        %700 = vmatprep.subr.mxu0 0.0
        %701 = vmatpush1.msra.mxu0 %v450
        %702 = vmatprep.subr.mxu0 0.0
        %703 = vmatpush1.msra.mxu0 %v451
        %704 = vmatprep.subr.mxu0 0.0
        %705 = vmatpush1.msra.mxu0 %v452
        %706 = vmatprep.subr.mxu0 0.0
        %707 = vmatpush1.msra.mxu0 %v453
        %708 = vmatprep.subr.mxu0 0.0
        %709 = vmatpush1.msra.mxu0 %v454
        %710 = vmatprep.subr.mxu0 0.0
        %711 = vmatpush1.msra.mxu0 %v455
        %712 = vmatprep.subr.mxu0 0.0
        %713 = vmatpush1.msra.mxu0 0.0
        %714 = vmatprep.subr.mxu0 0.0
        %715 = vmatpush1.msra.mxu0 0.0
        %716 = vmatprep.subr.mxu0 0.0
        %717 = vmatpush1.msra.mxu0 0.0
        %718 = vmatprep.subr.mxu0 0.0
        %719 = vmatpush1.msra.mxu0 0.0
        %720 = vmatprep.subr.mxu0 0.0
        %721 = vmatpush1.msra.mxu0 0.0
        %722 = vmatprep.subr.mxu0 0.0
        %723 = vmatpush1.msra.mxu0 0.0
        %724 = vmatprep.subr.mxu0 0.0
        %725 = vmatpush1.msra.mxu0 0.0
        %726 = vmatprep.subr.mxu0 0.0
        %727 = vmatpush1.msra.mxu0 0.0
        %728 = vmatprep.subr.mxu0 0.0
        %729 = vmatpush1.msra.mxu0 0.0
        %730 = vmatprep.subr.mxu0 0.0
        %731 = vmatpush1.msra.mxu0 0.0
        %732 = vmatprep.subr.mxu0 0.0
        %733 = vmatpush1.msra.mxu0 0.0
        %734 = vmatprep.subr.mxu0 0.0
        %735 = vmatpush1.msra.mxu0 0.0
        %736 = vmatprep.subr.mxu0 0.0
        %737 = vmatpush1.msra.mxu0 0.0
        %738 = vmatprep.subr.mxu0 0.0
        %739 = vmatpush1.msra.mxu0 0.0
        %740 = vmatprep.subr.mxu0 0.0
        %741 = vmatpush1.msra.mxu0 0.0
        %742 = vmatprep.subr.mxu0 0.0
        %743 = vmatpush1.msra.mxu0 0.0
        %744 = vmatprep.subr.mxu0 0.0
        %745 = vmatpush1.msra.mxu0 0.0
        %746 = vmatprep.subr.mxu0 0.0
        %747 = vmatpush1.msra.mxu0 0.0
        %748 = vmatprep.subr.mxu0 0.0
        %749 = vmatpush1.msra.mxu0 0.0
        %750 = vmatprep.subr.mxu0 0.0
        %751 = vmatpush1.msra.mxu0 0.0
        %752 = vmatprep.subr.mxu0 0.0
        %753 = vmatpush1.msra.mxu0 0.0
        %754 = vmatprep.subr.mxu0 0.0
        %755 = vmatpush1.msra.mxu0 0.0
        %756 = vmatprep.subr.mxu0 0.0
        %757 = vmatpush1.msra.mxu0 0.0
        %758 = vmatprep.mubr.f32.mxu0 0.0
        %759 = vmatmul.mubr.f32.gmra.mrb[0].mxu0 %v692
        %v760 = vpop.f32.mrb[0].mxu0
        %v761 = vadd.f32 0.0, %v760
        %v762 = vpop.f32.mrb[0].mxu0
        %763 = vdwg.mxu0
        %v764 = vadd.f32 %v686, %v761
        %v765 = vadd.f32 %v764, %v530
        %v766 = vmax.f32 %v765, 0.0
        %s767 = scalar_lea.vmem %s3, 128
        %v768 = vld [vmem:[%s767] sm:$0xff]
        %v769 = vld [vmem:[%s767 + $0x8] sm:$0xff]
        %v770 = vld [vmem:[%s767 + $0x10] sm:$0xff]
        %v771 = vld [vmem:[%s767 + $0x18] sm:$0xff]
        %v772 = vld [vmem:[%s767 + $0x20] sm:$0xff]
        %v773 = vld [vmem:[%s767 + $0x28] sm:$0xff]
        %v774 = vld [vmem:[%s767 + $0x30] sm:$0xff]
        %v775 = vld [vmem:[%s767 + $0x38] sm:$0xff]
        %v776 = vld [vmem:[%s767 + $0x40] sm:$0xff]
        %v777 = vld [vmem:[%s767 + $0x48] sm:$0xff]
        %v778 = vld [vmem:[%s767 + $0x50] sm:$0xff]
        %v779 = vld [vmem:[%s767 + $0x58] sm:$0xff]
        %v780 = vld [vmem:[%s767 + $0x60] sm:$0xff]
        %v781 = vld [vmem:[%s767 + $0x68] sm:$0xff]
        %v782 = vld [vmem:[%s767 + $0x70] sm:$0xff]
        %v783 = vld [vmem:[%s767 + $0x78] sm:$0xff]
        %784 = vmatprep.subr.mxu0 0.0
        %785 = vmatpush1.msra.mxu0 %v768
        %786 = vmatprep.subr.mxu0 0.0
        %787 = vmatpush1.msra.mxu0 %v769
        %788 = vmatprep.subr.mxu0 0.0
        %789 = vmatpush1.msra.mxu0 %v770
        %790 = vmatprep.subr.mxu0 0.0
        %791 = vmatpush1.msra.mxu0 %v771
        %792 = vmatprep.subr.mxu0 0.0
        %793 = vmatpush1.msra.mxu0 %v772
        %794 = vmatprep.subr.mxu0 0.0
        %795 = vmatpush1.msra.mxu0 %v773
        %796 = vmatprep.subr.mxu0 0.0
        %797 = vmatpush1.msra.mxu0 %v774
        %798 = vmatprep.subr.mxu0 0.0
        %799 = vmatpush1.msra.mxu0 %v775
        %800 = vmatprep.subr.mxu0 0.0
        %801 = vmatpush1.msra.mxu0 %v776
        %802 = vmatprep.subr.mxu0 0.0
        %803 = vmatpush1.msra.mxu0 %v777
        %804 = vmatprep.subr.mxu0 0.0
        %805 = vmatpush1.msra.mxu0 %v778
        %806 = vmatprep.subr.mxu0 0.0
        %807 = vmatpush1.msra.mxu0 %v779
        %808 = vmatprep.subr.mxu0 0.0
        %809 = vmatpush1.msra.mxu0 %v780
        %810 = vmatprep.subr.mxu0 0.0
        %811 = vmatpush1.msra.mxu0 %v781
        %812 = vmatprep.subr.mxu0 0.0
        %813 = vmatpush1.msra.mxu0 %v782
        %814 = vmatprep.subr.mxu0 0.0
        %815 = vmatpush1.msra.mxu0 %v783
        %816 = vmatprep.subr.mxu0 0.0
        %817 = vmatpush1.msra.mxu0 0.0
        %818 = vmatprep.subr.mxu0 0.0
        %819 = vmatpush1.msra.mxu0 0.0
        %820 = vmatprep.subr.mxu0 0.0
        %821 = vmatpush1.msra.mxu0 0.0
        %822 = vmatprep.subr.mxu0 0.0
        %823 = vmatpush1.msra.mxu0 0.0
        %824 = vmatprep.subr.mxu0 0.0
        %825 = vmatpush1.msra.mxu0 0.0
        %826 = vmatprep.subr.mxu0 0.0
        %827 = vmatpush1.msra.mxu0 0.0
        %828 = vmatprep.subr.mxu0 0.0
        %829 = vmatpush1.msra.mxu0 0.0
        %830 = vmatprep.subr.mxu0 0.0
        %831 = vmatpush1.msra.mxu0 0.0
        %832 = vmatprep.subr.mxu0 0.0
        %833 = vmatpush1.msra.mxu0 0.0
        %834 = vmatprep.subr.mxu0 0.0
        %835 = vmatpush1.msra.mxu0 0.0
        %836 = vmatprep.subr.mxu0 0.0
        %837 = vmatpush1.msra.mxu0 0.0
        %838 = vmatprep.subr.mxu0 0.0
        %839 = vmatpush1.msra.mxu0 0.0
        %840 = vmatprep.subr.mxu0 0.0
        %841 = vmatpush1.msra.mxu0 0.0
        %842 = vmatprep.subr.mxu0 0.0
        %843 = vmatpush1.msra.mxu0 0.0
        %844 = vmatprep.subr.mxu0 0.0
        %845 = vmatpush1.msra.mxu0 0.0
        %846 = vmatprep.subr.mxu0 0.0
        %847 = vmatpush1.msra.mxu0 0.0
        %848 = vmatprep.mubr.f32.mxu0 0.0
        %849 = vmatmul.mubr.f32.gmra.mrb[0].mxu0 %v766
        %v850 = vpop.f32.mrb[0].mxu0
        %v851 = vadd.f32 0.0, %v850
        %v852 = vpop.f32.mrb[0].mxu0
        %853 = vdwg.mxu0
        %854 = vmatprep.subr.mxu0 0.0
        %855 = vmatpush1.msra.mxu0 %v533
        %856 = vmatprep.subr.mxu0 0.0
        %857 = vmatpush1.msra.mxu0 %v534
        %858 = vmatprep.subr.mxu0 0.0
        %859 = vmatpush1.msra.mxu0 %v535
        %860 = vmatprep.subr.mxu0 0.0
        %861 = vmatpush1.msra.mxu0 %v536
        %862 = vmatprep.subr.mxu0 0.0
        %863 = vmatpush1.msra.mxu0 %v537
        %864 = vmatprep.subr.mxu0 0.0
        %865 = vmatpush1.msra.mxu0 %v538
        %866 = vmatprep.subr.mxu0 0.0
        %867 = vmatpush1.msra.mxu0 %v539
        %868 = vmatprep.subr.mxu0 0.0
        %869 = vmatpush1.msra.mxu0 %v540
        %870 = vmatprep.subr.mxu0 0.0
        %871 = vmatpush1.msra.mxu0 %v541
        %872 = vmatprep.subr.mxu0 0.0
        %873 = vmatpush1.msra.mxu0 %v542
        %874 = vmatprep.subr.mxu0 0.0
        %875 = vmatpush1.msra.mxu0 %v543
        %876 = vmatprep.subr.mxu0 0.0
        %877 = vmatpush1.msra.mxu0 %v544
        %878 = vmatprep.subr.mxu0 0.0
        %879 = vmatpush1.msra.mxu0 %v545
        %880 = vmatprep.subr.mxu0 0.0
        %881 = vmatpush1.msra.mxu0 %v546
        %882 = vmatprep.subr.mxu0 0.0
        %883 = vmatpush1.msra.mxu0 %v547
        %884 = vmatprep.subr.mxu0 0.0
        %885 = vmatpush1.msra.mxu0 %v548
        %886 = vmatprep.subr.mxu0 0.0
        %887 = vmatpush1.msra.mxu0 0.0
        %888 = vmatprep.subr.mxu0 0.0
        %889 = vmatpush1.msra.mxu0 0.0
        %890 = vmatprep.subr.mxu0 0.0
        %891 = vmatpush1.msra.mxu0 0.0
        %892 = vmatprep.subr.mxu0 0.0
        %893 = vmatpush1.msra.mxu0 0.0
        %894 = vmatprep.subr.mxu0 0.0
        %895 = vmatpush1.msra.mxu0 0.0
        %896 = vmatprep.subr.mxu0 0.0
        %897 = vmatpush1.msra.mxu0 0.0
        %898 = vmatprep.subr.mxu0 0.0
        %899 = vmatpush1.msra.mxu0 0.0
        %900 = vmatprep.subr.mxu0 0.0
        %901 = vmatpush1.msra.mxu0 0.0
        %902 = vmatprep.subr.mxu0 0.0
        %903 = vmatpush1.msra.mxu0 0.0
        %904 = vmatprep.subr.mxu0 0.0
        %905 = vmatpush1.msra.mxu0 0.0
        %906 = vmatprep.subr.mxu0 0.0
        %907 = vmatpush1.msra.mxu0 0.0
        %908 = vmatprep.subr.mxu0 0.0
        %909 = vmatpush1.msra.mxu0 0.0
        %910 = vmatprep.subr.mxu0 0.0
        %911 = vmatpush1.msra.mxu0 0.0
        %912 = vmatprep.subr.mxu0 0.0
        %913 = vmatpush1.msra.mxu0 0.0
        %914 = vmatprep.subr.mxu0 0.0
        %915 = vmatpush1.msra.mxu0 0.0
        %916 = vmatprep.subr.mxu0 0.0
        %917 = vmatpush1.msra.mxu0 0.0
        %918 = vmatprep.mubr.f32.mxu0 0.0
        %919 = vmatmul.mubr.f32.gmra.mrb[0].mxu0 %v532
        %v920 = vpop.f32.mrb[0].mxu0
        %v921 = vadd.f32 %v851, %v920
        %v922 = vpop.f32.mrb[0].mxu0
        %923 = vdwg.mxu0
        %924 = vmatprep.subr.mxu0 0.0
        %925 = vmatpush1.msra.mxu0 %v288
        %926 = vmatprep.subr.mxu0 0.0
        %927 = vmatpush1.msra.mxu0 %v289
        %928 = vmatprep.subr.mxu0 0.0
        %929 = vmatpush1.msra.mxu0 %v290
        %930 = vmatprep.subr.mxu0 0.0
        %931 = vmatpush1.msra.mxu0 %v291
        %932 = vmatprep.subr.mxu0 0.0
        %933 = vmatpush1.msra.mxu0 %v292
        %934 = vmatprep.subr.mxu0 0.0
        %935 = vmatpush1.msra.mxu0 %v293
        %936 = vmatprep.subr.mxu0 0.0
        %937 = vmatpush1.msra.mxu0 %v294
        %938 = vmatprep.subr.mxu0 0.0
        %939 = vmatpush1.msra.mxu0 %v295
        %940 = vmatprep.subr.mxu0 0.0
        %941 = vmatpush1.msra.mxu0 %v296
        %942 = vmatprep.subr.mxu0 0.0
        %943 = vmatpush1.msra.mxu0 0.0
        %944 = vmatprep.subr.mxu0 0.0
        %945 = vmatpush1.msra.mxu0 0.0
        %946 = vmatprep.subr.mxu0 0.0
        %947 = vmatpush1.msra.mxu0 0.0
        %948 = vmatprep.subr.mxu0 0.0
        %949 = vmatpush1.msra.mxu0 0.0
        %950 = vmatprep.subr.mxu0 0.0
        %951 = vmatpush1.msra.mxu0 0.0
        %952 = vmatprep.subr.mxu0 0.0
        %953 = vmatpush1.msra.mxu0 0.0
        %954 = vmatprep.subr.mxu0 0.0
        %955 = vmatpush1.msra.mxu0 0.0
        %956 = vmatprep.subr.mxu0 0.0
        %957 = vmatpush1.msra.mxu0 0.0
        %958 = vmatprep.subr.mxu0 0.0
        %959 = vmatpush1.msra.mxu0 0.0
        %960 = vmatprep.subr.mxu0 0.0
        %961 = vmatpush1.msra.mxu0 0.0
        %962 = vmatprep.subr.mxu0 0.0
        %963 = vmatpush1.msra.mxu0 0.0
        %964 = vmatprep.subr.mxu0 0.0
        %965 = vmatpush1.msra.mxu0 0.0
        %966 = vmatprep.subr.mxu0 0.0
        %967 = vmatpush1.msra.mxu0 0.0
        %968 = vmatprep.subr.mxu0 0.0
        %969 = vmatpush1.msra.mxu0 0.0
        %970 = vmatprep.subr.mxu0 0.0
        %971 = vmatpush1.msra.mxu0 0.0
        %972 = vmatprep.subr.mxu0 0.0
        %973 = vmatpush1.msra.mxu0 0.0
        %974 = vmatprep.subr.mxu0 0.0
        %975 = vmatpush1.msra.mxu0 0.0
        %976 = vmatprep.subr.mxu0 0.0
        %977 = vmatpush1.msra.mxu0 0.0
        %978 = vmatprep.subr.mxu0 0.0
        %979 = vmatpush1.msra.mxu0 0.0
        %980 = vmatprep.subr.mxu0 0.0
        %981 = vmatpush1.msra.mxu0 0.0
        %982 = vmatprep.subr.mxu0 0.0
        %983 = vmatpush1.msra.mxu0 0.0
        %984 = vmatprep.subr.mxu0 0.0
        %985 = vmatpush1.msra.mxu0 0.0
        %986 = vmatprep.subr.mxu0 0.0
        %987 = vmatpush1.msra.mxu0 0.0
        %988 = vmatprep.mubr.f32.mxu0 0.0
        %989 = vmatmul.mubr.f32.gmra.mrb[0].mxu0 %v692
        %v990 = vpop.f32.mrb[0].mxu0
        %v991 = vadd.f32 0.0, %v990
        %v992 = vpop.f32.mrb[0].mxu0
        %993 = vdwg.mxu0
        %994 = vmatprep.subr.mxu0 0.0
        %995 = vmatpush1.msra.mxu0 %v276
        %996 = vmatprep.subr.mxu0 0.0
        %997 = vmatpush1.msra.mxu0 %v277
        %998 = vmatprep.subr.mxu0 0.0
        %999 = vmatpush1.msra.mxu0 %v278
        %1000 = vmatprep.subr.mxu0 0.0
        %1001 = vmatpush1.msra.mxu0 %v279
        %1002 = vmatprep.subr.mxu0 0.0
        %1003 = vmatpush1.msra.mxu0 %v280
        %1004 = vmatprep.subr.mxu0 0.0
        %1005 = vmatpush1.msra.mxu0 %v281
        %1006 = vmatprep.subr.mxu0 0.0
        %1007 = vmatpush1.msra.mxu0 %v282
        %1008 = vmatprep.subr.mxu0 0.0
        %1009 = vmatpush1.msra.mxu0 %v283
        %1010 = vmatprep.subr.mxu0 0.0
        %1011 = vmatpush1.msra.mxu0 %v284
        %1012 = vmatprep.subr.mxu0 0.0
        %1013 = vmatpush1.msra.mxu0 0.0
        %1014 = vmatprep.subr.mxu0 0.0
        %1015 = vmatpush1.msra.mxu0 0.0
        %1016 = vmatprep.subr.mxu0 0.0
        %1017 = vmatpush1.msra.mxu0 0.0
        %1018 = vmatprep.subr.mxu0 0.0
        %1019 = vmatpush1.msra.mxu0 0.0
        %1020 = vmatprep.subr.mxu0 0.0
        %1021 = vmatpush1.msra.mxu0 0.0
        %1022 = vmatprep.subr.mxu0 0.0
        %1023 = vmatpush1.msra.mxu0 0.0
        %1024 = vmatprep.subr.mxu0 0.0
        %1025 = vmatpush1.msra.mxu0 0.0
        %1026 = vmatprep.subr.mxu0 0.0
        %1027 = vmatpush1.msra.mxu0 0.0
        %1028 = vmatprep.subr.mxu0 0.0
        %1029 = vmatpush1.msra.mxu0 0.0
        %1030 = vmatprep.subr.mxu0 0.0
        %1031 = vmatpush1.msra.mxu0 0.0
        %1032 = vmatprep.subr.mxu0 0.0
        %1033 = vmatpush1.msra.mxu0 0.0
        %1034 = vmatprep.subr.mxu0 0.0
        %1035 = vmatpush1.msra.mxu0 0.0
        %1036 = vmatprep.subr.mxu0 0.0
        %1037 = vmatpush1.msra.mxu0 0.0
        %1038 = vmatprep.subr.mxu0 0.0
        %1039 = vmatpush1.msra.mxu0 0.0
        %1040 = vmatprep.subr.mxu0 0.0
        %1041 = vmatpush1.msra.mxu0 0.0
        %1042 = vmatprep.subr.mxu0 0.0
        %1043 = vmatpush1.msra.mxu0 0.0
        %1044 = vmatprep.subr.mxu0 0.0
        %1045 = vmatpush1.msra.mxu0 0.0
        %1046 = vmatprep.subr.mxu0 0.0
        %1047 = vmatpush1.msra.mxu0 0.0
        %1048 = vmatprep.subr.mxu0 0.0
        %1049 = vmatpush1.msra.mxu0 0.0
        %1050 = vmatprep.subr.mxu0 0.0
        %1051 = vmatpush1.msra.mxu0 0.0
        %1052 = vmatprep.subr.mxu0 0.0
        %1053 = vmatpush1.msra.mxu0 0.0
        %1054 = vmatprep.subr.mxu0 0.0
        %1055 = vmatpush1.msra.mxu0 0.0
        %1056 = vmatprep.subr.mxu0 0.0
        %1057 = vmatpush1.msra.mxu0 0.0
        %1058 = vmatprep.mubr.f32.mxu0 0.0
        %1059 = vmatmul.mubr.f32.gmra.mrb[0].mxu0 %v457
        %v1060 = vpop.f32.mrb[0].mxu0
        %v1061 = vadd.f32 %v991, %v1060
        %v1062 = vpop.f32.mrb[0].mxu0
        %1063 = vdwg.mxu0
        %s1064 = scalar_lea.vmem %s273, 4
        %v1065 = vld [vmem:[%s1064] sm:$0x1]
        %v1067 = vsel %vm297, %v1065, 0
        %1069 = vmatprep.subr.mxu0 0.0
        %1070 = vmatpush1.msra.mxu0 %v447
        %1071 = vmatprep.subr.mxu0 0.0
        %1072 = vmatpush1.msra.mxu0 %v448
        %1073 = vmatprep.subr.mxu0 0.0
        %1074 = vmatpush1.msra.mxu0 %v449
        %1075 = vmatprep.subr.mxu0 0.0
        %1076 = vmatpush1.msra.mxu0 %v450
        %1077 = vmatprep.subr.mxu0 0.0
        %1078 = vmatpush1.msra.mxu0 %v451
        %1079 = vmatprep.subr.mxu0 0.0
        %1080 = vmatpush1.msra.mxu0 %v452
        %1081 = vmatprep.subr.mxu0 0.0
        %1082 = vmatpush1.msra.mxu0 %v453
        %1083 = vmatprep.subr.mxu0 0.0
        %1084 = vmatpush1.msra.mxu0 %v454
        %1085 = vmatprep.subr.mxu0 0.0
        %1086 = vmatpush1.msra.mxu0 %v455
        %1087 = vmatprep.subr.mxu0 0.0
        %1088 = vmatpush1.msra.mxu0 0.0
        %1089 = vmatprep.subr.mxu0 0.0
        %1090 = vmatpush1.msra.mxu0 0.0
        %1091 = vmatprep.subr.mxu0 0.0
        %1092 = vmatpush1.msra.mxu0 0.0
        %1093 = vmatprep.subr.mxu0 0.0
        %1094 = vmatpush1.msra.mxu0 0.0
        %1095 = vmatprep.subr.mxu0 0.0
        %1096 = vmatpush1.msra.mxu0 0.0
        %1097 = vmatprep.subr.mxu0 0.0
        %1098 = vmatpush1.msra.mxu0 0.0
        %1099 = vmatprep.subr.mxu0 0.0
        %1100 = vmatpush1.msra.mxu0 0.0
        %1101 = vmatprep.subr.mxu0 0.0
        %1102 = vmatpush1.msra.mxu0 0.0
        %1103 = vmatprep.subr.mxu0 0.0
        %1104 = vmatpush1.msra.mxu0 0.0
        %1105 = vmatprep.subr.mxu0 0.0
        %1106 = vmatpush1.msra.mxu0 0.0
        %1107 = vmatprep.subr.mxu0 0.0
        %1108 = vmatpush1.msra.mxu0 0.0
        %1109 = vmatprep.subr.mxu0 0.0
        %1110 = vmatpush1.msra.mxu0 0.0
        %1111 = vmatprep.subr.mxu0 0.0
        %1112 = vmatpush1.msra.mxu0 0.0
        %1113 = vmatprep.subr.mxu0 0.0
        %1114 = vmatpush1.msra.mxu0 0.0
        %1115 = vmatprep.subr.mxu0 0.0
        %1116 = vmatpush1.msra.mxu0 0.0
        %1117 = vmatprep.subr.mxu0 0.0
        %1118 = vmatpush1.msra.mxu0 0.0
        %1119 = vmatprep.subr.mxu0 0.0
        %1120 = vmatpush1.msra.mxu0 0.0
        %1121 = vmatprep.subr.mxu0 0.0
        %1122 = vmatpush1.msra.mxu0 0.0
        %1123 = vmatprep.subr.mxu0 0.0
        %1124 = vmatpush1.msra.mxu0 0.0
        %1125 = vmatprep.subr.mxu0 0.0
        %1126 = vmatpush1.msra.mxu0 0.0
        %1127 = vmatprep.subr.mxu0 0.0
        %1128 = vmatpush1.msra.mxu0 0.0
        %1129 = vmatprep.subr.mxu0 0.0
        %1130 = vmatpush1.msra.mxu0 0.0
        %1131 = vmatprep.subr.mxu0 0.0
        %1132 = vmatpush1.msra.mxu0 0.0
        %1133 = vmatprep.mubr.f32.mxu0 0.0
        %1134 = vmatmul.mubr.f32.gmra.mrb[0].mxu0 %v1067
        %v1135 = vpop.f32.mrb[0].mxu0
        %v1136 = vadd.f32 0.0, %v1135
        %v1137 = vpop.f32.mrb[0].mxu0
        %1138 = vdwg.mxu0
        %v1139 = vadd.f32 %v1061, %v1136
        %v1140 = vadd.f32 %v1139, %v530
        %v1141 = vmax.f32 %v1140, 0.0
        %s1142 = scalar_lea.vmem %s3, 256
        %v1143 = vld [vmem:[%s1142] sm:$0xff]
        %v1144 = vld [vmem:[%s1142 + $0x8] sm:$0xff]
        %v1145 = vld [vmem:[%s1142 + $0x10] sm:$0xff]
        %v1146 = vld [vmem:[%s1142 + $0x18] sm:$0xff]
        %v1147 = vld [vmem:[%s1142 + $0x20] sm:$0xff]
        %v1148 = vld [vmem:[%s1142 + $0x28] sm:$0xff]
        %v1149 = vld [vmem:[%s1142 + $0x30] sm:$0xff]
        %v1150 = vld [vmem:[%s1142 + $0x38] sm:$0xff]
        %v1151 = vld [vmem:[%s1142 + $0x40] sm:$0xff]
        %v1152 = vld [vmem:[%s1142 + $0x48] sm:$0xff]
        %v1153 = vld [vmem:[%s1142 + $0x50] sm:$0xff]
        %v1154 = vld [vmem:[%s1142 + $0x58] sm:$0xff]
        %v1155 = vld [vmem:[%s1142 + $0x60] sm:$0xff]
        %v1156 = vld [vmem:[%s1142 + $0x68] sm:$0xff]
        %v1157 = vld [vmem:[%s1142 + $0x70] sm:$0xff]
        %v1158 = vld [vmem:[%s1142 + $0x78] sm:$0xff]
        %1159 = vmatprep.subr.mxu0 0.0
        %1160 = vmatpush1.msra.mxu0 %v1143
        %1161 = vmatprep.subr.mxu0 0.0
        %1162 = vmatpush1.msra.mxu0 %v1144
        %1163 = vmatprep.subr.mxu0 0.0
        %1164 = vmatpush1.msra.mxu0 %v1145
        %1165 = vmatprep.subr.mxu0 0.0
        %1166 = vmatpush1.msra.mxu0 %v1146
        %1167 = vmatprep.subr.mxu0 0.0
        %1168 = vmatpush1.msra.mxu0 %v1147
        %1169 = vmatprep.subr.mxu0 0.0
        %1170 = vmatpush1.msra.mxu0 %v1148
        %1171 = vmatprep.subr.mxu0 0.0
        %1172 = vmatpush1.msra.mxu0 %v1149
        %1173 = vmatprep.subr.mxu0 0.0
        %1174 = vmatpush1.msra.mxu0 %v1150
        %1175 = vmatprep.subr.mxu0 0.0
        %1176 = vmatpush1.msra.mxu0 %v1151
        %1177 = vmatprep.subr.mxu0 0.0
        %1178 = vmatpush1.msra.mxu0 %v1152
        %1179 = vmatprep.subr.mxu0 0.0
        %1180 = vmatpush1.msra.mxu0 %v1153
        %1181 = vmatprep.subr.mxu0 0.0
        %1182 = vmatpush1.msra.mxu0 %v1154
        %1183 = vmatprep.subr.mxu0 0.0
        %1184 = vmatpush1.msra.mxu0 %v1155
        %1185 = vmatprep.subr.mxu0 0.0
        %1186 = vmatpush1.msra.mxu0 %v1156
        %1187 = vmatprep.subr.mxu0 0.0
        %1188 = vmatpush1.msra.mxu0 %v1157
        %1189 = vmatprep.subr.mxu0 0.0
        %1190 = vmatpush1.msra.mxu0 %v1158
        %1191 = vmatprep.subr.mxu0 0.0
        %1192 = vmatpush1.msra.mxu0 0.0
        %1193 = vmatprep.subr.mxu0 0.0
        %1194 = vmatpush1.msra.mxu0 0.0
        %1195 = vmatprep.subr.mxu0 0.0
        %1196 = vmatpush1.msra.mxu0 0.0
        %1197 = vmatprep.subr.mxu0 0.0
        %1198 = vmatpush1.msra.mxu0 0.0
        %1199 = vmatprep.subr.mxu0 0.0
        %1200 = vmatpush1.msra.mxu0 0.0
        %1201 = vmatprep.subr.mxu0 0.0
        %1202 = vmatpush1.msra.mxu0 0.0
        %1203 = vmatprep.subr.mxu0 0.0
        %1204 = vmatpush1.msra.mxu0 0.0
        %1205 = vmatprep.subr.mxu0 0.0
        %1206 = vmatpush1.msra.mxu0 0.0
        %1207 = vmatprep.subr.mxu0 0.0
        %1208 = vmatpush1.msra.mxu0 0.0
        %1209 = vmatprep.subr.mxu0 0.0
        %1210 = vmatpush1.msra.mxu0 0.0
        %1211 = vmatprep.subr.mxu0 0.0
        %1212 = vmatpush1.msra.mxu0 0.0
        %1213 = vmatprep.subr.mxu0 0.0
        %1214 = vmatpush1.msra.mxu0 0.0
        %1215 = vmatprep.subr.mxu0 0.0
        %1216 = vmatpush1.msra.mxu0 0.0
        %1217 = vmatprep.subr.mxu0 0.0
        %1218 = vmatpush1.msra.mxu0 0.0
        %1219 = vmatprep.subr.mxu0 0.0
        %1220 = vmatpush1.msra.mxu0 0.0
        %1221 = vmatprep.subr.mxu0 0.0
        %1222 = vmatpush1.msra.mxu0 0.0
        %1223 = vmatprep.mubr.f32.mxu0 0.0
        %1224 = vmatmul.mubr.f32.gmra.mrb[0].mxu0 %v1141
        %v1225 = vpop.f32.mrb[0].mxu0
        %v1226 = vadd.f32 0.0, %v1225
        %v1227 = vpop.f32.mrb[0].mxu0
        %1228 = vdwg.mxu0
        %v1229 = vadd.f32 %v921, %v1226
        %1230 = vmatprep.subr.mxu0 0.0
        %1231 = vmatpush1.msra.mxu0 %v288
        %1232 = vmatprep.subr.mxu0 0.0
        %1233 = vmatpush1.msra.mxu0 %v289
        %1234 = vmatprep.subr.mxu0 0.0
        %1235 = vmatpush1.msra.mxu0 %v290
        %1236 = vmatprep.subr.mxu0 0.0
        %1237 = vmatpush1.msra.mxu0 %v291
        %1238 = vmatprep.subr.mxu0 0.0
        %1239 = vmatpush1.msra.mxu0 %v292
        %1240 = vmatprep.subr.mxu0 0.0
        %1241 = vmatpush1.msra.mxu0 %v293
        %1242 = vmatprep.subr.mxu0 0.0
        %1243 = vmatpush1.msra.mxu0 %v294
        %1244 = vmatprep.subr.mxu0 0.0
        %1245 = vmatpush1.msra.mxu0 %v295
        %1246 = vmatprep.subr.mxu0 0.0
        %1247 = vmatpush1.msra.mxu0 %v296
        %1248 = vmatprep.subr.mxu0 0.0
        %1249 = vmatpush1.msra.mxu0 0.0
        %1250 = vmatprep.subr.mxu0 0.0
        %1251 = vmatpush1.msra.mxu0 0.0
        %1252 = vmatprep.subr.mxu0 0.0
        %1253 = vmatpush1.msra.mxu0 0.0
        %1254 = vmatprep.subr.mxu0 0.0
        %1255 = vmatpush1.msra.mxu0 0.0
        %1256 = vmatprep.subr.mxu0 0.0
        %1257 = vmatpush1.msra.mxu0 0.0
        %1258 = vmatprep.subr.mxu0 0.0
        %1259 = vmatpush1.msra.mxu0 0.0
        %1260 = vmatprep.subr.mxu0 0.0
        %1261 = vmatpush1.msra.mxu0 0.0
        %1262 = vmatprep.subr.mxu0 0.0
        %1263 = vmatpush1.msra.mxu0 0.0
        %1264 = vmatprep.subr.mxu0 0.0
        %1265 = vmatpush1.msra.mxu0 0.0
        %1266 = vmatprep.subr.mxu0 0.0
        %1267 = vmatpush1.msra.mxu0 0.0
        %1268 = vmatprep.subr.mxu0 0.0
        %1269 = vmatpush1.msra.mxu0 0.0
        %1270 = vmatprep.subr.mxu0 0.0
        %1271 = vmatpush1.msra.mxu0 0.0
        %1272 = vmatprep.subr.mxu0 0.0
        %1273 = vmatpush1.msra.mxu0 0.0
        %1274 = vmatprep.subr.mxu0 0.0
        %1275 = vmatpush1.msra.mxu0 0.0
        %1276 = vmatprep.subr.mxu0 0.0
        %1277 = vmatpush1.msra.mxu0 0.0
        %1278 = vmatprep.subr.mxu0 0.0
        %1279 = vmatpush1.msra.mxu0 0.0
        %1280 = vmatprep.subr.mxu0 0.0
        %1281 = vmatpush1.msra.mxu0 0.0
        %1282 = vmatprep.subr.mxu0 0.0
        %1283 = vmatpush1.msra.mxu0 0.0
        %1284 = vmatprep.subr.mxu0 0.0
        %1285 = vmatpush1.msra.mxu0 0.0
        %1286 = vmatprep.subr.mxu0 0.0
        %1287 = vmatpush1.msra.mxu0 0.0
        %1288 = vmatprep.subr.mxu0 0.0
        %1289 = vmatpush1.msra.mxu0 0.0
        %1290 = vmatprep.subr.mxu0 0.0
        %1291 = vmatpush1.msra.mxu0 0.0
        %1292 = vmatprep.subr.mxu0 0.0
        %1293 = vmatpush1.msra.mxu0 0.0
        %1294 = vmatprep.mubr.f32.mxu0 0.0
        %1295 = vmatmul.mubr.f32.gmra.mrb[0].mxu0 %v1067
        %v1296 = vpop.f32.mrb[0].mxu0
        %v1297 = vadd.f32 0.0, %v1296
        %v1298 = vpop.f32.mrb[0].mxu0
        %1299 = vdwg.mxu0
        %1300 = vmatprep.subr.mxu0 0.0
        %1301 = vmatpush1.msra.mxu0 %v276
        %1302 = vmatprep.subr.mxu0 0.0
        %1303 = vmatpush1.msra.mxu0 %v277
        %1304 = vmatprep.subr.mxu0 0.0
        %1305 = vmatpush1.msra.mxu0 %v278
        %1306 = vmatprep.subr.mxu0 0.0
        %1307 = vmatpush1.msra.mxu0 %v279
        %1308 = vmatprep.subr.mxu0 0.0
        %1309 = vmatpush1.msra.mxu0 %v280
        %1310 = vmatprep.subr.mxu0 0.0
        %1311 = vmatpush1.msra.mxu0 %v281
        %1312 = vmatprep.subr.mxu0 0.0
        %1313 = vmatpush1.msra.mxu0 %v282
        %1314 = vmatprep.subr.mxu0 0.0
        %1315 = vmatpush1.msra.mxu0 %v283
        %1316 = vmatprep.subr.mxu0 0.0
        %1317 = vmatpush1.msra.mxu0 %v284
        %1318 = vmatprep.subr.mxu0 0.0
        %1319 = vmatpush1.msra.mxu0 0.0
        %1320 = vmatprep.subr.mxu0 0.0
        %1321 = vmatpush1.msra.mxu0 0.0
        %1322 = vmatprep.subr.mxu0 0.0
        %1323 = vmatpush1.msra.mxu0 0.0
        %1324 = vmatprep.subr.mxu0 0.0
        %1325 = vmatpush1.msra.mxu0 0.0
        %1326 = vmatprep.subr.mxu0 0.0
        %1327 = vmatpush1.msra.mxu0 0.0
        %1328 = vmatprep.subr.mxu0 0.0
        %1329 = vmatpush1.msra.mxu0 0.0
        %1330 = vmatprep.subr.mxu0 0.0
        %1331 = vmatpush1.msra.mxu0 0.0
        %1332 = vmatprep.subr.mxu0 0.0
        %1333 = vmatpush1.msra.mxu0 0.0
        %1334 = vmatprep.subr.mxu0 0.0
        %1335 = vmatpush1.msra.mxu0 0.0
        %1336 = vmatprep.subr.mxu0 0.0
        %1337 = vmatpush1.msra.mxu0 0.0
        %1338 = vmatprep.subr.mxu0 0.0
        %1339 = vmatpush1.msra.mxu0 0.0
        %1340 = vmatprep.subr.mxu0 0.0
        %1341 = vmatpush1.msra.mxu0 0.0
        %1342 = vmatprep.subr.mxu0 0.0
        %1343 = vmatpush1.msra.mxu0 0.0
        %1344 = vmatprep.subr.mxu0 0.0
        %1345 = vmatpush1.msra.mxu0 0.0
        %1346 = vmatprep.subr.mxu0 0.0
        %1347 = vmatpush1.msra.mxu0 0.0
        %1348 = vmatprep.subr.mxu0 0.0
        %1349 = vmatpush1.msra.mxu0 0.0
        %1350 = vmatprep.subr.mxu0 0.0
        %1351 = vmatpush1.msra.mxu0 0.0
        %1352 = vmatprep.subr.mxu0 0.0
        %1353 = vmatpush1.msra.mxu0 0.0
        %1354 = vmatprep.subr.mxu0 0.0
        %1355 = vmatpush1.msra.mxu0 0.0
        %1356 = vmatprep.subr.mxu0 0.0
        %1357 = vmatpush1.msra.mxu0 0.0
        %1358 = vmatprep.subr.mxu0 0.0
        %1359 = vmatpush1.msra.mxu0 0.0
        %1360 = vmatprep.subr.mxu0 0.0
        %1361 = vmatpush1.msra.mxu0 0.0
        %1362 = vmatprep.subr.mxu0 0.0
        %1363 = vmatpush1.msra.mxu0 0.0
        %1364 = vmatprep.mubr.f32.mxu0 0.0
        %1365 = vmatmul.mubr.f32.gmra.mrb[0].mxu0 %v692
        %v1366 = vpop.f32.mrb[0].mxu0
        %v1367 = vadd.f32 %v1297, %v1366
        %v1368 = vpop.f32.mrb[0].mxu0
        %1369 = vdwg.mxu0
        %s1370 = scalar_lea.vmem %s273, 5
        %v1371 = vld [vmem:[%s1370] sm:$0x1]
        %v1373 = vsel %vm297, %v1371, 0
        %1375 = vmatprep.subr.mxu0 0.0
        %1376 = vmatpush1.msra.mxu0 %v447
        %1377 = vmatprep.subr.mxu0 0.0
        %1378 = vmatpush1.msra.mxu0 %v448
        %1379 = vmatprep.subr.mxu0 0.0
        %1380 = vmatpush1.msra.mxu0 %v449
        %1381 = vmatprep.subr.mxu0 0.0
        %1382 = vmatpush1.msra.mxu0 %v450
        %1383 = vmatprep.subr.mxu0 0.0
        %1384 = vmatpush1.msra.mxu0 %v451
        %1385 = vmatprep.subr.mxu0 0.0
        %1386 = vmatpush1.msra.mxu0 %v452
        %1387 = vmatprep.subr.mxu0 0.0
        %1388 = vmatpush1.msra.mxu0 %v453
        %1389 = vmatprep.subr.mxu0 0.0
        %1390 = vmatpush1.msra.mxu0 %v454
        %1391 = vmatprep.subr.mxu0 0.0
        %1392 = vmatpush1.msra.mxu0 %v455
        %1393 = vmatprep.subr.mxu0 0.0
        %1394 = vmatpush1.msra.mxu0 0.0
        %1395 = vmatprep.subr.mxu0 0.0
        %1396 = vmatpush1.msra.mxu0 0.0
        %1397 = vmatprep.subr.mxu0 0.0
        %1398 = vmatpush1.msra.mxu0 0.0
        %1399 = vmatprep.subr.mxu0 0.0
        %1400 = vmatpush1.msra.mxu0 0.0
        %1401 = vmatprep.subr.mxu0 0.0
        %1402 = vmatpush1.msra.mxu0 0.0
        %1403 = vmatprep.subr.mxu0 0.0
        %1404 = vmatpush1.msra.mxu0 0.0
        %1405 = vmatprep.subr.mxu0 0.0
        %1406 = vmatpush1.msra.mxu0 0.0
        %1407 = vmatprep.subr.mxu0 0.0
        %1408 = vmatpush1.msra.mxu0 0.0
        %1409 = vmatprep.subr.mxu0 0.0
        %1410 = vmatpush1.msra.mxu0 0.0
        %1411 = vmatprep.subr.mxu0 0.0
        %1412 = vmatpush1.msra.mxu0 0.0
        %1413 = vmatprep.subr.mxu0 0.0
        %1414 = vmatpush1.msra.mxu0 0.0
        %1415 = vmatprep.subr.mxu0 0.0
        %1416 = vmatpush1.msra.mxu0 0.0
        %1417 = vmatprep.subr.mxu0 0.0
        %1418 = vmatpush1.msra.mxu0 0.0
        %1419 = vmatprep.subr.mxu0 0.0
        %1420 = vmatpush1.msra.mxu0 0.0
        %1421 = vmatprep.subr.mxu0 0.0
        %1422 = vmatpush1.msra.mxu0 0.0
        %1423 = vmatprep.subr.mxu0 0.0
        %1424 = vmatpush1.msra.mxu0 0.0
        %1425 = vmatprep.subr.mxu0 0.0
        %1426 = vmatpush1.msra.mxu0 0.0
        %1427 = vmatprep.subr.mxu0 0.0
        %1428 = vmatpush1.msra.mxu0 0.0
        %1429 = vmatprep.subr.mxu0 0.0
        %1430 = vmatpush1.msra.mxu0 0.0
        %1431 = vmatprep.subr.mxu0 0.0
        %1432 = vmatpush1.msra.mxu0 0.0
        %1433 = vmatprep.subr.mxu0 0.0
        %1434 = vmatpush1.msra.mxu0 0.0
        %1435 = vmatprep.subr.mxu0 0.0
        %1436 = vmatpush1.msra.mxu0 0.0
        %1437 = vmatprep.subr.mxu0 0.0
        %1438 = vmatpush1.msra.mxu0 0.0
        %1439 = vmatprep.mubr.f32.mxu0 0.0
        %1440 = vmatmul.mubr.f32.gmra.mrb[0].mxu0 %v1373
        %v1441 = vpop.f32.mrb[0].mxu0
        %v1442 = vadd.f32 0.0, %v1441
        %v1443 = vpop.f32.mrb[0].mxu0
        %1444 = vdwg.mxu0
        %v1445 = vadd.f32 %v1367, %v1442
        %v1446 = vadd.f32 %v1445, %v530
        %v1447 = vmax.f32 %v1446, 0.0
        %s1448 = scalar_lea.vmem %s3, 384
        %v1449 = vld [vmem:[%s1448] sm:$0xff]
        %v1450 = vld [vmem:[%s1448 + $0x8] sm:$0xff]
        %v1451 = vld [vmem:[%s1448 + $0x10] sm:$0xff]
        %v1452 = vld [vmem:[%s1448 + $0x18] sm:$0xff]
        %v1453 = vld [vmem:[%s1448 + $0x20] sm:$0xff]
        %v1454 = vld [vmem:[%s1448 + $0x28] sm:$0xff]
        %v1455 = vld [vmem:[%s1448 + $0x30] sm:$0xff]
        %v1456 = vld [vmem:[%s1448 + $0x38] sm:$0xff]
        %v1457 = vld [vmem:[%s1448 + $0x40] sm:$0xff]
        %v1458 = vld [vmem:[%s1448 + $0x48] sm:$0xff]
        %v1459 = vld [vmem:[%s1448 + $0x50] sm:$0xff]
        %v1460 = vld [vmem:[%s1448 + $0x58] sm:$0xff]
        %v1461 = vld [vmem:[%s1448 + $0x60] sm:$0xff]
        %v1462 = vld [vmem:[%s1448 + $0x68] sm:$0xff]
        %v1463 = vld [vmem:[%s1448 + $0x70] sm:$0xff]
        %v1464 = vld [vmem:[%s1448 + $0x78] sm:$0xff]
        %1465 = vmatprep.subr.mxu0 0.0
        %1466 = vmatpush1.msra.mxu0 %v1449
        %1467 = vmatprep.subr.mxu0 0.0
        %1468 = vmatpush1.msra.mxu0 %v1450
        %1469 = vmatprep.subr.mxu0 0.0
        %1470 = vmatpush1.msra.mxu0 %v1451
        %1471 = vmatprep.subr.mxu0 0.0
        %1472 = vmatpush1.msra.mxu0 %v1452
        %1473 = vmatprep.subr.mxu0 0.0
        %1474 = vmatpush1.msra.mxu0 %v1453
        %1475 = vmatprep.subr.mxu0 0.0
        %1476 = vmatpush1.msra.mxu0 %v1454
        %1477 = vmatprep.subr.mxu0 0.0
        %1478 = vmatpush1.msra.mxu0 %v1455
        %1479 = vmatprep.subr.mxu0 0.0
        %1480 = vmatpush1.msra.mxu0 %v1456
        %1481 = vmatprep.subr.mxu0 0.0
        %1482 = vmatpush1.msra.mxu0 %v1457
        %1483 = vmatprep.subr.mxu0 0.0
        %1484 = vmatpush1.msra.mxu0 %v1458
        %1485 = vmatprep.subr.mxu0 0.0
        %1486 = vmatpush1.msra.mxu0 %v1459
        %1487 = vmatprep.subr.mxu0 0.0
        %1488 = vmatpush1.msra.mxu0 %v1460
        %1489 = vmatprep.subr.mxu0 0.0
        %1490 = vmatpush1.msra.mxu0 %v1461
        %1491 = vmatprep.subr.mxu0 0.0
        %1492 = vmatpush1.msra.mxu0 %v1462
        %1493 = vmatprep.subr.mxu0 0.0
        %1494 = vmatpush1.msra.mxu0 %v1463
        %1495 = vmatprep.subr.mxu0 0.0
        %1496 = vmatpush1.msra.mxu0 %v1464
        %1497 = vmatprep.subr.mxu0 0.0
        %1498 = vmatpush1.msra.mxu0 0.0
        %1499 = vmatprep.subr.mxu0 0.0
        %1500 = vmatpush1.msra.mxu0 0.0
        %1501 = vmatprep.subr.mxu0 0.0
        %1502 = vmatpush1.msra.mxu0 0.0
        %1503 = vmatprep.subr.mxu0 0.0
        %1504 = vmatpush1.msra.mxu0 0.0
        %1505 = vmatprep.subr.mxu0 0.0
        %1506 = vmatpush1.msra.mxu0 0.0
        %1507 = vmatprep.subr.mxu0 0.0
        %1508 = vmatpush1.msra.mxu0 0.0
        %1509 = vmatprep.subr.mxu0 0.0
        %1510 = vmatpush1.msra.mxu0 0.0
        %1511 = vmatprep.subr.mxu0 0.0
        %1512 = vmatpush1.msra.mxu0 0.0
        %1513 = vmatprep.subr.mxu0 0.0
        %1514 = vmatpush1.msra.mxu0 0.0
        %1515 = vmatprep.subr.mxu0 0.0
        %1516 = vmatpush1.msra.mxu0 0.0
        %1517 = vmatprep.subr.mxu0 0.0
        %1518 = vmatpush1.msra.mxu0 0.0
        %1519 = vmatprep.subr.mxu0 0.0
        %1520 = vmatpush1.msra.mxu0 0.0
        %1521 = vmatprep.subr.mxu0 0.0
        %1522 = vmatpush1.msra.mxu0 0.0
        %1523 = vmatprep.subr.mxu0 0.0
        %1524 = vmatpush1.msra.mxu0 0.0
        %1525 = vmatprep.subr.mxu0 0.0
        %1526 = vmatpush1.msra.mxu0 0.0
        %1527 = vmatprep.subr.mxu0 0.0
        %1528 = vmatpush1.msra.mxu0 0.0
        %1529 = vmatprep.mubr.f32.mxu0 0.0
        %1530 = vmatmul.mubr.f32.gmra.mrb[0].mxu0 %v1447
        %v1531 = vpop.f32.mrb[0].mxu0
        %v1532 = vadd.f32 0.0, %v1531
        %v1533 = vpop.f32.mrb[0].mxu0
        %1534 = vdwg.mxu0
        %v1535 = vadd.f32 %v1229, %v1532
        %1536 = vmatprep.subr.mxu0 0.0
        %1537 = vmatpush1.msra.mxu0 %v288
        %1538 = vmatprep.subr.mxu0 0.0
        %1539 = vmatpush1.msra.mxu0 %v289
        %1540 = vmatprep.subr.mxu0 0.0
        %1541 = vmatpush1.msra.mxu0 %v290
        %1542 = vmatprep.subr.mxu0 0.0
        %1543 = vmatpush1.msra.mxu0 %v291
        %1544 = vmatprep.subr.mxu0 0.0
        %1545 = vmatpush1.msra.mxu0 %v292
        %1546 = vmatprep.subr.mxu0 0.0
        %1547 = vmatpush1.msra.mxu0 %v293
        %1548 = vmatprep.subr.mxu0 0.0
        %1549 = vmatpush1.msra.mxu0 %v294
        %1550 = vmatprep.subr.mxu0 0.0
        %1551 = vmatpush1.msra.mxu0 %v295
        %1552 = vmatprep.subr.mxu0 0.0
        %1553 = vmatpush1.msra.mxu0 %v296
        %1554 = vmatprep.subr.mxu0 0.0
        %1555 = vmatpush1.msra.mxu0 0.0
        %1556 = vmatprep.subr.mxu0 0.0
        %1557 = vmatpush1.msra.mxu0 0.0
        %1558 = vmatprep.subr.mxu0 0.0
        %1559 = vmatpush1.msra.mxu0 0.0
        %1560 = vmatprep.subr.mxu0 0.0
        %1561 = vmatpush1.msra.mxu0 0.0
        %1562 = vmatprep.subr.mxu0 0.0
        %1563 = vmatpush1.msra.mxu0 0.0
        %1564 = vmatprep.subr.mxu0 0.0
        %1565 = vmatpush1.msra.mxu0 0.0
        %1566 = vmatprep.subr.mxu0 0.0
        %1567 = vmatpush1.msra.mxu0 0.0
        %1568 = vmatprep.subr.mxu0 0.0
        %1569 = vmatpush1.msra.mxu0 0.0
        %1570 = vmatprep.subr.mxu0 0.0
        %1571 = vmatpush1.msra.mxu0 0.0
        %1572 = vmatprep.subr.mxu0 0.0
        %1573 = vmatpush1.msra.mxu0 0.0
        %1574 = vmatprep.subr.mxu0 0.0
        %1575 = vmatpush1.msra.mxu0 0.0
        %1576 = vmatprep.subr.mxu0 0.0
        %1577 = vmatpush1.msra.mxu0 0.0
        %1578 = vmatprep.subr.mxu0 0.0
        %1579 = vmatpush1.msra.mxu0 0.0
        %1580 = vmatprep.subr.mxu0 0.0
        %1581 = vmatpush1.msra.mxu0 0.0
        %1582 = vmatprep.subr.mxu0 0.0
        %1583 = vmatpush1.msra.mxu0 0.0
        %1584 = vmatprep.subr.mxu0 0.0
        %1585 = vmatpush1.msra.mxu0 0.0
        %1586 = vmatprep.subr.mxu0 0.0
        %1587 = vmatpush1.msra.mxu0 0.0
        %1588 = vmatprep.subr.mxu0 0.0
        %1589 = vmatpush1.msra.mxu0 0.0
        %1590 = vmatprep.subr.mxu0 0.0
        %1591 = vmatpush1.msra.mxu0 0.0
        %1592 = vmatprep.subr.mxu0 0.0
        %1593 = vmatpush1.msra.mxu0 0.0
        %1594 = vmatprep.subr.mxu0 0.0
        %1595 = vmatpush1.msra.mxu0 0.0
        %1596 = vmatprep.subr.mxu0 0.0
        %1597 = vmatpush1.msra.mxu0 0.0
        %1598 = vmatprep.subr.mxu0 0.0
        %1599 = vmatpush1.msra.mxu0 0.0
        %1600 = vmatprep.mubr.f32.mxu0 0.0
        %1601 = vmatmul.mubr.f32.gmra.mrb[0].mxu0 %v1373
        %v1602 = vpop.f32.mrb[0].mxu0
        %v1603 = vadd.f32 0.0, %v1602
        %v1604 = vpop.f32.mrb[0].mxu0
        %1605 = vdwg.mxu0
        %1606 = vmatprep.subr.mxu0 0.0
        %1607 = vmatpush1.msra.mxu0 %v276
        %1608 = vmatprep.subr.mxu0 0.0
        %1609 = vmatpush1.msra.mxu0 %v277
        %1610 = vmatprep.subr.mxu0 0.0
        %1611 = vmatpush1.msra.mxu0 %v278
        %1612 = vmatprep.subr.mxu0 0.0
        %1613 = vmatpush1.msra.mxu0 %v279
        %1614 = vmatprep.subr.mxu0 0.0
        %1615 = vmatpush1.msra.mxu0 %v280
        %1616 = vmatprep.subr.mxu0 0.0
        %1617 = vmatpush1.msra.mxu0 %v281
        %1618 = vmatprep.subr.mxu0 0.0
        %1619 = vmatpush1.msra.mxu0 %v282
        %1620 = vmatprep.subr.mxu0 0.0
        %1621 = vmatpush1.msra.mxu0 %v283
        %1622 = vmatprep.subr.mxu0 0.0
        %1623 = vmatpush1.msra.mxu0 %v284
        %1624 = vmatprep.subr.mxu0 0.0
        %1625 = vmatpush1.msra.mxu0 0.0
        %1626 = vmatprep.subr.mxu0 0.0
        %1627 = vmatpush1.msra.mxu0 0.0
        %1628 = vmatprep.subr.mxu0 0.0
        %1629 = vmatpush1.msra.mxu0 0.0
        %1630 = vmatprep.subr.mxu0 0.0
        %1631 = vmatpush1.msra.mxu0 0.0
        %1632 = vmatprep.subr.mxu0 0.0
        %1633 = vmatpush1.msra.mxu0 0.0
        %1634 = vmatprep.subr.mxu0 0.0
        %1635 = vmatpush1.msra.mxu0 0.0
        %1636 = vmatprep.subr.mxu0 0.0
        %1637 = vmatpush1.msra.mxu0 0.0
        %1638 = vmatprep.subr.mxu0 0.0
        %1639 = vmatpush1.msra.mxu0 0.0
        %1640 = vmatprep.subr.mxu0 0.0
        %1641 = vmatpush1.msra.mxu0 0.0
        %1642 = vmatprep.subr.mxu0 0.0
        %1643 = vmatpush1.msra.mxu0 0.0
        %1644 = vmatprep.subr.mxu0 0.0
        %1645 = vmatpush1.msra.mxu0 0.0
        %1646 = vmatprep.subr.mxu0 0.0
        %1647 = vmatpush1.msra.mxu0 0.0
        %1648 = vmatprep.subr.mxu0 0.0
        %1649 = vmatpush1.msra.mxu0 0.0
        %1650 = vmatprep.subr.mxu0 0.0
        %1651 = vmatpush1.msra.mxu0 0.0
        %1652 = vmatprep.subr.mxu0 0.0
        %1653 = vmatpush1.msra.mxu0 0.0
        %1654 = vmatprep.subr.mxu0 0.0
        %1655 = vmatpush1.msra.mxu0 0.0
        %1656 = vmatprep.subr.mxu0 0.0
        %1657 = vmatpush1.msra.mxu0 0.0
        %1658 = vmatprep.subr.mxu0 0.0
        %1659 = vmatpush1.msra.mxu0 0.0
        %1660 = vmatprep.subr.mxu0 0.0
        %1661 = vmatpush1.msra.mxu0 0.0
        %1662 = vmatprep.subr.mxu0 0.0
        %1663 = vmatpush1.msra.mxu0 0.0
        %1664 = vmatprep.subr.mxu0 0.0
        %1665 = vmatpush1.msra.mxu0 0.0
        %1666 = vmatprep.subr.mxu0 0.0
        %1667 = vmatpush1.msra.mxu0 0.0
        %1668 = vmatprep.subr.mxu0 0.0
        %1669 = vmatpush1.msra.mxu0 0.0
        %1670 = vmatprep.mubr.f32.mxu0 0.0
        %1671 = vmatmul.mubr.f32.gmra.mrb[0].mxu0 %v1067
        %v1672 = vpop.f32.mrb[0].mxu0
        %v1673 = vadd.f32 %v1603, %v1672
        %v1674 = vpop.f32.mrb[0].mxu0
        %1675 = vdwg.mxu0
        %s1676 = scalar_lea.vmem %s273, 6
        %v1677 = vld [vmem:[%s1676] sm:$0x1]
        %v1679 = vsel %vm297, %v1677, 0
        %1681 = vmatprep.subr.mxu0 0.0
        %1682 = vmatpush1.msra.mxu0 %v447
        %1683 = vmatprep.subr.mxu0 0.0
        %1684 = vmatpush1.msra.mxu0 %v448
        %1685 = vmatprep.subr.mxu0 0.0
        %1686 = vmatpush1.msra.mxu0 %v449
        %1687 = vmatprep.subr.mxu0 0.0
        %1688 = vmatpush1.msra.mxu0 %v450
        %1689 = vmatprep.subr.mxu0 0.0
        %1690 = vmatpush1.msra.mxu0 %v451
        %1691 = vmatprep.subr.mxu0 0.0
        %1692 = vmatpush1.msra.mxu0 %v452
        %1693 = vmatprep.subr.mxu0 0.0
        %1694 = vmatpush1.msra.mxu0 %v453
        %1695 = vmatprep.subr.mxu0 0.0
        %1696 = vmatpush1.msra.mxu0 %v454
        %1697 = vmatprep.subr.mxu0 0.0
        %1698 = vmatpush1.msra.mxu0 %v455
        %1699 = vmatprep.subr.mxu0 0.0
        %1700 = vmatpush1.msra.mxu0 0.0
        %1701 = vmatprep.subr.mxu0 0.0
        %1702 = vmatpush1.msra.mxu0 0.0
        %1703 = vmatprep.subr.mxu0 0.0
        %1704 = vmatpush1.msra.mxu0 0.0
        %1705 = vmatprep.subr.mxu0 0.0
        %1706 = vmatpush1.msra.mxu0 0.0
        %1707 = vmatprep.subr.mxu0 0.0
        %1708 = vmatpush1.msra.mxu0 0.0
        %1709 = vmatprep.subr.mxu0 0.0
        %1710 = vmatpush1.msra.mxu0 0.0
        %1711 = vmatprep.subr.mxu0 0.0
        %1712 = vmatpush1.msra.mxu0 0.0
        %1713 = vmatprep.subr.mxu0 0.0
        %1714 = vmatpush1.msra.mxu0 0.0
        %1715 = vmatprep.subr.mxu0 0.0
        %1716 = vmatpush1.msra.mxu0 0.0
        %1717 = vmatprep.subr.mxu0 0.0
        %1718 = vmatpush1.msra.mxu0 0.0
        %1719 = vmatprep.subr.mxu0 0.0
        %1720 = vmatpush1.msra.mxu0 0.0
        %1721 = vmatprep.subr.mxu0 0.0
        %1722 = vmatpush1.msra.mxu0 0.0
        %1723 = vmatprep.subr.mxu0 0.0
        %1724 = vmatpush1.msra.mxu0 0.0
        %1725 = vmatprep.subr.mxu0 0.0
        %1726 = vmatpush1.msra.mxu0 0.0
        %1727 = vmatprep.subr.mxu0 0.0
        %1728 = vmatpush1.msra.mxu0 0.0
        %1729 = vmatprep.subr.mxu0 0.0
        %1730 = vmatpush1.msra.mxu0 0.0
        %1731 = vmatprep.subr.mxu0 0.0
        %1732 = vmatpush1.msra.mxu0 0.0
        %1733 = vmatprep.subr.mxu0 0.0
        %1734 = vmatpush1.msra.mxu0 0.0
        %1735 = vmatprep.subr.mxu0 0.0
        %1736 = vmatpush1.msra.mxu0 0.0
        %1737 = vmatprep.subr.mxu0 0.0
        %1738 = vmatpush1.msra.mxu0 0.0
        %1739 = vmatprep.subr.mxu0 0.0
        %1740 = vmatpush1.msra.mxu0 0.0
        %1741 = vmatprep.subr.mxu0 0.0
        %1742 = vmatpush1.msra.mxu0 0.0
        %1743 = vmatprep.subr.mxu0 0.0
        %1744 = vmatpush1.msra.mxu0 0.0
        %1745 = vmatprep.mubr.f32.mxu0 0.0
        %1746 = vmatmul.mubr.f32.gmra.mrb[0].mxu0 %v1679
        %v1747 = vpop.f32.mrb[0].mxu0
        %v1748 = vadd.f32 0.0, %v1747
        %v1749 = vpop.f32.mrb[0].mxu0
        %1750 = vdwg.mxu0
        %v1751 = vadd.f32 %v1673, %v1748
        %v1752 = vadd.f32 %v1751, %v530
        %v1753 = vmax.f32 %v1752, 0.0
        %s1754 = scalar_lea.vmem %s3, 512
        %v1755 = vld [vmem:[%s1754] sm:$0xff]
        %v1756 = vld [vmem:[%s1754 + $0x8] sm:$0xff]
        %v1757 = vld [vmem:[%s1754 + $0x10] sm:$0xff]
        %v1758 = vld [vmem:[%s1754 + $0x18] sm:$0xff]
        %v1759 = vld [vmem:[%s1754 + $0x20] sm:$0xff]
        %v1760 = vld [vmem:[%s1754 + $0x28] sm:$0xff]
        %v1761 = vld [vmem:[%s1754 + $0x30] sm:$0xff]
        %v1762 = vld [vmem:[%s1754 + $0x38] sm:$0xff]
        %v1763 = vld [vmem:[%s1754 + $0x40] sm:$0xff]
        %v1764 = vld [vmem:[%s1754 + $0x48] sm:$0xff]
        %v1765 = vld [vmem:[%s1754 + $0x50] sm:$0xff]
        %v1766 = vld [vmem:[%s1754 + $0x58] sm:$0xff]
        %v1767 = vld [vmem:[%s1754 + $0x60] sm:$0xff]
        %v1768 = vld [vmem:[%s1754 + $0x68] sm:$0xff]
        %v1769 = vld [vmem:[%s1754 + $0x70] sm:$0xff]
        %v1770 = vld [vmem:[%s1754 + $0x78] sm:$0xff]
        %1771 = vmatprep.subr.mxu0 0.0
        %1772 = vmatpush1.msra.mxu0 %v1755
        %1773 = vmatprep.subr.mxu0 0.0
        %1774 = vmatpush1.msra.mxu0 %v1756
        %1775 = vmatprep.subr.mxu0 0.0
        %1776 = vmatpush1.msra.mxu0 %v1757
        %1777 = vmatprep.subr.mxu0 0.0
        %1778 = vmatpush1.msra.mxu0 %v1758
        %1779 = vmatprep.subr.mxu0 0.0
        %1780 = vmatpush1.msra.mxu0 %v1759
        %1781 = vmatprep.subr.mxu0 0.0
        %1782 = vmatpush1.msra.mxu0 %v1760
        %1783 = vmatprep.subr.mxu0 0.0
        %1784 = vmatpush1.msra.mxu0 %v1761
        %1785 = vmatprep.subr.mxu0 0.0
        %1786 = vmatpush1.msra.mxu0 %v1762
        %1787 = vmatprep.subr.mxu0 0.0
        %1788 = vmatpush1.msra.mxu0 %v1763
        %1789 = vmatprep.subr.mxu0 0.0
        %1790 = vmatpush1.msra.mxu0 %v1764
        %1791 = vmatprep.subr.mxu0 0.0
        %1792 = vmatpush1.msra.mxu0 %v1765
        %1793 = vmatprep.subr.mxu0 0.0
        %1794 = vmatpush1.msra.mxu0 %v1766
        %1795 = vmatprep.subr.mxu0 0.0
        %1796 = vmatpush1.msra.mxu0 %v1767
        %1797 = vmatprep.subr.mxu0 0.0
        %1798 = vmatpush1.msra.mxu0 %v1768
        %1799 = vmatprep.subr.mxu0 0.0
        %1800 = vmatpush1.msra.mxu0 %v1769
        %1801 = vmatprep.subr.mxu0 0.0
        %1802 = vmatpush1.msra.mxu0 %v1770
        %1803 = vmatprep.subr.mxu0 0.0
        %1804 = vmatpush1.msra.mxu0 0.0
        %1805 = vmatprep.subr.mxu0 0.0
        %1806 = vmatpush1.msra.mxu0 0.0
        %1807 = vmatprep.subr.mxu0 0.0
        %1808 = vmatpush1.msra.mxu0 0.0
        %1809 = vmatprep.subr.mxu0 0.0
        %1810 = vmatpush1.msra.mxu0 0.0
        %1811 = vmatprep.subr.mxu0 0.0
        %1812 = vmatpush1.msra.mxu0 0.0
        %1813 = vmatprep.subr.mxu0 0.0
        %1814 = vmatpush1.msra.mxu0 0.0
        %1815 = vmatprep.subr.mxu0 0.0
        %1816 = vmatpush1.msra.mxu0 0.0
        %1817 = vmatprep.subr.mxu0 0.0
        %1818 = vmatpush1.msra.mxu0 0.0
        %1819 = vmatprep.subr.mxu0 0.0
        %1820 = vmatpush1.msra.mxu0 0.0
        %1821 = vmatprep.subr.mxu0 0.0
        %1822 = vmatpush1.msra.mxu0 0.0
        %1823 = vmatprep.subr.mxu0 0.0
        %1824 = vmatpush1.msra.mxu0 0.0
        %1825 = vmatprep.subr.mxu0 0.0
        %1826 = vmatpush1.msra.mxu0 0.0
        %1827 = vmatprep.subr.mxu0 0.0
        %1828 = vmatpush1.msra.mxu0 0.0
        %1829 = vmatprep.subr.mxu0 0.0
        %1830 = vmatpush1.msra.mxu0 0.0
        %1831 = vmatprep.subr.mxu0 0.0
        %1832 = vmatpush1.msra.mxu0 0.0
        %1833 = vmatprep.subr.mxu0 0.0
        %1834 = vmatpush1.msra.mxu0 0.0
        %1835 = vmatprep.mubr.f32.mxu0 0.0
        %1836 = vmatmul.mubr.f32.gmra.mrb[0].mxu0 %v1753
        %v1837 = vpop.f32.mrb[0].mxu0
        %v1838 = vadd.f32 0.0, %v1837
        %v1839 = vpop.f32.mrb[0].mxu0
        %1840 = vdwg.mxu0
        %v1841 = vadd.f32 %v1535, %v1838
        %1842 = vmatprep.subr.mxu0 0.0
        %1843 = vmatpush1.msra.mxu0 %v288
        %1844 = vmatprep.subr.mxu0 0.0
        %1845 = vmatpush1.msra.mxu0 %v289
        %1846 = vmatprep.subr.mxu0 0.0
        %1847 = vmatpush1.msra.mxu0 %v290
        %1848 = vmatprep.subr.mxu0 0.0
        %1849 = vmatpush1.msra.mxu0 %v291
        %1850 = vmatprep.subr.mxu0 0.0
        %1851 = vmatpush1.msra.mxu0 %v292
        %1852 = vmatprep.subr.mxu0 0.0
        %1853 = vmatpush1.msra.mxu0 %v293
        %1854 = vmatprep.subr.mxu0 0.0
        %1855 = vmatpush1.msra.mxu0 %v294
        %1856 = vmatprep.subr.mxu0 0.0
        %1857 = vmatpush1.msra.mxu0 %v295
        %1858 = vmatprep.subr.mxu0 0.0
        %1859 = vmatpush1.msra.mxu0 %v296
        %1860 = vmatprep.subr.mxu0 0.0
        %1861 = vmatpush1.msra.mxu0 0.0
        %1862 = vmatprep.subr.mxu0 0.0
        %1863 = vmatpush1.msra.mxu0 0.0
        %1864 = vmatprep.subr.mxu0 0.0
        %1865 = vmatpush1.msra.mxu0 0.0
        %1866 = vmatprep.subr.mxu0 0.0
        %1867 = vmatpush1.msra.mxu0 0.0
        %1868 = vmatprep.subr.mxu0 0.0
        %1869 = vmatpush1.msra.mxu0 0.0
        %1870 = vmatprep.subr.mxu0 0.0
        %1871 = vmatpush1.msra.mxu0 0.0
        %1872 = vmatprep.subr.mxu0 0.0
        %1873 = vmatpush1.msra.mxu0 0.0
        %1874 = vmatprep.subr.mxu0 0.0
        %1875 = vmatpush1.msra.mxu0 0.0
        %1876 = vmatprep.subr.mxu0 0.0
        %1877 = vmatpush1.msra.mxu0 0.0
        %1878 = vmatprep.subr.mxu0 0.0
        %1879 = vmatpush1.msra.mxu0 0.0
        %1880 = vmatprep.subr.mxu0 0.0
        %1881 = vmatpush1.msra.mxu0 0.0
        %1882 = vmatprep.subr.mxu0 0.0
        %1883 = vmatpush1.msra.mxu0 0.0
        %1884 = vmatprep.subr.mxu0 0.0
        %1885 = vmatpush1.msra.mxu0 0.0
        %1886 = vmatprep.subr.mxu0 0.0
        %1887 = vmatpush1.msra.mxu0 0.0
        %1888 = vmatprep.subr.mxu0 0.0
        %1889 = vmatpush1.msra.mxu0 0.0
        %1890 = vmatprep.subr.mxu0 0.0
        %1891 = vmatpush1.msra.mxu0 0.0
        %1892 = vmatprep.subr.mxu0 0.0
        %1893 = vmatpush1.msra.mxu0 0.0
        %1894 = vmatprep.subr.mxu0 0.0
        %1895 = vmatpush1.msra.mxu0 0.0
        %1896 = vmatprep.subr.mxu0 0.0
        %1897 = vmatpush1.msra.mxu0 0.0
        %1898 = vmatprep.subr.mxu0 0.0
        %1899 = vmatpush1.msra.mxu0 0.0
        %1900 = vmatprep.subr.mxu0 0.0
        %1901 = vmatpush1.msra.mxu0 0.0
        %1902 = vmatprep.subr.mxu0 0.0
        %1903 = vmatpush1.msra.mxu0 0.0
        %1904 = vmatprep.subr.mxu0 0.0
        %1905 = vmatpush1.msra.mxu0 0.0
        %1906 = vmatprep.mubr.f32.mxu0 0.0
        %1907 = vmatmul.mubr.f32.gmra.mrb[0].mxu0 %v1679
        %v1908 = vpop.f32.mrb[0].mxu0
        %v1909 = vadd.f32 0.0, %v1908
        %v1910 = vpop.f32.mrb[0].mxu0
        %1911 = vdwg.mxu0
        %1912 = vmatprep.subr.mxu0 0.0
        %1913 = vmatpush1.msra.mxu0 %v276
        %1914 = vmatprep.subr.mxu0 0.0
        %1915 = vmatpush1.msra.mxu0 %v277
        %1916 = vmatprep.subr.mxu0 0.0
        %1917 = vmatpush1.msra.mxu0 %v278
        %1918 = vmatprep.subr.mxu0 0.0
        %1919 = vmatpush1.msra.mxu0 %v279
        %1920 = vmatprep.subr.mxu0 0.0
        %1921 = vmatpush1.msra.mxu0 %v280
        %1922 = vmatprep.subr.mxu0 0.0
        %1923 = vmatpush1.msra.mxu0 %v281
        %1924 = vmatprep.subr.mxu0 0.0
        %1925 = vmatpush1.msra.mxu0 %v282
        %1926 = vmatprep.subr.mxu0 0.0
        %1927 = vmatpush1.msra.mxu0 %v283
        %1928 = vmatprep.subr.mxu0 0.0
        %1929 = vmatpush1.msra.mxu0 %v284
        %1930 = vmatprep.subr.mxu0 0.0
        %1931 = vmatpush1.msra.mxu0 0.0
        %1932 = vmatprep.subr.mxu0 0.0
        %1933 = vmatpush1.msra.mxu0 0.0
        %1934 = vmatprep.subr.mxu0 0.0
        %1935 = vmatpush1.msra.mxu0 0.0
        %1936 = vmatprep.subr.mxu0 0.0
        %1937 = vmatpush1.msra.mxu0 0.0
        %1938 = vmatprep.subr.mxu0 0.0
        %1939 = vmatpush1.msra.mxu0 0.0
        %1940 = vmatprep.subr.mxu0 0.0
        %1941 = vmatpush1.msra.mxu0 0.0
        %1942 = vmatprep.subr.mxu0 0.0
        %1943 = vmatpush1.msra.mxu0 0.0
        %1944 = vmatprep.subr.mxu0 0.0
        %1945 = vmatpush1.msra.mxu0 0.0
        %1946 = vmatprep.subr.mxu0 0.0
        %1947 = vmatpush1.msra.mxu0 0.0
        %1948 = vmatprep.subr.mxu0 0.0
        %1949 = vmatpush1.msra.mxu0 0.0
        %1950 = vmatprep.subr.mxu0 0.0
        %1951 = vmatpush1.msra.mxu0 0.0
        %1952 = vmatprep.subr.mxu0 0.0
        %1953 = vmatpush1.msra.mxu0 0.0
        %1954 = vmatprep.subr.mxu0 0.0
        %1955 = vmatpush1.msra.mxu0 0.0
        %1956 = vmatprep.subr.mxu0 0.0
        %1957 = vmatpush1.msra.mxu0 0.0
        %1958 = vmatprep.subr.mxu0 0.0
        %1959 = vmatpush1.msra.mxu0 0.0
        %1960 = vmatprep.subr.mxu0 0.0
        %1961 = vmatpush1.msra.mxu0 0.0
        %1962 = vmatprep.subr.mxu0 0.0
        %1963 = vmatpush1.msra.mxu0 0.0
        %1964 = vmatprep.subr.mxu0 0.0
        %1965 = vmatpush1.msra.mxu0 0.0
        %1966 = vmatprep.subr.mxu0 0.0
        %1967 = vmatpush1.msra.mxu0 0.0
        %1968 = vmatprep.subr.mxu0 0.0
        %1969 = vmatpush1.msra.mxu0 0.0
        %1970 = vmatprep.subr.mxu0 0.0
        %1971 = vmatpush1.msra.mxu0 0.0
        %1972 = vmatprep.subr.mxu0 0.0
        %1973 = vmatpush1.msra.mxu0 0.0
        %1974 = vmatprep.subr.mxu0 0.0
        %1975 = vmatpush1.msra.mxu0 0.0
        %1976 = vmatprep.mubr.f32.mxu0 0.0
        %1977 = vmatmul.mubr.f32.gmra.mrb[0].mxu0 %v1373
        %v1978 = vpop.f32.mrb[0].mxu0
        %v1979 = vadd.f32 %v1909, %v1978
        %v1980 = vpop.f32.mrb[0].mxu0
        %1981 = vdwg.mxu0
        %s1982 = scalar_lea.vmem %s273, 7
        %v1983 = vld [vmem:[%s1982] sm:$0x1]
        %v1985 = vsel %vm297, %v1983, 0
        %1987 = vmatprep.subr.mxu0 0.0
        %1988 = vmatpush1.msra.mxu0 %v447
        %1989 = vmatprep.subr.mxu0 0.0
        %1990 = vmatpush1.msra.mxu0 %v448
        %1991 = vmatprep.subr.mxu0 0.0
        %1992 = vmatpush1.msra.mxu0 %v449
        %1993 = vmatprep.subr.mxu0 0.0
        %1994 = vmatpush1.msra.mxu0 %v450
        %1995 = vmatprep.subr.mxu0 0.0
        %1996 = vmatpush1.msra.mxu0 %v451
        %1997 = vmatprep.subr.mxu0 0.0
        %1998 = vmatpush1.msra.mxu0 %v452
        %1999 = vmatprep.subr.mxu0 0.0
        %2000 = vmatpush1.msra.mxu0 %v453
        %2001 = vmatprep.subr.mxu0 0.0
        %2002 = vmatpush1.msra.mxu0 %v454
        %2003 = vmatprep.subr.mxu0 0.0
        %2004 = vmatpush1.msra.mxu0 %v455
        %2005 = vmatprep.subr.mxu0 0.0
        %2006 = vmatpush1.msra.mxu0 0.0
        %2007 = vmatprep.subr.mxu0 0.0
        %2008 = vmatpush1.msra.mxu0 0.0
        %2009 = vmatprep.subr.mxu0 0.0
        %2010 = vmatpush1.msra.mxu0 0.0
        %2011 = vmatprep.subr.mxu0 0.0
        %2012 = vmatpush1.msra.mxu0 0.0
        %2013 = vmatprep.subr.mxu0 0.0
        %2014 = vmatpush1.msra.mxu0 0.0
        %2015 = vmatprep.subr.mxu0 0.0
        %2016 = vmatpush1.msra.mxu0 0.0
        %2017 = vmatprep.subr.mxu0 0.0
        %2018 = vmatpush1.msra.mxu0 0.0
        %2019 = vmatprep.subr.mxu0 0.0
        %2020 = vmatpush1.msra.mxu0 0.0
        %2021 = vmatprep.subr.mxu0 0.0
        %2022 = vmatpush1.msra.mxu0 0.0
        %2023 = vmatprep.subr.mxu0 0.0
        %2024 = vmatpush1.msra.mxu0 0.0
        %2025 = vmatprep.subr.mxu0 0.0
        %2026 = vmatpush1.msra.mxu0 0.0
        %2027 = vmatprep.subr.mxu0 0.0
        %2028 = vmatpush1.msra.mxu0 0.0
        %2029 = vmatprep.subr.mxu0 0.0
        %2030 = vmatpush1.msra.mxu0 0.0
        %2031 = vmatprep.subr.mxu0 0.0
        %2032 = vmatpush1.msra.mxu0 0.0
        %2033 = vmatprep.subr.mxu0 0.0
        %2034 = vmatpush1.msra.mxu0 0.0
        %2035 = vmatprep.subr.mxu0 0.0
        %2036 = vmatpush1.msra.mxu0 0.0
        %2037 = vmatprep.subr.mxu0 0.0
        %2038 = vmatpush1.msra.mxu0 0.0
        %2039 = vmatprep.subr.mxu0 0.0
        %2040 = vmatpush1.msra.mxu0 0.0
        %2041 = vmatprep.subr.mxu0 0.0
        %2042 = vmatpush1.msra.mxu0 0.0
        %2043 = vmatprep.subr.mxu0 0.0
        %2044 = vmatpush1.msra.mxu0 0.0
        %2045 = vmatprep.subr.mxu0 0.0
        %2046 = vmatpush1.msra.mxu0 0.0
        %2047 = vmatprep.subr.mxu0 0.0
        %2048 = vmatpush1.msra.mxu0 0.0
        %2049 = vmatprep.subr.mxu0 0.0
        %2050 = vmatpush1.msra.mxu0 0.0
        %2051 = vmatprep.mubr.f32.mxu0 0.0
        %2052 = vmatmul.mubr.f32.gmra.mrb[0].mxu0 %v1985
        %v2053 = vpop.f32.mrb[0].mxu0
        %v2054 = vadd.f32 0.0, %v2053
        %v2055 = vpop.f32.mrb[0].mxu0
        %2056 = vdwg.mxu0
        %v2057 = vadd.f32 %v1979, %v2054
        %v2058 = vadd.f32 %v2057, %v530
        %v2059 = vmax.f32 %v2058, 0.0
        %s2060 = scalar_lea.vmem %s3, 640
        %v2061 = vld [vmem:[%s2060] sm:$0xff]
        %v2062 = vld [vmem:[%s2060 + $0x8] sm:$0xff]
        %v2063 = vld [vmem:[%s2060 + $0x10] sm:$0xff]
        %v2064 = vld [vmem:[%s2060 + $0x18] sm:$0xff]
        %v2065 = vld [vmem:[%s2060 + $0x20] sm:$0xff]
        %v2066 = vld [vmem:[%s2060 + $0x28] sm:$0xff]
        %v2067 = vld [vmem:[%s2060 + $0x30] sm:$0xff]
        %v2068 = vld [vmem:[%s2060 + $0x38] sm:$0xff]
        %v2069 = vld [vmem:[%s2060 + $0x40] sm:$0xff]
        %v2070 = vld [vmem:[%s2060 + $0x48] sm:$0xff]
        %v2071 = vld [vmem:[%s2060 + $0x50] sm:$0xff]
        %v2072 = vld [vmem:[%s2060 + $0x58] sm:$0xff]
        %v2073 = vld [vmem:[%s2060 + $0x60] sm:$0xff]
        %v2074 = vld [vmem:[%s2060 + $0x68] sm:$0xff]
        %v2075 = vld [vmem:[%s2060 + $0x70] sm:$0xff]
        %v2076 = vld [vmem:[%s2060 + $0x78] sm:$0xff]
        %2077 = vmatprep.subr.mxu0 0.0
        %2078 = vmatpush1.msra.mxu0 %v2061
        %2079 = vmatprep.subr.mxu0 0.0
        %2080 = vmatpush1.msra.mxu0 %v2062
        %2081 = vmatprep.subr.mxu0 0.0
        %2082 = vmatpush1.msra.mxu0 %v2063
        %2083 = vmatprep.subr.mxu0 0.0
        %2084 = vmatpush1.msra.mxu0 %v2064
        %2085 = vmatprep.subr.mxu0 0.0
        %2086 = vmatpush1.msra.mxu0 %v2065
        %2087 = vmatprep.subr.mxu0 0.0
        %2088 = vmatpush1.msra.mxu0 %v2066
        %2089 = vmatprep.subr.mxu0 0.0
        %2090 = vmatpush1.msra.mxu0 %v2067
        %2091 = vmatprep.subr.mxu0 0.0
        %2092 = vmatpush1.msra.mxu0 %v2068
        %2093 = vmatprep.subr.mxu0 0.0
        %2094 = vmatpush1.msra.mxu0 %v2069
        %2095 = vmatprep.subr.mxu0 0.0
        %2096 = vmatpush1.msra.mxu0 %v2070
        %2097 = vmatprep.subr.mxu0 0.0
        %2098 = vmatpush1.msra.mxu0 %v2071
        %2099 = vmatprep.subr.mxu0 0.0
        %2100 = vmatpush1.msra.mxu0 %v2072
        %2101 = vmatprep.subr.mxu0 0.0
        %2102 = vmatpush1.msra.mxu0 %v2073
        %2103 = vmatprep.subr.mxu0 0.0
        %2104 = vmatpush1.msra.mxu0 %v2074
        %2105 = vmatprep.subr.mxu0 0.0
        %2106 = vmatpush1.msra.mxu0 %v2075
        %2107 = vmatprep.subr.mxu0 0.0
        %2108 = vmatpush1.msra.mxu0 %v2076
        %2109 = vmatprep.subr.mxu0 0.0
        %2110 = vmatpush1.msra.mxu0 0.0
        %2111 = vmatprep.subr.mxu0 0.0
        %2112 = vmatpush1.msra.mxu0 0.0
        %2113 = vmatprep.subr.mxu0 0.0
        %2114 = vmatpush1.msra.mxu0 0.0
        %2115 = vmatprep.subr.mxu0 0.0
        %2116 = vmatpush1.msra.mxu0 0.0
        %2117 = vmatprep.subr.mxu0 0.0
        %2118 = vmatpush1.msra.mxu0 0.0
        %2119 = vmatprep.subr.mxu0 0.0
        %2120 = vmatpush1.msra.mxu0 0.0
        %2121 = vmatprep.subr.mxu0 0.0
        %2122 = vmatpush1.msra.mxu0 0.0
        %2123 = vmatprep.subr.mxu0 0.0
        %2124 = vmatpush1.msra.mxu0 0.0
        %2125 = vmatprep.subr.mxu0 0.0
        %2126 = vmatpush1.msra.mxu0 0.0
        %2127 = vmatprep.subr.mxu0 0.0
        %2128 = vmatpush1.msra.mxu0 0.0
        %2129 = vmatprep.subr.mxu0 0.0
        %2130 = vmatpush1.msra.mxu0 0.0
        %2131 = vmatprep.subr.mxu0 0.0
        %2132 = vmatpush1.msra.mxu0 0.0
        %2133 = vmatprep.subr.mxu0 0.0
        %2134 = vmatpush1.msra.mxu0 0.0
        %2135 = vmatprep.subr.mxu0 0.0
        %2136 = vmatpush1.msra.mxu0 0.0
        %2137 = vmatprep.subr.mxu0 0.0
        %2138 = vmatpush1.msra.mxu0 0.0
        %2139 = vmatprep.subr.mxu0 0.0
        %2140 = vmatpush1.msra.mxu0 0.0
        %2141 = vmatprep.mubr.f32.mxu0 0.0
        %2142 = vmatmul.mubr.f32.gmra.mrb[0].mxu0 %v2059
        %v2143 = vpop.f32.mrb[0].mxu0
        %v2144 = vadd.f32 0.0, %v2143
        %v2145 = vpop.f32.mrb[0].mxu0
        %2146 = vdwg.mxu0
        %v2147 = vadd.f32 %v1841, %v2144
        %2148 = vmatprep.subr.mxu0 0.0
        %2149 = vmatpush1.msra.mxu0 %v288
        %2150 = vmatprep.subr.mxu0 0.0
        %2151 = vmatpush1.msra.mxu0 %v289
        %2152 = vmatprep.subr.mxu0 0.0
        %2153 = vmatpush1.msra.mxu0 %v290
        %2154 = vmatprep.subr.mxu0 0.0
        %2155 = vmatpush1.msra.mxu0 %v291
        %2156 = vmatprep.subr.mxu0 0.0
        %2157 = vmatpush1.msra.mxu0 %v292
        %2158 = vmatprep.subr.mxu0 0.0
        %2159 = vmatpush1.msra.mxu0 %v293
        %2160 = vmatprep.subr.mxu0 0.0
        %2161 = vmatpush1.msra.mxu0 %v294
        %2162 = vmatprep.subr.mxu0 0.0
        %2163 = vmatpush1.msra.mxu0 %v295
        %2164 = vmatprep.subr.mxu0 0.0
        %2165 = vmatpush1.msra.mxu0 %v296
        %2166 = vmatprep.subr.mxu0 0.0
        %2167 = vmatpush1.msra.mxu0 0.0
        %2168 = vmatprep.subr.mxu0 0.0
        %2169 = vmatpush1.msra.mxu0 0.0
        %2170 = vmatprep.subr.mxu0 0.0
        %2171 = vmatpush1.msra.mxu0 0.0
        %2172 = vmatprep.subr.mxu0 0.0
        %2173 = vmatpush1.msra.mxu0 0.0
        %2174 = vmatprep.subr.mxu0 0.0
        %2175 = vmatpush1.msra.mxu0 0.0
        %2176 = vmatprep.subr.mxu0 0.0
        %2177 = vmatpush1.msra.mxu0 0.0
        %2178 = vmatprep.subr.mxu0 0.0
        %2179 = vmatpush1.msra.mxu0 0.0
        %2180 = vmatprep.subr.mxu0 0.0
        %2181 = vmatpush1.msra.mxu0 0.0
        %2182 = vmatprep.subr.mxu0 0.0
        %2183 = vmatpush1.msra.mxu0 0.0
        %2184 = vmatprep.subr.mxu0 0.0
        %2185 = vmatpush1.msra.mxu0 0.0
        %2186 = vmatprep.subr.mxu0 0.0
        %2187 = vmatpush1.msra.mxu0 0.0
        %2188 = vmatprep.subr.mxu0 0.0
        %2189 = vmatpush1.msra.mxu0 0.0
        %2190 = vmatprep.subr.mxu0 0.0
        %2191 = vmatpush1.msra.mxu0 0.0
        %2192 = vmatprep.subr.mxu0 0.0
        %2193 = vmatpush1.msra.mxu0 0.0
        %2194 = vmatprep.subr.mxu0 0.0
        %2195 = vmatpush1.msra.mxu0 0.0
        %2196 = vmatprep.subr.mxu0 0.0
        %2197 = vmatpush1.msra.mxu0 0.0
        %2198 = vmatprep.subr.mxu0 0.0
        %2199 = vmatpush1.msra.mxu0 0.0
        %2200 = vmatprep.subr.mxu0 0.0
        %2201 = vmatpush1.msra.mxu0 0.0
        %2202 = vmatprep.subr.mxu0 0.0
        %2203 = vmatpush1.msra.mxu0 0.0
        %2204 = vmatprep.subr.mxu0 0.0
        %2205 = vmatpush1.msra.mxu0 0.0
        %2206 = vmatprep.subr.mxu0 0.0
        %2207 = vmatpush1.msra.mxu0 0.0
        %2208 = vmatprep.subr.mxu0 0.0
        %2209 = vmatpush1.msra.mxu0 0.0
        %2210 = vmatprep.subr.mxu0 0.0
        %2211 = vmatpush1.msra.mxu0 0.0
        %2212 = vmatprep.mubr.f32.mxu0 0.0
        %2213 = vmatmul.mubr.f32.gmra.mrb[0].mxu0 %v1985
        %v2214 = vpop.f32.mrb[0].mxu0
        %v2215 = vadd.f32 0.0, %v2214
        %v2216 = vpop.f32.mrb[0].mxu0
        %2217 = vdwg.mxu0
        %2218 = vmatprep.subr.mxu0 0.0
        %2219 = vmatpush1.msra.mxu0 %v276
        %2220 = vmatprep.subr.mxu0 0.0
        %2221 = vmatpush1.msra.mxu0 %v277
        %2222 = vmatprep.subr.mxu0 0.0
        %2223 = vmatpush1.msra.mxu0 %v278
        %2224 = vmatprep.subr.mxu0 0.0
        %2225 = vmatpush1.msra.mxu0 %v279
        %2226 = vmatprep.subr.mxu0 0.0
        %2227 = vmatpush1.msra.mxu0 %v280
        %2228 = vmatprep.subr.mxu0 0.0
        %2229 = vmatpush1.msra.mxu0 %v281
        %2230 = vmatprep.subr.mxu0 0.0
        %2231 = vmatpush1.msra.mxu0 %v282
        %2232 = vmatprep.subr.mxu0 0.0
        %2233 = vmatpush1.msra.mxu0 %v283
        %2234 = vmatprep.subr.mxu0 0.0
        %2235 = vmatpush1.msra.mxu0 %v284
        %2236 = vmatprep.subr.mxu0 0.0
        %2237 = vmatpush1.msra.mxu0 0.0
        %2238 = vmatprep.subr.mxu0 0.0
        %2239 = vmatpush1.msra.mxu0 0.0
        %2240 = vmatprep.subr.mxu0 0.0
        %2241 = vmatpush1.msra.mxu0 0.0
        %2242 = vmatprep.subr.mxu0 0.0
        %2243 = vmatpush1.msra.mxu0 0.0
        %2244 = vmatprep.subr.mxu0 0.0
        %2245 = vmatpush1.msra.mxu0 0.0
        %2246 = vmatprep.subr.mxu0 0.0
        %2247 = vmatpush1.msra.mxu0 0.0
        %2248 = vmatprep.subr.mxu0 0.0
        %2249 = vmatpush1.msra.mxu0 0.0
        %2250 = vmatprep.subr.mxu0 0.0
        %2251 = vmatpush1.msra.mxu0 0.0
        %2252 = vmatprep.subr.mxu0 0.0
        %2253 = vmatpush1.msra.mxu0 0.0
        %2254 = vmatprep.subr.mxu0 0.0
        %2255 = vmatpush1.msra.mxu0 0.0
        %2256 = vmatprep.subr.mxu0 0.0
        %2257 = vmatpush1.msra.mxu0 0.0
        %2258 = vmatprep.subr.mxu0 0.0
        %2259 = vmatpush1.msra.mxu0 0.0
        %2260 = vmatprep.subr.mxu0 0.0
        %2261 = vmatpush1.msra.mxu0 0.0
        %2262 = vmatprep.subr.mxu0 0.0
        %2263 = vmatpush1.msra.mxu0 0.0
        %2264 = vmatprep.subr.mxu0 0.0
        %2265 = vmatpush1.msra.mxu0 0.0
        %2266 = vmatprep.subr.mxu0 0.0
        %2267 = vmatpush1.msra.mxu0 0.0
        %2268 = vmatprep.subr.mxu0 0.0
        %2269 = vmatpush1.msra.mxu0 0.0
        %2270 = vmatprep.subr.mxu0 0.0
        %2271 = vmatpush1.msra.mxu0 0.0
        %2272 = vmatprep.subr.mxu0 0.0
        %2273 = vmatpush1.msra.mxu0 0.0
        %2274 = vmatprep.subr.mxu0 0.0
        %2275 = vmatpush1.msra.mxu0 0.0
        %2276 = vmatprep.subr.mxu0 0.0
        %2277 = vmatpush1.msra.mxu0 0.0
        %2278 = vmatprep.subr.mxu0 0.0
        %2279 = vmatpush1.msra.mxu0 0.0
        %2280 = vmatprep.subr.mxu0 0.0
        %2281 = vmatpush1.msra.mxu0 0.0
        %2282 = vmatprep.mubr.f32.mxu0 0.0
        %2283 = vmatmul.mubr.f32.gmra.mrb[0].mxu0 %v1679
        %v2284 = vpop.f32.mrb[0].mxu0
        %v2285 = vadd.f32 %v2215, %v2284
        %v2286 = vpop.f32.mrb[0].mxu0
        %2287 = vdwg.mxu0
        %s2288 = scalar_lea.vmem %s273, 8
        %v2289 = vld [vmem:[%s2288] sm:$0x1]
        %v2291 = vsel %vm297, %v2289, 0
        %2293 = vmatprep.subr.mxu0 0.0
        %2294 = vmatpush1.msra.mxu0 %v447
        %2295 = vmatprep.subr.mxu0 0.0
        %2296 = vmatpush1.msra.mxu0 %v448
        %2297 = vmatprep.subr.mxu0 0.0
        %2298 = vmatpush1.msra.mxu0 %v449
        %2299 = vmatprep.subr.mxu0 0.0
        %2300 = vmatpush1.msra.mxu0 %v450
        %2301 = vmatprep.subr.mxu0 0.0
        %2302 = vmatpush1.msra.mxu0 %v451
        %2303 = vmatprep.subr.mxu0 0.0
        %2304 = vmatpush1.msra.mxu0 %v452
        %2305 = vmatprep.subr.mxu0 0.0
        %2306 = vmatpush1.msra.mxu0 %v453
        %2307 = vmatprep.subr.mxu0 0.0
        %2308 = vmatpush1.msra.mxu0 %v454
        %2309 = vmatprep.subr.mxu0 0.0
        %2310 = vmatpush1.msra.mxu0 %v455
        %2311 = vmatprep.subr.mxu0 0.0
        %2312 = vmatpush1.msra.mxu0 0.0
        %2313 = vmatprep.subr.mxu0 0.0
        %2314 = vmatpush1.msra.mxu0 0.0
        %2315 = vmatprep.subr.mxu0 0.0
        %2316 = vmatpush1.msra.mxu0 0.0
        %2317 = vmatprep.subr.mxu0 0.0
        %2318 = vmatpush1.msra.mxu0 0.0
        %2319 = vmatprep.subr.mxu0 0.0
        %2320 = vmatpush1.msra.mxu0 0.0
        %2321 = vmatprep.subr.mxu0 0.0
        %2322 = vmatpush1.msra.mxu0 0.0
        %2323 = vmatprep.subr.mxu0 0.0
        %2324 = vmatpush1.msra.mxu0 0.0
        %2325 = vmatprep.subr.mxu0 0.0
        %2326 = vmatpush1.msra.mxu0 0.0
        %2327 = vmatprep.subr.mxu0 0.0
        %2328 = vmatpush1.msra.mxu0 0.0
        %2329 = vmatprep.subr.mxu0 0.0
        %2330 = vmatpush1.msra.mxu0 0.0
        %2331 = vmatprep.subr.mxu0 0.0
        %2332 = vmatpush1.msra.mxu0 0.0
        %2333 = vmatprep.subr.mxu0 0.0
        %2334 = vmatpush1.msra.mxu0 0.0
        %2335 = vmatprep.subr.mxu0 0.0
        %2336 = vmatpush1.msra.mxu0 0.0
        %2337 = vmatprep.subr.mxu0 0.0
        %2338 = vmatpush1.msra.mxu0 0.0
        %2339 = vmatprep.subr.mxu0 0.0
        %2340 = vmatpush1.msra.mxu0 0.0
        %2341 = vmatprep.subr.mxu0 0.0
        %2342 = vmatpush1.msra.mxu0 0.0
        %2343 = vmatprep.subr.mxu0 0.0
        %2344 = vmatpush1.msra.mxu0 0.0
        %2345 = vmatprep.subr.mxu0 0.0
        %2346 = vmatpush1.msra.mxu0 0.0
        %2347 = vmatprep.subr.mxu0 0.0
        %2348 = vmatpush1.msra.mxu0 0.0
        %2349 = vmatprep.subr.mxu0 0.0
        %2350 = vmatpush1.msra.mxu0 0.0
        %2351 = vmatprep.subr.mxu0 0.0
        %2352 = vmatpush1.msra.mxu0 0.0
        %2353 = vmatprep.subr.mxu0 0.0
        %2354 = vmatpush1.msra.mxu0 0.0
        %2355 = vmatprep.subr.mxu0 0.0
        %2356 = vmatpush1.msra.mxu0 0.0
        %2357 = vmatprep.mubr.f32.mxu0 0.0
        %2358 = vmatmul.mubr.f32.gmra.mrb[0].mxu0 %v2291
        %v2359 = vpop.f32.mrb[0].mxu0
        %v2360 = vadd.f32 0.0, %v2359
        %v2361 = vpop.f32.mrb[0].mxu0
        %2362 = vdwg.mxu0
        %v2363 = vadd.f32 %v2285, %v2360
        %v2364 = vadd.f32 %v2363, %v530
        %v2365 = vmax.f32 %v2364, 0.0
        %s2366 = scalar_lea.vmem %s3, 768
        %v2367 = vld [vmem:[%s2366] sm:$0xff]
        %v2368 = vld [vmem:[%s2366 + $0x8] sm:$0xff]
        %v2369 = vld [vmem:[%s2366 + $0x10] sm:$0xff]
        %v2370 = vld [vmem:[%s2366 + $0x18] sm:$0xff]
        %v2371 = vld [vmem:[%s2366 + $0x20] sm:$0xff]
        %v2372 = vld [vmem:[%s2366 + $0x28] sm:$0xff]
        %v2373 = vld [vmem:[%s2366 + $0x30] sm:$0xff]
        %v2374 = vld [vmem:[%s2366 + $0x38] sm:$0xff]
        %v2375 = vld [vmem:[%s2366 + $0x40] sm:$0xff]
        %v2376 = vld [vmem:[%s2366 + $0x48] sm:$0xff]
        %v2377 = vld [vmem:[%s2366 + $0x50] sm:$0xff]
        %v2378 = vld [vmem:[%s2366 + $0x58] sm:$0xff]
        %v2379 = vld [vmem:[%s2366 + $0x60] sm:$0xff]
        %v2380 = vld [vmem:[%s2366 + $0x68] sm:$0xff]
        %v2381 = vld [vmem:[%s2366 + $0x70] sm:$0xff]
        %v2382 = vld [vmem:[%s2366 + $0x78] sm:$0xff]
        %2383 = vmatprep.subr.mxu0 0.0
        %2384 = vmatpush1.msra.mxu0 %v2367
        %2385 = vmatprep.subr.mxu0 0.0
        %2386 = vmatpush1.msra.mxu0 %v2368
        %2387 = vmatprep.subr.mxu0 0.0
        %2388 = vmatpush1.msra.mxu0 %v2369
        %2389 = vmatprep.subr.mxu0 0.0
        %2390 = vmatpush1.msra.mxu0 %v2370
        %2391 = vmatprep.subr.mxu0 0.0
        %2392 = vmatpush1.msra.mxu0 %v2371
        %2393 = vmatprep.subr.mxu0 0.0
        %2394 = vmatpush1.msra.mxu0 %v2372
        %2395 = vmatprep.subr.mxu0 0.0
        %2396 = vmatpush1.msra.mxu0 %v2373
        %2397 = vmatprep.subr.mxu0 0.0
        %2398 = vmatpush1.msra.mxu0 %v2374
        %2399 = vmatprep.subr.mxu0 0.0
        %2400 = vmatpush1.msra.mxu0 %v2375
        %2401 = vmatprep.subr.mxu0 0.0
        %2402 = vmatpush1.msra.mxu0 %v2376
        %2403 = vmatprep.subr.mxu0 0.0
        %2404 = vmatpush1.msra.mxu0 %v2377
        %2405 = vmatprep.subr.mxu0 0.0
        %2406 = vmatpush1.msra.mxu0 %v2378
        %2407 = vmatprep.subr.mxu0 0.0
        %2408 = vmatpush1.msra.mxu0 %v2379
        %2409 = vmatprep.subr.mxu0 0.0
        %2410 = vmatpush1.msra.mxu0 %v2380
        %2411 = vmatprep.subr.mxu0 0.0
        %2412 = vmatpush1.msra.mxu0 %v2381
        %2413 = vmatprep.subr.mxu0 0.0
        %2414 = vmatpush1.msra.mxu0 %v2382
        %2415 = vmatprep.subr.mxu0 0.0
        %2416 = vmatpush1.msra.mxu0 0.0
        %2417 = vmatprep.subr.mxu0 0.0
        %2418 = vmatpush1.msra.mxu0 0.0
        %2419 = vmatprep.subr.mxu0 0.0
        %2420 = vmatpush1.msra.mxu0 0.0
        %2421 = vmatprep.subr.mxu0 0.0
        %2422 = vmatpush1.msra.mxu0 0.0
        %2423 = vmatprep.subr.mxu0 0.0
        %2424 = vmatpush1.msra.mxu0 0.0
        %2425 = vmatprep.subr.mxu0 0.0
        %2426 = vmatpush1.msra.mxu0 0.0
        %2427 = vmatprep.subr.mxu0 0.0
        %2428 = vmatpush1.msra.mxu0 0.0
        %2429 = vmatprep.subr.mxu0 0.0
        %2430 = vmatpush1.msra.mxu0 0.0
        %2431 = vmatprep.subr.mxu0 0.0
        %2432 = vmatpush1.msra.mxu0 0.0
        %2433 = vmatprep.subr.mxu0 0.0
        %2434 = vmatpush1.msra.mxu0 0.0
        %2435 = vmatprep.subr.mxu0 0.0
        %2436 = vmatpush1.msra.mxu0 0.0
        %2437 = vmatprep.subr.mxu0 0.0
        %2438 = vmatpush1.msra.mxu0 0.0
        %2439 = vmatprep.subr.mxu0 0.0
        %2440 = vmatpush1.msra.mxu0 0.0
        %2441 = vmatprep.subr.mxu0 0.0
        %2442 = vmatpush1.msra.mxu0 0.0
        %2443 = vmatprep.subr.mxu0 0.0
        %2444 = vmatpush1.msra.mxu0 0.0
        %2445 = vmatprep.subr.mxu0 0.0
        %2446 = vmatpush1.msra.mxu0 0.0
        %2447 = vmatprep.mubr.f32.mxu0 0.0
        %2448 = vmatmul.mubr.f32.gmra.mrb[0].mxu0 %v2365
        %v2449 = vpop.f32.mrb[0].mxu0
        %v2450 = vadd.f32 0.0, %v2449
        %v2451 = vpop.f32.mrb[0].mxu0
        %2452 = vdwg.mxu0
        %v2453 = vadd.f32 %v2147, %v2450
        %2454 = vmatprep.subr.mxu0 0.0
        %2455 = vmatpush1.msra.mxu0 %v288
        %2456 = vmatprep.subr.mxu0 0.0
        %2457 = vmatpush1.msra.mxu0 %v289
        %2458 = vmatprep.subr.mxu0 0.0
        %2459 = vmatpush1.msra.mxu0 %v290
        %2460 = vmatprep.subr.mxu0 0.0
        %2461 = vmatpush1.msra.mxu0 %v291
        %2462 = vmatprep.subr.mxu0 0.0
        %2463 = vmatpush1.msra.mxu0 %v292
        %2464 = vmatprep.subr.mxu0 0.0
        %2465 = vmatpush1.msra.mxu0 %v293
        %2466 = vmatprep.subr.mxu0 0.0
        %2467 = vmatpush1.msra.mxu0 %v294
        %2468 = vmatprep.subr.mxu0 0.0
        %2469 = vmatpush1.msra.mxu0 %v295
        %2470 = vmatprep.subr.mxu0 0.0
        %2471 = vmatpush1.msra.mxu0 %v296
        %2472 = vmatprep.subr.mxu0 0.0
        %2473 = vmatpush1.msra.mxu0 0.0
        %2474 = vmatprep.subr.mxu0 0.0
        %2475 = vmatpush1.msra.mxu0 0.0
        %2476 = vmatprep.subr.mxu0 0.0
        %2477 = vmatpush1.msra.mxu0 0.0
        %2478 = vmatprep.subr.mxu0 0.0
        %2479 = vmatpush1.msra.mxu0 0.0
        %2480 = vmatprep.subr.mxu0 0.0
        %2481 = vmatpush1.msra.mxu0 0.0
        %2482 = vmatprep.subr.mxu0 0.0
        %2483 = vmatpush1.msra.mxu0 0.0
        %2484 = vmatprep.subr.mxu0 0.0
        %2485 = vmatpush1.msra.mxu0 0.0
        %2486 = vmatprep.subr.mxu0 0.0
        %2487 = vmatpush1.msra.mxu0 0.0
        %2488 = vmatprep.subr.mxu0 0.0
        %2489 = vmatpush1.msra.mxu0 0.0
        %2490 = vmatprep.subr.mxu0 0.0
        %2491 = vmatpush1.msra.mxu0 0.0
        %2492 = vmatprep.subr.mxu0 0.0
        %2493 = vmatpush1.msra.mxu0 0.0
        %2494 = vmatprep.subr.mxu0 0.0
        %2495 = vmatpush1.msra.mxu0 0.0
        %2496 = vmatprep.subr.mxu0 0.0
        %2497 = vmatpush1.msra.mxu0 0.0
        %2498 = vmatprep.subr.mxu0 0.0
        %2499 = vmatpush1.msra.mxu0 0.0
        %2500 = vmatprep.subr.mxu0 0.0
        %2501 = vmatpush1.msra.mxu0 0.0
        %2502 = vmatprep.subr.mxu0 0.0
        %2503 = vmatpush1.msra.mxu0 0.0
        %2504 = vmatprep.subr.mxu0 0.0
        %2505 = vmatpush1.msra.mxu0 0.0
        %2506 = vmatprep.subr.mxu0 0.0
        %2507 = vmatpush1.msra.mxu0 0.0
        %2508 = vmatprep.subr.mxu0 0.0
        %2509 = vmatpush1.msra.mxu0 0.0
        %2510 = vmatprep.subr.mxu0 0.0
        %2511 = vmatpush1.msra.mxu0 0.0
        %2512 = vmatprep.subr.mxu0 0.0
        %2513 = vmatpush1.msra.mxu0 0.0
        %2514 = vmatprep.subr.mxu0 0.0
        %2515 = vmatpush1.msra.mxu0 0.0
        %2516 = vmatprep.subr.mxu0 0.0
        %2517 = vmatpush1.msra.mxu0 0.0
        %2518 = vmatprep.mubr.f32.mxu0 0.0
        %2519 = vmatmul.mubr.f32.gmra.mrb[0].mxu0 %v2291
        %v2520 = vpop.f32.mrb[0].mxu0
        %v2521 = vadd.f32 0.0, %v2520
        %v2522 = vpop.f32.mrb[0].mxu0
        %2523 = vdwg.mxu0
        %2524 = vmatprep.subr.mxu0 0.0
        %2525 = vmatpush1.msra.mxu0 %v276
        %2526 = vmatprep.subr.mxu0 0.0
        %2527 = vmatpush1.msra.mxu0 %v277
        %2528 = vmatprep.subr.mxu0 0.0
        %2529 = vmatpush1.msra.mxu0 %v278
        %2530 = vmatprep.subr.mxu0 0.0
        %2531 = vmatpush1.msra.mxu0 %v279
        %2532 = vmatprep.subr.mxu0 0.0
        %2533 = vmatpush1.msra.mxu0 %v280
        %2534 = vmatprep.subr.mxu0 0.0
        %2535 = vmatpush1.msra.mxu0 %v281
        %2536 = vmatprep.subr.mxu0 0.0
        %2537 = vmatpush1.msra.mxu0 %v282
        %2538 = vmatprep.subr.mxu0 0.0
        %2539 = vmatpush1.msra.mxu0 %v283
        %2540 = vmatprep.subr.mxu0 0.0
        %2541 = vmatpush1.msra.mxu0 %v284
        %2542 = vmatprep.subr.mxu0 0.0
        %2543 = vmatpush1.msra.mxu0 0.0
        %2544 = vmatprep.subr.mxu0 0.0
        %2545 = vmatpush1.msra.mxu0 0.0
        %2546 = vmatprep.subr.mxu0 0.0
        %2547 = vmatpush1.msra.mxu0 0.0
        %2548 = vmatprep.subr.mxu0 0.0
        %2549 = vmatpush1.msra.mxu0 0.0
        %2550 = vmatprep.subr.mxu0 0.0
        %2551 = vmatpush1.msra.mxu0 0.0
        %2552 = vmatprep.subr.mxu0 0.0
        %2553 = vmatpush1.msra.mxu0 0.0
        %2554 = vmatprep.subr.mxu0 0.0
        %2555 = vmatpush1.msra.mxu0 0.0
        %2556 = vmatprep.subr.mxu0 0.0
        %2557 = vmatpush1.msra.mxu0 0.0
        %2558 = vmatprep.subr.mxu0 0.0
        %2559 = vmatpush1.msra.mxu0 0.0
        %2560 = vmatprep.subr.mxu0 0.0
        %2561 = vmatpush1.msra.mxu0 0.0
        %2562 = vmatprep.subr.mxu0 0.0
        %2563 = vmatpush1.msra.mxu0 0.0
        %2564 = vmatprep.subr.mxu0 0.0
        %2565 = vmatpush1.msra.mxu0 0.0
        %2566 = vmatprep.subr.mxu0 0.0
        %2567 = vmatpush1.msra.mxu0 0.0
        %2568 = vmatprep.subr.mxu0 0.0
        %2569 = vmatpush1.msra.mxu0 0.0
        %2570 = vmatprep.subr.mxu0 0.0
        %2571 = vmatpush1.msra.mxu0 0.0
        %2572 = vmatprep.subr.mxu0 0.0
        %2573 = vmatpush1.msra.mxu0 0.0
        %2574 = vmatprep.subr.mxu0 0.0
        %2575 = vmatpush1.msra.mxu0 0.0
        %2576 = vmatprep.subr.mxu0 0.0
        %2577 = vmatpush1.msra.mxu0 0.0
        %2578 = vmatprep.subr.mxu0 0.0
        %2579 = vmatpush1.msra.mxu0 0.0
        %2580 = vmatprep.subr.mxu0 0.0
        %2581 = vmatpush1.msra.mxu0 0.0
        %2582 = vmatprep.subr.mxu0 0.0
        %2583 = vmatpush1.msra.mxu0 0.0
        %2584 = vmatprep.subr.mxu0 0.0
        %2585 = vmatpush1.msra.mxu0 0.0
        %2586 = vmatprep.subr.mxu0 0.0
        %2587 = vmatpush1.msra.mxu0 0.0
        %2588 = vmatprep.mubr.f32.mxu0 0.0
        %2589 = vmatmul.mubr.f32.gmra.mrb[0].mxu0 %v1985
        %v2590 = vpop.f32.mrb[0].mxu0
        %v2591 = vadd.f32 %v2521, %v2590
        %v2592 = vpop.f32.mrb[0].mxu0
        %2593 = vdwg.mxu0
        %s2594 = scalar_lea.vmem %s273, 9
        %v2595 = vld [vmem:[%s2594] sm:$0x1]
        %v2597 = vsel %vm297, %v2595, 0
        %2599 = vmatprep.subr.mxu0 0.0
        %2600 = vmatpush1.msra.mxu0 %v447
        %2601 = vmatprep.subr.mxu0 0.0
        %2602 = vmatpush1.msra.mxu0 %v448
        %2603 = vmatprep.subr.mxu0 0.0
        %2604 = vmatpush1.msra.mxu0 %v449
        %2605 = vmatprep.subr.mxu0 0.0
        %2606 = vmatpush1.msra.mxu0 %v450
        %2607 = vmatprep.subr.mxu0 0.0
        %2608 = vmatpush1.msra.mxu0 %v451
        %2609 = vmatprep.subr.mxu0 0.0
        %2610 = vmatpush1.msra.mxu0 %v452
        %2611 = vmatprep.subr.mxu0 0.0
        %2612 = vmatpush1.msra.mxu0 %v453
        %2613 = vmatprep.subr.mxu0 0.0
        %2614 = vmatpush1.msra.mxu0 %v454
        %2615 = vmatprep.subr.mxu0 0.0
        %2616 = vmatpush1.msra.mxu0 %v455
        %2617 = vmatprep.subr.mxu0 0.0
        %2618 = vmatpush1.msra.mxu0 0.0
        %2619 = vmatprep.subr.mxu0 0.0
        %2620 = vmatpush1.msra.mxu0 0.0
        %2621 = vmatprep.subr.mxu0 0.0
        %2622 = vmatpush1.msra.mxu0 0.0
        %2623 = vmatprep.subr.mxu0 0.0
        %2624 = vmatpush1.msra.mxu0 0.0
        %2625 = vmatprep.subr.mxu0 0.0
        %2626 = vmatpush1.msra.mxu0 0.0
        %2627 = vmatprep.subr.mxu0 0.0
        %2628 = vmatpush1.msra.mxu0 0.0
        %2629 = vmatprep.subr.mxu0 0.0
        %2630 = vmatpush1.msra.mxu0 0.0
        %2631 = vmatprep.subr.mxu0 0.0
        %2632 = vmatpush1.msra.mxu0 0.0
        %2633 = vmatprep.subr.mxu0 0.0
        %2634 = vmatpush1.msra.mxu0 0.0
        %2635 = vmatprep.subr.mxu0 0.0
        %2636 = vmatpush1.msra.mxu0 0.0
        %2637 = vmatprep.subr.mxu0 0.0
        %2638 = vmatpush1.msra.mxu0 0.0
        %2639 = vmatprep.subr.mxu0 0.0
        %2640 = vmatpush1.msra.mxu0 0.0
        %2641 = vmatprep.subr.mxu0 0.0
        %2642 = vmatpush1.msra.mxu0 0.0
        %2643 = vmatprep.subr.mxu0 0.0
        %2644 = vmatpush1.msra.mxu0 0.0
        %2645 = vmatprep.subr.mxu0 0.0
        %2646 = vmatpush1.msra.mxu0 0.0
        %2647 = vmatprep.subr.mxu0 0.0
        %2648 = vmatpush1.msra.mxu0 0.0
        %2649 = vmatprep.subr.mxu0 0.0
        %2650 = vmatpush1.msra.mxu0 0.0
        %2651 = vmatprep.subr.mxu0 0.0
        %2652 = vmatpush1.msra.mxu0 0.0
        %2653 = vmatprep.subr.mxu0 0.0
        %2654 = vmatpush1.msra.mxu0 0.0
        %2655 = vmatprep.subr.mxu0 0.0
        %2656 = vmatpush1.msra.mxu0 0.0
        %2657 = vmatprep.subr.mxu0 0.0
        %2658 = vmatpush1.msra.mxu0 0.0
        %2659 = vmatprep.subr.mxu0 0.0
        %2660 = vmatpush1.msra.mxu0 0.0
        %2661 = vmatprep.subr.mxu0 0.0
        %2662 = vmatpush1.msra.mxu0 0.0
        %2663 = vmatprep.mubr.f32.mxu0 0.0
        %2664 = vmatmul.mubr.f32.gmra.mrb[0].mxu0 %v2597
        %v2665 = vpop.f32.mrb[0].mxu0
        %v2666 = vadd.f32 0.0, %v2665
        %v2667 = vpop.f32.mrb[0].mxu0
        %2668 = vdwg.mxu0
        %v2669 = vadd.f32 %v2591, %v2666
        %v2670 = vadd.f32 %v2669, %v530
        %v2671 = vmax.f32 %v2670, 0.0
        %s2672 = scalar_lea.vmem %s3, 896
        %v2673 = vld [vmem:[%s2672] sm:$0xff]
        %v2674 = vld [vmem:[%s2672 + $0x8] sm:$0xff]
        %v2675 = vld [vmem:[%s2672 + $0x10] sm:$0xff]
        %v2676 = vld [vmem:[%s2672 + $0x18] sm:$0xff]
        %v2677 = vld [vmem:[%s2672 + $0x20] sm:$0xff]
        %v2678 = vld [vmem:[%s2672 + $0x28] sm:$0xff]
        %v2679 = vld [vmem:[%s2672 + $0x30] sm:$0xff]
        %v2680 = vld [vmem:[%s2672 + $0x38] sm:$0xff]
        %v2681 = vld [vmem:[%s2672 + $0x40] sm:$0xff]
        %v2682 = vld [vmem:[%s2672 + $0x48] sm:$0xff]
        %v2683 = vld [vmem:[%s2672 + $0x50] sm:$0xff]
        %v2684 = vld [vmem:[%s2672 + $0x58] sm:$0xff]
        %v2685 = vld [vmem:[%s2672 + $0x60] sm:$0xff]
        %v2686 = vld [vmem:[%s2672 + $0x68] sm:$0xff]
        %v2687 = vld [vmem:[%s2672 + $0x70] sm:$0xff]
        %v2688 = vld [vmem:[%s2672 + $0x78] sm:$0xff]
        %2689 = vmatprep.subr.mxu0 0.0
        %2690 = vmatpush1.msra.mxu0 %v2673
        %2691 = vmatprep.subr.mxu0 0.0
        %2692 = vmatpush1.msra.mxu0 %v2674
        %2693 = vmatprep.subr.mxu0 0.0
        %2694 = vmatpush1.msra.mxu0 %v2675
        %2695 = vmatprep.subr.mxu0 0.0
        %2696 = vmatpush1.msra.mxu0 %v2676
        %2697 = vmatprep.subr.mxu0 0.0
        %2698 = vmatpush1.msra.mxu0 %v2677
        %2699 = vmatprep.subr.mxu0 0.0
        %2700 = vmatpush1.msra.mxu0 %v2678
        %2701 = vmatprep.subr.mxu0 0.0
        %2702 = vmatpush1.msra.mxu0 %v2679
        %2703 = vmatprep.subr.mxu0 0.0
        %2704 = vmatpush1.msra.mxu0 %v2680
        %2705 = vmatprep.subr.mxu0 0.0
        %2706 = vmatpush1.msra.mxu0 %v2681
        %2707 = vmatprep.subr.mxu0 0.0
        %2708 = vmatpush1.msra.mxu0 %v2682
        %2709 = vmatprep.subr.mxu0 0.0
        %2710 = vmatpush1.msra.mxu0 %v2683
        %2711 = vmatprep.subr.mxu0 0.0
        %2712 = vmatpush1.msra.mxu0 %v2684
        %2713 = vmatprep.subr.mxu0 0.0
        %2714 = vmatpush1.msra.mxu0 %v2685
        %2715 = vmatprep.subr.mxu0 0.0
        %2716 = vmatpush1.msra.mxu0 %v2686
        %2717 = vmatprep.subr.mxu0 0.0
        %2718 = vmatpush1.msra.mxu0 %v2687
        %2719 = vmatprep.subr.mxu0 0.0
        %2720 = vmatpush1.msra.mxu0 %v2688
        %2721 = vmatprep.subr.mxu0 0.0
        %2722 = vmatpush1.msra.mxu0 0.0
        %2723 = vmatprep.subr.mxu0 0.0
        %2724 = vmatpush1.msra.mxu0 0.0
        %2725 = vmatprep.subr.mxu0 0.0
        %2726 = vmatpush1.msra.mxu0 0.0
        %2727 = vmatprep.subr.mxu0 0.0
        %2728 = vmatpush1.msra.mxu0 0.0
        %2729 = vmatprep.subr.mxu0 0.0
        %2730 = vmatpush1.msra.mxu0 0.0
        %2731 = vmatprep.subr.mxu0 0.0
        %2732 = vmatpush1.msra.mxu0 0.0
        %2733 = vmatprep.subr.mxu0 0.0
        %2734 = vmatpush1.msra.mxu0 0.0
        %2735 = vmatprep.subr.mxu0 0.0
        %2736 = vmatpush1.msra.mxu0 0.0
        %2737 = vmatprep.subr.mxu0 0.0
        %2738 = vmatpush1.msra.mxu0 0.0
        %2739 = vmatprep.subr.mxu0 0.0
        %2740 = vmatpush1.msra.mxu0 0.0
        %2741 = vmatprep.subr.mxu0 0.0
        %2742 = vmatpush1.msra.mxu0 0.0
        %2743 = vmatprep.subr.mxu0 0.0
        %2744 = vmatpush1.msra.mxu0 0.0
        %2745 = vmatprep.subr.mxu0 0.0
        %2746 = vmatpush1.msra.mxu0 0.0
        %2747 = vmatprep.subr.mxu0 0.0
        %2748 = vmatpush1.msra.mxu0 0.0
        %2749 = vmatprep.subr.mxu0 0.0
        %2750 = vmatpush1.msra.mxu0 0.0
        %2751 = vmatprep.subr.mxu0 0.0
        %2752 = vmatpush1.msra.mxu0 0.0
        %2753 = vmatprep.mubr.f32.mxu0 0.0
        %2754 = vmatmul.mubr.f32.gmra.mrb[0].mxu0 %v2671
        %v2755 = vpop.f32.mrb[0].mxu0
        %v2756 = vadd.f32 0.0, %v2755
        %v2757 = vpop.f32.mrb[0].mxu0
        %2758 = vdwg.mxu0
        %v2759 = vadd.f32 %v2453, %v2756
        %2760 = vmatprep.subr.mxu0 0.0
        %2761 = vmatpush1.msra.mxu0 %v288
        %2762 = vmatprep.subr.mxu0 0.0
        %2763 = vmatpush1.msra.mxu0 %v289
        %2764 = vmatprep.subr.mxu0 0.0
        %2765 = vmatpush1.msra.mxu0 %v290
        %2766 = vmatprep.subr.mxu0 0.0
        %2767 = vmatpush1.msra.mxu0 %v291
        %2768 = vmatprep.subr.mxu0 0.0
        %2769 = vmatpush1.msra.mxu0 %v292
        %2770 = vmatprep.subr.mxu0 0.0
        %2771 = vmatpush1.msra.mxu0 %v293
        %2772 = vmatprep.subr.mxu0 0.0
        %2773 = vmatpush1.msra.mxu0 %v294
        %2774 = vmatprep.subr.mxu0 0.0
        %2775 = vmatpush1.msra.mxu0 %v295
        %2776 = vmatprep.subr.mxu0 0.0
        %2777 = vmatpush1.msra.mxu0 %v296
        %2778 = vmatprep.subr.mxu0 0.0
        %2779 = vmatpush1.msra.mxu0 0.0
        %2780 = vmatprep.subr.mxu0 0.0
        %2781 = vmatpush1.msra.mxu0 0.0
        %2782 = vmatprep.subr.mxu0 0.0
        %2783 = vmatpush1.msra.mxu0 0.0
        %2784 = vmatprep.subr.mxu0 0.0
        %2785 = vmatpush1.msra.mxu0 0.0
        %2786 = vmatprep.subr.mxu0 0.0
        %2787 = vmatpush1.msra.mxu0 0.0
        %2788 = vmatprep.subr.mxu0 0.0
        %2789 = vmatpush1.msra.mxu0 0.0
        %2790 = vmatprep.subr.mxu0 0.0
        %2791 = vmatpush1.msra.mxu0 0.0
        %2792 = vmatprep.subr.mxu0 0.0
        %2793 = vmatpush1.msra.mxu0 0.0
        %2794 = vmatprep.subr.mxu0 0.0
        %2795 = vmatpush1.msra.mxu0 0.0
        %2796 = vmatprep.subr.mxu0 0.0
        %2797 = vmatpush1.msra.mxu0 0.0
        %2798 = vmatprep.subr.mxu0 0.0
        %2799 = vmatpush1.msra.mxu0 0.0
        %2800 = vmatprep.subr.mxu0 0.0
        %2801 = vmatpush1.msra.mxu0 0.0
        %2802 = vmatprep.subr.mxu0 0.0
        %2803 = vmatpush1.msra.mxu0 0.0
        %2804 = vmatprep.subr.mxu0 0.0
        %2805 = vmatpush1.msra.mxu0 0.0
        %2806 = vmatprep.subr.mxu0 0.0
        %2807 = vmatpush1.msra.mxu0 0.0
        %2808 = vmatprep.subr.mxu0 0.0
        %2809 = vmatpush1.msra.mxu0 0.0
        %2810 = vmatprep.subr.mxu0 0.0
        %2811 = vmatpush1.msra.mxu0 0.0
        %2812 = vmatprep.subr.mxu0 0.0
        %2813 = vmatpush1.msra.mxu0 0.0
        %2814 = vmatprep.subr.mxu0 0.0
        %2815 = vmatpush1.msra.mxu0 0.0
        %2816 = vmatprep.subr.mxu0 0.0
        %2817 = vmatpush1.msra.mxu0 0.0
        %2818 = vmatprep.subr.mxu0 0.0
        %2819 = vmatpush1.msra.mxu0 0.0
        %2820 = vmatprep.subr.mxu0 0.0
        %2821 = vmatpush1.msra.mxu0 0.0
        %2822 = vmatprep.subr.mxu0 0.0
        %2823 = vmatpush1.msra.mxu0 0.0
        %2824 = vmatprep.mubr.f32.mxu0 0.0
        %2825 = vmatmul.mubr.f32.gmra.mrb[0].mxu0 %v2597
        %v2826 = vpop.f32.mrb[0].mxu0
        %v2827 = vadd.f32 0.0, %v2826
        %v2828 = vpop.f32.mrb[0].mxu0
        %2829 = vdwg.mxu0
        %2830 = vmatprep.subr.mxu0 0.0
        %2831 = vmatpush1.msra.mxu0 %v276
        %2832 = vmatprep.subr.mxu0 0.0
        %2833 = vmatpush1.msra.mxu0 %v277
        %2834 = vmatprep.subr.mxu0 0.0
        %2835 = vmatpush1.msra.mxu0 %v278
        %2836 = vmatprep.subr.mxu0 0.0
        %2837 = vmatpush1.msra.mxu0 %v279
        %2838 = vmatprep.subr.mxu0 0.0
        %2839 = vmatpush1.msra.mxu0 %v280
        %2840 = vmatprep.subr.mxu0 0.0
        %2841 = vmatpush1.msra.mxu0 %v281
        %2842 = vmatprep.subr.mxu0 0.0
        %2843 = vmatpush1.msra.mxu0 %v282
        %2844 = vmatprep.subr.mxu0 0.0
        %2845 = vmatpush1.msra.mxu0 %v283
        %2846 = vmatprep.subr.mxu0 0.0
        %2847 = vmatpush1.msra.mxu0 %v284
        %2848 = vmatprep.subr.mxu0 0.0
        %2849 = vmatpush1.msra.mxu0 0.0
        %2850 = vmatprep.subr.mxu0 0.0
        %2851 = vmatpush1.msra.mxu0 0.0
        %2852 = vmatprep.subr.mxu0 0.0
        %2853 = vmatpush1.msra.mxu0 0.0
        %2854 = vmatprep.subr.mxu0 0.0
        %2855 = vmatpush1.msra.mxu0 0.0
        %2856 = vmatprep.subr.mxu0 0.0
        %2857 = vmatpush1.msra.mxu0 0.0
        %2858 = vmatprep.subr.mxu0 0.0
        %2859 = vmatpush1.msra.mxu0 0.0
        %2860 = vmatprep.subr.mxu0 0.0
        %2861 = vmatpush1.msra.mxu0 0.0
        %2862 = vmatprep.subr.mxu0 0.0
        %2863 = vmatpush1.msra.mxu0 0.0
        %2864 = vmatprep.subr.mxu0 0.0
        %2865 = vmatpush1.msra.mxu0 0.0
        %2866 = vmatprep.subr.mxu0 0.0
        %2867 = vmatpush1.msra.mxu0 0.0
        %2868 = vmatprep.subr.mxu0 0.0
        %2869 = vmatpush1.msra.mxu0 0.0
        %2870 = vmatprep.subr.mxu0 0.0
        %2871 = vmatpush1.msra.mxu0 0.0
        %2872 = vmatprep.subr.mxu0 0.0
        %2873 = vmatpush1.msra.mxu0 0.0
        %2874 = vmatprep.subr.mxu0 0.0
        %2875 = vmatpush1.msra.mxu0 0.0
        %2876 = vmatprep.subr.mxu0 0.0
        %2877 = vmatpush1.msra.mxu0 0.0
        %2878 = vmatprep.subr.mxu0 0.0
        %2879 = vmatpush1.msra.mxu0 0.0
        %2880 = vmatprep.subr.mxu0 0.0
        %2881 = vmatpush1.msra.mxu0 0.0
        %2882 = vmatprep.subr.mxu0 0.0
        %2883 = vmatpush1.msra.mxu0 0.0
        %2884 = vmatprep.subr.mxu0 0.0
        %2885 = vmatpush1.msra.mxu0 0.0
        %2886 = vmatprep.subr.mxu0 0.0
        %2887 = vmatpush1.msra.mxu0 0.0
        %2888 = vmatprep.subr.mxu0 0.0
        %2889 = vmatpush1.msra.mxu0 0.0
        %2890 = vmatprep.subr.mxu0 0.0
        %2891 = vmatpush1.msra.mxu0 0.0
        %2892 = vmatprep.subr.mxu0 0.0
        %2893 = vmatpush1.msra.mxu0 0.0
        %2894 = vmatprep.mubr.f32.mxu0 0.0
        %2895 = vmatmul.mubr.f32.gmra.mrb[0].mxu0 %v2291
        %v2896 = vpop.f32.mrb[0].mxu0
        %v2897 = vadd.f32 %v2827, %v2896
        %v2898 = vpop.f32.mrb[0].mxu0
        %2899 = vdwg.mxu0
        %s2900 = scalar_lea.vmem %s273, 10
        %v2901 = vld [vmem:[%s2900] sm:$0x1]
        %v2903 = vsel %vm297, %v2901, 0
        %2905 = vmatprep.subr.mxu0 0.0
        %2906 = vmatpush1.msra.mxu0 %v447
        %2907 = vmatprep.subr.mxu0 0.0
        %2908 = vmatpush1.msra.mxu0 %v448
        %2909 = vmatprep.subr.mxu0 0.0
        %2910 = vmatpush1.msra.mxu0 %v449
        %2911 = vmatprep.subr.mxu0 0.0
        %2912 = vmatpush1.msra.mxu0 %v450
        %2913 = vmatprep.subr.mxu0 0.0
        %2914 = vmatpush1.msra.mxu0 %v451
        %2915 = vmatprep.subr.mxu0 0.0
        %2916 = vmatpush1.msra.mxu0 %v452
        %2917 = vmatprep.subr.mxu0 0.0
        %2918 = vmatpush1.msra.mxu0 %v453
        %2919 = vmatprep.subr.mxu0 0.0
        %2920 = vmatpush1.msra.mxu0 %v454
        %2921 = vmatprep.subr.mxu0 0.0
        %2922 = vmatpush1.msra.mxu0 %v455
        %2923 = vmatprep.subr.mxu0 0.0
        %2924 = vmatpush1.msra.mxu0 0.0
        %2925 = vmatprep.subr.mxu0 0.0
        %2926 = vmatpush1.msra.mxu0 0.0
        %2927 = vmatprep.subr.mxu0 0.0
        %2928 = vmatpush1.msra.mxu0 0.0
        %2929 = vmatprep.subr.mxu0 0.0
        %2930 = vmatpush1.msra.mxu0 0.0
        %2931 = vmatprep.subr.mxu0 0.0
        %2932 = vmatpush1.msra.mxu0 0.0
        %2933 = vmatprep.subr.mxu0 0.0
        %2934 = vmatpush1.msra.mxu0 0.0
        %2935 = vmatprep.subr.mxu0 0.0
        %2936 = vmatpush1.msra.mxu0 0.0
        %2937 = vmatprep.subr.mxu0 0.0
        %2938 = vmatpush1.msra.mxu0 0.0
        %2939 = vmatprep.subr.mxu0 0.0
        %2940 = vmatpush1.msra.mxu0 0.0
        %2941 = vmatprep.subr.mxu0 0.0
        %2942 = vmatpush1.msra.mxu0 0.0
        %2943 = vmatprep.subr.mxu0 0.0
        %2944 = vmatpush1.msra.mxu0 0.0
        %2945 = vmatprep.subr.mxu0 0.0
        %2946 = vmatpush1.msra.mxu0 0.0
        %2947 = vmatprep.subr.mxu0 0.0
        %2948 = vmatpush1.msra.mxu0 0.0
        %2949 = vmatprep.subr.mxu0 0.0
        %2950 = vmatpush1.msra.mxu0 0.0
        %2951 = vmatprep.subr.mxu0 0.0
        %2952 = vmatpush1.msra.mxu0 0.0
        %2953 = vmatprep.subr.mxu0 0.0
        %2954 = vmatpush1.msra.mxu0 0.0
        %2955 = vmatprep.subr.mxu0 0.0
        %2956 = vmatpush1.msra.mxu0 0.0
        %2957 = vmatprep.subr.mxu0 0.0
        %2958 = vmatpush1.msra.mxu0 0.0
        %2959 = vmatprep.subr.mxu0 0.0
        %2960 = vmatpush1.msra.mxu0 0.0
        %2961 = vmatprep.subr.mxu0 0.0
        %2962 = vmatpush1.msra.mxu0 0.0
        %2963 = vmatprep.subr.mxu0 0.0
        %2964 = vmatpush1.msra.mxu0 0.0
        %2965 = vmatprep.subr.mxu0 0.0
        %2966 = vmatpush1.msra.mxu0 0.0
        %2967 = vmatprep.subr.mxu0 0.0
        %2968 = vmatpush1.msra.mxu0 0.0
        %2969 = vmatprep.mubr.f32.mxu0 0.0
        %2970 = vmatmul.mubr.f32.gmra.mrb[0].mxu0 %v2903
        %v2971 = vpop.f32.mrb[0].mxu0
        %v2972 = vadd.f32 0.0, %v2971
        %v2973 = vpop.f32.mrb[0].mxu0
        %2974 = vdwg.mxu0
        %v2975 = vadd.f32 %v2897, %v2972
        %v2976 = vadd.f32 %v2975, %v530
        %v2977 = vmax.f32 %v2976, 0.0
        %s2978 = scalar_lea.vmem %s3, 1024
        %v2979 = vld [vmem:[%s2978] sm:$0xff]
        %v2980 = vld [vmem:[%s2978 + $0x8] sm:$0xff]
        %v2981 = vld [vmem:[%s2978 + $0x10] sm:$0xff]
        %v2982 = vld [vmem:[%s2978 + $0x18] sm:$0xff]
        %v2983 = vld [vmem:[%s2978 + $0x20] sm:$0xff]
        %v2984 = vld [vmem:[%s2978 + $0x28] sm:$0xff]
        %v2985 = vld [vmem:[%s2978 + $0x30] sm:$0xff]
        %v2986 = vld [vmem:[%s2978 + $0x38] sm:$0xff]
        %v2987 = vld [vmem:[%s2978 + $0x40] sm:$0xff]
        %v2988 = vld [vmem:[%s2978 + $0x48] sm:$0xff]
        %v2989 = vld [vmem:[%s2978 + $0x50] sm:$0xff]
        %v2990 = vld [vmem:[%s2978 + $0x58] sm:$0xff]
        %v2991 = vld [vmem:[%s2978 + $0x60] sm:$0xff]
        %v2992 = vld [vmem:[%s2978 + $0x68] sm:$0xff]
        %v2993 = vld [vmem:[%s2978 + $0x70] sm:$0xff]
        %v2994 = vld [vmem:[%s2978 + $0x78] sm:$0xff]
        %2995 = vmatprep.subr.mxu0 0.0
        %2996 = vmatpush1.msra.mxu0 %v2979
        %2997 = vmatprep.subr.mxu0 0.0
        %2998 = vmatpush1.msra.mxu0 %v2980
        %2999 = vmatprep.subr.mxu0 0.0
        %3000 = vmatpush1.msra.mxu0 %v2981
        %3001 = vmatprep.subr.mxu0 0.0
        %3002 = vmatpush1.msra.mxu0 %v2982
        %3003 = vmatprep.subr.mxu0 0.0
        %3004 = vmatpush1.msra.mxu0 %v2983
        %3005 = vmatprep.subr.mxu0 0.0
        %3006 = vmatpush1.msra.mxu0 %v2984
        %3007 = vmatprep.subr.mxu0 0.0
        %3008 = vmatpush1.msra.mxu0 %v2985
        %3009 = vmatprep.subr.mxu0 0.0
        %3010 = vmatpush1.msra.mxu0 %v2986
        %3011 = vmatprep.subr.mxu0 0.0
        %3012 = vmatpush1.msra.mxu0 %v2987
        %3013 = vmatprep.subr.mxu0 0.0
        %3014 = vmatpush1.msra.mxu0 %v2988
        %3015 = vmatprep.subr.mxu0 0.0
        %3016 = vmatpush1.msra.mxu0 %v2989
        %3017 = vmatprep.subr.mxu0 0.0
        %3018 = vmatpush1.msra.mxu0 %v2990
        %3019 = vmatprep.subr.mxu0 0.0
        %3020 = vmatpush1.msra.mxu0 %v2991
        %3021 = vmatprep.subr.mxu0 0.0
        %3022 = vmatpush1.msra.mxu0 %v2992
        %3023 = vmatprep.subr.mxu0 0.0
        %3024 = vmatpush1.msra.mxu0 %v2993
        %3025 = vmatprep.subr.mxu0 0.0
        %3026 = vmatpush1.msra.mxu0 %v2994
        %3027 = vmatprep.subr.mxu0 0.0
        %3028 = vmatpush1.msra.mxu0 0.0
        %3029 = vmatprep.subr.mxu0 0.0
        %3030 = vmatpush1.msra.mxu0 0.0
        %3031 = vmatprep.subr.mxu0 0.0
        %3032 = vmatpush1.msra.mxu0 0.0
        %3033 = vmatprep.subr.mxu0 0.0
        %3034 = vmatpush1.msra.mxu0 0.0
        %3035 = vmatprep.subr.mxu0 0.0
        %3036 = vmatpush1.msra.mxu0 0.0
        %3037 = vmatprep.subr.mxu0 0.0
        %3038 = vmatpush1.msra.mxu0 0.0
        %3039 = vmatprep.subr.mxu0 0.0
        %3040 = vmatpush1.msra.mxu0 0.0
        %3041 = vmatprep.subr.mxu0 0.0
        %3042 = vmatpush1.msra.mxu0 0.0
        %3043 = vmatprep.subr.mxu0 0.0
        %3044 = vmatpush1.msra.mxu0 0.0
        %3045 = vmatprep.subr.mxu0 0.0
        %3046 = vmatpush1.msra.mxu0 0.0
        %3047 = vmatprep.subr.mxu0 0.0
        %3048 = vmatpush1.msra.mxu0 0.0
        %3049 = vmatprep.subr.mxu0 0.0
        %3050 = vmatpush1.msra.mxu0 0.0
        %3051 = vmatprep.subr.mxu0 0.0
        %3052 = vmatpush1.msra.mxu0 0.0
        %3053 = vmatprep.subr.mxu0 0.0
        %3054 = vmatpush1.msra.mxu0 0.0
        %3055 = vmatprep.subr.mxu0 0.0
        %3056 = vmatpush1.msra.mxu0 0.0
        %3057 = vmatprep.subr.mxu0 0.0
        %3058 = vmatpush1.msra.mxu0 0.0
        %3059 = vmatprep.mubr.f32.mxu0 0.0
        %3060 = vmatmul.mubr.f32.gmra.mrb[0].mxu0 %v2977
        %v3061 = vpop.f32.mrb[0].mxu0
        %v3062 = vadd.f32 0.0, %v3061
        %v3063 = vpop.f32.mrb[0].mxu0
        %3064 = vdwg.mxu0
        %v3065 = vadd.f32 %v2759, %v3062
        %3066 = vmatprep.subr.mxu0 0.0
        %3067 = vmatpush1.msra.mxu0 %v288
        %3068 = vmatprep.subr.mxu0 0.0
        %3069 = vmatpush1.msra.mxu0 %v289
        %3070 = vmatprep.subr.mxu0 0.0
        %3071 = vmatpush1.msra.mxu0 %v290
        %3072 = vmatprep.subr.mxu0 0.0
        %3073 = vmatpush1.msra.mxu0 %v291
        %3074 = vmatprep.subr.mxu0 0.0
        %3075 = vmatpush1.msra.mxu0 %v292
        %3076 = vmatprep.subr.mxu0 0.0
        %3077 = vmatpush1.msra.mxu0 %v293
        %3078 = vmatprep.subr.mxu0 0.0
        %3079 = vmatpush1.msra.mxu0 %v294
        %3080 = vmatprep.subr.mxu0 0.0
        %3081 = vmatpush1.msra.mxu0 %v295
        %3082 = vmatprep.subr.mxu0 0.0
        %3083 = vmatpush1.msra.mxu0 %v296
        %3084 = vmatprep.subr.mxu0 0.0
        %3085 = vmatpush1.msra.mxu0 0.0
        %3086 = vmatprep.subr.mxu0 0.0
        %3087 = vmatpush1.msra.mxu0 0.0
        %3088 = vmatprep.subr.mxu0 0.0
        %3089 = vmatpush1.msra.mxu0 0.0
        %3090 = vmatprep.subr.mxu0 0.0
        %3091 = vmatpush1.msra.mxu0 0.0
        %3092 = vmatprep.subr.mxu0 0.0
        %3093 = vmatpush1.msra.mxu0 0.0
        %3094 = vmatprep.subr.mxu0 0.0
        %3095 = vmatpush1.msra.mxu0 0.0
        %3096 = vmatprep.subr.mxu0 0.0
        %3097 = vmatpush1.msra.mxu0 0.0
        %3098 = vmatprep.subr.mxu0 0.0
        %3099 = vmatpush1.msra.mxu0 0.0
        %3100 = vmatprep.subr.mxu0 0.0
        %3101 = vmatpush1.msra.mxu0 0.0
        %3102 = vmatprep.subr.mxu0 0.0
        %3103 = vmatpush1.msra.mxu0 0.0
        %3104 = vmatprep.subr.mxu0 0.0
        %3105 = vmatpush1.msra.mxu0 0.0
        %3106 = vmatprep.subr.mxu0 0.0
        %3107 = vmatpush1.msra.mxu0 0.0
        %3108 = vmatprep.subr.mxu0 0.0
        %3109 = vmatpush1.msra.mxu0 0.0
        %3110 = vmatprep.subr.mxu0 0.0
        %3111 = vmatpush1.msra.mxu0 0.0
        %3112 = vmatprep.subr.mxu0 0.0
        %3113 = vmatpush1.msra.mxu0 0.0
        %3114 = vmatprep.subr.mxu0 0.0
        %3115 = vmatpush1.msra.mxu0 0.0
        %3116 = vmatprep.subr.mxu0 0.0
        %3117 = vmatpush1.msra.mxu0 0.0
        %3118 = vmatprep.subr.mxu0 0.0
        %3119 = vmatpush1.msra.mxu0 0.0
        %3120 = vmatprep.subr.mxu0 0.0
        %3121 = vmatpush1.msra.mxu0 0.0
        %3122 = vmatprep.subr.mxu0 0.0
        %3123 = vmatpush1.msra.mxu0 0.0
        %3124 = vmatprep.subr.mxu0 0.0
        %3125 = vmatpush1.msra.mxu0 0.0
        %3126 = vmatprep.subr.mxu0 0.0
        %3127 = vmatpush1.msra.mxu0 0.0
        %3128 = vmatprep.subr.mxu0 0.0
        %3129 = vmatpush1.msra.mxu0 0.0
        %3130 = vmatprep.mubr.f32.mxu0 0.0
        %3131 = vmatmul.mubr.f32.gmra.mrb[0].mxu0 %v2903
        %v3132 = vpop.f32.mrb[0].mxu0
        %v3133 = vadd.f32 0.0, %v3132
        %v3134 = vpop.f32.mrb[0].mxu0
        %3135 = vdwg.mxu0
        %3136 = vmatprep.subr.mxu0 0.0
        %3137 = vmatpush1.msra.mxu0 %v276
        %3138 = vmatprep.subr.mxu0 0.0
        %3139 = vmatpush1.msra.mxu0 %v277
        %3140 = vmatprep.subr.mxu0 0.0
        %3141 = vmatpush1.msra.mxu0 %v278
        %3142 = vmatprep.subr.mxu0 0.0
        %3143 = vmatpush1.msra.mxu0 %v279
        %3144 = vmatprep.subr.mxu0 0.0
        %3145 = vmatpush1.msra.mxu0 %v280
        %3146 = vmatprep.subr.mxu0 0.0
        %3147 = vmatpush1.msra.mxu0 %v281
        %3148 = vmatprep.subr.mxu0 0.0
        %3149 = vmatpush1.msra.mxu0 %v282
        %3150 = vmatprep.subr.mxu0 0.0
        %3151 = vmatpush1.msra.mxu0 %v283
        %3152 = vmatprep.subr.mxu0 0.0
        %3153 = vmatpush1.msra.mxu0 %v284
        %3154 = vmatprep.subr.mxu0 0.0
        %3155 = vmatpush1.msra.mxu0 0.0
        %3156 = vmatprep.subr.mxu0 0.0
        %3157 = vmatpush1.msra.mxu0 0.0
        %3158 = vmatprep.subr.mxu0 0.0
        %3159 = vmatpush1.msra.mxu0 0.0
        %3160 = vmatprep.subr.mxu0 0.0
        %3161 = vmatpush1.msra.mxu0 0.0
        %3162 = vmatprep.subr.mxu0 0.0
        %3163 = vmatpush1.msra.mxu0 0.0
        %3164 = vmatprep.subr.mxu0 0.0
        %3165 = vmatpush1.msra.mxu0 0.0
        %3166 = vmatprep.subr.mxu0 0.0
        %3167 = vmatpush1.msra.mxu0 0.0
        %3168 = vmatprep.subr.mxu0 0.0
        %3169 = vmatpush1.msra.mxu0 0.0
        %3170 = vmatprep.subr.mxu0 0.0
        %3171 = vmatpush1.msra.mxu0 0.0
        %3172 = vmatprep.subr.mxu0 0.0
        %3173 = vmatpush1.msra.mxu0 0.0
        %3174 = vmatprep.subr.mxu0 0.0
        %3175 = vmatpush1.msra.mxu0 0.0
        %3176 = vmatprep.subr.mxu0 0.0
        %3177 = vmatpush1.msra.mxu0 0.0
        %3178 = vmatprep.subr.mxu0 0.0
        %3179 = vmatpush1.msra.mxu0 0.0
        %3180 = vmatprep.subr.mxu0 0.0
        %3181 = vmatpush1.msra.mxu0 0.0
        %3182 = vmatprep.subr.mxu0 0.0
        %3183 = vmatpush1.msra.mxu0 0.0
        %3184 = vmatprep.subr.mxu0 0.0
        %3185 = vmatpush1.msra.mxu0 0.0
        %3186 = vmatprep.subr.mxu0 0.0
        %3187 = vmatpush1.msra.mxu0 0.0
        %3188 = vmatprep.subr.mxu0 0.0
        %3189 = vmatpush1.msra.mxu0 0.0
        %3190 = vmatprep.subr.mxu0 0.0
        %3191 = vmatpush1.msra.mxu0 0.0
        %3192 = vmatprep.subr.mxu0 0.0
        %3193 = vmatpush1.msra.mxu0 0.0
        %3194 = vmatprep.subr.mxu0 0.0
        %3195 = vmatpush1.msra.mxu0 0.0
        %3196 = vmatprep.subr.mxu0 0.0
        %3197 = vmatpush1.msra.mxu0 0.0
        %3198 = vmatprep.subr.mxu0 0.0
        %3199 = vmatpush1.msra.mxu0 0.0
        %3200 = vmatprep.mubr.f32.mxu0 0.0
        %3201 = vmatmul.mubr.f32.gmra.mrb[0].mxu0 %v2597
        %v3202 = vpop.f32.mrb[0].mxu0
        %v3203 = vadd.f32 %v3133, %v3202
        %v3204 = vpop.f32.mrb[0].mxu0
        %3205 = vdwg.mxu0
        %s3206 = scalar_lea.vmem %s273, 11
        %v3207 = vld [vmem:[%s3206] sm:$0x1]
        %v3209 = vsel %vm297, %v3207, 0
        %3211 = vmatprep.subr.mxu0 0.0
        %3212 = vmatpush1.msra.mxu0 %v447
        %3213 = vmatprep.subr.mxu0 0.0
        %3214 = vmatpush1.msra.mxu0 %v448
        %3215 = vmatprep.subr.mxu0 0.0
        %3216 = vmatpush1.msra.mxu0 %v449
        %3217 = vmatprep.subr.mxu0 0.0
        %3218 = vmatpush1.msra.mxu0 %v450
        %3219 = vmatprep.subr.mxu0 0.0
        %3220 = vmatpush1.msra.mxu0 %v451
        %3221 = vmatprep.subr.mxu0 0.0
        %3222 = vmatpush1.msra.mxu0 %v452
        %3223 = vmatprep.subr.mxu0 0.0
        %3224 = vmatpush1.msra.mxu0 %v453
        %3225 = vmatprep.subr.mxu0 0.0
        %3226 = vmatpush1.msra.mxu0 %v454
        %3227 = vmatprep.subr.mxu0 0.0
        %3228 = vmatpush1.msra.mxu0 %v455
        %3229 = vmatprep.subr.mxu0 0.0
        %3230 = vmatpush1.msra.mxu0 0.0
        %3231 = vmatprep.subr.mxu0 0.0
        %3232 = vmatpush1.msra.mxu0 0.0
        %3233 = vmatprep.subr.mxu0 0.0
        %3234 = vmatpush1.msra.mxu0 0.0
        %3235 = vmatprep.subr.mxu0 0.0
        %3236 = vmatpush1.msra.mxu0 0.0
        %3237 = vmatprep.subr.mxu0 0.0
        %3238 = vmatpush1.msra.mxu0 0.0
        %3239 = vmatprep.subr.mxu0 0.0
        %3240 = vmatpush1.msra.mxu0 0.0
        %3241 = vmatprep.subr.mxu0 0.0
        %3242 = vmatpush1.msra.mxu0 0.0
        %3243 = vmatprep.subr.mxu0 0.0
        %3244 = vmatpush1.msra.mxu0 0.0
        %3245 = vmatprep.subr.mxu0 0.0
        %3246 = vmatpush1.msra.mxu0 0.0
        %3247 = vmatprep.subr.mxu0 0.0
        %3248 = vmatpush1.msra.mxu0 0.0
        %3249 = vmatprep.subr.mxu0 0.0
        %3250 = vmatpush1.msra.mxu0 0.0
        %3251 = vmatprep.subr.mxu0 0.0
        %3252 = vmatpush1.msra.mxu0 0.0
        %3253 = vmatprep.subr.mxu0 0.0
        %3254 = vmatpush1.msra.mxu0 0.0
        %3255 = vmatprep.subr.mxu0 0.0
        %3256 = vmatpush1.msra.mxu0 0.0
        %3257 = vmatprep.subr.mxu0 0.0
        %3258 = vmatpush1.msra.mxu0 0.0
        %3259 = vmatprep.subr.mxu0 0.0
        %3260 = vmatpush1.msra.mxu0 0.0
        %3261 = vmatprep.subr.mxu0 0.0
        %3262 = vmatpush1.msra.mxu0 0.0
        %3263 = vmatprep.subr.mxu0 0.0
        %3264 = vmatpush1.msra.mxu0 0.0
        %3265 = vmatprep.subr.mxu0 0.0
        %3266 = vmatpush1.msra.mxu0 0.0
        %3267 = vmatprep.subr.mxu0 0.0
        %3268 = vmatpush1.msra.mxu0 0.0
        %3269 = vmatprep.subr.mxu0 0.0
        %3270 = vmatpush1.msra.mxu0 0.0
        %3271 = vmatprep.subr.mxu0 0.0
        %3272 = vmatpush1.msra.mxu0 0.0
        %3273 = vmatprep.subr.mxu0 0.0
        %3274 = vmatpush1.msra.mxu0 0.0
        %3275 = vmatprep.mubr.f32.mxu0 0.0
        %3276 = vmatmul.mubr.f32.gmra.mrb[0].mxu0 %v3209
        %v3277 = vpop.f32.mrb[0].mxu0
        %v3278 = vadd.f32 0.0, %v3277
        %v3279 = vpop.f32.mrb[0].mxu0
        %3280 = vdwg.mxu0
        %v3281 = vadd.f32 %v3203, %v3278
        %v3282 = vadd.f32 %v3281, %v530
        %v3283 = vmax.f32 %v3282, 0.0
        %s3284 = scalar_lea.vmem %s3, 1152
        %v3285 = vld [vmem:[%s3284] sm:$0xff]
        %v3286 = vld [vmem:[%s3284 + $0x8] sm:$0xff]
        %v3287 = vld [vmem:[%s3284 + $0x10] sm:$0xff]
        %v3288 = vld [vmem:[%s3284 + $0x18] sm:$0xff]
        %v3289 = vld [vmem:[%s3284 + $0x20] sm:$0xff]
        %v3290 = vld [vmem:[%s3284 + $0x28] sm:$0xff]
        %v3291 = vld [vmem:[%s3284 + $0x30] sm:$0xff]
        %v3292 = vld [vmem:[%s3284 + $0x38] sm:$0xff]
        %v3293 = vld [vmem:[%s3284 + $0x40] sm:$0xff]
        %v3294 = vld [vmem:[%s3284 + $0x48] sm:$0xff]
        %v3295 = vld [vmem:[%s3284 + $0x50] sm:$0xff]
        %v3296 = vld [vmem:[%s3284 + $0x58] sm:$0xff]
        %v3297 = vld [vmem:[%s3284 + $0x60] sm:$0xff]
        %v3298 = vld [vmem:[%s3284 + $0x68] sm:$0xff]
        %v3299 = vld [vmem:[%s3284 + $0x70] sm:$0xff]
        %v3300 = vld [vmem:[%s3284 + $0x78] sm:$0xff]
        %3301 = vmatprep.subr.mxu0 0.0
        %3302 = vmatpush1.msra.mxu0 %v3285
        %3303 = vmatprep.subr.mxu0 0.0
        %3304 = vmatpush1.msra.mxu0 %v3286
        %3305 = vmatprep.subr.mxu0 0.0
        %3306 = vmatpush1.msra.mxu0 %v3287
        %3307 = vmatprep.subr.mxu0 0.0
        %3308 = vmatpush1.msra.mxu0 %v3288
        %3309 = vmatprep.subr.mxu0 0.0
        %3310 = vmatpush1.msra.mxu0 %v3289
        %3311 = vmatprep.subr.mxu0 0.0
        %3312 = vmatpush1.msra.mxu0 %v3290
        %3313 = vmatprep.subr.mxu0 0.0
        %3314 = vmatpush1.msra.mxu0 %v3291
        %3315 = vmatprep.subr.mxu0 0.0
        %3316 = vmatpush1.msra.mxu0 %v3292
        %3317 = vmatprep.subr.mxu0 0.0
        %3318 = vmatpush1.msra.mxu0 %v3293
        %3319 = vmatprep.subr.mxu0 0.0
        %3320 = vmatpush1.msra.mxu0 %v3294
        %3321 = vmatprep.subr.mxu0 0.0
        %3322 = vmatpush1.msra.mxu0 %v3295
        %3323 = vmatprep.subr.mxu0 0.0
        %3324 = vmatpush1.msra.mxu0 %v3296
        %3325 = vmatprep.subr.mxu0 0.0
        %3326 = vmatpush1.msra.mxu0 %v3297
        %3327 = vmatprep.subr.mxu0 0.0
        %3328 = vmatpush1.msra.mxu0 %v3298
        %3329 = vmatprep.subr.mxu0 0.0
        %3330 = vmatpush1.msra.mxu0 %v3299
        %3331 = vmatprep.subr.mxu0 0.0
        %3332 = vmatpush1.msra.mxu0 %v3300
        %3333 = vmatprep.subr.mxu0 0.0
        %3334 = vmatpush1.msra.mxu0 0.0
        %3335 = vmatprep.subr.mxu0 0.0
        %3336 = vmatpush1.msra.mxu0 0.0
        %3337 = vmatprep.subr.mxu0 0.0
        %3338 = vmatpush1.msra.mxu0 0.0
        %3339 = vmatprep.subr.mxu0 0.0
        %3340 = vmatpush1.msra.mxu0 0.0
        %3341 = vmatprep.subr.mxu0 0.0
        %3342 = vmatpush1.msra.mxu0 0.0
        %3343 = vmatprep.subr.mxu0 0.0
        %3344 = vmatpush1.msra.mxu0 0.0
        %3345 = vmatprep.subr.mxu0 0.0
        %3346 = vmatpush1.msra.mxu0 0.0
        %3347 = vmatprep.subr.mxu0 0.0
        %3348 = vmatpush1.msra.mxu0 0.0
        %3349 = vmatprep.subr.mxu0 0.0
        %3350 = vmatpush1.msra.mxu0 0.0
        %3351 = vmatprep.subr.mxu0 0.0
        %3352 = vmatpush1.msra.mxu0 0.0
        %3353 = vmatprep.subr.mxu0 0.0
        %3354 = vmatpush1.msra.mxu0 0.0
        %3355 = vmatprep.subr.mxu0 0.0
        %3356 = vmatpush1.msra.mxu0 0.0
        %3357 = vmatprep.subr.mxu0 0.0
        %3358 = vmatpush1.msra.mxu0 0.0
        %3359 = vmatprep.subr.mxu0 0.0
        %3360 = vmatpush1.msra.mxu0 0.0
        %3361 = vmatprep.subr.mxu0 0.0
        %3362 = vmatpush1.msra.mxu0 0.0
        %3363 = vmatprep.subr.mxu0 0.0
        %3364 = vmatpush1.msra.mxu0 0.0
        %3365 = vmatprep.mubr.f32.mxu0 0.0
        %3366 = vmatmul.mubr.f32.gmra.mrb[0].mxu0 %v3283
        %v3367 = vpop.f32.mrb[0].mxu0
        %v3368 = vadd.f32 0.0, %v3367
        %v3369 = vpop.f32.mrb[0].mxu0
        %3370 = vdwg.mxu0
        %v3371 = vadd.f32 %v3065, %v3368
        %3372 = vmatprep.subr.mxu0 0.0
        %3373 = vmatpush1.msra.mxu0 %v288
        %3374 = vmatprep.subr.mxu0 0.0
        %3375 = vmatpush1.msra.mxu0 %v289
        %3376 = vmatprep.subr.mxu0 0.0
        %3377 = vmatpush1.msra.mxu0 %v290
        %3378 = vmatprep.subr.mxu0 0.0
        %3379 = vmatpush1.msra.mxu0 %v291
        %3380 = vmatprep.subr.mxu0 0.0
        %3381 = vmatpush1.msra.mxu0 %v292
        %3382 = vmatprep.subr.mxu0 0.0
        %3383 = vmatpush1.msra.mxu0 %v293
        %3384 = vmatprep.subr.mxu0 0.0
        %3385 = vmatpush1.msra.mxu0 %v294
        %3386 = vmatprep.subr.mxu0 0.0
        %3387 = vmatpush1.msra.mxu0 %v295
        %3388 = vmatprep.subr.mxu0 0.0
        %3389 = vmatpush1.msra.mxu0 %v296
        %3390 = vmatprep.subr.mxu0 0.0
        %3391 = vmatpush1.msra.mxu0 0.0
        %3392 = vmatprep.subr.mxu0 0.0
        %3393 = vmatpush1.msra.mxu0 0.0
        %3394 = vmatprep.subr.mxu0 0.0
        %3395 = vmatpush1.msra.mxu0 0.0
        %3396 = vmatprep.subr.mxu0 0.0
        %3397 = vmatpush1.msra.mxu0 0.0
        %3398 = vmatprep.subr.mxu0 0.0
        %3399 = vmatpush1.msra.mxu0 0.0
        %3400 = vmatprep.subr.mxu0 0.0
        %3401 = vmatpush1.msra.mxu0 0.0
        %3402 = vmatprep.subr.mxu0 0.0
        %3403 = vmatpush1.msra.mxu0 0.0
        %3404 = vmatprep.subr.mxu0 0.0
        %3405 = vmatpush1.msra.mxu0 0.0
        %3406 = vmatprep.subr.mxu0 0.0
        %3407 = vmatpush1.msra.mxu0 0.0
        %3408 = vmatprep.subr.mxu0 0.0
        %3409 = vmatpush1.msra.mxu0 0.0
        %3410 = vmatprep.subr.mxu0 0.0
        %3411 = vmatpush1.msra.mxu0 0.0
        %3412 = vmatprep.subr.mxu0 0.0
        %3413 = vmatpush1.msra.mxu0 0.0
        %3414 = vmatprep.subr.mxu0 0.0
        %3415 = vmatpush1.msra.mxu0 0.0
        %3416 = vmatprep.subr.mxu0 0.0
        %3417 = vmatpush1.msra.mxu0 0.0
        %3418 = vmatprep.subr.mxu0 0.0
        %3419 = vmatpush1.msra.mxu0 0.0
        %3420 = vmatprep.subr.mxu0 0.0
        %3421 = vmatpush1.msra.mxu0 0.0
        %3422 = vmatprep.subr.mxu0 0.0
        %3423 = vmatpush1.msra.mxu0 0.0
        %3424 = vmatprep.subr.mxu0 0.0
        %3425 = vmatpush1.msra.mxu0 0.0
        %3426 = vmatprep.subr.mxu0 0.0
        %3427 = vmatpush1.msra.mxu0 0.0
        %3428 = vmatprep.subr.mxu0 0.0
        %3429 = vmatpush1.msra.mxu0 0.0
        %3430 = vmatprep.subr.mxu0 0.0
        %3431 = vmatpush1.msra.mxu0 0.0
        %3432 = vmatprep.subr.mxu0 0.0
        %3433 = vmatpush1.msra.mxu0 0.0
        %3434 = vmatprep.subr.mxu0 0.0
        %3435 = vmatpush1.msra.mxu0 0.0
        %3436 = vmatprep.mubr.f32.mxu0 0.0
        %3437 = vmatmul.mubr.f32.gmra.mrb[0].mxu0 %v3209
        %v3438 = vpop.f32.mrb[0].mxu0
        %v3439 = vadd.f32 0.0, %v3438
        %v3440 = vpop.f32.mrb[0].mxu0
        %3441 = vdwg.mxu0
        %3442 = vmatprep.subr.mxu0 0.0
        %3443 = vmatpush1.msra.mxu0 %v276
        %3444 = vmatprep.subr.mxu0 0.0
        %3445 = vmatpush1.msra.mxu0 %v277
        %3446 = vmatprep.subr.mxu0 0.0
        %3447 = vmatpush1.msra.mxu0 %v278
        %3448 = vmatprep.subr.mxu0 0.0
        %3449 = vmatpush1.msra.mxu0 %v279
        %3450 = vmatprep.subr.mxu0 0.0
        %3451 = vmatpush1.msra.mxu0 %v280
        %3452 = vmatprep.subr.mxu0 0.0
        %3453 = vmatpush1.msra.mxu0 %v281
        %3454 = vmatprep.subr.mxu0 0.0
        %3455 = vmatpush1.msra.mxu0 %v282
        %3456 = vmatprep.subr.mxu0 0.0
        %3457 = vmatpush1.msra.mxu0 %v283
        %3458 = vmatprep.subr.mxu0 0.0
        %3459 = vmatpush1.msra.mxu0 %v284
        %3460 = vmatprep.subr.mxu0 0.0
        %3461 = vmatpush1.msra.mxu0 0.0
        %3462 = vmatprep.subr.mxu0 0.0
        %3463 = vmatpush1.msra.mxu0 0.0
        %3464 = vmatprep.subr.mxu0 0.0
        %3465 = vmatpush1.msra.mxu0 0.0
        %3466 = vmatprep.subr.mxu0 0.0
        %3467 = vmatpush1.msra.mxu0 0.0
        %3468 = vmatprep.subr.mxu0 0.0
        %3469 = vmatpush1.msra.mxu0 0.0
        %3470 = vmatprep.subr.mxu0 0.0
        %3471 = vmatpush1.msra.mxu0 0.0
        %3472 = vmatprep.subr.mxu0 0.0
        %3473 = vmatpush1.msra.mxu0 0.0
        %3474 = vmatprep.subr.mxu0 0.0
        %3475 = vmatpush1.msra.mxu0 0.0
        %3476 = vmatprep.subr.mxu0 0.0
        %3477 = vmatpush1.msra.mxu0 0.0
        %3478 = vmatprep.subr.mxu0 0.0
        %3479 = vmatpush1.msra.mxu0 0.0
        %3480 = vmatprep.subr.mxu0 0.0
        %3481 = vmatpush1.msra.mxu0 0.0
        %3482 = vmatprep.subr.mxu0 0.0
        %3483 = vmatpush1.msra.mxu0 0.0
        %3484 = vmatprep.subr.mxu0 0.0
        %3485 = vmatpush1.msra.mxu0 0.0
        %3486 = vmatprep.subr.mxu0 0.0
        %3487 = vmatpush1.msra.mxu0 0.0
        %3488 = vmatprep.subr.mxu0 0.0
        %3489 = vmatpush1.msra.mxu0 0.0
        %3490 = vmatprep.subr.mxu0 0.0
        %3491 = vmatpush1.msra.mxu0 0.0
        %3492 = vmatprep.subr.mxu0 0.0
        %3493 = vmatpush1.msra.mxu0 0.0
        %3494 = vmatprep.subr.mxu0 0.0
        %3495 = vmatpush1.msra.mxu0 0.0
        %3496 = vmatprep.subr.mxu0 0.0
        %3497 = vmatpush1.msra.mxu0 0.0
        %3498 = vmatprep.subr.mxu0 0.0
        %3499 = vmatpush1.msra.mxu0 0.0
        %3500 = vmatprep.subr.mxu0 0.0
        %3501 = vmatpush1.msra.mxu0 0.0
        %3502 = vmatprep.subr.mxu0 0.0
        %3503 = vmatpush1.msra.mxu0 0.0
        %3504 = vmatprep.subr.mxu0 0.0
        %3505 = vmatpush1.msra.mxu0 0.0
        %3506 = vmatprep.mubr.f32.mxu0 0.0
        %3507 = vmatmul.mubr.f32.gmra.mrb[0].mxu0 %v2903
        %v3508 = vpop.f32.mrb[0].mxu0
        %v3509 = vadd.f32 %v3439, %v3508
        %v3510 = vpop.f32.mrb[0].mxu0
        %3511 = vdwg.mxu0
        %s3512 = scalar_lea.vmem %s273, 12
        %v3513 = vld [vmem:[%s3512] sm:$0x1]
        %v3515 = vsel %vm297, %v3513, 0
        %3517 = vmatprep.subr.mxu0 0.0
        %3518 = vmatpush1.msra.mxu0 %v447
        %3519 = vmatprep.subr.mxu0 0.0
        %3520 = vmatpush1.msra.mxu0 %v448
        %3521 = vmatprep.subr.mxu0 0.0
        %3522 = vmatpush1.msra.mxu0 %v449
        %3523 = vmatprep.subr.mxu0 0.0
        %3524 = vmatpush1.msra.mxu0 %v450
        %3525 = vmatprep.subr.mxu0 0.0
        %3526 = vmatpush1.msra.mxu0 %v451
        %3527 = vmatprep.subr.mxu0 0.0
        %3528 = vmatpush1.msra.mxu0 %v452
        %3529 = vmatprep.subr.mxu0 0.0
        %3530 = vmatpush1.msra.mxu0 %v453
        %3531 = vmatprep.subr.mxu0 0.0
        %3532 = vmatpush1.msra.mxu0 %v454
        %3533 = vmatprep.subr.mxu0 0.0
        %3534 = vmatpush1.msra.mxu0 %v455
        %3535 = vmatprep.subr.mxu0 0.0
        %3536 = vmatpush1.msra.mxu0 0.0
        %3537 = vmatprep.subr.mxu0 0.0
        %3538 = vmatpush1.msra.mxu0 0.0
        %3539 = vmatprep.subr.mxu0 0.0
        %3540 = vmatpush1.msra.mxu0 0.0
        %3541 = vmatprep.subr.mxu0 0.0
        %3542 = vmatpush1.msra.mxu0 0.0
        %3543 = vmatprep.subr.mxu0 0.0
        %3544 = vmatpush1.msra.mxu0 0.0
        %3545 = vmatprep.subr.mxu0 0.0
        %3546 = vmatpush1.msra.mxu0 0.0
        %3547 = vmatprep.subr.mxu0 0.0
        %3548 = vmatpush1.msra.mxu0 0.0
        %3549 = vmatprep.subr.mxu0 0.0
        %3550 = vmatpush1.msra.mxu0 0.0
        %3551 = vmatprep.subr.mxu0 0.0
        %3552 = vmatpush1.msra.mxu0 0.0
        %3553 = vmatprep.subr.mxu0 0.0
        %3554 = vmatpush1.msra.mxu0 0.0
        %3555 = vmatprep.subr.mxu0 0.0
        %3556 = vmatpush1.msra.mxu0 0.0
        %3557 = vmatprep.subr.mxu0 0.0
        %3558 = vmatpush1.msra.mxu0 0.0
        %3559 = vmatprep.subr.mxu0 0.0
        %3560 = vmatpush1.msra.mxu0 0.0
        %3561 = vmatprep.subr.mxu0 0.0
        %3562 = vmatpush1.msra.mxu0 0.0
        %3563 = vmatprep.subr.mxu0 0.0
        %3564 = vmatpush1.msra.mxu0 0.0
        %3565 = vmatprep.subr.mxu0 0.0
        %3566 = vmatpush1.msra.mxu0 0.0
        %3567 = vmatprep.subr.mxu0 0.0
        %3568 = vmatpush1.msra.mxu0 0.0
        %3569 = vmatprep.subr.mxu0 0.0
        %3570 = vmatpush1.msra.mxu0 0.0
        %3571 = vmatprep.subr.mxu0 0.0
        %3572 = vmatpush1.msra.mxu0 0.0
        %3573 = vmatprep.subr.mxu0 0.0
        %3574 = vmatpush1.msra.mxu0 0.0
        %3575 = vmatprep.subr.mxu0 0.0
        %3576 = vmatpush1.msra.mxu0 0.0
        %3577 = vmatprep.subr.mxu0 0.0
        %3578 = vmatpush1.msra.mxu0 0.0
        %3579 = vmatprep.subr.mxu0 0.0
        %3580 = vmatpush1.msra.mxu0 0.0
        %3581 = vmatprep.mubr.f32.mxu0 0.0
        %3582 = vmatmul.mubr.f32.gmra.mrb[0].mxu0 %v3515
        %v3583 = vpop.f32.mrb[0].mxu0
        %v3584 = vadd.f32 0.0, %v3583
        %v3585 = vpop.f32.mrb[0].mxu0
        %3586 = vdwg.mxu0
        %v3587 = vadd.f32 %v3509, %v3584
        %v3588 = vadd.f32 %v3587, %v530
        %v3589 = vmax.f32 %v3588, 0.0
        %s3590 = scalar_lea.vmem %s3, 1280
        %v3591 = vld [vmem:[%s3590] sm:$0xff]
        %v3592 = vld [vmem:[%s3590 + $0x8] sm:$0xff]
        %v3593 = vld [vmem:[%s3590 + $0x10] sm:$0xff]
        %v3594 = vld [vmem:[%s3590 + $0x18] sm:$0xff]
        %v3595 = vld [vmem:[%s3590 + $0x20] sm:$0xff]
        %v3596 = vld [vmem:[%s3590 + $0x28] sm:$0xff]
        %v3597 = vld [vmem:[%s3590 + $0x30] sm:$0xff]
        %v3598 = vld [vmem:[%s3590 + $0x38] sm:$0xff]
        %v3599 = vld [vmem:[%s3590 + $0x40] sm:$0xff]
        %v3600 = vld [vmem:[%s3590 + $0x48] sm:$0xff]
        %v3601 = vld [vmem:[%s3590 + $0x50] sm:$0xff]
        %v3602 = vld [vmem:[%s3590 + $0x58] sm:$0xff]
        %v3603 = vld [vmem:[%s3590 + $0x60] sm:$0xff]
        %v3604 = vld [vmem:[%s3590 + $0x68] sm:$0xff]
        %v3605 = vld [vmem:[%s3590 + $0x70] sm:$0xff]
        %v3606 = vld [vmem:[%s3590 + $0x78] sm:$0xff]
        %3607 = vmatprep.subr.mxu0 0.0
        %3608 = vmatpush1.msra.mxu0 %v3591
        %3609 = vmatprep.subr.mxu0 0.0
        %3610 = vmatpush1.msra.mxu0 %v3592
        %3611 = vmatprep.subr.mxu0 0.0
        %3612 = vmatpush1.msra.mxu0 %v3593
        %3613 = vmatprep.subr.mxu0 0.0
        %3614 = vmatpush1.msra.mxu0 %v3594
        %3615 = vmatprep.subr.mxu0 0.0
        %3616 = vmatpush1.msra.mxu0 %v3595
        %3617 = vmatprep.subr.mxu0 0.0
        %3618 = vmatpush1.msra.mxu0 %v3596
        %3619 = vmatprep.subr.mxu0 0.0
        %3620 = vmatpush1.msra.mxu0 %v3597
        %3621 = vmatprep.subr.mxu0 0.0
        %3622 = vmatpush1.msra.mxu0 %v3598
        %3623 = vmatprep.subr.mxu0 0.0
        %3624 = vmatpush1.msra.mxu0 %v3599
        %3625 = vmatprep.subr.mxu0 0.0
        %3626 = vmatpush1.msra.mxu0 %v3600
        %3627 = vmatprep.subr.mxu0 0.0
        %3628 = vmatpush1.msra.mxu0 %v3601
        %3629 = vmatprep.subr.mxu0 0.0
        %3630 = vmatpush1.msra.mxu0 %v3602
        %3631 = vmatprep.subr.mxu0 0.0
        %3632 = vmatpush1.msra.mxu0 %v3603
        %3633 = vmatprep.subr.mxu0 0.0
        %3634 = vmatpush1.msra.mxu0 %v3604
        %3635 = vmatprep.subr.mxu0 0.0
        %3636 = vmatpush1.msra.mxu0 %v3605
        %3637 = vmatprep.subr.mxu0 0.0
        %3638 = vmatpush1.msra.mxu0 %v3606
        %3639 = vmatprep.subr.mxu0 0.0
        %3640 = vmatpush1.msra.mxu0 0.0
        %3641 = vmatprep.subr.mxu0 0.0
        %3642 = vmatpush1.msra.mxu0 0.0
        %3643 = vmatprep.subr.mxu0 0.0
        %3644 = vmatpush1.msra.mxu0 0.0
        %3645 = vmatprep.subr.mxu0 0.0
        %3646 = vmatpush1.msra.mxu0 0.0
        %3647 = vmatprep.subr.mxu0 0.0
        %3648 = vmatpush1.msra.mxu0 0.0
        %3649 = vmatprep.subr.mxu0 0.0
        %3650 = vmatpush1.msra.mxu0 0.0
        %3651 = vmatprep.subr.mxu0 0.0
        %3652 = vmatpush1.msra.mxu0 0.0
        %3653 = vmatprep.subr.mxu0 0.0
        %3654 = vmatpush1.msra.mxu0 0.0
        %3655 = vmatprep.subr.mxu0 0.0
        %3656 = vmatpush1.msra.mxu0 0.0
        %3657 = vmatprep.subr.mxu0 0.0
        %3658 = vmatpush1.msra.mxu0 0.0
        %3659 = vmatprep.subr.mxu0 0.0
        %3660 = vmatpush1.msra.mxu0 0.0
        %3661 = vmatprep.subr.mxu0 0.0
        %3662 = vmatpush1.msra.mxu0 0.0
        %3663 = vmatprep.subr.mxu0 0.0
        %3664 = vmatpush1.msra.mxu0 0.0
        %3665 = vmatprep.subr.mxu0 0.0
        %3666 = vmatpush1.msra.mxu0 0.0
        %3667 = vmatprep.subr.mxu0 0.0
        %3668 = vmatpush1.msra.mxu0 0.0
        %3669 = vmatprep.subr.mxu0 0.0
        %3670 = vmatpush1.msra.mxu0 0.0
        %3671 = vmatprep.mubr.f32.mxu0 0.0
        %3672 = vmatmul.mubr.f32.gmra.mrb[0].mxu0 %v3589
        %v3673 = vpop.f32.mrb[0].mxu0
        %v3674 = vadd.f32 0.0, %v3673
        %v3675 = vpop.f32.mrb[0].mxu0
        %3676 = vdwg.mxu0
        %v3677 = vadd.f32 %v3371, %v3674
        %3678 = vmatprep.subr.mxu0 0.0
        %3679 = vmatpush1.msra.mxu0 %v288
        %3680 = vmatprep.subr.mxu0 0.0
        %3681 = vmatpush1.msra.mxu0 %v289
        %3682 = vmatprep.subr.mxu0 0.0
        %3683 = vmatpush1.msra.mxu0 %v290
        %3684 = vmatprep.subr.mxu0 0.0
        %3685 = vmatpush1.msra.mxu0 %v291
        %3686 = vmatprep.subr.mxu0 0.0
        %3687 = vmatpush1.msra.mxu0 %v292
        %3688 = vmatprep.subr.mxu0 0.0
        %3689 = vmatpush1.msra.mxu0 %v293
        %3690 = vmatprep.subr.mxu0 0.0
        %3691 = vmatpush1.msra.mxu0 %v294
        %3692 = vmatprep.subr.mxu0 0.0
        %3693 = vmatpush1.msra.mxu0 %v295
        %3694 = vmatprep.subr.mxu0 0.0
        %3695 = vmatpush1.msra.mxu0 %v296
        %3696 = vmatprep.subr.mxu0 0.0
        %3697 = vmatpush1.msra.mxu0 0.0
        %3698 = vmatprep.subr.mxu0 0.0
        %3699 = vmatpush1.msra.mxu0 0.0
        %3700 = vmatprep.subr.mxu0 0.0
        %3701 = vmatpush1.msra.mxu0 0.0
        %3702 = vmatprep.subr.mxu0 0.0
        %3703 = vmatpush1.msra.mxu0 0.0
        %3704 = vmatprep.subr.mxu0 0.0
        %3705 = vmatpush1.msra.mxu0 0.0
        %3706 = vmatprep.subr.mxu0 0.0
        %3707 = vmatpush1.msra.mxu0 0.0
        %3708 = vmatprep.subr.mxu0 0.0
        %3709 = vmatpush1.msra.mxu0 0.0
        %3710 = vmatprep.subr.mxu0 0.0
        %3711 = vmatpush1.msra.mxu0 0.0
        %3712 = vmatprep.subr.mxu0 0.0
        %3713 = vmatpush1.msra.mxu0 0.0
        %3714 = vmatprep.subr.mxu0 0.0
        %3715 = vmatpush1.msra.mxu0 0.0
        %3716 = vmatprep.subr.mxu0 0.0
        %3717 = vmatpush1.msra.mxu0 0.0
        %3718 = vmatprep.subr.mxu0 0.0
        %3719 = vmatpush1.msra.mxu0 0.0
        %3720 = vmatprep.subr.mxu0 0.0
        %3721 = vmatpush1.msra.mxu0 0.0
        %3722 = vmatprep.subr.mxu0 0.0
        %3723 = vmatpush1.msra.mxu0 0.0
        %3724 = vmatprep.subr.mxu0 0.0
        %3725 = vmatpush1.msra.mxu0 0.0
        %3726 = vmatprep.subr.mxu0 0.0
        %3727 = vmatpush1.msra.mxu0 0.0
        %3728 = vmatprep.subr.mxu0 0.0
        %3729 = vmatpush1.msra.mxu0 0.0
        %3730 = vmatprep.subr.mxu0 0.0
        %3731 = vmatpush1.msra.mxu0 0.0
        %3732 = vmatprep.subr.mxu0 0.0
        %3733 = vmatpush1.msra.mxu0 0.0
        %3734 = vmatprep.subr.mxu0 0.0
        %3735 = vmatpush1.msra.mxu0 0.0
        %3736 = vmatprep.subr.mxu0 0.0
        %3737 = vmatpush1.msra.mxu0 0.0
        %3738 = vmatprep.subr.mxu0 0.0
        %3739 = vmatpush1.msra.mxu0 0.0
        %3740 = vmatprep.subr.mxu0 0.0
        %3741 = vmatpush1.msra.mxu0 0.0
        %3742 = vmatprep.mubr.f32.mxu0 0.0
        %3743 = vmatmul.mubr.f32.gmra.mrb[0].mxu0 %v3515
        %v3744 = vpop.f32.mrb[0].mxu0
        %v3745 = vadd.f32 0.0, %v3744
        %v3746 = vpop.f32.mrb[0].mxu0
        %3747 = vdwg.mxu0
        %3748 = vmatprep.subr.mxu0 0.0
        %3749 = vmatpush1.msra.mxu0 %v276
        %3750 = vmatprep.subr.mxu0 0.0
        %3751 = vmatpush1.msra.mxu0 %v277
        %3752 = vmatprep.subr.mxu0 0.0
        %3753 = vmatpush1.msra.mxu0 %v278
        %3754 = vmatprep.subr.mxu0 0.0
        %3755 = vmatpush1.msra.mxu0 %v279
        %3756 = vmatprep.subr.mxu0 0.0
        %3757 = vmatpush1.msra.mxu0 %v280
        %3758 = vmatprep.subr.mxu0 0.0
        %3759 = vmatpush1.msra.mxu0 %v281
        %3760 = vmatprep.subr.mxu0 0.0
        %3761 = vmatpush1.msra.mxu0 %v282
        %3762 = vmatprep.subr.mxu0 0.0
        %3763 = vmatpush1.msra.mxu0 %v283
        %3764 = vmatprep.subr.mxu0 0.0
        %3765 = vmatpush1.msra.mxu0 %v284
        %3766 = vmatprep.subr.mxu0 0.0
        %3767 = vmatpush1.msra.mxu0 0.0
        %3768 = vmatprep.subr.mxu0 0.0
        %3769 = vmatpush1.msra.mxu0 0.0
        %3770 = vmatprep.subr.mxu0 0.0
        %3771 = vmatpush1.msra.mxu0 0.0
        %3772 = vmatprep.subr.mxu0 0.0
        %3773 = vmatpush1.msra.mxu0 0.0
        %3774 = vmatprep.subr.mxu0 0.0
        %3775 = vmatpush1.msra.mxu0 0.0
        %3776 = vmatprep.subr.mxu0 0.0
        %3777 = vmatpush1.msra.mxu0 0.0
        %3778 = vmatprep.subr.mxu0 0.0
        %3779 = vmatpush1.msra.mxu0 0.0
        %3780 = vmatprep.subr.mxu0 0.0
        %3781 = vmatpush1.msra.mxu0 0.0
        %3782 = vmatprep.subr.mxu0 0.0
        %3783 = vmatpush1.msra.mxu0 0.0
        %3784 = vmatprep.subr.mxu0 0.0
        %3785 = vmatpush1.msra.mxu0 0.0
        %3786 = vmatprep.subr.mxu0 0.0
        %3787 = vmatpush1.msra.mxu0 0.0
        %3788 = vmatprep.subr.mxu0 0.0
        %3789 = vmatpush1.msra.mxu0 0.0
        %3790 = vmatprep.subr.mxu0 0.0
        %3791 = vmatpush1.msra.mxu0 0.0
        %3792 = vmatprep.subr.mxu0 0.0
        %3793 = vmatpush1.msra.mxu0 0.0
        %3794 = vmatprep.subr.mxu0 0.0
        %3795 = vmatpush1.msra.mxu0 0.0
        %3796 = vmatprep.subr.mxu0 0.0
        %3797 = vmatpush1.msra.mxu0 0.0
        %3798 = vmatprep.subr.mxu0 0.0
        %3799 = vmatpush1.msra.mxu0 0.0
        %3800 = vmatprep.subr.mxu0 0.0
        %3801 = vmatpush1.msra.mxu0 0.0
        %3802 = vmatprep.subr.mxu0 0.0
        %3803 = vmatpush1.msra.mxu0 0.0
        %3804 = vmatprep.subr.mxu0 0.0
        %3805 = vmatpush1.msra.mxu0 0.0
        %3806 = vmatprep.subr.mxu0 0.0
        %3807 = vmatpush1.msra.mxu0 0.0
        %3808 = vmatprep.subr.mxu0 0.0
        %3809 = vmatpush1.msra.mxu0 0.0
        %3810 = vmatprep.subr.mxu0 0.0
        %3811 = vmatpush1.msra.mxu0 0.0
        %3812 = vmatprep.mubr.f32.mxu0 0.0
        %3813 = vmatmul.mubr.f32.gmra.mrb[0].mxu0 %v3209
        %v3814 = vpop.f32.mrb[0].mxu0
        %v3815 = vadd.f32 %v3745, %v3814
        %v3816 = vpop.f32.mrb[0].mxu0
        %3817 = vdwg.mxu0
        %s3818 = scalar_lea.vmem %s273, 13
        %v3819 = vld [vmem:[%s3818] sm:$0x1]
        %v3821 = vsel %vm297, %v3819, 0
        %3823 = vmatprep.subr.mxu0 0.0
        %3824 = vmatpush1.msra.mxu0 %v447
        %3825 = vmatprep.subr.mxu0 0.0
        %3826 = vmatpush1.msra.mxu0 %v448
        %3827 = vmatprep.subr.mxu0 0.0
        %3828 = vmatpush1.msra.mxu0 %v449
        %3829 = vmatprep.subr.mxu0 0.0
        %3830 = vmatpush1.msra.mxu0 %v450
        %3831 = vmatprep.subr.mxu0 0.0
        %3832 = vmatpush1.msra.mxu0 %v451
        %3833 = vmatprep.subr.mxu0 0.0
        %3834 = vmatpush1.msra.mxu0 %v452
        %3835 = vmatprep.subr.mxu0 0.0
        %3836 = vmatpush1.msra.mxu0 %v453
        %3837 = vmatprep.subr.mxu0 0.0
        %3838 = vmatpush1.msra.mxu0 %v454
        %3839 = vmatprep.subr.mxu0 0.0
        %3840 = vmatpush1.msra.mxu0 %v455
        %3841 = vmatprep.subr.mxu0 0.0
        %3842 = vmatpush1.msra.mxu0 0.0
        %3843 = vmatprep.subr.mxu0 0.0
        %3844 = vmatpush1.msra.mxu0 0.0
        %3845 = vmatprep.subr.mxu0 0.0
        %3846 = vmatpush1.msra.mxu0 0.0
        %3847 = vmatprep.subr.mxu0 0.0
        %3848 = vmatpush1.msra.mxu0 0.0
        %3849 = vmatprep.subr.mxu0 0.0
        %3850 = vmatpush1.msra.mxu0 0.0
        %3851 = vmatprep.subr.mxu0 0.0
        %3852 = vmatpush1.msra.mxu0 0.0
        %3853 = vmatprep.subr.mxu0 0.0
        %3854 = vmatpush1.msra.mxu0 0.0
        %3855 = vmatprep.subr.mxu0 0.0
        %3856 = vmatpush1.msra.mxu0 0.0
        %3857 = vmatprep.subr.mxu0 0.0
        %3858 = vmatpush1.msra.mxu0 0.0
        %3859 = vmatprep.subr.mxu0 0.0
        %3860 = vmatpush1.msra.mxu0 0.0
        %3861 = vmatprep.subr.mxu0 0.0
        %3862 = vmatpush1.msra.mxu0 0.0
        %3863 = vmatprep.subr.mxu0 0.0
        %3864 = vmatpush1.msra.mxu0 0.0
        %3865 = vmatprep.subr.mxu0 0.0
        %3866 = vmatpush1.msra.mxu0 0.0
        %3867 = vmatprep.subr.mxu0 0.0
        %3868 = vmatpush1.msra.mxu0 0.0
        %3869 = vmatprep.subr.mxu0 0.0
        %3870 = vmatpush1.msra.mxu0 0.0
        %3871 = vmatprep.subr.mxu0 0.0
        %3872 = vmatpush1.msra.mxu0 0.0
        %3873 = vmatprep.subr.mxu0 0.0
        %3874 = vmatpush1.msra.mxu0 0.0
        %3875 = vmatprep.subr.mxu0 0.0
        %3876 = vmatpush1.msra.mxu0 0.0
        %3877 = vmatprep.subr.mxu0 0.0
        %3878 = vmatpush1.msra.mxu0 0.0
        %3879 = vmatprep.subr.mxu0 0.0
        %3880 = vmatpush1.msra.mxu0 0.0
        %3881 = vmatprep.subr.mxu0 0.0
        %3882 = vmatpush1.msra.mxu0 0.0
        %3883 = vmatprep.subr.mxu0 0.0
        %3884 = vmatpush1.msra.mxu0 0.0
        %3885 = vmatprep.subr.mxu0 0.0
        %3886 = vmatpush1.msra.mxu0 0.0
        %3887 = vmatprep.mubr.f32.mxu0 0.0
        %3888 = vmatmul.mubr.f32.gmra.mrb[0].mxu0 %v3821
        %v3889 = vpop.f32.mrb[0].mxu0
        %v3890 = vadd.f32 0.0, %v3889
        %v3891 = vpop.f32.mrb[0].mxu0
        %3892 = vdwg.mxu0
        %v3893 = vadd.f32 %v3815, %v3890
        %v3894 = vadd.f32 %v3893, %v530
        %v3895 = vmax.f32 %v3894, 0.0
        %s3896 = scalar_lea.vmem %s3, 1408
        %v3897 = vld [vmem:[%s3896] sm:$0xff]
        %v3898 = vld [vmem:[%s3896 + $0x8] sm:$0xff]
        %v3899 = vld [vmem:[%s3896 + $0x10] sm:$0xff]
        %v3900 = vld [vmem:[%s3896 + $0x18] sm:$0xff]
        %v3901 = vld [vmem:[%s3896 + $0x20] sm:$0xff]
        %v3902 = vld [vmem:[%s3896 + $0x28] sm:$0xff]
        %v3903 = vld [vmem:[%s3896 + $0x30] sm:$0xff]
        %v3904 = vld [vmem:[%s3896 + $0x38] sm:$0xff]
        %v3905 = vld [vmem:[%s3896 + $0x40] sm:$0xff]
        %v3906 = vld [vmem:[%s3896 + $0x48] sm:$0xff]
        %v3907 = vld [vmem:[%s3896 + $0x50] sm:$0xff]
        %v3908 = vld [vmem:[%s3896 + $0x58] sm:$0xff]
        %v3909 = vld [vmem:[%s3896 + $0x60] sm:$0xff]
        %v3910 = vld [vmem:[%s3896 + $0x68] sm:$0xff]
        %v3911 = vld [vmem:[%s3896 + $0x70] sm:$0xff]
        %v3912 = vld [vmem:[%s3896 + $0x78] sm:$0xff]
        %3913 = vmatprep.subr.mxu0 0.0
        %3914 = vmatpush1.msra.mxu0 %v3897
        %3915 = vmatprep.subr.mxu0 0.0
        %3916 = vmatpush1.msra.mxu0 %v3898
        %3917 = vmatprep.subr.mxu0 0.0
        %3918 = vmatpush1.msra.mxu0 %v3899
        %3919 = vmatprep.subr.mxu0 0.0
        %3920 = vmatpush1.msra.mxu0 %v3900
        %3921 = vmatprep.subr.mxu0 0.0
        %3922 = vmatpush1.msra.mxu0 %v3901
        %3923 = vmatprep.subr.mxu0 0.0
        %3924 = vmatpush1.msra.mxu0 %v3902
        %3925 = vmatprep.subr.mxu0 0.0
        %3926 = vmatpush1.msra.mxu0 %v3903
        %3927 = vmatprep.subr.mxu0 0.0
        %3928 = vmatpush1.msra.mxu0 %v3904
        %3929 = vmatprep.subr.mxu0 0.0
        %3930 = vmatpush1.msra.mxu0 %v3905
        %3931 = vmatprep.subr.mxu0 0.0
        %3932 = vmatpush1.msra.mxu0 %v3906
        %3933 = vmatprep.subr.mxu0 0.0
        %3934 = vmatpush1.msra.mxu0 %v3907
        %3935 = vmatprep.subr.mxu0 0.0
        %3936 = vmatpush1.msra.mxu0 %v3908
        %3937 = vmatprep.subr.mxu0 0.0
        %3938 = vmatpush1.msra.mxu0 %v3909
        %3939 = vmatprep.subr.mxu0 0.0
        %3940 = vmatpush1.msra.mxu0 %v3910
        %3941 = vmatprep.subr.mxu0 0.0
        %3942 = vmatpush1.msra.mxu0 %v3911
        %3943 = vmatprep.subr.mxu0 0.0
        %3944 = vmatpush1.msra.mxu0 %v3912
        %3945 = vmatprep.subr.mxu0 0.0
        %3946 = vmatpush1.msra.mxu0 0.0
        %3947 = vmatprep.subr.mxu0 0.0
        %3948 = vmatpush1.msra.mxu0 0.0
        %3949 = vmatprep.subr.mxu0 0.0
        %3950 = vmatpush1.msra.mxu0 0.0
        %3951 = vmatprep.subr.mxu0 0.0
        %3952 = vmatpush1.msra.mxu0 0.0
        %3953 = vmatprep.subr.mxu0 0.0
        %3954 = vmatpush1.msra.mxu0 0.0
        %3955 = vmatprep.subr.mxu0 0.0
        %3956 = vmatpush1.msra.mxu0 0.0
        %3957 = vmatprep.subr.mxu0 0.0
        %3958 = vmatpush1.msra.mxu0 0.0
        %3959 = vmatprep.subr.mxu0 0.0
        %3960 = vmatpush1.msra.mxu0 0.0
        %3961 = vmatprep.subr.mxu0 0.0
        %3962 = vmatpush1.msra.mxu0 0.0
        %3963 = vmatprep.subr.mxu0 0.0
        %3964 = vmatpush1.msra.mxu0 0.0
        %3965 = vmatprep.subr.mxu0 0.0
        %3966 = vmatpush1.msra.mxu0 0.0
        %3967 = vmatprep.subr.mxu0 0.0
        %3968 = vmatpush1.msra.mxu0 0.0
        %3969 = vmatprep.subr.mxu0 0.0
        %3970 = vmatpush1.msra.mxu0 0.0
        %3971 = vmatprep.subr.mxu0 0.0
        %3972 = vmatpush1.msra.mxu0 0.0
        %3973 = vmatprep.subr.mxu0 0.0
        %3974 = vmatpush1.msra.mxu0 0.0
        %3975 = vmatprep.subr.mxu0 0.0
        %3976 = vmatpush1.msra.mxu0 0.0
        %3977 = vmatprep.mubr.f32.mxu0 0.0
        %3978 = vmatmul.mubr.f32.gmra.mrb[0].mxu0 %v3895
        %v3979 = vpop.f32.mrb[0].mxu0
        %v3980 = vadd.f32 0.0, %v3979
        %v3981 = vpop.f32.mrb[0].mxu0
        %3982 = vdwg.mxu0
        %v3983 = vadd.f32 %v3677, %v3980
        %3984 = vmatprep.subr.mxu0 0.0
        %3985 = vmatpush1.msra.mxu0 %v288
        %3986 = vmatprep.subr.mxu0 0.0
        %3987 = vmatpush1.msra.mxu0 %v289
        %3988 = vmatprep.subr.mxu0 0.0
        %3989 = vmatpush1.msra.mxu0 %v290
        %3990 = vmatprep.subr.mxu0 0.0
        %3991 = vmatpush1.msra.mxu0 %v291
        %3992 = vmatprep.subr.mxu0 0.0
        %3993 = vmatpush1.msra.mxu0 %v292
        %3994 = vmatprep.subr.mxu0 0.0
        %3995 = vmatpush1.msra.mxu0 %v293
        %3996 = vmatprep.subr.mxu0 0.0
        %3997 = vmatpush1.msra.mxu0 %v294
        %3998 = vmatprep.subr.mxu0 0.0
        %3999 = vmatpush1.msra.mxu0 %v295
        %4000 = vmatprep.subr.mxu0 0.0
        %4001 = vmatpush1.msra.mxu0 %v296
        %4002 = vmatprep.subr.mxu0 0.0
        %4003 = vmatpush1.msra.mxu0 0.0
        %4004 = vmatprep.subr.mxu0 0.0
        %4005 = vmatpush1.msra.mxu0 0.0
        %4006 = vmatprep.subr.mxu0 0.0
        %4007 = vmatpush1.msra.mxu0 0.0
        %4008 = vmatprep.subr.mxu0 0.0
        %4009 = vmatpush1.msra.mxu0 0.0
        %4010 = vmatprep.subr.mxu0 0.0
        %4011 = vmatpush1.msra.mxu0 0.0
        %4012 = vmatprep.subr.mxu0 0.0
        %4013 = vmatpush1.msra.mxu0 0.0
        %4014 = vmatprep.subr.mxu0 0.0
        %4015 = vmatpush1.msra.mxu0 0.0
        %4016 = vmatprep.subr.mxu0 0.0
        %4017 = vmatpush1.msra.mxu0 0.0
        %4018 = vmatprep.subr.mxu0 0.0
        %4019 = vmatpush1.msra.mxu0 0.0
        %4020 = vmatprep.subr.mxu0 0.0
        %4021 = vmatpush1.msra.mxu0 0.0
        %4022 = vmatprep.subr.mxu0 0.0
        %4023 = vmatpush1.msra.mxu0 0.0
        %4024 = vmatprep.subr.mxu0 0.0
        %4025 = vmatpush1.msra.mxu0 0.0
        %4026 = vmatprep.subr.mxu0 0.0
        %4027 = vmatpush1.msra.mxu0 0.0
        %4028 = vmatprep.subr.mxu0 0.0
        %4029 = vmatpush1.msra.mxu0 0.0
        %4030 = vmatprep.subr.mxu0 0.0
        %4031 = vmatpush1.msra.mxu0 0.0
        %4032 = vmatprep.subr.mxu0 0.0
        %4033 = vmatpush1.msra.mxu0 0.0
        %4034 = vmatprep.subr.mxu0 0.0
        %4035 = vmatpush1.msra.mxu0 0.0
        %4036 = vmatprep.subr.mxu0 0.0
        %4037 = vmatpush1.msra.mxu0 0.0
        %4038 = vmatprep.subr.mxu0 0.0
        %4039 = vmatpush1.msra.mxu0 0.0
        %4040 = vmatprep.subr.mxu0 0.0
        %4041 = vmatpush1.msra.mxu0 0.0
        %4042 = vmatprep.subr.mxu0 0.0
        %4043 = vmatpush1.msra.mxu0 0.0
        %4044 = vmatprep.subr.mxu0 0.0
        %4045 = vmatpush1.msra.mxu0 0.0
        %4046 = vmatprep.subr.mxu0 0.0
        %4047 = vmatpush1.msra.mxu0 0.0
        %4048 = vmatprep.mubr.f32.mxu0 0.0
        %4049 = vmatmul.mubr.f32.gmra.mrb[0].mxu0 %v3821
        %v4050 = vpop.f32.mrb[0].mxu0
        %v4051 = vadd.f32 0.0, %v4050
        %v4052 = vpop.f32.mrb[0].mxu0
        %4053 = vdwg.mxu0
        %4054 = vmatprep.subr.mxu0 0.0
        %4055 = vmatpush1.msra.mxu0 %v276
        %4056 = vmatprep.subr.mxu0 0.0
        %4057 = vmatpush1.msra.mxu0 %v277
        %4058 = vmatprep.subr.mxu0 0.0
        %4059 = vmatpush1.msra.mxu0 %v278
        %4060 = vmatprep.subr.mxu0 0.0
        %4061 = vmatpush1.msra.mxu0 %v279
        %4062 = vmatprep.subr.mxu0 0.0
        %4063 = vmatpush1.msra.mxu0 %v280
        %4064 = vmatprep.subr.mxu0 0.0
        %4065 = vmatpush1.msra.mxu0 %v281
        %4066 = vmatprep.subr.mxu0 0.0
        %4067 = vmatpush1.msra.mxu0 %v282
        %4068 = vmatprep.subr.mxu0 0.0
        %4069 = vmatpush1.msra.mxu0 %v283
        %4070 = vmatprep.subr.mxu0 0.0
        %4071 = vmatpush1.msra.mxu0 %v284
        %4072 = vmatprep.subr.mxu0 0.0
        %4073 = vmatpush1.msra.mxu0 0.0
        %4074 = vmatprep.subr.mxu0 0.0
        %4075 = vmatpush1.msra.mxu0 0.0
        %4076 = vmatprep.subr.mxu0 0.0
        %4077 = vmatpush1.msra.mxu0 0.0
        %4078 = vmatprep.subr.mxu0 0.0
        %4079 = vmatpush1.msra.mxu0 0.0
        %4080 = vmatprep.subr.mxu0 0.0
        %4081 = vmatpush1.msra.mxu0 0.0
        %4082 = vmatprep.subr.mxu0 0.0
        %4083 = vmatpush1.msra.mxu0 0.0
        %4084 = vmatprep.subr.mxu0 0.0
        %4085 = vmatpush1.msra.mxu0 0.0
        %4086 = vmatprep.subr.mxu0 0.0
        %4087 = vmatpush1.msra.mxu0 0.0
        %4088 = vmatprep.subr.mxu0 0.0
        %4089 = vmatpush1.msra.mxu0 0.0
        %4090 = vmatprep.subr.mxu0 0.0
        %4091 = vmatpush1.msra.mxu0 0.0
        %4092 = vmatprep.subr.mxu0 0.0
        %4093 = vmatpush1.msra.mxu0 0.0
        %4094 = vmatprep.subr.mxu0 0.0
        %4095 = vmatpush1.msra.mxu0 0.0
        %4096 = vmatprep.subr.mxu0 0.0
        %4097 = vmatpush1.msra.mxu0 0.0
        %4098 = vmatprep.subr.mxu0 0.0
        %4099 = vmatpush1.msra.mxu0 0.0
        %4100 = vmatprep.subr.mxu0 0.0
        %4101 = vmatpush1.msra.mxu0 0.0
        %4102 = vmatprep.subr.mxu0 0.0
        %4103 = vmatpush1.msra.mxu0 0.0
        %4104 = vmatprep.subr.mxu0 0.0
        %4105 = vmatpush1.msra.mxu0 0.0
        %4106 = vmatprep.subr.mxu0 0.0
        %4107 = vmatpush1.msra.mxu0 0.0
        %4108 = vmatprep.subr.mxu0 0.0
        %4109 = vmatpush1.msra.mxu0 0.0
        %4110 = vmatprep.subr.mxu0 0.0
        %4111 = vmatpush1.msra.mxu0 0.0
        %4112 = vmatprep.subr.mxu0 0.0
        %4113 = vmatpush1.msra.mxu0 0.0
        %4114 = vmatprep.subr.mxu0 0.0
        %4115 = vmatpush1.msra.mxu0 0.0
        %4116 = vmatprep.subr.mxu0 0.0
        %4117 = vmatpush1.msra.mxu0 0.0
        %4118 = vmatprep.mubr.f32.mxu0 0.0
        %4119 = vmatmul.mubr.f32.gmra.mrb[0].mxu0 %v3515
        %v4120 = vpop.f32.mrb[0].mxu0
        %v4121 = vadd.f32 %v4051, %v4120
        %v4122 = vpop.f32.mrb[0].mxu0
        %4123 = vdwg.mxu0
        %s4124 = scalar_lea.vmem %s273, 14
        %v4125 = vld [vmem:[%s4124] sm:$0x1]
        %v4127 = vsel %vm297, %v4125, 0
        %4129 = vmatprep.subr.mxu0 0.0
        %4130 = vmatpush1.msra.mxu0 %v447
        %4131 = vmatprep.subr.mxu0 0.0
        %4132 = vmatpush1.msra.mxu0 %v448
        %4133 = vmatprep.subr.mxu0 0.0
        %4134 = vmatpush1.msra.mxu0 %v449
        %4135 = vmatprep.subr.mxu0 0.0
        %4136 = vmatpush1.msra.mxu0 %v450
        %4137 = vmatprep.subr.mxu0 0.0
        %4138 = vmatpush1.msra.mxu0 %v451
        %4139 = vmatprep.subr.mxu0 0.0
        %4140 = vmatpush1.msra.mxu0 %v452
        %4141 = vmatprep.subr.mxu0 0.0
        %4142 = vmatpush1.msra.mxu0 %v453
        %4143 = vmatprep.subr.mxu0 0.0
        %4144 = vmatpush1.msra.mxu0 %v454
        %4145 = vmatprep.subr.mxu0 0.0
        %4146 = vmatpush1.msra.mxu0 %v455
        %4147 = vmatprep.subr.mxu0 0.0
        %4148 = vmatpush1.msra.mxu0 0.0
        %4149 = vmatprep.subr.mxu0 0.0
        %4150 = vmatpush1.msra.mxu0 0.0
        %4151 = vmatprep.subr.mxu0 0.0
        %4152 = vmatpush1.msra.mxu0 0.0
        %4153 = vmatprep.subr.mxu0 0.0
        %4154 = vmatpush1.msra.mxu0 0.0
        %4155 = vmatprep.subr.mxu0 0.0
        %4156 = vmatpush1.msra.mxu0 0.0
        %4157 = vmatprep.subr.mxu0 0.0
        %4158 = vmatpush1.msra.mxu0 0.0
        %4159 = vmatprep.subr.mxu0 0.0
        %4160 = vmatpush1.msra.mxu0 0.0
        %4161 = vmatprep.subr.mxu0 0.0
        %4162 = vmatpush1.msra.mxu0 0.0
        %4163 = vmatprep.subr.mxu0 0.0
        %4164 = vmatpush1.msra.mxu0 0.0
        %4165 = vmatprep.subr.mxu0 0.0
        %4166 = vmatpush1.msra.mxu0 0.0
        %4167 = vmatprep.subr.mxu0 0.0
        %4168 = vmatpush1.msra.mxu0 0.0
        %4169 = vmatprep.subr.mxu0 0.0
        %4170 = vmatpush1.msra.mxu0 0.0
        %4171 = vmatprep.subr.mxu0 0.0
        %4172 = vmatpush1.msra.mxu0 0.0
        %4173 = vmatprep.subr.mxu0 0.0
        %4174 = vmatpush1.msra.mxu0 0.0
        %4175 = vmatprep.subr.mxu0 0.0
        %4176 = vmatpush1.msra.mxu0 0.0
        %4177 = vmatprep.subr.mxu0 0.0
        %4178 = vmatpush1.msra.mxu0 0.0
        %4179 = vmatprep.subr.mxu0 0.0
        %4180 = vmatpush1.msra.mxu0 0.0
        %4181 = vmatprep.subr.mxu0 0.0
        %4182 = vmatpush1.msra.mxu0 0.0
        %4183 = vmatprep.subr.mxu0 0.0
        %4184 = vmatpush1.msra.mxu0 0.0
        %4185 = vmatprep.subr.mxu0 0.0
        %4186 = vmatpush1.msra.mxu0 0.0
        %4187 = vmatprep.subr.mxu0 0.0
        %4188 = vmatpush1.msra.mxu0 0.0
        %4189 = vmatprep.subr.mxu0 0.0
        %4190 = vmatpush1.msra.mxu0 0.0
        %4191 = vmatprep.subr.mxu0 0.0
        %4192 = vmatpush1.msra.mxu0 0.0
        %4193 = vmatprep.mubr.f32.mxu0 0.0
        %4194 = vmatmul.mubr.f32.gmra.mrb[0].mxu0 %v4127
        %v4195 = vpop.f32.mrb[0].mxu0
        %v4196 = vadd.f32 0.0, %v4195
        %v4197 = vpop.f32.mrb[0].mxu0
        %4198 = vdwg.mxu0
        %v4199 = vadd.f32 %v4121, %v4196
        %v4200 = vadd.f32 %v4199, %v530
        %v4201 = vmax.f32 %v4200, 0.0
        %s4202 = scalar_lea.vmem %s3, 1536
        %v4203 = vld [vmem:[%s4202] sm:$0xff]
        %v4204 = vld [vmem:[%s4202 + $0x8] sm:$0xff]
        %v4205 = vld [vmem:[%s4202 + $0x10] sm:$0xff]
        %v4206 = vld [vmem:[%s4202 + $0x18] sm:$0xff]
        %v4207 = vld [vmem:[%s4202 + $0x20] sm:$0xff]
        %v4208 = vld [vmem:[%s4202 + $0x28] sm:$0xff]
        %v4209 = vld [vmem:[%s4202 + $0x30] sm:$0xff]
        %v4210 = vld [vmem:[%s4202 + $0x38] sm:$0xff]
        %v4211 = vld [vmem:[%s4202 + $0x40] sm:$0xff]
        %v4212 = vld [vmem:[%s4202 + $0x48] sm:$0xff]
        %v4213 = vld [vmem:[%s4202 + $0x50] sm:$0xff]
        %v4214 = vld [vmem:[%s4202 + $0x58] sm:$0xff]
        %v4215 = vld [vmem:[%s4202 + $0x60] sm:$0xff]
        %v4216 = vld [vmem:[%s4202 + $0x68] sm:$0xff]
        %v4217 = vld [vmem:[%s4202 + $0x70] sm:$0xff]
        %v4218 = vld [vmem:[%s4202 + $0x78] sm:$0xff]
        %4219 = vmatprep.subr.mxu0 0.0
        %4220 = vmatpush1.msra.mxu0 %v4203
        %4221 = vmatprep.subr.mxu0 0.0
        %4222 = vmatpush1.msra.mxu0 %v4204
        %4223 = vmatprep.subr.mxu0 0.0
        %4224 = vmatpush1.msra.mxu0 %v4205
        %4225 = vmatprep.subr.mxu0 0.0
        %4226 = vmatpush1.msra.mxu0 %v4206
        %4227 = vmatprep.subr.mxu0 0.0
        %4228 = vmatpush1.msra.mxu0 %v4207
        %4229 = vmatprep.subr.mxu0 0.0
        %4230 = vmatpush1.msra.mxu0 %v4208
        %4231 = vmatprep.subr.mxu0 0.0
        %4232 = vmatpush1.msra.mxu0 %v4209
        %4233 = vmatprep.subr.mxu0 0.0
        %4234 = vmatpush1.msra.mxu0 %v4210
        %4235 = vmatprep.subr.mxu0 0.0
        %4236 = vmatpush1.msra.mxu0 %v4211
        %4237 = vmatprep.subr.mxu0 0.0
        %4238 = vmatpush1.msra.mxu0 %v4212
        %4239 = vmatprep.subr.mxu0 0.0
        %4240 = vmatpush1.msra.mxu0 %v4213
        %4241 = vmatprep.subr.mxu0 0.0
        %4242 = vmatpush1.msra.mxu0 %v4214
        %4243 = vmatprep.subr.mxu0 0.0
        %4244 = vmatpush1.msra.mxu0 %v4215
        %4245 = vmatprep.subr.mxu0 0.0
        %4246 = vmatpush1.msra.mxu0 %v4216
        %4247 = vmatprep.subr.mxu0 0.0
        %4248 = vmatpush1.msra.mxu0 %v4217
        %4249 = vmatprep.subr.mxu0 0.0
        %4250 = vmatpush1.msra.mxu0 %v4218
        %4251 = vmatprep.subr.mxu0 0.0
        %4252 = vmatpush1.msra.mxu0 0.0
        %4253 = vmatprep.subr.mxu0 0.0
        %4254 = vmatpush1.msra.mxu0 0.0
        %4255 = vmatprep.subr.mxu0 0.0
        %4256 = vmatpush1.msra.mxu0 0.0
        %4257 = vmatprep.subr.mxu0 0.0
        %4258 = vmatpush1.msra.mxu0 0.0
        %4259 = vmatprep.subr.mxu0 0.0
        %4260 = vmatpush1.msra.mxu0 0.0
        %4261 = vmatprep.subr.mxu0 0.0
        %4262 = vmatpush1.msra.mxu0 0.0
        %4263 = vmatprep.subr.mxu0 0.0
        %4264 = vmatpush1.msra.mxu0 0.0
        %4265 = vmatprep.subr.mxu0 0.0
        %4266 = vmatpush1.msra.mxu0 0.0
        %4267 = vmatprep.subr.mxu0 0.0
        %4268 = vmatpush1.msra.mxu0 0.0
        %4269 = vmatprep.subr.mxu0 0.0
        %4270 = vmatpush1.msra.mxu0 0.0
        %4271 = vmatprep.subr.mxu0 0.0
        %4272 = vmatpush1.msra.mxu0 0.0
        %4273 = vmatprep.subr.mxu0 0.0
        %4274 = vmatpush1.msra.mxu0 0.0
        %4275 = vmatprep.subr.mxu0 0.0
        %4276 = vmatpush1.msra.mxu0 0.0
        %4277 = vmatprep.subr.mxu0 0.0
        %4278 = vmatpush1.msra.mxu0 0.0
        %4279 = vmatprep.subr.mxu0 0.0
        %4280 = vmatpush1.msra.mxu0 0.0
        %4281 = vmatprep.subr.mxu0 0.0
        %4282 = vmatpush1.msra.mxu0 0.0
        %4283 = vmatprep.mubr.f32.mxu0 0.0
        %4284 = vmatmul.mubr.f32.gmra.mrb[0].mxu0 %v4201
        %v4285 = vpop.f32.mrb[0].mxu0
        %v4286 = vadd.f32 0.0, %v4285
        %v4287 = vpop.f32.mrb[0].mxu0
        %4288 = vdwg.mxu0
        %v4289 = vadd.f32 %v3983, %v4286
        %4290 = vmatprep.subr.mxu0 0.0
        %4291 = vmatpush1.msra.mxu0 %v288
        %4292 = vmatprep.subr.mxu0 0.0
        %4293 = vmatpush1.msra.mxu0 %v289
        %4294 = vmatprep.subr.mxu0 0.0
        %4295 = vmatpush1.msra.mxu0 %v290
        %4296 = vmatprep.subr.mxu0 0.0
        %4297 = vmatpush1.msra.mxu0 %v291
        %4298 = vmatprep.subr.mxu0 0.0
        %4299 = vmatpush1.msra.mxu0 %v292
        %4300 = vmatprep.subr.mxu0 0.0
        %4301 = vmatpush1.msra.mxu0 %v293
        %4302 = vmatprep.subr.mxu0 0.0
        %4303 = vmatpush1.msra.mxu0 %v294
        %4304 = vmatprep.subr.mxu0 0.0
        %4305 = vmatpush1.msra.mxu0 %v295
        %4306 = vmatprep.subr.mxu0 0.0
        %4307 = vmatpush1.msra.mxu0 %v296
        %4308 = vmatprep.subr.mxu0 0.0
        %4309 = vmatpush1.msra.mxu0 0.0
        %4310 = vmatprep.subr.mxu0 0.0
        %4311 = vmatpush1.msra.mxu0 0.0
        %4312 = vmatprep.subr.mxu0 0.0
        %4313 = vmatpush1.msra.mxu0 0.0
        %4314 = vmatprep.subr.mxu0 0.0
        %4315 = vmatpush1.msra.mxu0 0.0
        %4316 = vmatprep.subr.mxu0 0.0
        %4317 = vmatpush1.msra.mxu0 0.0
        %4318 = vmatprep.subr.mxu0 0.0
        %4319 = vmatpush1.msra.mxu0 0.0
        %4320 = vmatprep.subr.mxu0 0.0
        %4321 = vmatpush1.msra.mxu0 0.0
        %4322 = vmatprep.subr.mxu0 0.0
        %4323 = vmatpush1.msra.mxu0 0.0
        %4324 = vmatprep.subr.mxu0 0.0
        %4325 = vmatpush1.msra.mxu0 0.0
        %4326 = vmatprep.subr.mxu0 0.0
        %4327 = vmatpush1.msra.mxu0 0.0
        %4328 = vmatprep.subr.mxu0 0.0
        %4329 = vmatpush1.msra.mxu0 0.0
        %4330 = vmatprep.subr.mxu0 0.0
        %4331 = vmatpush1.msra.mxu0 0.0
        %4332 = vmatprep.subr.mxu0 0.0
        %4333 = vmatpush1.msra.mxu0 0.0
        %4334 = vmatprep.subr.mxu0 0.0
        %4335 = vmatpush1.msra.mxu0 0.0
        %4336 = vmatprep.subr.mxu0 0.0
        %4337 = vmatpush1.msra.mxu0 0.0
        %4338 = vmatprep.subr.mxu0 0.0
        %4339 = vmatpush1.msra.mxu0 0.0
        %4340 = vmatprep.subr.mxu0 0.0
        %4341 = vmatpush1.msra.mxu0 0.0
        %4342 = vmatprep.subr.mxu0 0.0
        %4343 = vmatpush1.msra.mxu0 0.0
        %4344 = vmatprep.subr.mxu0 0.0
        %4345 = vmatpush1.msra.mxu0 0.0
        %4346 = vmatprep.subr.mxu0 0.0
        %4347 = vmatpush1.msra.mxu0 0.0
        %4348 = vmatprep.subr.mxu0 0.0
        %4349 = vmatpush1.msra.mxu0 0.0
        %4350 = vmatprep.subr.mxu0 0.0
        %4351 = vmatpush1.msra.mxu0 0.0
        %4352 = vmatprep.subr.mxu0 0.0
        %4353 = vmatpush1.msra.mxu0 0.0
        %4354 = vmatprep.mubr.f32.mxu0 0.0
        %4355 = vmatmul.mubr.f32.gmra.mrb[0].mxu0 %v4127
        %v4356 = vpop.f32.mrb[0].mxu0
        %v4357 = vadd.f32 0.0, %v4356
        %v4358 = vpop.f32.mrb[0].mxu0
        %4359 = vdwg.mxu0
        %4360 = vmatprep.subr.mxu0 0.0
        %4361 = vmatpush1.msra.mxu0 %v276
        %4362 = vmatprep.subr.mxu0 0.0
        %4363 = vmatpush1.msra.mxu0 %v277
        %4364 = vmatprep.subr.mxu0 0.0
        %4365 = vmatpush1.msra.mxu0 %v278
        %4366 = vmatprep.subr.mxu0 0.0
        %4367 = vmatpush1.msra.mxu0 %v279
        %4368 = vmatprep.subr.mxu0 0.0
        %4369 = vmatpush1.msra.mxu0 %v280
        %4370 = vmatprep.subr.mxu0 0.0
        %4371 = vmatpush1.msra.mxu0 %v281
        %4372 = vmatprep.subr.mxu0 0.0
        %4373 = vmatpush1.msra.mxu0 %v282
        %4374 = vmatprep.subr.mxu0 0.0
        %4375 = vmatpush1.msra.mxu0 %v283
        %4376 = vmatprep.subr.mxu0 0.0
        %4377 = vmatpush1.msra.mxu0 %v284
        %4378 = vmatprep.subr.mxu0 0.0
        %4379 = vmatpush1.msra.mxu0 0.0
        %4380 = vmatprep.subr.mxu0 0.0
        %4381 = vmatpush1.msra.mxu0 0.0
        %4382 = vmatprep.subr.mxu0 0.0
        %4383 = vmatpush1.msra.mxu0 0.0
        %4384 = vmatprep.subr.mxu0 0.0
        %4385 = vmatpush1.msra.mxu0 0.0
        %4386 = vmatprep.subr.mxu0 0.0
        %4387 = vmatpush1.msra.mxu0 0.0
        %4388 = vmatprep.subr.mxu0 0.0
        %4389 = vmatpush1.msra.mxu0 0.0
        %4390 = vmatprep.subr.mxu0 0.0
        %4391 = vmatpush1.msra.mxu0 0.0
        %4392 = vmatprep.subr.mxu0 0.0
        %4393 = vmatpush1.msra.mxu0 0.0
        %4394 = vmatprep.subr.mxu0 0.0
        %4395 = vmatpush1.msra.mxu0 0.0
        %4396 = vmatprep.subr.mxu0 0.0
        %4397 = vmatpush1.msra.mxu0 0.0
        %4398 = vmatprep.subr.mxu0 0.0
        %4399 = vmatpush1.msra.mxu0 0.0
        %4400 = vmatprep.subr.mxu0 0.0
        %4401 = vmatpush1.msra.mxu0 0.0
        %4402 = vmatprep.subr.mxu0 0.0
        %4403 = vmatpush1.msra.mxu0 0.0
        %4404 = vmatprep.subr.mxu0 0.0
        %4405 = vmatpush1.msra.mxu0 0.0
        %4406 = vmatprep.subr.mxu0 0.0
        %4407 = vmatpush1.msra.mxu0 0.0
        %4408 = vmatprep.subr.mxu0 0.0
        %4409 = vmatpush1.msra.mxu0 0.0
        %4410 = vmatprep.subr.mxu0 0.0
        %4411 = vmatpush1.msra.mxu0 0.0
        %4412 = vmatprep.subr.mxu0 0.0
        %4413 = vmatpush1.msra.mxu0 0.0
        %4414 = vmatprep.subr.mxu0 0.0
        %4415 = vmatpush1.msra.mxu0 0.0
        %4416 = vmatprep.subr.mxu0 0.0
        %4417 = vmatpush1.msra.mxu0 0.0
        %4418 = vmatprep.subr.mxu0 0.0
        %4419 = vmatpush1.msra.mxu0 0.0
        %4420 = vmatprep.subr.mxu0 0.0
        %4421 = vmatpush1.msra.mxu0 0.0
        %4422 = vmatprep.subr.mxu0 0.0
        %4423 = vmatpush1.msra.mxu0 0.0
        %4424 = vmatprep.mubr.f32.mxu0 0.0
        %4425 = vmatmul.mubr.f32.gmra.mrb[0].mxu0 %v3821
        %v4426 = vpop.f32.mrb[0].mxu0
        %v4427 = vadd.f32 %v4357, %v4426
        %v4428 = vpop.f32.mrb[0].mxu0
        %4429 = vdwg.mxu0
        %s4430 = scalar_lea.vmem %s273, 15
        %v4431 = vld [vmem:[%s4430] sm:$0x1]
        %v4433 = vsel %vm297, %v4431, 0
        %4435 = vmatprep.subr.mxu0 0.0
        %4436 = vmatpush1.msra.mxu0 %v447
        %4437 = vmatprep.subr.mxu0 0.0
        %4438 = vmatpush1.msra.mxu0 %v448
        %4439 = vmatprep.subr.mxu0 0.0
        %4440 = vmatpush1.msra.mxu0 %v449
        %4441 = vmatprep.subr.mxu0 0.0
        %4442 = vmatpush1.msra.mxu0 %v450
        %4443 = vmatprep.subr.mxu0 0.0
        %4444 = vmatpush1.msra.mxu0 %v451
        %4445 = vmatprep.subr.mxu0 0.0
        %4446 = vmatpush1.msra.mxu0 %v452
        %4447 = vmatprep.subr.mxu0 0.0
        %4448 = vmatpush1.msra.mxu0 %v453
        %4449 = vmatprep.subr.mxu0 0.0
        %4450 = vmatpush1.msra.mxu0 %v454
        %4451 = vmatprep.subr.mxu0 0.0
        %4452 = vmatpush1.msra.mxu0 %v455
        %4453 = vmatprep.subr.mxu0 0.0
        %4454 = vmatpush1.msra.mxu0 0.0
        %4455 = vmatprep.subr.mxu0 0.0
        %4456 = vmatpush1.msra.mxu0 0.0
        %4457 = vmatprep.subr.mxu0 0.0
        %4458 = vmatpush1.msra.mxu0 0.0
        %4459 = vmatprep.subr.mxu0 0.0
        %4460 = vmatpush1.msra.mxu0 0.0
        %4461 = vmatprep.subr.mxu0 0.0
        %4462 = vmatpush1.msra.mxu0 0.0
        %4463 = vmatprep.subr.mxu0 0.0
        %4464 = vmatpush1.msra.mxu0 0.0
        %4465 = vmatprep.subr.mxu0 0.0
        %4466 = vmatpush1.msra.mxu0 0.0
        %4467 = vmatprep.subr.mxu0 0.0
        %4468 = vmatpush1.msra.mxu0 0.0
        %4469 = vmatprep.subr.mxu0 0.0
        %4470 = vmatpush1.msra.mxu0 0.0
        %4471 = vmatprep.subr.mxu0 0.0
        %4472 = vmatpush1.msra.mxu0 0.0
        %4473 = vmatprep.subr.mxu0 0.0
        %4474 = vmatpush1.msra.mxu0 0.0
        %4475 = vmatprep.subr.mxu0 0.0
        %4476 = vmatpush1.msra.mxu0 0.0
        %4477 = vmatprep.subr.mxu0 0.0
        %4478 = vmatpush1.msra.mxu0 0.0
        %4479 = vmatprep.subr.mxu0 0.0
        %4480 = vmatpush1.msra.mxu0 0.0
        %4481 = vmatprep.subr.mxu0 0.0
        %4482 = vmatpush1.msra.mxu0 0.0
        %4483 = vmatprep.subr.mxu0 0.0
        %4484 = vmatpush1.msra.mxu0 0.0
        %4485 = vmatprep.subr.mxu0 0.0
        %4486 = vmatpush1.msra.mxu0 0.0
        %4487 = vmatprep.subr.mxu0 0.0
        %4488 = vmatpush1.msra.mxu0 0.0
        %4489 = vmatprep.subr.mxu0 0.0
        %4490 = vmatpush1.msra.mxu0 0.0
        %4491 = vmatprep.subr.mxu0 0.0
        %4492 = vmatpush1.msra.mxu0 0.0
        %4493 = vmatprep.subr.mxu0 0.0
        %4494 = vmatpush1.msra.mxu0 0.0
        %4495 = vmatprep.subr.mxu0 0.0
        %4496 = vmatpush1.msra.mxu0 0.0
        %4497 = vmatprep.subr.mxu0 0.0
        %4498 = vmatpush1.msra.mxu0 0.0
        %4499 = vmatprep.mubr.f32.mxu0 0.0
        %4500 = vmatmul.mubr.f32.gmra.mrb[0].mxu0 %v4433
        %v4501 = vpop.f32.mrb[0].mxu0
        %v4502 = vadd.f32 0.0, %v4501
        %v4503 = vpop.f32.mrb[0].mxu0
        %4504 = vdwg.mxu0
        %v4505 = vadd.f32 %v4427, %v4502
        %v4506 = vadd.f32 %v4505, %v530
        %v4507 = vmax.f32 %v4506, 0.0
        %s4508 = scalar_lea.vmem %s3, 1664
        %v4509 = vld [vmem:[%s4508] sm:$0xff]
        %v4510 = vld [vmem:[%s4508 + $0x8] sm:$0xff]
        %v4511 = vld [vmem:[%s4508 + $0x10] sm:$0xff]
        %v4512 = vld [vmem:[%s4508 + $0x18] sm:$0xff]
        %v4513 = vld [vmem:[%s4508 + $0x20] sm:$0xff]
        %v4514 = vld [vmem:[%s4508 + $0x28] sm:$0xff]
        %v4515 = vld [vmem:[%s4508 + $0x30] sm:$0xff]
        %v4516 = vld [vmem:[%s4508 + $0x38] sm:$0xff]
        %v4517 = vld [vmem:[%s4508 + $0x40] sm:$0xff]
        %v4518 = vld [vmem:[%s4508 + $0x48] sm:$0xff]
        %v4519 = vld [vmem:[%s4508 + $0x50] sm:$0xff]
        %v4520 = vld [vmem:[%s4508 + $0x58] sm:$0xff]
        %v4521 = vld [vmem:[%s4508 + $0x60] sm:$0xff]
        %v4522 = vld [vmem:[%s4508 + $0x68] sm:$0xff]
        %v4523 = vld [vmem:[%s4508 + $0x70] sm:$0xff]
        %v4524 = vld [vmem:[%s4508 + $0x78] sm:$0xff]
        %4525 = vmatprep.subr.mxu0 0.0
        %4526 = vmatpush1.msra.mxu0 %v4509
        %4527 = vmatprep.subr.mxu0 0.0
        %4528 = vmatpush1.msra.mxu0 %v4510
        %4529 = vmatprep.subr.mxu0 0.0
        %4530 = vmatpush1.msra.mxu0 %v4511
        %4531 = vmatprep.subr.mxu0 0.0
        %4532 = vmatpush1.msra.mxu0 %v4512
        %4533 = vmatprep.subr.mxu0 0.0
        %4534 = vmatpush1.msra.mxu0 %v4513
        %4535 = vmatprep.subr.mxu0 0.0
        %4536 = vmatpush1.msra.mxu0 %v4514
        %4537 = vmatprep.subr.mxu0 0.0
        %4538 = vmatpush1.msra.mxu0 %v4515
        %4539 = vmatprep.subr.mxu0 0.0
        %4540 = vmatpush1.msra.mxu0 %v4516
        %4541 = vmatprep.subr.mxu0 0.0
        %4542 = vmatpush1.msra.mxu0 %v4517
        %4543 = vmatprep.subr.mxu0 0.0
        %4544 = vmatpush1.msra.mxu0 %v4518
        %4545 = vmatprep.subr.mxu0 0.0
        %4546 = vmatpush1.msra.mxu0 %v4519
        %4547 = vmatprep.subr.mxu0 0.0
        %4548 = vmatpush1.msra.mxu0 %v4520
        %4549 = vmatprep.subr.mxu0 0.0
        %4550 = vmatpush1.msra.mxu0 %v4521
        %4551 = vmatprep.subr.mxu0 0.0
        %4552 = vmatpush1.msra.mxu0 %v4522
        %4553 = vmatprep.subr.mxu0 0.0
        %4554 = vmatpush1.msra.mxu0 %v4523
        %4555 = vmatprep.subr.mxu0 0.0
        %4556 = vmatpush1.msra.mxu0 %v4524
        %4557 = vmatprep.subr.mxu0 0.0
        %4558 = vmatpush1.msra.mxu0 0.0
        %4559 = vmatprep.subr.mxu0 0.0
        %4560 = vmatpush1.msra.mxu0 0.0
        %4561 = vmatprep.subr.mxu0 0.0
        %4562 = vmatpush1.msra.mxu0 0.0
        %4563 = vmatprep.subr.mxu0 0.0
        %4564 = vmatpush1.msra.mxu0 0.0
        %4565 = vmatprep.subr.mxu0 0.0
        %4566 = vmatpush1.msra.mxu0 0.0
        %4567 = vmatprep.subr.mxu0 0.0
        %4568 = vmatpush1.msra.mxu0 0.0
        %4569 = vmatprep.subr.mxu0 0.0
        %4570 = vmatpush1.msra.mxu0 0.0
        %4571 = vmatprep.subr.mxu0 0.0
        %4572 = vmatpush1.msra.mxu0 0.0
        %4573 = vmatprep.subr.mxu0 0.0
        %4574 = vmatpush1.msra.mxu0 0.0
        %4575 = vmatprep.subr.mxu0 0.0
        %4576 = vmatpush1.msra.mxu0 0.0
        %4577 = vmatprep.subr.mxu0 0.0
        %4578 = vmatpush1.msra.mxu0 0.0
        %4579 = vmatprep.subr.mxu0 0.0
        %4580 = vmatpush1.msra.mxu0 0.0
        %4581 = vmatprep.subr.mxu0 0.0
        %4582 = vmatpush1.msra.mxu0 0.0
        %4583 = vmatprep.subr.mxu0 0.0
        %4584 = vmatpush1.msra.mxu0 0.0
        %4585 = vmatprep.subr.mxu0 0.0
        %4586 = vmatpush1.msra.mxu0 0.0
        %4587 = vmatprep.subr.mxu0 0.0
        %4588 = vmatpush1.msra.mxu0 0.0
        %4589 = vmatprep.mubr.f32.mxu0 0.0
        %4590 = vmatmul.mubr.f32.gmra.mrb[0].mxu0 %v4507
        %v4591 = vpop.f32.mrb[0].mxu0
        %v4592 = vadd.f32 0.0, %v4591
        %v4593 = vpop.f32.mrb[0].mxu0
        %4594 = vdwg.mxu0
        %v4595 = vadd.f32 %v4289, %v4592
        %4596 = vmatprep.subr.mxu0 0.0
        %4597 = vmatpush1.msra.mxu0 %v288
        %4598 = vmatprep.subr.mxu0 0.0
        %4599 = vmatpush1.msra.mxu0 %v289
        %4600 = vmatprep.subr.mxu0 0.0
        %4601 = vmatpush1.msra.mxu0 %v290
        %4602 = vmatprep.subr.mxu0 0.0
        %4603 = vmatpush1.msra.mxu0 %v291
        %4604 = vmatprep.subr.mxu0 0.0
        %4605 = vmatpush1.msra.mxu0 %v292
        %4606 = vmatprep.subr.mxu0 0.0
        %4607 = vmatpush1.msra.mxu0 %v293
        %4608 = vmatprep.subr.mxu0 0.0
        %4609 = vmatpush1.msra.mxu0 %v294
        %4610 = vmatprep.subr.mxu0 0.0
        %4611 = vmatpush1.msra.mxu0 %v295
        %4612 = vmatprep.subr.mxu0 0.0
        %4613 = vmatpush1.msra.mxu0 %v296
        %4614 = vmatprep.subr.mxu0 0.0
        %4615 = vmatpush1.msra.mxu0 0.0
        %4616 = vmatprep.subr.mxu0 0.0
        %4617 = vmatpush1.msra.mxu0 0.0
        %4618 = vmatprep.subr.mxu0 0.0
        %4619 = vmatpush1.msra.mxu0 0.0
        %4620 = vmatprep.subr.mxu0 0.0
        %4621 = vmatpush1.msra.mxu0 0.0
        %4622 = vmatprep.subr.mxu0 0.0
        %4623 = vmatpush1.msra.mxu0 0.0
        %4624 = vmatprep.subr.mxu0 0.0
        %4625 = vmatpush1.msra.mxu0 0.0
        %4626 = vmatprep.subr.mxu0 0.0
        %4627 = vmatpush1.msra.mxu0 0.0
        %4628 = vmatprep.subr.mxu0 0.0
        %4629 = vmatpush1.msra.mxu0 0.0
        %4630 = vmatprep.subr.mxu0 0.0
        %4631 = vmatpush1.msra.mxu0 0.0
        %4632 = vmatprep.subr.mxu0 0.0
        %4633 = vmatpush1.msra.mxu0 0.0
        %4634 = vmatprep.subr.mxu0 0.0
        %4635 = vmatpush1.msra.mxu0 0.0
        %4636 = vmatprep.subr.mxu0 0.0
        %4637 = vmatpush1.msra.mxu0 0.0
        %4638 = vmatprep.subr.mxu0 0.0
        %4639 = vmatpush1.msra.mxu0 0.0
        %4640 = vmatprep.subr.mxu0 0.0
        %4641 = vmatpush1.msra.mxu0 0.0
        %4642 = vmatprep.subr.mxu0 0.0
        %4643 = vmatpush1.msra.mxu0 0.0
        %4644 = vmatprep.subr.mxu0 0.0
        %4645 = vmatpush1.msra.mxu0 0.0
        %4646 = vmatprep.subr.mxu0 0.0
        %4647 = vmatpush1.msra.mxu0 0.0
        %4648 = vmatprep.subr.mxu0 0.0
        %4649 = vmatpush1.msra.mxu0 0.0
        %4650 = vmatprep.subr.mxu0 0.0
        %4651 = vmatpush1.msra.mxu0 0.0
        %4652 = vmatprep.subr.mxu0 0.0
        %4653 = vmatpush1.msra.mxu0 0.0
        %4654 = vmatprep.subr.mxu0 0.0
        %4655 = vmatpush1.msra.mxu0 0.0
        %4656 = vmatprep.subr.mxu0 0.0
        %4657 = vmatpush1.msra.mxu0 0.0
        %4658 = vmatprep.subr.mxu0 0.0
        %4659 = vmatpush1.msra.mxu0 0.0
        %4660 = vmatprep.mubr.f32.mxu0 0.0
        %4661 = vmatmul.mubr.f32.gmra.mrb[0].mxu0 %v4433
        %v4662 = vpop.f32.mrb[0].mxu0
        %v4663 = vadd.f32 0.0, %v4662
        %v4664 = vpop.f32.mrb[0].mxu0
        %4665 = vdwg.mxu0
        %4666 = vmatprep.subr.mxu0 0.0
        %4667 = vmatpush1.msra.mxu0 %v276
        %4668 = vmatprep.subr.mxu0 0.0
        %4669 = vmatpush1.msra.mxu0 %v277
        %4670 = vmatprep.subr.mxu0 0.0
        %4671 = vmatpush1.msra.mxu0 %v278
        %4672 = vmatprep.subr.mxu0 0.0
        %4673 = vmatpush1.msra.mxu0 %v279
        %4674 = vmatprep.subr.mxu0 0.0
        %4675 = vmatpush1.msra.mxu0 %v280
        %4676 = vmatprep.subr.mxu0 0.0
        %4677 = vmatpush1.msra.mxu0 %v281
        %4678 = vmatprep.subr.mxu0 0.0
        %4679 = vmatpush1.msra.mxu0 %v282
        %4680 = vmatprep.subr.mxu0 0.0
        %4681 = vmatpush1.msra.mxu0 %v283
        %4682 = vmatprep.subr.mxu0 0.0
        %4683 = vmatpush1.msra.mxu0 %v284
        %4684 = vmatprep.subr.mxu0 0.0
        %4685 = vmatpush1.msra.mxu0 0.0
        %4686 = vmatprep.subr.mxu0 0.0
        %4687 = vmatpush1.msra.mxu0 0.0
        %4688 = vmatprep.subr.mxu0 0.0
        %4689 = vmatpush1.msra.mxu0 0.0
        %4690 = vmatprep.subr.mxu0 0.0
        %4691 = vmatpush1.msra.mxu0 0.0
        %4692 = vmatprep.subr.mxu0 0.0
        %4693 = vmatpush1.msra.mxu0 0.0
        %4694 = vmatprep.subr.mxu0 0.0
        %4695 = vmatpush1.msra.mxu0 0.0
        %4696 = vmatprep.subr.mxu0 0.0
        %4697 = vmatpush1.msra.mxu0 0.0
        %4698 = vmatprep.subr.mxu0 0.0
        %4699 = vmatpush1.msra.mxu0 0.0
        %4700 = vmatprep.subr.mxu0 0.0
        %4701 = vmatpush1.msra.mxu0 0.0
        %4702 = vmatprep.subr.mxu0 0.0
        %4703 = vmatpush1.msra.mxu0 0.0
        %4704 = vmatprep.subr.mxu0 0.0
        %4705 = vmatpush1.msra.mxu0 0.0
        %4706 = vmatprep.subr.mxu0 0.0
        %4707 = vmatpush1.msra.mxu0 0.0
        %4708 = vmatprep.subr.mxu0 0.0
        %4709 = vmatpush1.msra.mxu0 0.0
        %4710 = vmatprep.subr.mxu0 0.0
        %4711 = vmatpush1.msra.mxu0 0.0
        %4712 = vmatprep.subr.mxu0 0.0
        %4713 = vmatpush1.msra.mxu0 0.0
        %4714 = vmatprep.subr.mxu0 0.0
        %4715 = vmatpush1.msra.mxu0 0.0
        %4716 = vmatprep.subr.mxu0 0.0
        %4717 = vmatpush1.msra.mxu0 0.0
        %4718 = vmatprep.subr.mxu0 0.0
        %4719 = vmatpush1.msra.mxu0 0.0
        %4720 = vmatprep.subr.mxu0 0.0
        %4721 = vmatpush1.msra.mxu0 0.0
        %4722 = vmatprep.subr.mxu0 0.0
        %4723 = vmatpush1.msra.mxu0 0.0
        %4724 = vmatprep.subr.mxu0 0.0
        %4725 = vmatpush1.msra.mxu0 0.0
        %4726 = vmatprep.subr.mxu0 0.0
        %4727 = vmatpush1.msra.mxu0 0.0
        %4728 = vmatprep.subr.mxu0 0.0
        %4729 = vmatpush1.msra.mxu0 0.0
        %4730 = vmatprep.mubr.f32.mxu0 0.0
        %4731 = vmatmul.mubr.f32.gmra.mrb[0].mxu0 %v4127
        %v4732 = vpop.f32.mrb[0].mxu0
        %v4733 = vadd.f32 %v4663, %v4732
        %v4734 = vpop.f32.mrb[0].mxu0
        %4735 = vdwg.mxu0
        %s4736 = scalar_lea.vmem %s273, 16
        %v4737 = vld [vmem:[%s4736] sm:$0x1]
        %v4739 = vsel %vm297, %v4737, 0
        %4741 = vmatprep.subr.mxu0 0.0
        %4742 = vmatpush1.msra.mxu0 %v447
        %4743 = vmatprep.subr.mxu0 0.0
        %4744 = vmatpush1.msra.mxu0 %v448
        %4745 = vmatprep.subr.mxu0 0.0
        %4746 = vmatpush1.msra.mxu0 %v449
        %4747 = vmatprep.subr.mxu0 0.0
        %4748 = vmatpush1.msra.mxu0 %v450
        %4749 = vmatprep.subr.mxu0 0.0
        %4750 = vmatpush1.msra.mxu0 %v451
        %4751 = vmatprep.subr.mxu0 0.0
        %4752 = vmatpush1.msra.mxu0 %v452
        %4753 = vmatprep.subr.mxu0 0.0
        %4754 = vmatpush1.msra.mxu0 %v453
        %4755 = vmatprep.subr.mxu0 0.0
        %4756 = vmatpush1.msra.mxu0 %v454
        %4757 = vmatprep.subr.mxu0 0.0
        %4758 = vmatpush1.msra.mxu0 %v455
        %4759 = vmatprep.subr.mxu0 0.0
        %4760 = vmatpush1.msra.mxu0 0.0
        %4761 = vmatprep.subr.mxu0 0.0
        %4762 = vmatpush1.msra.mxu0 0.0
        %4763 = vmatprep.subr.mxu0 0.0
        %4764 = vmatpush1.msra.mxu0 0.0
        %4765 = vmatprep.subr.mxu0 0.0
        %4766 = vmatpush1.msra.mxu0 0.0
        %4767 = vmatprep.subr.mxu0 0.0
        %4768 = vmatpush1.msra.mxu0 0.0
        %4769 = vmatprep.subr.mxu0 0.0
        %4770 = vmatpush1.msra.mxu0 0.0
        %4771 = vmatprep.subr.mxu0 0.0
        %4772 = vmatpush1.msra.mxu0 0.0
        %4773 = vmatprep.subr.mxu0 0.0
        %4774 = vmatpush1.msra.mxu0 0.0
        %4775 = vmatprep.subr.mxu0 0.0
        %4776 = vmatpush1.msra.mxu0 0.0
        %4777 = vmatprep.subr.mxu0 0.0
        %4778 = vmatpush1.msra.mxu0 0.0
        %4779 = vmatprep.subr.mxu0 0.0
        %4780 = vmatpush1.msra.mxu0 0.0
        %4781 = vmatprep.subr.mxu0 0.0
        %4782 = vmatpush1.msra.mxu0 0.0
        %4783 = vmatprep.subr.mxu0 0.0
        %4784 = vmatpush1.msra.mxu0 0.0
        %4785 = vmatprep.subr.mxu0 0.0
        %4786 = vmatpush1.msra.mxu0 0.0
        %4787 = vmatprep.subr.mxu0 0.0
        %4788 = vmatpush1.msra.mxu0 0.0
        %4789 = vmatprep.subr.mxu0 0.0
        %4790 = vmatpush1.msra.mxu0 0.0
        %4791 = vmatprep.subr.mxu0 0.0
        %4792 = vmatpush1.msra.mxu0 0.0
        %4793 = vmatprep.subr.mxu0 0.0
        %4794 = vmatpush1.msra.mxu0 0.0
        %4795 = vmatprep.subr.mxu0 0.0
        %4796 = vmatpush1.msra.mxu0 0.0
        %4797 = vmatprep.subr.mxu0 0.0
        %4798 = vmatpush1.msra.mxu0 0.0
        %4799 = vmatprep.subr.mxu0 0.0
        %4800 = vmatpush1.msra.mxu0 0.0
        %4801 = vmatprep.subr.mxu0 0.0
        %4802 = vmatpush1.msra.mxu0 0.0
        %4803 = vmatprep.subr.mxu0 0.0
        %4804 = vmatpush1.msra.mxu0 0.0
        %4805 = vmatprep.mubr.f32.mxu0 0.0
        %4806 = vmatmul.mubr.f32.gmra.mrb[0].mxu0 %v4739
        %v4807 = vpop.f32.mrb[0].mxu0
        %v4808 = vadd.f32 0.0, %v4807
        %v4809 = vpop.f32.mrb[0].mxu0
        %4810 = vdwg.mxu0
        %v4811 = vadd.f32 %v4733, %v4808
        %v4812 = vadd.f32 %v4811, %v530
        %v4813 = vmax.f32 %v4812, 0.0
        %s4814 = scalar_lea.vmem %s3, 1792
        %v4815 = vld [vmem:[%s4814] sm:$0xff]
        %v4816 = vld [vmem:[%s4814 + $0x8] sm:$0xff]
        %v4817 = vld [vmem:[%s4814 + $0x10] sm:$0xff]
        %v4818 = vld [vmem:[%s4814 + $0x18] sm:$0xff]
        %v4819 = vld [vmem:[%s4814 + $0x20] sm:$0xff]
        %v4820 = vld [vmem:[%s4814 + $0x28] sm:$0xff]
        %v4821 = vld [vmem:[%s4814 + $0x30] sm:$0xff]
        %v4822 = vld [vmem:[%s4814 + $0x38] sm:$0xff]
        %v4823 = vld [vmem:[%s4814 + $0x40] sm:$0xff]
        %v4824 = vld [vmem:[%s4814 + $0x48] sm:$0xff]
        %v4825 = vld [vmem:[%s4814 + $0x50] sm:$0xff]
        %v4826 = vld [vmem:[%s4814 + $0x58] sm:$0xff]
        %v4827 = vld [vmem:[%s4814 + $0x60] sm:$0xff]
        %v4828 = vld [vmem:[%s4814 + $0x68] sm:$0xff]
        %v4829 = vld [vmem:[%s4814 + $0x70] sm:$0xff]
        %v4830 = vld [vmem:[%s4814 + $0x78] sm:$0xff]
        %4831 = vmatprep.subr.mxu0 0.0
        %4832 = vmatpush1.msra.mxu0 %v4815
        %4833 = vmatprep.subr.mxu0 0.0
        %4834 = vmatpush1.msra.mxu0 %v4816
        %4835 = vmatprep.subr.mxu0 0.0
        %4836 = vmatpush1.msra.mxu0 %v4817
        %4837 = vmatprep.subr.mxu0 0.0
        %4838 = vmatpush1.msra.mxu0 %v4818
        %4839 = vmatprep.subr.mxu0 0.0
        %4840 = vmatpush1.msra.mxu0 %v4819
        %4841 = vmatprep.subr.mxu0 0.0
        %4842 = vmatpush1.msra.mxu0 %v4820
        %4843 = vmatprep.subr.mxu0 0.0
        %4844 = vmatpush1.msra.mxu0 %v4821
        %4845 = vmatprep.subr.mxu0 0.0
        %4846 = vmatpush1.msra.mxu0 %v4822
        %4847 = vmatprep.subr.mxu0 0.0
        %4848 = vmatpush1.msra.mxu0 %v4823
        %4849 = vmatprep.subr.mxu0 0.0
        %4850 = vmatpush1.msra.mxu0 %v4824
        %4851 = vmatprep.subr.mxu0 0.0
        %4852 = vmatpush1.msra.mxu0 %v4825
        %4853 = vmatprep.subr.mxu0 0.0
        %4854 = vmatpush1.msra.mxu0 %v4826
        %4855 = vmatprep.subr.mxu0 0.0
        %4856 = vmatpush1.msra.mxu0 %v4827
        %4857 = vmatprep.subr.mxu0 0.0
        %4858 = vmatpush1.msra.mxu0 %v4828
        %4859 = vmatprep.subr.mxu0 0.0
        %4860 = vmatpush1.msra.mxu0 %v4829
        %4861 = vmatprep.subr.mxu0 0.0
        %4862 = vmatpush1.msra.mxu0 %v4830
        %4863 = vmatprep.subr.mxu0 0.0
        %4864 = vmatpush1.msra.mxu0 0.0
        %4865 = vmatprep.subr.mxu0 0.0
        %4866 = vmatpush1.msra.mxu0 0.0
        %4867 = vmatprep.subr.mxu0 0.0
        %4868 = vmatpush1.msra.mxu0 0.0
        %4869 = vmatprep.subr.mxu0 0.0
        %4870 = vmatpush1.msra.mxu0 0.0
        %4871 = vmatprep.subr.mxu0 0.0
        %4872 = vmatpush1.msra.mxu0 0.0
        %4873 = vmatprep.subr.mxu0 0.0
        %4874 = vmatpush1.msra.mxu0 0.0
        %4875 = vmatprep.subr.mxu0 0.0
        %4876 = vmatpush1.msra.mxu0 0.0
        %4877 = vmatprep.subr.mxu0 0.0
        %4878 = vmatpush1.msra.mxu0 0.0
        %4879 = vmatprep.subr.mxu0 0.0
        %4880 = vmatpush1.msra.mxu0 0.0
        %4881 = vmatprep.subr.mxu0 0.0
        %4882 = vmatpush1.msra.mxu0 0.0
        %4883 = vmatprep.subr.mxu0 0.0
        %4884 = vmatpush1.msra.mxu0 0.0
        %4885 = vmatprep.subr.mxu0 0.0
        %4886 = vmatpush1.msra.mxu0 0.0
        %4887 = vmatprep.subr.mxu0 0.0
        %4888 = vmatpush1.msra.mxu0 0.0
        %4889 = vmatprep.subr.mxu0 0.0
        %4890 = vmatpush1.msra.mxu0 0.0
        %4891 = vmatprep.subr.mxu0 0.0
        %4892 = vmatpush1.msra.mxu0 0.0
        %4893 = vmatprep.subr.mxu0 0.0
        %4894 = vmatpush1.msra.mxu0 0.0
        %4895 = vmatprep.mubr.f32.mxu0 0.0
        %4896 = vmatmul.mubr.f32.gmra.mrb[0].mxu0 %v4813
        %v4897 = vpop.f32.mrb[0].mxu0
        %v4898 = vadd.f32 0.0, %v4897
        %v4899 = vpop.f32.mrb[0].mxu0
        %4900 = vdwg.mxu0
        %v4901 = vadd.f32 %v4595, %v4898
        %4902 = vmatprep.subr.mxu0 0.0
        %4903 = vmatpush1.msra.mxu0 %v288
        %4904 = vmatprep.subr.mxu0 0.0
        %4905 = vmatpush1.msra.mxu0 %v289
        %4906 = vmatprep.subr.mxu0 0.0
        %4907 = vmatpush1.msra.mxu0 %v290
        %4908 = vmatprep.subr.mxu0 0.0
        %4909 = vmatpush1.msra.mxu0 %v291
        %4910 = vmatprep.subr.mxu0 0.0
        %4911 = vmatpush1.msra.mxu0 %v292
        %4912 = vmatprep.subr.mxu0 0.0
        %4913 = vmatpush1.msra.mxu0 %v293
        %4914 = vmatprep.subr.mxu0 0.0
        %4915 = vmatpush1.msra.mxu0 %v294
        %4916 = vmatprep.subr.mxu0 0.0
        %4917 = vmatpush1.msra.mxu0 %v295
        %4918 = vmatprep.subr.mxu0 0.0
        %4919 = vmatpush1.msra.mxu0 %v296
        %4920 = vmatprep.subr.mxu0 0.0
        %4921 = vmatpush1.msra.mxu0 0.0
        %4922 = vmatprep.subr.mxu0 0.0
        %4923 = vmatpush1.msra.mxu0 0.0
        %4924 = vmatprep.subr.mxu0 0.0
        %4925 = vmatpush1.msra.mxu0 0.0
        %4926 = vmatprep.subr.mxu0 0.0
        %4927 = vmatpush1.msra.mxu0 0.0
        %4928 = vmatprep.subr.mxu0 0.0
        %4929 = vmatpush1.msra.mxu0 0.0
        %4930 = vmatprep.subr.mxu0 0.0
        %4931 = vmatpush1.msra.mxu0 0.0
        %4932 = vmatprep.subr.mxu0 0.0
        %4933 = vmatpush1.msra.mxu0 0.0
        %4934 = vmatprep.subr.mxu0 0.0
        %4935 = vmatpush1.msra.mxu0 0.0
        %4936 = vmatprep.subr.mxu0 0.0
        %4937 = vmatpush1.msra.mxu0 0.0
        %4938 = vmatprep.subr.mxu0 0.0
        %4939 = vmatpush1.msra.mxu0 0.0
        %4940 = vmatprep.subr.mxu0 0.0
        %4941 = vmatpush1.msra.mxu0 0.0
        %4942 = vmatprep.subr.mxu0 0.0
        %4943 = vmatpush1.msra.mxu0 0.0
        %4944 = vmatprep.subr.mxu0 0.0
        %4945 = vmatpush1.msra.mxu0 0.0
        %4946 = vmatprep.subr.mxu0 0.0
        %4947 = vmatpush1.msra.mxu0 0.0
        %4948 = vmatprep.subr.mxu0 0.0
        %4949 = vmatpush1.msra.mxu0 0.0
        %4950 = vmatprep.subr.mxu0 0.0
        %4951 = vmatpush1.msra.mxu0 0.0
        %4952 = vmatprep.subr.mxu0 0.0
        %4953 = vmatpush1.msra.mxu0 0.0
        %4954 = vmatprep.subr.mxu0 0.0
        %4955 = vmatpush1.msra.mxu0 0.0
        %4956 = vmatprep.subr.mxu0 0.0
        %4957 = vmatpush1.msra.mxu0 0.0
        %4958 = vmatprep.subr.mxu0 0.0
        %4959 = vmatpush1.msra.mxu0 0.0
        %4960 = vmatprep.subr.mxu0 0.0
        %4961 = vmatpush1.msra.mxu0 0.0
        %4962 = vmatprep.subr.mxu0 0.0
        %4963 = vmatpush1.msra.mxu0 0.0
        %4964 = vmatprep.subr.mxu0 0.0
        %4965 = vmatpush1.msra.mxu0 0.0
        %4966 = vmatprep.mubr.f32.mxu0 0.0
        %4967 = vmatmul.mubr.f32.gmra.mrb[0].mxu0 %v4739
        %v4968 = vpop.f32.mrb[0].mxu0
        %v4969 = vadd.f32 0.0, %v4968
        %v4970 = vpop.f32.mrb[0].mxu0
        %4971 = vdwg.mxu0
        %4972 = vmatprep.subr.mxu0 0.0
        %4973 = vmatpush1.msra.mxu0 %v276
        %4974 = vmatprep.subr.mxu0 0.0
        %4975 = vmatpush1.msra.mxu0 %v277
        %4976 = vmatprep.subr.mxu0 0.0
        %4977 = vmatpush1.msra.mxu0 %v278
        %4978 = vmatprep.subr.mxu0 0.0
        %4979 = vmatpush1.msra.mxu0 %v279
        %4980 = vmatprep.subr.mxu0 0.0
        %4981 = vmatpush1.msra.mxu0 %v280
        %4982 = vmatprep.subr.mxu0 0.0
        %4983 = vmatpush1.msra.mxu0 %v281
        %4984 = vmatprep.subr.mxu0 0.0
        %4985 = vmatpush1.msra.mxu0 %v282
        %4986 = vmatprep.subr.mxu0 0.0
        %4987 = vmatpush1.msra.mxu0 %v283
        %4988 = vmatprep.subr.mxu0 0.0
        %4989 = vmatpush1.msra.mxu0 %v284
        %4990 = vmatprep.subr.mxu0 0.0
        %4991 = vmatpush1.msra.mxu0 0.0
        %4992 = vmatprep.subr.mxu0 0.0
        %4993 = vmatpush1.msra.mxu0 0.0
        %4994 = vmatprep.subr.mxu0 0.0
        %4995 = vmatpush1.msra.mxu0 0.0
        %4996 = vmatprep.subr.mxu0 0.0
        %4997 = vmatpush1.msra.mxu0 0.0
        %4998 = vmatprep.subr.mxu0 0.0
        %4999 = vmatpush1.msra.mxu0 0.0
        %5000 = vmatprep.subr.mxu0 0.0
        %5001 = vmatpush1.msra.mxu0 0.0
        %5002 = vmatprep.subr.mxu0 0.0
        %5003 = vmatpush1.msra.mxu0 0.0
        %5004 = vmatprep.subr.mxu0 0.0
        %5005 = vmatpush1.msra.mxu0 0.0
        %5006 = vmatprep.subr.mxu0 0.0
        %5007 = vmatpush1.msra.mxu0 0.0
        %5008 = vmatprep.subr.mxu0 0.0
        %5009 = vmatpush1.msra.mxu0 0.0
        %5010 = vmatprep.subr.mxu0 0.0
        %5011 = vmatpush1.msra.mxu0 0.0
        %5012 = vmatprep.subr.mxu0 0.0
        %5013 = vmatpush1.msra.mxu0 0.0
        %5014 = vmatprep.subr.mxu0 0.0
        %5015 = vmatpush1.msra.mxu0 0.0
        %5016 = vmatprep.subr.mxu0 0.0
        %5017 = vmatpush1.msra.mxu0 0.0
        %5018 = vmatprep.subr.mxu0 0.0
        %5019 = vmatpush1.msra.mxu0 0.0
        %5020 = vmatprep.subr.mxu0 0.0
        %5021 = vmatpush1.msra.mxu0 0.0
        %5022 = vmatprep.subr.mxu0 0.0
        %5023 = vmatpush1.msra.mxu0 0.0
        %5024 = vmatprep.subr.mxu0 0.0
        %5025 = vmatpush1.msra.mxu0 0.0
        %5026 = vmatprep.subr.mxu0 0.0
        %5027 = vmatpush1.msra.mxu0 0.0
        %5028 = vmatprep.subr.mxu0 0.0
        %5029 = vmatpush1.msra.mxu0 0.0
        %5030 = vmatprep.subr.mxu0 0.0
        %5031 = vmatpush1.msra.mxu0 0.0
        %5032 = vmatprep.subr.mxu0 0.0
        %5033 = vmatpush1.msra.mxu0 0.0
        %5034 = vmatprep.subr.mxu0 0.0
        %5035 = vmatpush1.msra.mxu0 0.0
        %5036 = vmatprep.mubr.f32.mxu0 0.0
        %5037 = vmatmul.mubr.f32.gmra.mrb[0].mxu0 %v4433
        %v5038 = vpop.f32.mrb[0].mxu0
        %v5039 = vadd.f32 %v4969, %v5038
        %v5040 = vpop.f32.mrb[0].mxu0
        %5041 = vdwg.mxu0
        %s5042 = scalar_lea.vmem %s273, 17
        %v5043 = vld [vmem:[%s5042] sm:$0x1]
        %v5045 = vsel %vm297, %v5043, 0
        %5047 = vmatprep.subr.mxu0 0.0
        %5048 = vmatpush1.msra.mxu0 %v447
        %5049 = vmatprep.subr.mxu0 0.0
        %5050 = vmatpush1.msra.mxu0 %v448
        %5051 = vmatprep.subr.mxu0 0.0
        %5052 = vmatpush1.msra.mxu0 %v449
        %5053 = vmatprep.subr.mxu0 0.0
        %5054 = vmatpush1.msra.mxu0 %v450
        %5055 = vmatprep.subr.mxu0 0.0
        %5056 = vmatpush1.msra.mxu0 %v451
        %5057 = vmatprep.subr.mxu0 0.0
        %5058 = vmatpush1.msra.mxu0 %v452
        %5059 = vmatprep.subr.mxu0 0.0
        %5060 = vmatpush1.msra.mxu0 %v453
        %5061 = vmatprep.subr.mxu0 0.0
        %5062 = vmatpush1.msra.mxu0 %v454
        %5063 = vmatprep.subr.mxu0 0.0
        %5064 = vmatpush1.msra.mxu0 %v455
        %5065 = vmatprep.subr.mxu0 0.0
        %5066 = vmatpush1.msra.mxu0 0.0
        %5067 = vmatprep.subr.mxu0 0.0
        %5068 = vmatpush1.msra.mxu0 0.0
        %5069 = vmatprep.subr.mxu0 0.0
        %5070 = vmatpush1.msra.mxu0 0.0
        %5071 = vmatprep.subr.mxu0 0.0
        %5072 = vmatpush1.msra.mxu0 0.0
        %5073 = vmatprep.subr.mxu0 0.0
        %5074 = vmatpush1.msra.mxu0 0.0
        %5075 = vmatprep.subr.mxu0 0.0
        %5076 = vmatpush1.msra.mxu0 0.0
        %5077 = vmatprep.subr.mxu0 0.0
        %5078 = vmatpush1.msra.mxu0 0.0
        %5079 = vmatprep.subr.mxu0 0.0
        %5080 = vmatpush1.msra.mxu0 0.0
        %5081 = vmatprep.subr.mxu0 0.0
        %5082 = vmatpush1.msra.mxu0 0.0
        %5083 = vmatprep.subr.mxu0 0.0
        %5084 = vmatpush1.msra.mxu0 0.0
        %5085 = vmatprep.subr.mxu0 0.0
        %5086 = vmatpush1.msra.mxu0 0.0
        %5087 = vmatprep.subr.mxu0 0.0
        %5088 = vmatpush1.msra.mxu0 0.0
        %5089 = vmatprep.subr.mxu0 0.0
        %5090 = vmatpush1.msra.mxu0 0.0
        %5091 = vmatprep.subr.mxu0 0.0
        %5092 = vmatpush1.msra.mxu0 0.0
        %5093 = vmatprep.subr.mxu0 0.0
        %5094 = vmatpush1.msra.mxu0 0.0
        %5095 = vmatprep.subr.mxu0 0.0
        %5096 = vmatpush1.msra.mxu0 0.0
        %5097 = vmatprep.subr.mxu0 0.0
        %5098 = vmatpush1.msra.mxu0 0.0
        %5099 = vmatprep.subr.mxu0 0.0
        %5100 = vmatpush1.msra.mxu0 0.0
        %5101 = vmatprep.subr.mxu0 0.0
        %5102 = vmatpush1.msra.mxu0 0.0
        %5103 = vmatprep.subr.mxu0 0.0
        %5104 = vmatpush1.msra.mxu0 0.0
        %5105 = vmatprep.subr.mxu0 0.0
        %5106 = vmatpush1.msra.mxu0 0.0
        %5107 = vmatprep.subr.mxu0 0.0
        %5108 = vmatpush1.msra.mxu0 0.0
        %5109 = vmatprep.subr.mxu0 0.0
        %5110 = vmatpush1.msra.mxu0 0.0
        %5111 = vmatprep.mubr.f32.mxu0 0.0
        %5112 = vmatmul.mubr.f32.gmra.mrb[0].mxu0 %v5045
        %v5113 = vpop.f32.mrb[0].mxu0
        %v5114 = vadd.f32 0.0, %v5113
        %v5115 = vpop.f32.mrb[0].mxu0
        %5116 = vdwg.mxu0
        %v5117 = vadd.f32 %v5039, %v5114
        %v5118 = vadd.f32 %v5117, %v530
        %v5119 = vmax.f32 %v5118, 0.0
        %s5120 = scalar_lea.vmem %s3, 1920
        %v5121 = vld [vmem:[%s5120] sm:$0xff]
        %v5122 = vld [vmem:[%s5120 + $0x8] sm:$0xff]
        %v5123 = vld [vmem:[%s5120 + $0x10] sm:$0xff]
        %v5124 = vld [vmem:[%s5120 + $0x18] sm:$0xff]
        %v5125 = vld [vmem:[%s5120 + $0x20] sm:$0xff]
        %v5126 = vld [vmem:[%s5120 + $0x28] sm:$0xff]
        %v5127 = vld [vmem:[%s5120 + $0x30] sm:$0xff]
        %v5128 = vld [vmem:[%s5120 + $0x38] sm:$0xff]
        %v5129 = vld [vmem:[%s5120 + $0x40] sm:$0xff]
        %v5130 = vld [vmem:[%s5120 + $0x48] sm:$0xff]
        %v5131 = vld [vmem:[%s5120 + $0x50] sm:$0xff]
        %v5132 = vld [vmem:[%s5120 + $0x58] sm:$0xff]
        %v5133 = vld [vmem:[%s5120 + $0x60] sm:$0xff]
        %v5134 = vld [vmem:[%s5120 + $0x68] sm:$0xff]
        %v5135 = vld [vmem:[%s5120 + $0x70] sm:$0xff]
        %v5136 = vld [vmem:[%s5120 + $0x78] sm:$0xff]
        %5137 = vmatprep.subr.mxu0 0.0
        %5138 = vmatpush1.msra.mxu0 %v5121
        %5139 = vmatprep.subr.mxu0 0.0
        %5140 = vmatpush1.msra.mxu0 %v5122
        %5141 = vmatprep.subr.mxu0 0.0
        %5142 = vmatpush1.msra.mxu0 %v5123
        %5143 = vmatprep.subr.mxu0 0.0
        %5144 = vmatpush1.msra.mxu0 %v5124
        %5145 = vmatprep.subr.mxu0 0.0
        %5146 = vmatpush1.msra.mxu0 %v5125
        %5147 = vmatprep.subr.mxu0 0.0
        %5148 = vmatpush1.msra.mxu0 %v5126
        %5149 = vmatprep.subr.mxu0 0.0
        %5150 = vmatpush1.msra.mxu0 %v5127
        %5151 = vmatprep.subr.mxu0 0.0
        %5152 = vmatpush1.msra.mxu0 %v5128
        %5153 = vmatprep.subr.mxu0 0.0
        %5154 = vmatpush1.msra.mxu0 %v5129
        %5155 = vmatprep.subr.mxu0 0.0
        %5156 = vmatpush1.msra.mxu0 %v5130
        %5157 = vmatprep.subr.mxu0 0.0
        %5158 = vmatpush1.msra.mxu0 %v5131
        %5159 = vmatprep.subr.mxu0 0.0
        %5160 = vmatpush1.msra.mxu0 %v5132
        %5161 = vmatprep.subr.mxu0 0.0
        %5162 = vmatpush1.msra.mxu0 %v5133
        %5163 = vmatprep.subr.mxu0 0.0
        %5164 = vmatpush1.msra.mxu0 %v5134
        %5165 = vmatprep.subr.mxu0 0.0
        %5166 = vmatpush1.msra.mxu0 %v5135
        %5167 = vmatprep.subr.mxu0 0.0
        %5168 = vmatpush1.msra.mxu0 %v5136
        %5169 = vmatprep.subr.mxu0 0.0
        %5170 = vmatpush1.msra.mxu0 0.0
        %5171 = vmatprep.subr.mxu0 0.0
        %5172 = vmatpush1.msra.mxu0 0.0
        %5173 = vmatprep.subr.mxu0 0.0
        %5174 = vmatpush1.msra.mxu0 0.0
        %5175 = vmatprep.subr.mxu0 0.0
        %5176 = vmatpush1.msra.mxu0 0.0
        %5177 = vmatprep.subr.mxu0 0.0
        %5178 = vmatpush1.msra.mxu0 0.0
        %5179 = vmatprep.subr.mxu0 0.0
        %5180 = vmatpush1.msra.mxu0 0.0
        %5181 = vmatprep.subr.mxu0 0.0
        %5182 = vmatpush1.msra.mxu0 0.0
        %5183 = vmatprep.subr.mxu0 0.0
        %5184 = vmatpush1.msra.mxu0 0.0
        %5185 = vmatprep.subr.mxu0 0.0
        %5186 = vmatpush1.msra.mxu0 0.0
        %5187 = vmatprep.subr.mxu0 0.0
        %5188 = vmatpush1.msra.mxu0 0.0
        %5189 = vmatprep.subr.mxu0 0.0
        %5190 = vmatpush1.msra.mxu0 0.0
        %5191 = vmatprep.subr.mxu0 0.0
        %5192 = vmatpush1.msra.mxu0 0.0
        %5193 = vmatprep.subr.mxu0 0.0
        %5194 = vmatpush1.msra.mxu0 0.0
        %5195 = vmatprep.subr.mxu0 0.0
        %5196 = vmatpush1.msra.mxu0 0.0
        %5197 = vmatprep.subr.mxu0 0.0
        %5198 = vmatpush1.msra.mxu0 0.0
        %5199 = vmatprep.subr.mxu0 0.0
        %5200 = vmatpush1.msra.mxu0 0.0
        %5201 = vmatprep.mubr.f32.mxu0 0.0
        %5202 = vmatmul.mubr.f32.gmra.mrb[0].mxu0 %v5119
        %v5203 = vpop.f32.mrb[0].mxu0
        %v5204 = vadd.f32 0.0, %v5203
        %v5205 = vpop.f32.mrb[0].mxu0
        %5206 = vdwg.mxu0
        %v5207 = vadd.f32 %v4901, %v5204
        %v5208 = vld [vmem:[%s4] sm:$0x1]
        %v5209 = vadd.f32 %v5207, %v5208
        %v5210 = vmax.f32 %v5209, 0.0
        %v5211 = vld [vmem:[%s5] sm:$0xff]
        %v5212 = vld [vmem:[%s5 + $0x8] sm:$0xff]
        %v5213 = vld [vmem:[%s5 + $0x10] sm:$0xff]
        %v5214 = vld [vmem:[%s5 + $0x18] sm:$0xff]
        %v5215 = vld [vmem:[%s6] sm:$0x1]
        %vm5216 = vcmask 261120
        %v5218 = vsel %vm5216, %v5210, 0
        %5220 = vmatprep.subr.mxu0 0.0
        %5221 = vmatpush1.msra.mxu0 %v5211
        %5222 = vmatprep.subr.mxu0 0.0
        %5223 = vmatpush1.msra.mxu0 %v5212
        %5224 = vmatprep.subr.mxu0 0.0
        %5225 = vmatpush1.msra.mxu0 %v5213
        %5226 = vmatprep.subr.mxu0 0.0
        %5227 = vmatpush1.msra.mxu0 %v5214
        %5228 = vmatprep.subr.mxu0 0.0
        %5229 = vmatpush1.msra.mxu0 0.0
        %5230 = vmatprep.subr.mxu0 0.0
        %5231 = vmatpush1.msra.mxu0 0.0
        %5232 = vmatprep.subr.mxu0 0.0
        %5233 = vmatpush1.msra.mxu0 0.0
        %5234 = vmatprep.subr.mxu0 0.0
        %5235 = vmatpush1.msra.mxu0 0.0
        %5236 = vmatprep.subr.mxu0 0.0
        %5237 = vmatpush1.msra.mxu0 0.0
        %5238 = vmatprep.subr.mxu0 0.0
        %5239 = vmatpush1.msra.mxu0 0.0
        %5240 = vmatprep.subr.mxu0 0.0
        %5241 = vmatpush1.msra.mxu0 0.0
        %5242 = vmatprep.subr.mxu0 0.0
        %5243 = vmatpush1.msra.mxu0 0.0
        %5244 = vmatprep.subr.mxu0 0.0
        %5245 = vmatpush1.msra.mxu0 0.0
        %5246 = vmatprep.subr.mxu0 0.0
        %5247 = vmatpush1.msra.mxu0 0.0
        %5248 = vmatprep.subr.mxu0 0.0
        %5249 = vmatpush1.msra.mxu0 0.0
        %5250 = vmatprep.subr.mxu0 0.0
        %5251 = vmatpush1.msra.mxu0 0.0
        %5252 = vmatprep.subr.mxu0 0.0
        %5253 = vmatpush1.msra.mxu0 0.0
        %5254 = vmatprep.subr.mxu0 0.0
        %5255 = vmatpush1.msra.mxu0 0.0
        %5256 = vmatprep.subr.mxu0 0.0
        %5257 = vmatpush1.msra.mxu0 0.0
        %5258 = vmatprep.subr.mxu0 0.0
        %5259 = vmatpush1.msra.mxu0 0.0
        %5260 = vmatprep.subr.mxu0 0.0
        %5261 = vmatpush1.msra.mxu0 0.0
        %5262 = vmatprep.subr.mxu0 0.0
        %5263 = vmatpush1.msra.mxu0 0.0
        %5264 = vmatprep.subr.mxu0 0.0
        %5265 = vmatpush1.msra.mxu0 0.0
        %5266 = vmatprep.subr.mxu0 0.0
        %5267 = vmatpush1.msra.mxu0 0.0
        %5268 = vmatprep.subr.mxu0 0.0
        %5269 = vmatpush1.msra.mxu0 0.0
        %5270 = vmatprep.subr.mxu0 0.0
        %5271 = vmatpush1.msra.mxu0 0.0
        %5272 = vmatprep.subr.mxu0 0.0
        %5273 = vmatpush1.msra.mxu0 0.0
        %5274 = vmatprep.subr.mxu0 0.0
        %5275 = vmatpush1.msra.mxu0 0.0
        %5276 = vmatprep.subr.mxu0 0.0
        %5277 = vmatpush1.msra.mxu0 0.0
        %5278 = vmatprep.subr.mxu0 0.0
        %5279 = vmatpush1.msra.mxu0 0.0
        %5280 = vmatprep.subr.mxu0 0.0
        %5281 = vmatpush1.msra.mxu0 0.0
        %5282 = vmatprep.subr.mxu0 0.0
        %5283 = vmatpush1.msra.mxu0 0.0
        %5284 = vmatprep.mubr.f32.mxu0 0.0
        %5285 = vmatmul.mubr.f32.gmra.mrb[0].mxu0 %v5218
        %v5286 = vpop.f32.mrb[0].mxu0
        %v5287 = vadd.f32 %v5215, %v5286
        %v5288 = vpop.f32.mrb[0].mxu0
        %5289 = vdwg.mxu0
        %vm5290 = vcmask 122880
        %5291 = vst.msk [vmem:[%s269] sm:$0x1] %vm5290, %v5287
        %s5292 = sand.u32 %s181, 1
        %s5293 = scalar_lea.sflag [#allocation3], %s5292
        %s5294 = sand.u32 %s181, 1
        %s5295 = scalar_lea.vmem [#allocation2], %s5294
        // Predicated region
        $region49: #{tpu_custom_call.1} parent=47 // pred_check
          %p5296 = pneg %p191
        $region50: #{tpu_custom_call.1} parent=47 // pred_check_branch
          %5298 = sbr.rel (%p5296) target = $region52
        $region51: #{tpu_custom_call.1} parent=47 // pred_region
          %s5300 = ssub.s32 16, 16
          %5301 = vsyncadd %s5293, %s5300
          %s5302 = smul.addr %s21, 16
          %s5303 = scalar_lea.hbm %s7, %s5302
          %s5305 = sshll.u32 %s5295, 4
          %s5306 = int_to_ptr.vmem [resolvable:$true] %s5305
          %5308 = dma.vmem_to_hbm [thread:$0]  %s5306, 16, %s5303, %s5293
        $region52: #{tpu_custom_call.1} parent=47 // pred_fallthru
          _
      $region48: #{tpu_custom_call.1} parent=5 // pred_fallthru
        _
      %p5309 = scmp.le.s32.totalorder 2, %s16
      // Predicated region
      $region53: #{tpu_custom_call.1} parent=5 // pred_check
        %p5310 = pneg %p5309
      $region54: #{tpu_custom_call.1} parent=5 // pred_check_branch
        %5312 = sbr.rel (%p5310) target = $region56
      $region55: #{tpu_custom_call.1} parent=5 // pred_region
        %s5313 = ssub.s32 %s16, 2
        // Predicated region
        $region57: #{tpu_custom_call.1} parent=55 // pred_check
          %p5314 = pneg %p197
        $region58: #{tpu_custom_call.1} parent=55 // pred_check_branch
          %5316 = sbr.rel (%p5314) target = $region60
        $region59: #{tpu_custom_call.1} parent=55 // pred_region
          %s5317 = sand.u32 %s182, 1
          %s5318 = scalar_lea.sflag [#allocation3], %s5317
          %s5319 = sand.u32 %s182, 1
          %s5320 = scalar_lea.vmem [#allocation2], %s5319
          %5321 = dma.done %s5318, 16
        $region60: #{tpu_custom_call.1} parent=55 // pred_fallthru
          _
      $region56: #{tpu_custom_call.1} parent=5 // pred_fallthru
        _
    $region6: #{tpu_custom_call.1} parent=1 // loop_footer
      %s20 = sadd.s32 1, %s16
    $region7: #{tpu_custom_call.1} parent=1 // loop_footer_branch
      %15 = sbr.rel target = $region3
    $region8: #{tpu_custom_call.1} parent=1 // loop_exit
      _
    %5322 = vsyncpa [#allocation3], 1
    %s5323 = scalar_lea.sflag [#allocation3], 1
    %5324 = vsyncpa %s5323, 1

</llo_original>
